<compile_context>
chip_gen: v7x
topology: tpu7x:2x2x1
jax: 0.10.0
libtpu: 0.0.40
codegen_flags: <defaults>
</compile_context>

<pallas_src>
import functools

import jax
import jax.numpy as jnp
from jax.experimental import pallas as pl
from jax.experimental.pallas import tpu as pltpu


def _resblock_kernel(x_ref, g1_ref, b1_ref, w1_ref, g2_ref, b2_ref, w2_ref,
                     o_ref, pad_ref, *, eps):
    """One batch sample per grid step; everything channels-last (NHWC).

    x_ref  : (1, H, W, C)   input sample
    g*/b*  : (1, 1, C)      GroupNorm affine params (num_groups == 1)
    w*_ref : (9, C, C)      conv taps, w[ky*3+kx] == torch_weight[:, :, ky, kx].T
    o_ref  : (1, H, W, C)   output sample
    pad_ref: (H+2, W+2, C)  f32 VMEM scratch implementing 'same' zero padding
    """
    _, hh, ww, cc = x_ref.shape

    # Zero the padded scratch; the 1-pixel zero border provides 'same' padding
    # for both convs (only the interior is rewritten below).  Done every step
    # on purpose: with "parallel" semantics each core has its own scratch.
    pad_ref[...] = jnp.zeros_like(pad_ref)

    x = x_ref[0].astype(jnp.float32)                        # (H, W, C)

    def group_norm(v, g_ref, b_ref):
        # num_groups == 1 -> statistics over the whole (H, W, C) sample.
        n = v.shape[0] * v.shape[1] * v.shape[2]
        mean = jnp.sum(v) * (1.0 / n)
        vc = v - mean
        var = jnp.sum(vc * vc) * (1.0 / (n - 1))            # torch.var: unbiased
        vn = vc * jax.lax.rsqrt(var + eps)
        return vn * g_ref[...] + b_ref[...]                 # per-channel affine

    def silu(v):
        return v * (1.0 / (1.0 + jnp.exp(-v)))              # EUP exp + VPU mul

    def conv3x3(v, w_ref):
        # 'same' 3x3 conv, bias=False: 9 shifted (H*W, Cin) @ (Cin, Cout)
        # MXU matmuls accumulated in f32.
        pad_ref[pl.ds(1, hh), pl.ds(1, ww), :] = v
        co = w_ref.shape[2]
        acc = jnp.zeros((hh * ww, co), jnp.float32)
        for k in range(9):
            dy, dx = k // 3, k % 3
            tap = pad_ref[pl.ds(dy, hh), pl.ds(dx, ww), :]   # (H, W, Cin)
            acc = acc + jnp.dot(tap.reshape(hh * ww, cc), w_ref[k],
                                preferred_element_type=jnp.float32)
        return acc.reshape(hh, ww, co)

    r = silu(group_norm(x, g1_ref, b1_ref))
    r = conv3x3(r, w1_ref)
    r = silu(group_norm(r, g2_ref, b2_ref))
    r = conv3x3(r, w2_ref)

    o_ref[0] = (x + r).astype(o_ref.dtype)


def res_block(x, gamma1, beta1, w1, gamma2, beta2, w2, *, eps=1e-6):
    """ResBlock forward, default config (no conv_shortcut), PyTorch layouts.

    x      : (N, C, H, W)
    gamma*/beta*: (C,) or (1, C, 1, 1)   GroupNorm affine
    w1, w2 : (C, C, 3, 3)                Conv2d weights (OIHW), bias=False
    """
    n, c, h, w = x.shape
    assert w1.shape == (c, c, 3, 3) and w2.shape == (c, c, 3, 3)
    # W a multiple of 8 keeps the (H, W, C) -> (H*W, C) collapse a free cast.

    # Channels-last so C rides the lane axis inside the kernel.
    x_nhwc = jnp.transpose(x, (0, 2, 3, 1))
    g1 = gamma1.reshape(1, 1, c).astype(jnp.float32)
    b1 = beta1.reshape(1, 1, c).astype(jnp.float32)
    g2 = gamma2.reshape(1, 1, c).astype(jnp.float32)
    b2 = beta2.reshape(1, 1, c).astype(jnp.float32)

    # OIHW -> taps (9, Cin, Cout): taps[ky*3+kx] = w[:, :, ky, kx].T
    def to_taps(wt):
        return jnp.transpose(wt, (2, 3, 1, 0)).reshape(9, c, c).astype(jnp.float32)

    kernel = functools.partial(_resblock_kernel, eps=eps)

    out_nhwc = pl.pallas_call(
        kernel,
        out_shape=jax.ShapeDtypeStruct((n, h, w, c), x.dtype),
        grid_spec=pltpu.PrefetchScalarGridSpec(
            num_scalar_prefetch=0,
            grid=(n,),                                      # one sample / step
            in_specs=[
                pl.BlockSpec((1, h, w, c), lambda i: (i, 0, 0, 0)),
                pl.BlockSpec((1, 1, c), lambda i: (0, 0, 0)),
                pl.BlockSpec((1, 1, c), lambda i: (0, 0, 0)),
                pl.BlockSpec((9, c, c), lambda i: (0, 0, 0)),
                pl.BlockSpec((1, 1, c), lambda i: (0, 0, 0)),
                pl.BlockSpec((1, 1, c), lambda i: (0, 0, 0)),
                pl.BlockSpec((9, c, c), lambda i: (0, 0, 0)),
            ],
            out_specs=pl.BlockSpec((1, h, w, c), lambda i: (i, 0, 0, 0)),
            scratch_shapes=[pltpu.VMEM((h + 2, w + 2, c), jnp.float32)],
        ),
        compiler_params=pltpu.CompilerParams(
            dimension_semantics=("parallel",),              # megacore sharding
            vmem_limit_bytes=48 * 1024 * 1024,              # safe on v5e/v6e/v7x
        ),
    )(x_nhwc, g1, b1, to_taps(w1), g2, b2, to_taps(w2))

    return jnp.transpose(out_nhwc, (0, 3, 1, 2))


# ----------------------------- pure-JAX reference -----------------------------

def _silu_ref(v):
    return v * (1.0 / (1.0 + jnp.exp(-v)))


def _group_norm_ref(x, g, b, eps=1e-6):
    n = x.shape[0]
    c = x.shape[1]
    xf = x.reshape(n, -1)
    mean = jnp.mean(xf, axis=1, keepdims=True)
    var = jnp.var(xf, axis=1, keepdims=True, ddof=1)        # unbiased, as torch
    xn = ((xf - mean) / jnp.sqrt(var + eps)).reshape(x.shape)
    return xn * g.reshape(1, c, 1, 1) + b.reshape(1, c, 1, 1)


def _conv3x3_ref(x, w):
    return jax.lax.conv_general_dilated(
        x, w, window_strides=(1, 1), padding='SAME',
        dimension_numbers=('NCHW', 'OIHW', 'NCHW'),
        precision=jax.lax.Precision.HIGHEST)


def _res_block_ref(x, g1, b1, w1, g2, b2, w2, eps=1e-6):
    r = _silu_ref(_group_norm_ref(x, g1, b1, eps))
    r = _conv3x3_ref(r, w1)
    r = _silu_ref(_group_norm_ref(r, g2, b2, eps))
    r = _conv3x3_ref(r, w2)
    return x + r


if __name__ == "__main__":
    key = jax.random.PRNGKey(0)
    N, C, H, W = 2, 8, 16, 16
    ks = jax.random.split(key, 7)

    x = jax.random.normal(ks[0], (N, C, H, W), jnp.float32)
    gamma1 = 1.0 + 0.1 * jax.random.normal(ks[1], (C,), jnp.float32)
    beta1 = 0.1 * jax.random.normal(ks[2], (C,), jnp.float32)
    w1 = 0.1 * jax.random.normal(ks[3], (C, C, 3, 3), jnp.float32)
    gamma2 = 1.0 + 0.1 * jax.random.normal(ks[4], (C,), jnp.float32)
    beta2 = 0.1 * jax.random.normal(ks[5], (C,), jnp.float32)
    w2 = 0.1 * jax.random.normal(ks[6], (C, C, 3, 3), jnp.float32)

    out = res_block(x, gamma1, beta1, w1, gamma2, beta2, w2)
    out = jax.block_until_ready(out)

    ref = _res_block_ref(x, gamma1, beta1, w1, gamma2, beta2, w2)
    assert out.shape == (N, C, H, W), out.shape
    max_err = float(jnp.max(jnp.abs(out - ref)))
    # Loose-ish tolerance covers MXU f32 pass-precision differences; structural
    # bugs produce errors orders of magnitude larger.
    assert jnp.allclose(out, ref, atol=1e-2, rtol=1e-2), f"mismatch, max err {max_err}"

    print("KERNEL_OK")
</pallas_src>

<mosaic_0001>
module attributes {stable_mosaic.version = 11 : i64} {
  func.func @_resblock_kernel(%arg0: i32, %arg1: memref<1x16x16x8xf32, #tpu.memory_space<vmem>>, %arg2: memref<1x1x8xf32, #tpu.memory_space<vmem>>, %arg3: memref<1x1x8xf32, #tpu.memory_space<vmem>>, %arg4: memref<9x8x8xf32, #tpu.memory_space<vmem>>, %arg5: memref<1x1x8xf32, #tpu.memory_space<vmem>>, %arg6: memref<1x1x8xf32, #tpu.memory_space<vmem>>, %arg7: memref<9x8x8xf32, #tpu.memory_space<vmem>>, %arg8: memref<1x16x16x8xf32, #tpu.memory_space<vmem>>, %arg9: memref<18x18x8xf32, #tpu.memory_space<vmem>>) attributes {dimension_semantics = [#tpu.dimension_semantics<parallel>], iteration_bounds = array<i64: 2>, scalar_prefetch = 0 : i64, scratch_operands = 1 : i64, tpu.core_type = #tpu.core_type<tc>, window_params = [{transform_indices = @transform_0, window_bounds = array<i64: 1, 16, 16, 8>}, {pipeline_mode = #tpu.pipeline_mode<synchronous>, transform_indices = @transform_1, window_bounds = array<i64: 1, 1, 8>}, {pipeline_mode = #tpu.pipeline_mode<synchronous>, transform_indices = @transform_2, window_bounds = array<i64: 1, 1, 8>}, {pipeline_mode = #tpu.pipeline_mode<synchronous>, transform_indices = @transform_3, window_bounds = array<i64: 9, 8, 8>}, {pipeline_mode = #tpu.pipeline_mode<synchronous>, transform_indices = @transform_4, window_bounds = array<i64: 1, 1, 8>}, {pipeline_mode = #tpu.pipeline_mode<synchronous>, transform_indices = @transform_5, window_bounds = array<i64: 1, 1, 8>}, {pipeline_mode = #tpu.pipeline_mode<synchronous>, transform_indices = @transform_6, window_bounds = array<i64: 9, 8, 8>}, {transform_indices = @transform_7, window_bounds = array<i64: 1, 16, 16, 8>}]} {
    %cst = arith.constant 0.000000e+00 : f32
    %0 = vector.broadcast %cst : f32 to vector<18x18x8xf32>
    %c0 = arith.constant 0 : index
    %c0_0 = arith.constant 0 : index
    %c0_1 = arith.constant 0 : index
    %1 = vector.load %arg9[%c0, %c0_0, %c0_1] : memref<18x18x8xf32, #tpu.memory_space<vmem>>, vector<18x18x8xf32>
    tpu.vector_store %arg9[%c0, %c0_0, %c0_1], %0 {strides = array<i32>} : memref<18x18x8xf32, #tpu.memory_space<vmem>>, vector<18x18x8xf32>,
    %c0_2 = arith.constant 0 : index
    %c0_3 = arith.constant 0 : index
    %c0_4 = arith.constant 0 : index
    %c0_5 = arith.constant 0 : index
    %2 = vector.load %arg1[%c0_2, %c0_3, %c0_4, %c0_5] : memref<1x16x16x8xf32, #tpu.memory_space<vmem>>, vector<1x16x16x8xf32>
    %3 = vector.shape_cast %2 : vector<1x16x16x8xf32> to vector<16x16x8xf32>
    %4 = vector.shape_cast %3 : vector<16x16x8xf32> to vector<1x16x16x8xf32>
    %cst_6 = arith.constant dense<0.000000e+00> : vector<1xf32>
    %5 = vector.multi_reduction <add>, %4, %cst_6 [1, 2, 3] : vector<1x16x16x8xf32> to vector<1xf32>
    %6 = vector.shape_cast %5 : vector<1xf32> to vector<1x1x1x1xf32>
    %7 = vector.extract %6[0, 0, 0, 0] : f32 from vector<1x1x1x1xf32>
    %cst_7 = arith.constant 4.8828125E-4 : f32
    %8 = arith.mulf %7, %cst_7 : f32
    %9 = vector.broadcast %8 : f32 to vector<16x16x8xf32>
    %10 = arith.subf %3, %9 : vector<16x16x8xf32>
    %11 = arith.mulf %10, %10 : vector<16x16x8xf32>
    %12 = vector.shape_cast %11 : vector<16x16x8xf32> to vector<1x16x16x8xf32>
    %cst_8 = arith.constant dense<0.000000e+00> : vector<1xf32>
    %13 = vector.multi_reduction <add>, %12, %cst_8 [1, 2, 3] : vector<1x16x16x8xf32> to vector<1xf32>
    %14 = vector.shape_cast %13 : vector<1xf32> to vector<1x1x1x1xf32>
    %15 = vector.extract %14[0, 0, 0, 0] : f32 from vector<1x1x1x1xf32>
    %cst_9 = arith.constant 4.88519785E-4 : f32
    %16 = arith.mulf %15, %cst_9 : f32
    %cst_10 = arith.constant 9.99999997E-7 : f32
    %17 = arith.addf %16, %cst_10 : f32
    %18 = math.rsqrt %17 : f32
    %19 = vector.broadcast %18 : f32 to vector<16x16x8xf32>
    %20 = arith.mulf %10, %19 : vector<16x16x8xf32>
    %c0_11 = arith.constant 0 : index
    %c0_12 = arith.constant 0 : index
    %c0_13 = arith.constant 0 : index
    %21 = vector.load %arg2[%c0_11, %c0_12, %c0_13] : memref<1x1x8xf32, #tpu.memory_space<vmem>>, vector<1x1x8xf32>
    %22 = vector.broadcast %21 : vector<1x1x8xf32> to vector<16x16x8xf32>
    %23 = arith.mulf %20, %22 : vector<16x16x8xf32>
    %c0_14 = arith.constant 0 : index
    %c0_15 = arith.constant 0 : index
    %c0_16 = arith.constant 0 : index
    %24 = vector.load %arg3[%c0_14, %c0_15, %c0_16] : memref<1x1x8xf32, #tpu.memory_space<vmem>>, vector<1x1x8xf32>
    %25 = vector.broadcast %24 : vector<1x1x8xf32> to vector<16x16x8xf32>
    %26 = arith.addf %23, %25 : vector<16x16x8xf32>
    %cst_17 = arith.constant 0.000000e+00 : f32
    %27 = vector.broadcast %cst_17 : f32 to vector<16x16x8xf32>
    %28 = arith.subf %27, %26 : vector<16x16x8xf32>
    %29 = math.exp %28 : vector<16x16x8xf32>
    %cst_18 = arith.constant 1.000000e+00 : f32
    %30 = vector.broadcast %cst_18 : f32 to vector<16x16x8xf32>
    %31 = arith.addf %30, %29 : vector<16x16x8xf32>
    %cst_19 = arith.constant 1.000000e+00 : f32
    %32 = vector.broadcast %cst_19 : f32 to vector<16x16x8xf32>
    %33 = arith.divf %32, %31 : vector<16x16x8xf32>
    %34 = arith.mulf %26, %33 : vector<16x16x8xf32>
    %c1 = arith.constant 1 : index
    %c1_20 = arith.constant 1 : index
    %c0_21 = arith.constant 0 : index
    %35 = vector.load %arg9[%c1, %c1_20, %c0_21] : memref<18x18x8xf32, #tpu.memory_space<vmem>>, vector<16x16x8xf32>
    tpu.vector_store %arg9[%c1, %c1_20, %c0_21], %34 {strides = array<i32>} : memref<18x18x8xf32, #tpu.memory_space<vmem>>, vector<16x16x8xf32>,
    %cst_22 = arith.constant 0.000000e+00 : f32
    %36 = vector.broadcast %cst_22 : f32 to vector<256x8xf32>
    %c0_23 = arith.constant 0 : index
    %c0_24 = arith.constant 0 : index
    %c0_25 = arith.constant 0 : index
    %37 = vector.load %arg9[%c0_23, %c0_24, %c0_25] : memref<18x18x8xf32, #tpu.memory_space<vmem>>, vector<16x16x8xf32>
    %38 = vector.shape_cast %37 : vector<16x16x8xf32> to vector<256x8xf32>
    %c0_26 = arith.constant 0 : index
    %c0_27 = arith.constant 0 : index
    %c0_28 = arith.constant 0 : index
    %39 = vector.load %arg4[%c0_26, %c0_27, %c0_28] : memref<9x8x8xf32, #tpu.memory_space<vmem>>, vector<1x8x8xf32>
    %40 = vector.shape_cast %39 : vector<1x8x8xf32> to vector<8x8xf32>
    %cst_29 = arith.constant dense<0.000000e+00> : vector<256x8xf32>
    %41 = tpu.matmul %38, %40, %cst_29 {dimension_numbers = #tpu.dot_dimension_numbers<[1], [0], [0], [1], [0, 0, 1, 1], [], []>} : vector<256x8xf32>, vector<8x8xf32>, vector<256x8xf32> -> vector<256x8xf32>
    %42 = arith.addf %36, %41 : vector<256x8xf32>
    %c0_30 = arith.constant 0 : index
    %c1_31 = arith.constant 1 : index
    %c0_32 = arith.constant 0 : index
    %43 = vector.load %arg9[%c0_30, %c1_31, %c0_32] : memref<18x18x8xf32, #tpu.memory_space<vmem>>, vector<16x16x8xf32>
    %44 = vector.shape_cast %43 : vector<16x16x8xf32> to vector<256x8xf32>
    %c1_33 = arith.constant 1 : index
    %c0_34 = arith.constant 0 : index
    %c0_35 = arith.constant 0 : index
    %45 = vector.load %arg4[%c1_33, %c0_34, %c0_35] : memref<9x8x8xf32, #tpu.memory_space<vmem>>, vector<1x8x8xf32>
    %46 = vector.shape_cast %45 : vector<1x8x8xf32> to vector<8x8xf32>
    %cst_36 = arith.constant dense<0.000000e+00> : vector<256x8xf32>
    %47 = tpu.matmul %44, %46, %cst_36 {dimension_numbers = #tpu.dot_dimension_numbers<[1], [0], [0], [1], [0, 0, 1, 1], [], []>} : vector<256x8xf32>, vector<8x8xf32>, vector<256x8xf32> -> vector<256x8xf32>
    %48 = arith.addf %42, %47 : vector<256x8xf32>
    %c0_37 = arith.constant 0 : index
    %c2 = arith.constant 2 : index
    %c0_38 = arith.constant 0 : index
    %49 = vector.load %arg9[%c0_37, %c2, %c0_38] : memref<18x18x8xf32, #tpu.memory_space<vmem>>, vector<16x16x8xf32>
    %50 = vector.shape_cast %49 : vector<16x16x8xf32> to vector<256x8xf32>
    %c2_39 = arith.constant 2 : index
    %c0_40 = arith.constant 0 : index
    %c0_41 = arith.constant 0 : index
    %51 = vector.load %arg4[%c2_39, %c0_40, %c0_41] : memref<9x8x8xf32, #tpu.memory_space<vmem>>, vector<1x8x8xf32>
    %52 = vector.shape_cast %51 : vector<1x8x8xf32> to vector<8x8xf32>
    %cst_42 = arith.constant dense<0.000000e+00> : vector<256x8xf32>
    %53 = tpu.matmul %50, %52, %cst_42 {dimension_numbers = #tpu.dot_dimension_numbers<[1], [0], [0], [1], [0, 0, 1, 1], [], []>} : vector<256x8xf32>, vector<8x8xf32>, vector<256x8xf32> -> vector<256x8xf32>
    %54 = arith.addf %48, %53 : vector<256x8xf32>
    %c1_43 = arith.constant 1 : index
    %c0_44 = arith.constant 0 : index
    %c0_45 = arith.constant 0 : index
    %55 = vector.load %arg9[%c1_43, %c0_44, %c0_45] : memref<18x18x8xf32, #tpu.memory_space<vmem>>, vector<16x16x8xf32>
    %56 = vector.shape_cast %55 : vector<16x16x8xf32> to vector<256x8xf32>
    %c3 = arith.constant 3 : index
    %c0_46 = arith.constant 0 : index
    %c0_47 = arith.constant 0 : index
    %57 = vector.load %arg4[%c3, %c0_46, %c0_47] : memref<9x8x8xf32, #tpu.memory_space<vmem>>, vector<1x8x8xf32>
    %58 = vector.shape_cast %57 : vector<1x8x8xf32> to vector<8x8xf32>
    %cst_48 = arith.constant dense<0.000000e+00> : vector<256x8xf32>
    %59 = tpu.matmul %56, %58, %cst_48 {dimension_numbers = #tpu.dot_dimension_numbers<[1], [0], [0], [1], [0, 0, 1, 1], [], []>} : vector<256x8xf32>, vector<8x8xf32>, vector<256x8xf32> -> vector<256x8xf32>
    %60 = arith.addf %54, %59 : vector<256x8xf32>
    %c1_49 = arith.constant 1 : index
    %c1_50 = arith.constant 1 : index
    %c0_51 = arith.constant 0 : index
    %61 = vector.load %arg9[%c1_49, %c1_50, %c0_51] : memref<18x18x8xf32, #tpu.memory_space<vmem>>, vector<16x16x8xf32>
    %62 = vector.shape_cast %61 : vector<16x16x8xf32> to vector<256x8xf32>
    %c4 = arith.constant 4 : index
    %c0_52 = arith.constant 0 : index
    %c0_53 = arith.constant 0 : index
    %63 = vector.load %arg4[%c4, %c0_52, %c0_53] : memref<9x8x8xf32, #tpu.memory_space<vmem>>, vector<1x8x8xf32>
    %64 = vector.shape_cast %63 : vector<1x8x8xf32> to vector<8x8xf32>
    %cst_54 = arith.constant dense<0.000000e+00> : vector<256x8xf32>
    %65 = tpu.matmul %62, %64, %cst_54 {dimension_numbers = #tpu.dot_dimension_numbers<[1], [0], [0], [1], [0, 0, 1, 1], [], []>} : vector<256x8xf32>, vector<8x8xf32>, vector<256x8xf32> -> vector<256x8xf32>
    %66 = arith.addf %60, %65 : vector<256x8xf32>
    %c1_55 = arith.constant 1 : index
    %c2_56 = arith.constant 2 : index
    %c0_57 = arith.constant 0 : index
    %67 = vector.load %arg9[%c1_55, %c2_56, %c0_57] : memref<18x18x8xf32, #tpu.memory_space<vmem>>, vector<16x16x8xf32>
    %68 = vector.shape_cast %67 : vector<16x16x8xf32> to vector<256x8xf32>
    %c5 = arith.constant 5 : index
    %c0_58 = arith.constant 0 : index
    %c0_59 = arith.constant 0 : index
    %69 = vector.load %arg4[%c5, %c0_58, %c0_59] : memref<9x8x8xf32, #tpu.memory_space<vmem>>, vector<1x8x8xf32>
    %70 = vector.shape_cast %69 : vector<1x8x8xf32> to vector<8x8xf32>
    %cst_60 = arith.constant dense<0.000000e+00> : vector<256x8xf32>
    %71 = tpu.matmul %68, %70, %cst_60 {dimension_numbers = #tpu.dot_dimension_numbers<[1], [0], [0], [1], [0, 0, 1, 1], [], []>} : vector<256x8xf32>, vector<8x8xf32>, vector<256x8xf32> -> vector<256x8xf32>
    %72 = arith.addf %66, %71 : vector<256x8xf32>
    %c2_61 = arith.constant 2 : index
    %c0_62 = arith.constant 0 : index
    %c0_63 = arith.constant 0 : index
    %73 = vector.load %arg9[%c2_61, %c0_62, %c0_63] : memref<18x18x8xf32, #tpu.memory_space<vmem>>, vector<16x16x8xf32>
    %74 = vector.shape_cast %73 : vector<16x16x8xf32> to vector<256x8xf32>
    %c6 = arith.constant 6 : index
    %c0_64 = arith.constant 0 : index
    %c0_65 = arith.constant 0 : index
    %75 = vector.load %arg4[%c6, %c0_64, %c0_65] : memref<9x8x8xf32, #tpu.memory_space<vmem>>, vector<1x8x8xf32>
    %76 = vector.shape_cast %75 : vector<1x8x8xf32> to vector<8x8xf32>
    %cst_66 = arith.constant dense<0.000000e+00> : vector<256x8xf32>
    %77 = tpu.matmul %74, %76, %cst_66 {dimension_numbers = #tpu.dot_dimension_numbers<[1], [0], [0], [1], [0, 0, 1, 1], [], []>} : vector<256x8xf32>, vector<8x8xf32>, vector<256x8xf32> -> vector<256x8xf32>
    %78 = arith.addf %72, %77 : vector<256x8xf32>
    %c2_67 = arith.constant 2 : index
    %c1_68 = arith.constant 1 : index
    %c0_69 = arith.constant 0 : index
    %79 = vector.load %arg9[%c2_67, %c1_68, %c0_69] : memref<18x18x8xf32, #tpu.memory_space<vmem>>, vector<16x16x8xf32>
    %80 = vector.shape_cast %79 : vector<16x16x8xf32> to vector<256x8xf32>
    %c7 = arith.constant 7 : index
    %c0_70 = arith.constant 0 : index
    %c0_71 = arith.constant 0 : index
    %81 = vector.load %arg4[%c7, %c0_70, %c0_71] : memref<9x8x8xf32, #tpu.memory_space<vmem>>, vector<1x8x8xf32>
    %82 = vector.shape_cast %81 : vector<1x8x8xf32> to vector<8x8xf32>
    %cst_72 = arith.constant dense<0.000000e+00> : vector<256x8xf32>
    %83 = tpu.matmul %80, %82, %cst_72 {dimension_numbers = #tpu.dot_dimension_numbers<[1], [0], [0], [1], [0, 0, 1, 1], [], []>} : vector<256x8xf32>, vector<8x8xf32>, vector<256x8xf32> -> vector<256x8xf32>
    %84 = arith.addf %78, %83 : vector<256x8xf32>
    %c2_73 = arith.constant 2 : index
    %c2_74 = arith.constant 2 : index
    %c0_75 = arith.constant 0 : index
    %85 = vector.load %arg9[%c2_73, %c2_74, %c0_75] : memref<18x18x8xf32, #tpu.memory_space<vmem>>, vector<16x16x8xf32>
    %86 = vector.shape_cast %85 : vector<16x16x8xf32> to vector<256x8xf32>
    %c8 = arith.constant 8 : index
    %c0_76 = arith.constant 0 : index
    %c0_77 = arith.constant 0 : index
    %87 = vector.load %arg4[%c8, %c0_76, %c0_77] : memref<9x8x8xf32, #tpu.memory_space<vmem>>, vector<1x8x8xf32>
    %88 = vector.shape_cast %87 : vector<1x8x8xf32> to vector<8x8xf32>
    %cst_78 = arith.constant dense<0.000000e+00> : vector<256x8xf32>
    %89 = tpu.matmul %86, %88, %cst_78 {dimension_numbers = #tpu.dot_dimension_numbers<[1], [0], [0], [1], [0, 0, 1, 1], [], []>} : vector<256x8xf32>, vector<8x8xf32>, vector<256x8xf32> -> vector<256x8xf32>
    %90 = arith.addf %84, %89 : vector<256x8xf32>
    %91 = vector.shape_cast %90 : vector<256x8xf32> to vector<16x16x8xf32>
    %92 = vector.shape_cast %91 : vector<16x16x8xf32> to vector<1x16x16x8xf32>
    %cst_79 = arith.constant dense<0.000000e+00> : vector<1xf32>
    %93 = vector.multi_reduction <add>, %92, %cst_79 [1, 2, 3] : vector<1x16x16x8xf32> to vector<1xf32>
    %94 = vector.shape_cast %93 : vector<1xf32> to vector<1x1x1x1xf32>
    %95 = vector.extract %94[0, 0, 0, 0] : f32 from vector<1x1x1x1xf32>
    %cst_80 = arith.constant 4.8828125E-4 : f32
    %96 = arith.mulf %95, %cst_80 : f32
    %97 = vector.broadcast %96 : f32 to vector<16x16x8xf32>
    %98 = arith.subf %91, %97 : vector<16x16x8xf32>
    %99 = arith.mulf %98, %98 : vector<16x16x8xf32>
    %100 = vector.shape_cast %99 : vector<16x16x8xf32> to vector<1x16x16x8xf32>
    %cst_81 = arith.constant dense<0.000000e+00> : vector<1xf32>
    %101 = vector.multi_reduction <add>, %100, %cst_81 [1, 2, 3] : vector<1x16x16x8xf32> to vector<1xf32>
    %102 = vector.shape_cast %101 : vector<1xf32> to vector<1x1x1x1xf32>
    %103 = vector.extract %102[0, 0, 0, 0] : f32 from vector<1x1x1x1xf32>
    %cst_82 = arith.constant 4.88519785E-4 : f32
    %104 = arith.mulf %103, %cst_82 : f32
    %cst_83 = arith.constant 9.99999997E-7 : f32
    %105 = arith.addf %104, %cst_83 : f32
    %106 = math.rsqrt %105 : f32
    %107 = vector.broadcast %106 : f32 to vector<16x16x8xf32>
    %108 = arith.mulf %98, %107 : vector<16x16x8xf32>
    %c0_84 = arith.constant 0 : index
    %c0_85 = arith.constant 0 : index
    %c0_86 = arith.constant 0 : index
    %109 = vector.load %arg5[%c0_84, %c0_85, %c0_86] : memref<1x1x8xf32, #tpu.memory_space<vmem>>, vector<1x1x8xf32>
    %110 = vector.broadcast %109 : vector<1x1x8xf32> to vector<16x16x8xf32>
    %111 = arith.mulf %108, %110 : vector<16x16x8xf32>
    %c0_87 = arith.constant 0 : index
    %c0_88 = arith.constant 0 : index
    %c0_89 = arith.constant 0 : index
    %112 = vector.load %arg6[%c0_87, %c0_88, %c0_89] : memref<1x1x8xf32, #tpu.memory_space<vmem>>, vector<1x1x8xf32>
    %113 = vector.broadcast %112 : vector<1x1x8xf32> to vector<16x16x8xf32>
    %114 = arith.addf %111, %113 : vector<16x16x8xf32>
    %cst_90 = arith.constant 0.000000e+00 : f32
    %115 = vector.broadcast %cst_90 : f32 to vector<16x16x8xf32>
    %116 = arith.subf %115, %114 : vector<16x16x8xf32>
    %117 = math.exp %116 : vector<16x16x8xf32>
    %cst_91 = arith.constant 1.000000e+00 : f32
    %118 = vector.broadcast %cst_91 : f32 to vector<16x16x8xf32>
    %119 = arith.addf %118, %117 : vector<16x16x8xf32>
    %cst_92 = arith.constant 1.000000e+00 : f32
    %120 = vector.broadcast %cst_92 : f32 to vector<16x16x8xf32>
    %121 = arith.divf %120, %119 : vector<16x16x8xf32>
    %122 = arith.mulf %114, %121 : vector<16x16x8xf32>
    %c1_93 = arith.constant 1 : index
    %c1_94 = arith.constant 1 : index
    %c0_95 = arith.constant 0 : index
    %123 = vector.load %arg9[%c1_93, %c1_94, %c0_95] : memref<18x18x8xf32, #tpu.memory_space<vmem>>, vector<16x16x8xf32>
    tpu.vector_store %arg9[%c1_93, %c1_94, %c0_95], %122 {strides = array<i32>} : memref<18x18x8xf32, #tpu.memory_space<vmem>>, vector<16x16x8xf32>,
    %cst_96 = arith.constant 0.000000e+00 : f32
    %124 = vector.broadcast %cst_96 : f32 to vector<256x8xf32>
    %c0_97 = arith.constant 0 : index
    %c0_98 = arith.constant 0 : index
    %c0_99 = arith.constant 0 : index
    %125 = vector.load %arg9[%c0_97, %c0_98, %c0_99] : memref<18x18x8xf32, #tpu.memory_space<vmem>>, vector<16x16x8xf32>
    %126 = vector.shape_cast %125 : vector<16x16x8xf32> to vector<256x8xf32>
    %c0_100 = arith.constant 0 : index
    %c0_101 = arith.constant 0 : index
    %c0_102 = arith.constant 0 : index
    %127 = vector.load %arg7[%c0_100, %c0_101, %c0_102] : memref<9x8x8xf32, #tpu.memory_space<vmem>>, vector<1x8x8xf32>
    %128 = vector.shape_cast %127 : vector<1x8x8xf32> to vector<8x8xf32>
    %cst_103 = arith.constant dense<0.000000e+00> : vector<256x8xf32>
    %129 = tpu.matmul %126, %128, %cst_103 {dimension_numbers = #tpu.dot_dimension_numbers<[1], [0], [0], [1], [0, 0, 1, 1], [], []>} : vector<256x8xf32>, vector<8x8xf32>, vector<256x8xf32> -> vector<256x8xf32>
    %130 = arith.addf %124, %129 : vector<256x8xf32>
    %c0_104 = arith.constant 0 : index
    %c1_105 = arith.constant 1 : index
    %c0_106 = arith.constant 0 : index
    %131 = vector.load %arg9[%c0_104, %c1_105, %c0_106] : memref<18x18x8xf32, #tpu.memory_space<vmem>>, vector<16x16x8xf32>
    %132 = vector.shape_cast %131 : vector<16x16x8xf32> to vector<256x8xf32>
    %c1_107 = arith.constant 1 : index
    %c0_108 = arith.constant 0 : index
    %c0_109 = arith.constant 0 : index
    %133 = vector.load %arg7[%c1_107, %c0_108, %c0_109] : memref<9x8x8xf32, #tpu.memory_space<vmem>>, vector<1x8x8xf32>
    %134 = vector.shape_cast %133 : vector<1x8x8xf32> to vector<8x8xf32>
    %cst_110 = arith.constant dense<0.000000e+00> : vector<256x8xf32>
    %135 = tpu.matmul %132, %134, %cst_110 {dimension_numbers = #tpu.dot_dimension_numbers<[1], [0], [0], [1], [0, 0, 1, 1], [], []>} : vector<256x8xf32>, vector<8x8xf32>, vector<256x8xf32> -> vector<256x8xf32>
    %136 = arith.addf %130, %135 : vector<256x8xf32>
    %c0_111 = arith.constant 0 : index
    %c2_112 = arith.constant 2 : index
    %c0_113 = arith.constant 0 : index
    %137 = vector.load %arg9[%c0_111, %c2_112, %c0_113] : memref<18x18x8xf32, #tpu.memory_space<vmem>>, vector<16x16x8xf32>
    %138 = vector.shape_cast %137 : vector<16x16x8xf32> to vector<256x8xf32>
    %c2_114 = arith.constant 2 : index
    %c0_115 = arith.constant 0 : index
    %c0_116 = arith.constant 0 : index
    %139 = vector.load %arg7[%c2_114, %c0_115, %c0_116] : memref<9x8x8xf32, #tpu.memory_space<vmem>>, vector<1x8x8xf32>
    %140 = vector.shape_cast %139 : vector<1x8x8xf32> to vector<8x8xf32>
    %cst_117 = arith.constant dense<0.000000e+00> : vector<256x8xf32>
    %141 = tpu.matmul %138, %140, %cst_117 {dimension_numbers = #tpu.dot_dimension_numbers<[1], [0], [0], [1], [0, 0, 1, 1], [], []>} : vector<256x8xf32>, vector<8x8xf32>, vector<256x8xf32> -> vector<256x8xf32>
    %142 = arith.addf %136, %141 : vector<256x8xf32>
    %c1_118 = arith.constant 1 : index
    %c0_119 = arith.constant 0 : index
    %c0_120 = arith.constant 0 : index
    %143 = vector.load %arg9[%c1_118, %c0_119, %c0_120] : memref<18x18x8xf32, #tpu.memory_space<vmem>>, vector<16x16x8xf32>
    %144 = vector.shape_cast %143 : vector<16x16x8xf32> to vector<256x8xf32>
    %c3_121 = arith.constant 3 : index
    %c0_122 = arith.constant 0 : index
    %c0_123 = arith.constant 0 : index
    %145 = vector.load %arg7[%c3_121, %c0_122, %c0_123] : memref<9x8x8xf32, #tpu.memory_space<vmem>>, vector<1x8x8xf32>
    %146 = vector.shape_cast %145 : vector<1x8x8xf32> to vector<8x8xf32>
    %cst_124 = arith.constant dense<0.000000e+00> : vector<256x8xf32>
    %147 = tpu.matmul %144, %146, %cst_124 {dimension_numbers = #tpu.dot_dimension_numbers<[1], [0], [0], [1], [0, 0, 1, 1], [], []>} : vector<256x8xf32>, vector<8x8xf32>, vector<256x8xf32> -> vector<256x8xf32>
    %148 = arith.addf %142, %147 : vector<256x8xf32>
    %c1_125 = arith.constant 1 : index
    %c1_126 = arith.constant 1 : index
    %c0_127 = arith.constant 0 : index
    %149 = vector.load %arg9[%c1_125, %c1_126, %c0_127] : memref<18x18x8xf32, #tpu.memory_space<vmem>>, vector<16x16x8xf32>
    %150 = vector.shape_cast %149 : vector<16x16x8xf32> to vector<256x8xf32>
    %c4_128 = arith.constant 4 : index
    %c0_129 = arith.constant 0 : index
    %c0_130 = arith.constant 0 : index
    %151 = vector.load %arg7[%c4_128, %c0_129, %c0_130] : memref<9x8x8xf32, #tpu.memory_space<vmem>>, vector<1x8x8xf32>
    %152 = vector.shape_cast %151 : vector<1x8x8xf32> to vector<8x8xf32>
    %cst_131 = arith.constant dense<0.000000e+00> : vector<256x8xf32>
    %153 = tpu.matmul %150, %152, %cst_131 {dimension_numbers = #tpu.dot_dimension_numbers<[1], [0], [0], [1], [0, 0, 1, 1], [], []>} : vector<256x8xf32>, vector<8x8xf32>, vector<256x8xf32> -> vector<256x8xf32>
    %154 = arith.addf %148, %153 : vector<256x8xf32>
    %c1_132 = arith.constant 1 : index
    %c2_133 = arith.constant 2 : index
    %c0_134 = arith.constant 0 : index
    %155 = vector.load %arg9[%c1_132, %c2_133, %c0_134] : memref<18x18x8xf32, #tpu.memory_space<vmem>>, vector<16x16x8xf32>
    %156 = vector.shape_cast %155 : vector<16x16x8xf32> to vector<256x8xf32>
    %c5_135 = arith.constant 5 : index
    %c0_136 = arith.constant 0 : index
    %c0_137 = arith.constant 0 : index
    %157 = vector.load %arg7[%c5_135, %c0_136, %c0_137] : memref<9x8x8xf32, #tpu.memory_space<vmem>>, vector<1x8x8xf32>
    %158 = vector.shape_cast %157 : vector<1x8x8xf32> to vector<8x8xf32>
    %cst_138 = arith.constant dense<0.000000e+00> : vector<256x8xf32>
    %159 = tpu.matmul %156, %158, %cst_138 {dimension_numbers = #tpu.dot_dimension_numbers<[1], [0], [0], [1], [0, 0, 1, 1], [], []>} : vector<256x8xf32>, vector<8x8xf32>, vector<256x8xf32> -> vector<256x8xf32>
    %160 = arith.addf %154, %159 : vector<256x8xf32>
    %c2_139 = arith.constant 2 : index
    %c0_140 = arith.constant 0 : index
    %c0_141 = arith.constant 0 : index
    %161 = vector.load %arg9[%c2_139, %c0_140, %c0_141] : memref<18x18x8xf32, #tpu.memory_space<vmem>>, vector<16x16x8xf32>
    %162 = vector.shape_cast %161 : vector<16x16x8xf32> to vector<256x8xf32>
    %c6_142 = arith.constant 6 : index
    %c0_143 = arith.constant 0 : index
    %c0_144 = arith.constant 0 : index
    %163 = vector.load %arg7[%c6_142, %c0_143, %c0_144] : memref<9x8x8xf32, #tpu.memory_space<vmem>>, vector<1x8x8xf32>
    %164 = vector.shape_cast %163 : vector<1x8x8xf32> to vector<8x8xf32>
    %cst_145 = arith.constant dense<0.000000e+00> : vector<256x8xf32>
    %165 = tpu.matmul %162, %164, %cst_145 {dimension_numbers = #tpu.dot_dimension_numbers<[1], [0], [0], [1], [0, 0, 1, 1], [], []>} : vector<256x8xf32>, vector<8x8xf32>, vector<256x8xf32> -> vector<256x8xf32>
    %166 = arith.addf %160, %165 : vector<256x8xf32>
    %c2_146 = arith.constant 2 : index
    %c1_147 = arith.constant 1 : index
    %c0_148 = arith.constant 0 : index
    %167 = vector.load %arg9[%c2_146, %c1_147, %c0_148] : memref<18x18x8xf32, #tpu.memory_space<vmem>>, vector<16x16x8xf32>
    %168 = vector.shape_cast %167 : vector<16x16x8xf32> to vector<256x8xf32>
    %c7_149 = arith.constant 7 : index
    %c0_150 = arith.constant 0 : index
    %c0_151 = arith.constant 0 : index
    %169 = vector.load %arg7[%c7_149, %c0_150, %c0_151] : memref<9x8x8xf32, #tpu.memory_space<vmem>>, vector<1x8x8xf32>
    %170 = vector.shape_cast %169 : vector<1x8x8xf32> to vector<8x8xf32>
    %cst_152 = arith.constant dense<0.000000e+00> : vector<256x8xf32>
    %171 = tpu.matmul %168, %170, %cst_152 {dimension_numbers = #tpu.dot_dimension_numbers<[1], [0], [0], [1], [0, 0, 1, 1], [], []>} : vector<256x8xf32>, vector<8x8xf32>, vector<256x8xf32> -> vector<256x8xf32>
    %172 = arith.addf %166, %171 : vector<256x8xf32>
    %c2_153 = arith.constant 2 : index
    %c2_154 = arith.constant 2 : index
    %c0_155 = arith.constant 0 : index
    %173 = vector.load %arg9[%c2_153, %c2_154, %c0_155] : memref<18x18x8xf32, #tpu.memory_space<vmem>>, vector<16x16x8xf32>
    %174 = vector.shape_cast %173 : vector<16x16x8xf32> to vector<256x8xf32>
    %c8_156 = arith.constant 8 : index
    %c0_157 = arith.constant 0 : index
    %c0_158 = arith.constant 0 : index
    %175 = vector.load %arg7[%c8_156, %c0_157, %c0_158] : memref<9x8x8xf32, #tpu.memory_space<vmem>>, vector<1x8x8xf32>
    %176 = vector.shape_cast %175 : vector<1x8x8xf32> to vector<8x8xf32>
    %cst_159 = arith.constant dense<0.000000e+00> : vector<256x8xf32>
    %177 = tpu.matmul %174, %176, %cst_159 {dimension_numbers = #tpu.dot_dimension_numbers<[1], [0], [0], [1], [0, 0, 1, 1], [], []>} : vector<256x8xf32>, vector<8x8xf32>, vector<256x8xf32> -> vector<256x8xf32>
    %178 = arith.addf %172, %177 : vector<256x8xf32>
    %179 = vector.shape_cast %178 : vector<256x8xf32> to vector<16x16x8xf32>
    %180 = arith.addf %3, %179 : vector<16x16x8xf32>
    %c0_160 = arith.constant 0 : index
    %c0_161 = arith.constant 0 : index
    %c0_162 = arith.constant 0 : index
    %c0_163 = arith.constant 0 : index
    %181 = vector.load %arg8[%c0_160, %c0_161, %c0_162, %c0_163] : memref<1x16x16x8xf32, #tpu.memory_space<vmem>>, vector<1x16x16x8xf32>
    %182 = vector.shape_cast %181 : vector<1x16x16x8xf32> to vector<16x16x8xf32>
    %183 = vector.shape_cast %180 : vector<16x16x8xf32> to vector<1x16x16x8xf32>
    tpu.vector_store %arg8[%c0_160, %c0_161, %c0_162, %c0_163], %183 {strides = array<i32>} : memref<1x16x16x8xf32, #tpu.memory_space<vmem>>, vector<1x16x16x8xf32>,
    return
  }
  func.func @transform_0(%arg0: i32) -> (i32, i32, i32, i32) {
    %c0_i32 = arith.constant 0 : i32
    %c0_i32_0 = arith.constant 0 : i32
    %c0_i32_1 = arith.constant 0 : i32
    %c0_i32_2 = arith.constant 0 : i32
    return %arg0, %c0_i32, %c0_i32_0, %c0_i32_1 : i32, i32, i32, i32
  }
  func.func @transform_1(%arg0: i32) -> (i32, i32, i32) {
    %c0_i32 = arith.constant 0 : i32
    %c0_i32_0 = arith.constant 0 : i32
    %c0_i32_1 = arith.constant 0 : i32
    %c0_i32_2 = arith.constant 0 : i32
    return %c0_i32, %c0_i32_0, %c0_i32_1 : i32, i32, i32
  }
  func.func @transform_2(%arg0: i32) -> (i32, i32, i32) {
    %c0_i32 = arith.constant 0 : i32
    %c0_i32_0 = arith.constant 0 : i32
    %c0_i32_1 = arith.constant 0 : i32
    %c0_i32_2 = arith.constant 0 : i32
    return %c0_i32, %c0_i32_0, %c0_i32_1 : i32, i32, i32
  }
  func.func @transform_3(%arg0: i32) -> (i32, i32, i32) {
    %c0_i32 = arith.constant 0 : i32
    %c0_i32_0 = arith.constant 0 : i32
    %c0_i32_1 = arith.constant 0 : i32
    %c0_i32_2 = arith.constant 0 : i32
    return %c0_i32, %c0_i32_0, %c0_i32_1 : i32, i32, i32
  }
  func.func @transform_4(%arg0: i32) -> (i32, i32, i32) {
    %c0_i32 = arith.constant 0 : i32
    %c0_i32_0 = arith.constant 0 : i32
    %c0_i32_1 = arith.constant 0 : i32
    %c0_i32_2 = arith.constant 0 : i32
    return %c0_i32, %c0_i32_0, %c0_i32_1 : i32, i32, i32
  }
  func.func @transform_5(%arg0: i32) -> (i32, i32, i32) {
    %c0_i32 = arith.constant 0 : i32
    %c0_i32_0 = arith.constant 0 : i32
    %c0_i32_1 = arith.constant 0 : i32
    %c0_i32_2 = arith.constant 0 : i32
    return %c0_i32, %c0_i32_0, %c0_i32_1 : i32, i32, i32
  }
  func.func @transform_6(%arg0: i32) -> (i32, i32, i32) {
    %c0_i32 = arith.constant 0 : i32
    %c0_i32_0 = arith.constant 0 : i32
    %c0_i32_1 = arith.constant 0 : i32
    %c0_i32_2 = arith.constant 0 : i32
    return %c0_i32, %c0_i32_0, %c0_i32_1 : i32, i32, i32
  }
  func.func @transform_7(%arg0: i32) -> (i32, i32, i32, i32) {
    %c0_i32 = arith.constant 0 : i32
    %c0_i32_0 = arith.constant 0 : i32
    %c0_i32_1 = arith.constant 0 : i32
    %c0_i32_2 = arith.constant 0 : i32
    return %arg0, %c0_i32, %c0_i32_0, %c0_i32_1 : i32, i32, i32, i32
  }
}

</mosaic_0001>

<llo_original>
// kernel: tpu_custom_call.1
$region0: #{tpu_custom_call.1}
  #allocation0 [shape = 'u32[]', space=smem, size = 0x4, offset = 0x4, fixed_abs, tag = 'smem constant byte address 0x4 - core index']
  #allocation1 [shape = 'u32[144,128]{1,0:T(1,128)}', space=vmem, size = 0x12000, scoped, tag = 'internal scratch']
  #allocation2 [shape = 'f32[18,18,8]{2,1,0:T(8,128)}', space=vmem, size = 0x36000, scoped, tag = 'scratch operand']
  %s0 = inlined_call_operand.vmem [shape: f32[2,16,16,8], index: 0, kind: input, shape index: {}]
  %s1 = inlined_call_operand.vmem [shape: f32[1,1,8], index: 1, kind: input, shape index: {}]
  %s2 = inlined_call_operand.vmem [shape: f32[1,1,8], index: 2, kind: input, shape index: {}]
  %s3 = inlined_call_operand.vmem [shape: f32[9,8,8], index: 3, kind: input, shape index: {}]
  %s4 = inlined_call_operand.vmem [shape: f32[1,1,8], index: 4, kind: input, shape index: {}]
  %s5 = inlined_call_operand.vmem [shape: f32[1,1,8], index: 5, kind: input, shape index: {}]
  %s6 = inlined_call_operand.vmem [shape: f32[9,8,8], index: 6, kind: input, shape index: {}]
  %s7 = inlined_call_operand.vmem [shape: f32[2,16,16,8], index: 7, kind: output, shape index: {}]
  %s8 = sld [smem:[#allocation0]]
  $region61: #{tpu_custom_call.1} parent=0
    _
  %s10 = ssub.s32 1, %s8
  %s11 = scalar_select 0, %s10, %s8
  loop: start=0, step=1, limit=4
  $region2: #{tpu_custom_call.1} parent=0 // loop_pre_header
    _
  $region3: #{tpu_custom_call.1} parent=0 // loop_header
    %s13 = sphi 0, %s17
    %p14 = scmp.ge.s32.totalorder %s13, 4
    %s23 = sphi 0, %s25
    %s26 = sphi 0, %s23
    %s27 = sphi 0, %s26
    %s43 = sphi 0, %s27
    %s47 = sphi 0, %s47
    %s49 = sphi 0, %s47
    %s50 = sphi 0, %s49
    %s64 = sphi 0, %s50
    %s68 = sphi 0, %s68
    %s70 = sphi 0, %s68
    %s71 = sphi 0, %s70
    %s85 = sphi 0, %s71
    %s89 = sphi 0, %s89
    %s91 = sphi 0, %s89
    %s92 = sphi 0, %s91
    %s106 = sphi 0, %s92
    %s110 = sphi 0, %s110
    %s112 = sphi 0, %s110
    %s113 = sphi 0, %s112
    %s127 = sphi 0, %s113
    %s131 = sphi 0, %s131
    %s133 = sphi 0, %s131
    %s134 = sphi 0, %s133
    %s148 = sphi 0, %s134
    %s152 = sphi 0, %s152
    %s154 = sphi 0, %s152
    %s155 = sphi 0, %s154
    %s169 = sphi 0, %s155
    %s175 = sphi 0, %s177
    %s178 = sphi 0, %s175
    %s179 = sphi 0, %s178
    %s195 = sphi 0, %s179
  $region4: #{tpu_custom_call.1} parent=0 // loop_header_branch
    %16 = sbr.rel (%p14) target = $region8
  $region5: #{tpu_custom_call.1} parent=0 // loop_body
    %s18 = ssub.s32 %s13, 1
    %s19 = ssub.s32 %s13, 2
    %s20 = sadd.s32 %s13, 1
    %s21 = ssub.s32 %s13, %s20
    %p22 = scmp.eq.s32.totalorder %s21, 0
    %s24 = sadd.s32 %s23, 1
    %s25 = scalar_select %p22, %s23, %s24
    %p28 = pneg %p22
    %p29 = scmp.eq.s32.totalorder %s13, 1
    %p30 = por %p28, %p29
    %p31 = scmp.ne.s32.totalorder %s23, %s26
    %p32 = scmp.eq.s32.totalorder %s13, 0
    %p33 = por %p31, %p32
    %p34 = scmp.ne.s32.totalorder %s23, %s26
    %p35 = scmp.eq.s32.totalorder %s18, 1
    %p36 = por %p34, %p35
    %p37 = scmp.ne.s32.totalorder %s26, %s27
    %p38 = scmp.eq.s32.totalorder %s18, 0
    %p39 = por %p37, %p38
    %p40 = scmp.ne.s32.totalorder %s26, %s27
    %p41 = scmp.eq.s32.totalorder %s19, 1
    %p42 = por %p40, %p41
    %p44 = scmp.ne.s32.totalorder %s27, %s43
    %p45 = scmp.eq.s32.totalorder %s19, 0
    %p46 = por %p44, %p45
    %s48 = sadd.s32 %s47, 1
    %p51 = scmp.eq.s32.totalorder %s13, 1
    %p52 = scmp.ne.s32.totalorder %s47, %s49
    %p53 = scmp.eq.s32.totalorder %s13, 0
    %p54 = por %p52, %p53
    %p55 = scmp.ne.s32.totalorder %s47, %s49
    %p56 = scmp.eq.s32.totalorder %s18, 1
    %p57 = por %p55, %p56
    %p58 = scmp.ne.s32.totalorder %s49, %s50
    %p59 = scmp.eq.s32.totalorder %s18, 0
    %p60 = por %p58, %p59
    %p61 = scmp.ne.s32.totalorder %s49, %s50
    %p62 = scmp.eq.s32.totalorder %s19, 1
    %p63 = por %p61, %p62
    %p65 = scmp.ne.s32.totalorder %s50, %s64
    %p66 = scmp.eq.s32.totalorder %s19, 0
    %p67 = por %p65, %p66
    %s69 = sadd.s32 %s68, 1
    %p72 = scmp.eq.s32.totalorder %s13, 1
    %p73 = scmp.ne.s32.totalorder %s68, %s70
    %p74 = scmp.eq.s32.totalorder %s13, 0
    %p75 = por %p73, %p74
    %p76 = scmp.ne.s32.totalorder %s68, %s70
    %p77 = scmp.eq.s32.totalorder %s18, 1
    %p78 = por %p76, %p77
    %p79 = scmp.ne.s32.totalorder %s70, %s71
    %p80 = scmp.eq.s32.totalorder %s18, 0
    %p81 = por %p79, %p80
    %p82 = scmp.ne.s32.totalorder %s70, %s71
    %p83 = scmp.eq.s32.totalorder %s19, 1
    %p84 = por %p82, %p83
    %p86 = scmp.ne.s32.totalorder %s71, %s85
    %p87 = scmp.eq.s32.totalorder %s19, 0
    %p88 = por %p86, %p87
    %s90 = sadd.s32 %s89, 1
    %p93 = scmp.eq.s32.totalorder %s13, 1
    %p94 = scmp.ne.s32.totalorder %s89, %s91
    %p95 = scmp.eq.s32.totalorder %s13, 0
    %p96 = por %p94, %p95
    %p97 = scmp.ne.s32.totalorder %s89, %s91
    %p98 = scmp.eq.s32.totalorder %s18, 1
    %p99 = por %p97, %p98
    %p100 = scmp.ne.s32.totalorder %s91, %s92
    %p101 = scmp.eq.s32.totalorder %s18, 0
    %p102 = por %p100, %p101
    %p103 = scmp.ne.s32.totalorder %s91, %s92
    %p104 = scmp.eq.s32.totalorder %s19, 1
    %p105 = por %p103, %p104
    %p107 = scmp.ne.s32.totalorder %s92, %s106
    %p108 = scmp.eq.s32.totalorder %s19, 0
    %p109 = por %p107, %p108
    %s111 = sadd.s32 %s110, 1
    %p114 = scmp.eq.s32.totalorder %s13, 1
    %p115 = scmp.ne.s32.totalorder %s110, %s112
    %p116 = scmp.eq.s32.totalorder %s13, 0
    %p117 = por %p115, %p116
    %p118 = scmp.ne.s32.totalorder %s110, %s112
    %p119 = scmp.eq.s32.totalorder %s18, 1
    %p120 = por %p118, %p119
    %p121 = scmp.ne.s32.totalorder %s112, %s113
    %p122 = scmp.eq.s32.totalorder %s18, 0
    %p123 = por %p121, %p122
    %p124 = scmp.ne.s32.totalorder %s112, %s113
    %p125 = scmp.eq.s32.totalorder %s19, 1
    %p126 = por %p124, %p125
    %p128 = scmp.ne.s32.totalorder %s113, %s127
    %p129 = scmp.eq.s32.totalorder %s19, 0
    %p130 = por %p128, %p129
    %s132 = sadd.s32 %s131, 1
    %p135 = scmp.eq.s32.totalorder %s13, 1
    %p136 = scmp.ne.s32.totalorder %s131, %s133
    %p137 = scmp.eq.s32.totalorder %s13, 0
    %p138 = por %p136, %p137
    %p139 = scmp.ne.s32.totalorder %s131, %s133
    %p140 = scmp.eq.s32.totalorder %s18, 1
    %p141 = por %p139, %p140
    %p142 = scmp.ne.s32.totalorder %s133, %s134
    %p143 = scmp.eq.s32.totalorder %s18, 0
    %p144 = por %p142, %p143
    %p145 = scmp.ne.s32.totalorder %s133, %s134
    %p146 = scmp.eq.s32.totalorder %s19, 1
    %p147 = por %p145, %p146
    %p149 = scmp.ne.s32.totalorder %s134, %s148
    %p150 = scmp.eq.s32.totalorder %s19, 0
    %p151 = por %p149, %p150
    %s153 = sadd.s32 %s152, 1
    %p156 = scmp.eq.s32.totalorder %s13, 1
    %p157 = scmp.ne.s32.totalorder %s152, %s154
    %p158 = scmp.eq.s32.totalorder %s13, 0
    %p159 = por %p157, %p158
    %p160 = scmp.ne.s32.totalorder %s152, %s154
    %p161 = scmp.eq.s32.totalorder %s18, 1
    %p162 = por %p160, %p161
    %p163 = scmp.ne.s32.totalorder %s154, %s155
    %p164 = scmp.eq.s32.totalorder %s18, 0
    %p165 = por %p163, %p164
    %p166 = scmp.ne.s32.totalorder %s154, %s155
    %p167 = scmp.eq.s32.totalorder %s19, 1
    %p168 = por %p166, %p167
    %p170 = scmp.ne.s32.totalorder %s155, %s169
    %p171 = scmp.eq.s32.totalorder %s19, 0
    %p172 = por %p170, %p171
    %s173 = ssub.s32 %s13, %s20
    %p174 = scmp.eq.s32.totalorder %s173, 0
    %s176 = sadd.s32 %s175, 1
    %s177 = scalar_select %p174, %s175, %s176
    %p180 = pneg %p174
    %p181 = scmp.eq.s32.totalorder %s13, 1
    %p182 = por %p180, %p181
    %p183 = scmp.ne.s32.totalorder %s175, %s178
    %p184 = scmp.eq.s32.totalorder %s13, 0
    %p185 = por %p183, %p184
    %p186 = scmp.ne.s32.totalorder %s175, %s178
    %p187 = scmp.eq.s32.totalorder %s18, 1
    %p188 = por %p186, %p187
    %p189 = scmp.ne.s32.totalorder %s178, %s179
    %p190 = scmp.eq.s32.totalorder %s18, 0
    %p191 = por %p189, %p190
    %p192 = scmp.ne.s32.totalorder %s178, %s179
    %p193 = scmp.eq.s32.totalorder %s19, 1
    %p194 = por %p192, %p193
    %p196 = scmp.ne.s32.totalorder %s179, %s195
    %p197 = scmp.eq.s32.totalorder %s19, 0
    %p198 = por %p196, %p197
    %p199 = scmp.le.s32.totalorder 1, %s13
    %p200 = scmp.lt.s32.totalorder %s13, 3
    %p201 = pnand %p199, %p200
    %p202 = pneg %p201
    // Predicated region
    $region9: #{tpu_custom_call.1} parent=5 // pred_check
      _
    $region10: #{tpu_custom_call.1} parent=5 // pred_check_branch
      %204 = sbr.rel (%p201) target = $region12
    $region11: #{tpu_custom_call.1} parent=5 // pred_region
      %s205 = ssub.s32 %s13, 1
      // Predicated region
      $region13: #{tpu_custom_call.1} parent=11 // pred_check
        %p206 = pneg %p60
      $region14: #{tpu_custom_call.1} parent=11 // pred_check_branch
        %208 = sbr.rel (%p206) target = $region16
      $region15: #{tpu_custom_call.1} parent=11 // pred_region
        _
      $region16: #{tpu_custom_call.1} parent=11 // pred_fallthru
        _
      // Predicated region
      $region17: #{tpu_custom_call.1} parent=11 // pred_check
        %p209 = pneg %p81
      $region18: #{tpu_custom_call.1} parent=11 // pred_check_branch
        %211 = sbr.rel (%p209) target = $region20
      $region19: #{tpu_custom_call.1} parent=11 // pred_region
        _
      $region20: #{tpu_custom_call.1} parent=11 // pred_fallthru
        _
      // Predicated region
      $region21: #{tpu_custom_call.1} parent=11 // pred_check
        %p212 = pneg %p102
      $region22: #{tpu_custom_call.1} parent=11 // pred_check_branch
        %214 = sbr.rel (%p212) target = $region24
      $region23: #{tpu_custom_call.1} parent=11 // pred_region
        _
      $region24: #{tpu_custom_call.1} parent=11 // pred_fallthru
        _
      // Predicated region
      $region25: #{tpu_custom_call.1} parent=11 // pred_check
        %p215 = pneg %p123
      $region26: #{tpu_custom_call.1} parent=11 // pred_check_branch
        %217 = sbr.rel (%p215) target = $region28
      $region27: #{tpu_custom_call.1} parent=11 // pred_region
        _
      $region28: #{tpu_custom_call.1} parent=11 // pred_fallthru
        _
      // Predicated region
      $region29: #{tpu_custom_call.1} parent=11 // pred_check
        %p218 = pneg %p144
      $region30: #{tpu_custom_call.1} parent=11 // pred_check_branch
        %220 = sbr.rel (%p218) target = $region32
      $region31: #{tpu_custom_call.1} parent=11 // pred_region
        _
      $region32: #{tpu_custom_call.1} parent=11 // pred_fallthru
        _
      // Predicated region
      $region33: #{tpu_custom_call.1} parent=11 // pred_check
        %p221 = pneg %p165
      $region34: #{tpu_custom_call.1} parent=11 // pred_check_branch
        %223 = sbr.rel (%p221) target = $region36
      $region35: #{tpu_custom_call.1} parent=11 // pred_region
        _
      $region36: #{tpu_custom_call.1} parent=11 // pred_fallthru
        _
    $region12: #{tpu_custom_call.1} parent=5 // pred_fallthru
      _
    %p224 = scmp.lt.s32.totalorder %s13, 2
    // Predicated region
    $region37: #{tpu_custom_call.1} parent=5 // pred_check
      %p225 = pneg %p224
    $region38: #{tpu_custom_call.1} parent=5 // pred_check_branch
      %227 = sbr.rel (%p225) target = $region40
    $region39: #{tpu_custom_call.1} parent=5 // pred_region
      // Predicated region
      $region41: #{tpu_custom_call.1} parent=39 // pred_check
        %p228 = pneg %p33
      $region42: #{tpu_custom_call.1} parent=39 // pred_check_branch
        %230 = sbr.rel (%p228) target = $region44
      $region43: #{tpu_custom_call.1} parent=39 // pred_region
        %p231 = scmp.lt.s32.totalorder %s13, 1
        %s232 = scalar_select %p231, %s13, 1
        %s233 = smul.addr %s232, 32
        %s234 = smul.addr %s233, 8
        %s235 = scalar_lea.vmem %s0, %s234
      $region44: #{tpu_custom_call.1} parent=39 // pred_fallthru
        _
    $region40: #{tpu_custom_call.1} parent=5 // pred_fallthru
      _
    %p236 = scmp.le.s32.totalorder 1, %s13
    %p237 = scmp.lt.s32.totalorder %s13, 3
    %p238 = pnand %p236, %p237
    %p239 = pneg %p238
    // Predicated region
    $region45: #{tpu_custom_call.1} parent=5 // pred_check
      _
    $region46: #{tpu_custom_call.1} parent=5 // pred_check_branch
      %241 = sbr.rel (%p238) target = $region48
    $region47: #{tpu_custom_call.1} parent=5 // pred_region
      %s242 = ssub.s32 %s13, 1
      %p243 = scmp.lt.s32.totalorder %s18, 1
      %s244 = scalar_select %p243, %s18, 1
      %s245 = smul.addr %s244, 32
      %s246 = smul.addr %s245, 8
      %s247 = scalar_lea.vmem %s0, %s246
      %p248 = pneg %p39
      %p249 = pneg %p36
      %p250 = pneg %p60
      %p251 = pneg %p57
      %p252 = pneg %p81
      %p253 = pneg %p78
      %p254 = pneg %p102
      %p255 = pneg %p99
      %p256 = pneg %p123
      %p257 = pneg %p120
      %p258 = pneg %p144
      %p259 = pneg %p141
      %p260 = pneg %p165
      %p261 = pneg %p162
      %p262 = pneg %p191
      %p263 = pneg %p188
      %p264 = scmp.lt.s32.totalorder %s18, 1
      %s265 = scalar_select %p264, %s18, 1
      %s266 = smul.addr %s265, 32
      %s267 = smul.addr %s266, 8
      %s268 = scalar_lea.vmem %s7, %s267
      %p269 = scmp.lt.s32.totalorder %s18, 1
      %s270 = scalar_select %p269, %s18, 1
      %s271 = smul.addr %s270, 32
      %s272 = smul.addr %s271, 8
      %s273 = scalar_lea.vmem %s0, %s272
      %p274 = scmp.lt.s32.totalorder %s18, 1
      %s275 = scalar_select %p274, %s18, 1
      %s276 = smul.addr %s275, 32
      %s277 = smul.addr %s276, 8
      %s278 = scalar_lea.vmem %s7, %s277
      %vm279 = vcmask 64512
      %280 = vst.msk [vmem:[#allocation2] sm:$0xff] %vm279, 0.0
      %281 = vst.msk [vmem:[#allocation2 + $0x8] sm:$0xff] %vm279, 0.0
      %vm282 = vcmask 58368
      %283 = vst.msk [vmem:[#allocation2 + $0x10] sm:$0x3] %vm282, 0.0
      %284 = vst.msk [vmem:[#allocation2 + $0x18] sm:$0xff] %vm279, 0.0
      %285 = vst.msk [vmem:[#allocation2 + $0x20] sm:$0xff] %vm279, 0.0
      %286 = vst.msk [vmem:[#allocation2 + $0x28] sm:$0x3] %vm282, 0.0
      %287 = vst.msk [vmem:[#allocation2 + $0x30] sm:$0xff] %vm279, 0.0
      %288 = vst.msk [vmem:[#allocation2 + $0x38] sm:$0xff] %vm279, 0.0
      %289 = vst.msk [vmem:[#allocation2 + $0x40] sm:$0x3] %vm282, 0.0
      %290 = vst.msk [vmem:[#allocation2 + $0x48] sm:$0xff] %vm279, 0.0
      %291 = vst.msk [vmem:[#allocation2 + $0x50] sm:$0xff] %vm279, 0.0
      %292 = vst.msk [vmem:[#allocation2 + $0x58] sm:$0x3] %vm282, 0.0
      %293 = vst.msk [vmem:[#allocation2 + $0x60] sm:$0xff] %vm279, 0.0
      %294 = vst.msk [vmem:[#allocation2 + $0x68] sm:$0xff] %vm279, 0.0
      %295 = vst.msk [vmem:[#allocation2 + $0x70] sm:$0x3] %vm282, 0.0
      %296 = vst.msk [vmem:[#allocation2 + $0x78] sm:$0xff] %vm279, 0.0
      %297 = vst.msk [vmem:[#allocation2 + $0x80] sm:$0xff] %vm279, 0.0
      %298 = vst.msk [vmem:[#allocation2 + $0x88] sm:$0x3] %vm282, 0.0
      %299 = vst.msk [vmem:[#allocation2 + $0x90] sm:$0xff] %vm279, 0.0
      %300 = vst.msk [vmem:[#allocation2 + $0x98] sm:$0xff] %vm279, 0.0
      %301 = vst.msk [vmem:[#allocation2 + $0xa0] sm:$0x3] %vm282, 0.0
      %302 = vst.msk [vmem:[#allocation2 + $0xa8] sm:$0xff] %vm279, 0.0
      %303 = vst.msk [vmem:[#allocation2 + $0xb0] sm:$0xff] %vm279, 0.0
      %304 = vst.msk [vmem:[#allocation2 + $0xb8] sm:$0x3] %vm282, 0.0
      %305 = vst.msk [vmem:[#allocation2 + $0xc0] sm:$0xff] %vm279, 0.0
      %306 = vst.msk [vmem:[#allocation2 + $0xc8] sm:$0xff] %vm279, 0.0
      %307 = vst.msk [vmem:[#allocation2 + $0xd0] sm:$0x3] %vm282, 0.0
      %308 = vst.msk [vmem:[#allocation2 + $0xd8] sm:$0xff] %vm279, 0.0
      %309 = vst.msk [vmem:[#allocation2 + $0xe0] sm:$0xff] %vm279, 0.0
      %310 = vst.msk [vmem:[#allocation2 + $0xe8] sm:$0x3] %vm282, 0.0
      %311 = vst.msk [vmem:[#allocation2 + $0xf0] sm:$0xff] %vm279, 0.0
      %312 = vst.msk [vmem:[#allocation2 + $0xf8] sm:$0xff] %vm279, 0.0
      %313 = vst.msk [vmem:[#allocation2 + $0x100] sm:$0x3] %vm282, 0.0
      %314 = vst.msk [vmem:[#allocation2 + $0x108] sm:$0xff] %vm279, 0.0
      %315 = vst.msk [vmem:[#allocation2 + $0x110] sm:$0xff] %vm279, 0.0
      %316 = vst.msk [vmem:[#allocation2 + $0x118] sm:$0x3] %vm282, 0.0
      %317 = vst.msk [vmem:[#allocation2 + $0x120] sm:$0xff] %vm279, 0.0
      %318 = vst.msk [vmem:[#allocation2 + $0x128] sm:$0xff] %vm279, 0.0
      %319 = vst.msk [vmem:[#allocation2 + $0x130] sm:$0x3] %vm282, 0.0
      %320 = vst.msk [vmem:[#allocation2 + $0x138] sm:$0xff] %vm279, 0.0
      %321 = vst.msk [vmem:[#allocation2 + $0x140] sm:$0xff] %vm279, 0.0
      %322 = vst.msk [vmem:[#allocation2 + $0x148] sm:$0x3] %vm282, 0.0
      %323 = vst.msk [vmem:[#allocation2 + $0x150] sm:$0xff] %vm279, 0.0
      %324 = vst.msk [vmem:[#allocation2 + $0x158] sm:$0xff] %vm279, 0.0
      %325 = vst.msk [vmem:[#allocation2 + $0x160] sm:$0x3] %vm282, 0.0
      %326 = vst.msk [vmem:[#allocation2 + $0x168] sm:$0xff] %vm279, 0.0
      %327 = vst.msk [vmem:[#allocation2 + $0x170] sm:$0xff] %vm279, 0.0
      %328 = vst.msk [vmem:[#allocation2 + $0x178] sm:$0x3] %vm282, 0.0
      %329 = vst.msk [vmem:[#allocation2 + $0x180] sm:$0xff] %vm279, 0.0
      %330 = vst.msk [vmem:[#allocation2 + $0x188] sm:$0xff] %vm279, 0.0
      %331 = vst.msk [vmem:[#allocation2 + $0x190] sm:$0x3] %vm282, 0.0
      %332 = vst.msk [vmem:[#allocation2 + $0x198] sm:$0xff] %vm279, 0.0
      %333 = vst.msk [vmem:[#allocation2 + $0x1a0] sm:$0xff] %vm279, 0.0
      %334 = vst.msk [vmem:[#allocation2 + $0x1a8] sm:$0x3] %vm282, 0.0
      %v335 = vld [vmem:[%s273] sm:$0xff]
      %v336 = vld [vmem:[%s273 + $0x8] sm:$0xff]
      %v337 = vld [vmem:[%s273 + $0x10] sm:$0xff]
      %v338 = vld [vmem:[%s273 + $0x18] sm:$0xff]
      %v339 = vld [vmem:[%s273 + $0x20] sm:$0xff]
      %v340 = vld [vmem:[%s273 + $0x28] sm:$0xff]
      %v341 = vld [vmem:[%s273 + $0x30] sm:$0xff]
      %v342 = vld [vmem:[%s273 + $0x38] sm:$0xff]
      %v343 = vld [vmem:[%s273 + $0x40] sm:$0xff]
      %v344 = vld [vmem:[%s273 + $0x48] sm:$0xff]
      %v345 = vld [vmem:[%s273 + $0x50] sm:$0xff]
      %v346 = vld [vmem:[%s273 + $0x58] sm:$0xff]
      %v347 = vld [vmem:[%s273 + $0x60] sm:$0xff]
      %v348 = vld [vmem:[%s273 + $0x68] sm:$0xff]
      %v349 = vld [vmem:[%s273 + $0x70] sm:$0xff]
      %v350 = vld [vmem:[%s273 + $0x78] sm:$0xff]
      %v351 = vld [vmem:[%s273 + $0x80] sm:$0xff]
      %v352 = vld [vmem:[%s273 + $0x88] sm:$0xff]
      %v353 = vld [vmem:[%s273 + $0x90] sm:$0xff]
      %v354 = vld [vmem:[%s273 + $0x98] sm:$0xff]
      %v355 = vld [vmem:[%s273 + $0xa0] sm:$0xff]
      %v356 = vld [vmem:[%s273 + $0xa8] sm:$0xff]
      %v357 = vld [vmem:[%s273 + $0xb0] sm:$0xff]
      %v358 = vld [vmem:[%s273 + $0xb8] sm:$0xff]
      %v359 = vld [vmem:[%s273 + $0xc0] sm:$0xff]
      %v360 = vld [vmem:[%s273 + $0xc8] sm:$0xff]
      %v361 = vld [vmem:[%s273 + $0xd0] sm:$0xff]
      %v362 = vld [vmem:[%s273 + $0xd8] sm:$0xff]
      %v363 = vld [vmem:[%s273 + $0xe0] sm:$0xff]
      %v364 = vld [vmem:[%s273 + $0xe8] sm:$0xff]
      %v365 = vld [vmem:[%s273 + $0xf0] sm:$0xff]
      %v366 = vld [vmem:[%s273 + $0xf8] sm:$0xff]
      %v367 = vsel %vm279, %v335, 0.0
      %v368 = vsel %vm279, %v336, 0.0
      %v369 = vadd.f32 %v367, %v368
      %v370 = vsel %vm279, %v337, 0.0
      %v371 = vadd.f32 %v369, %v370
      %v372 = vsel %vm279, %v338, 0.0
      %v373 = vadd.f32 %v371, %v372
      %v374 = vsel %vm279, %v339, 0.0
      %v375 = vadd.f32 %v373, %v374
      %v376 = vsel %vm279, %v340, 0.0
      %v377 = vadd.f32 %v375, %v376
      %v378 = vsel %vm279, %v341, 0.0
      %v379 = vadd.f32 %v377, %v378
      %v380 = vsel %vm279, %v342, 0.0
      %v381 = vadd.f32 %v379, %v380
      %v382 = vsel %vm279, %v343, 0.0
      %v383 = vadd.f32 %v381, %v382
      %v384 = vsel %vm279, %v344, 0.0
      %v385 = vadd.f32 %v383, %v384
      %v386 = vsel %vm279, %v345, 0.0
      %v387 = vadd.f32 %v385, %v386
      %v388 = vsel %vm279, %v346, 0.0
      %v389 = vadd.f32 %v387, %v388
      %v390 = vsel %vm279, %v347, 0.0
      %v391 = vadd.f32 %v389, %v390
      %v392 = vsel %vm279, %v348, 0.0
      %v393 = vadd.f32 %v391, %v392
      %v394 = vsel %vm279, %v349, 0.0
      %v395 = vadd.f32 %v393, %v394
      %v396 = vsel %vm279, %v350, 0.0
      %v397 = vadd.f32 %v395, %v396
      %v398 = vsel %vm279, %v351, 0.0
      %v399 = vadd.f32 %v397, %v398
      %v400 = vsel %vm279, %v352, 0.0
      %v401 = vadd.f32 %v399, %v400
      %v402 = vsel %vm279, %v353, 0.0
      %v403 = vadd.f32 %v401, %v402
      %v404 = vsel %vm279, %v354, 0.0
      %v405 = vadd.f32 %v403, %v404
      %v406 = vsel %vm279, %v355, 0.0
      %v407 = vadd.f32 %v405, %v406
      %v408 = vsel %vm279, %v356, 0.0
      %v409 = vadd.f32 %v407, %v408
      %v410 = vsel %vm279, %v357, 0.0
      %v411 = vadd.f32 %v409, %v410
      %v412 = vsel %vm279, %v358, 0.0
      %v413 = vadd.f32 %v411, %v412
      %v414 = vsel %vm279, %v359, 0.0
      %v415 = vadd.f32 %v413, %v414
      %v416 = vsel %vm279, %v360, 0.0
      %v417 = vadd.f32 %v415, %v416
      %v418 = vsel %vm279, %v361, 0.0
      %v419 = vadd.f32 %v417, %v418
      %v420 = vsel %vm279, %v362, 0.0
      %v421 = vadd.f32 %v419, %v420
      %v422 = vsel %vm279, %v363, 0.0
      %v423 = vadd.f32 %v421, %v422
      %v424 = vsel %vm279, %v364, 0.0
      %v425 = vadd.f32 %v423, %v424
      %v426 = vsel %vm279, %v365, 0.0
      %v427 = vadd.f32 %v425, %v426
      %v428 = vsel %vm279, %v366, 0.0
      %v429 = vadd.f32 %v427, %v428
      %430 = vadd.xlane.f32.xlu0 %v429
      %v431 = vpop.xlane.xlu0 %430
      %v432 = vrot.slane %v431, 4
      %v433 = vadd.f32 %v431, %v432
      %v434 = vrot.slane %v433, 2
      %v435 = vadd.f32 %v433, %v434
      %v436 = vrot.slane %v435, 1
      %v437 = vadd.f32 %v435, %v436
      %s438 = vtos %v437
      %s439 = smul.f32 %s438, 0.00048828125
      %v440 = vstv %s439
      %v441 = vsub.f32 %v335, %v440
      %v442 = vsub.f32 %v336, %v440
      %v443 = vsub.f32 %v337, %v440
      %v444 = vsub.f32 %v338, %v440
      %v445 = vsub.f32 %v339, %v440
      %v446 = vsub.f32 %v340, %v440
      %v447 = vsub.f32 %v341, %v440
      %v448 = vsub.f32 %v342, %v440
      %v449 = vsub.f32 %v343, %v440
      %v450 = vsub.f32 %v344, %v440
      %v451 = vsub.f32 %v345, %v440
      %v452 = vsub.f32 %v346, %v440
      %v453 = vsub.f32 %v347, %v440
      %v454 = vsub.f32 %v348, %v440
      %v455 = vsub.f32 %v349, %v440
      %v456 = vsub.f32 %v350, %v440
      %v457 = vsub.f32 %v351, %v440
      %v458 = vsub.f32 %v352, %v440
      %v459 = vsub.f32 %v353, %v440
      %v460 = vsub.f32 %v354, %v440
      %v461 = vsub.f32 %v355, %v440
      %v462 = vsub.f32 %v356, %v440
      %v463 = vsub.f32 %v357, %v440
      %v464 = vsub.f32 %v358, %v440
      %v465 = vsub.f32 %v359, %v440
      %v466 = vsub.f32 %v360, %v440
      %v467 = vsub.f32 %v361, %v440
      %v468 = vsub.f32 %v362, %v440
      %v469 = vsub.f32 %v363, %v440
      %v470 = vsub.f32 %v364, %v440
      %v471 = vsub.f32 %v365, %v440
      %v472 = vsub.f32 %v366, %v440
      %v473 = vmul.f32 %v441, %v441
      %v474 = vmul.f32 %v442, %v442
      %v475 = vmul.f32 %v443, %v443
      %v476 = vmul.f32 %v444, %v444
      %v477 = vmul.f32 %v445, %v445
      %v478 = vmul.f32 %v446, %v446
      %v479 = vmul.f32 %v447, %v447
      %v480 = vmul.f32 %v448, %v448
      %v481 = vmul.f32 %v449, %v449
      %v482 = vmul.f32 %v450, %v450
      %v483 = vmul.f32 %v451, %v451
      %v484 = vmul.f32 %v452, %v452
      %v485 = vmul.f32 %v453, %v453
      %v486 = vmul.f32 %v454, %v454
      %v487 = vmul.f32 %v455, %v455
      %v488 = vmul.f32 %v456, %v456
      %v489 = vmul.f32 %v457, %v457
      %v490 = vmul.f32 %v458, %v458
      %v491 = vmul.f32 %v459, %v459
      %v492 = vmul.f32 %v460, %v460
      %v493 = vmul.f32 %v461, %v461
      %v494 = vmul.f32 %v462, %v462
      %v495 = vmul.f32 %v463, %v463
      %v496 = vmul.f32 %v464, %v464
      %v497 = vmul.f32 %v465, %v465
      %v498 = vmul.f32 %v466, %v466
      %v499 = vmul.f32 %v467, %v467
      %v500 = vmul.f32 %v468, %v468
      %v501 = vmul.f32 %v469, %v469
      %v502 = vmul.f32 %v470, %v470
      %v503 = vmul.f32 %v471, %v471
      %v504 = vmul.f32 %v472, %v472
      %v505 = vsel %vm279, %v473, 0.0
      %v506 = vsel %vm279, %v474, 0.0
      %v507 = vadd.f32 %v505, %v506
      %v508 = vsel %vm279, %v475, 0.0
      %v509 = vadd.f32 %v507, %v508
      %v510 = vsel %vm279, %v476, 0.0
      %v511 = vadd.f32 %v509, %v510
      %v512 = vsel %vm279, %v477, 0.0
      %v513 = vadd.f32 %v511, %v512
      %v514 = vsel %vm279, %v478, 0.0
      %v515 = vadd.f32 %v513, %v514
      %v516 = vsel %vm279, %v479, 0.0
      %v517 = vadd.f32 %v515, %v516
      %v518 = vsel %vm279, %v480, 0.0
      %v519 = vadd.f32 %v517, %v518
      %v520 = vsel %vm279, %v481, 0.0
      %v521 = vadd.f32 %v519, %v520
      %v522 = vsel %vm279, %v482, 0.0
      %v523 = vadd.f32 %v521, %v522
      %v524 = vsel %vm279, %v483, 0.0
      %v525 = vadd.f32 %v523, %v524
      %v526 = vsel %vm279, %v484, 0.0
      %v527 = vadd.f32 %v525, %v526
      %v528 = vsel %vm279, %v485, 0.0
      %v529 = vadd.f32 %v527, %v528
      %v530 = vsel %vm279, %v486, 0.0
      %v531 = vadd.f32 %v529, %v530
      %v532 = vsel %vm279, %v487, 0.0
      %v533 = vadd.f32 %v531, %v532
      %v534 = vsel %vm279, %v488, 0.0
      %v535 = vadd.f32 %v533, %v534
      %v536 = vsel %vm279, %v489, 0.0
      %v537 = vadd.f32 %v535, %v536
      %v538 = vsel %vm279, %v490, 0.0
      %v539 = vadd.f32 %v537, %v538
      %v540 = vsel %vm279, %v491, 0.0
      %v541 = vadd.f32 %v539, %v540
      %v542 = vsel %vm279, %v492, 0.0
      %v543 = vadd.f32 %v541, %v542
      %v544 = vsel %vm279, %v493, 0.0
      %v545 = vadd.f32 %v543, %v544
      %v546 = vsel %vm279, %v494, 0.0
      %v547 = vadd.f32 %v545, %v546
      %v548 = vsel %vm279, %v495, 0.0
      %v549 = vadd.f32 %v547, %v548
      %v550 = vsel %vm279, %v496, 0.0
      %v551 = vadd.f32 %v549, %v550
      %v552 = vsel %vm279, %v497, 0.0
      %v553 = vadd.f32 %v551, %v552
      %v554 = vsel %vm279, %v498, 0.0
      %v555 = vadd.f32 %v553, %v554
      %v556 = vsel %vm279, %v499, 0.0
      %v557 = vadd.f32 %v555, %v556
      %v558 = vsel %vm279, %v500, 0.0
      %v559 = vadd.f32 %v557, %v558
      %v560 = vsel %vm279, %v501, 0.0
      %v561 = vadd.f32 %v559, %v560
      %v562 = vsel %vm279, %v502, 0.0
      %v563 = vadd.f32 %v561, %v562
      %v564 = vsel %vm279, %v503, 0.0
      %v565 = vadd.f32 %v563, %v564
      %v566 = vsel %vm279, %v504, 0.0
      %v567 = vadd.f32 %v565, %v566
      %568 = vadd.xlane.f32.xlu0 %v567
      %v569 = vpop.xlane.xlu0 %568
      %v570 = vrot.slane %v569, 4
      %v571 = vadd.f32 %v569, %v570
      %v572 = vrot.slane %v571, 2
      %v573 = vadd.f32 %v571, %v572
      %v574 = vrot.slane %v573, 1
      %v575 = vadd.f32 %v573, %v574
      %s576 = vtos %v575
      %s577 = smul.f32 %s576, 0.0004885198
      %s578 = sadd.f32 %s577, 1e-06
      %v579 = vstv %s578
      %v580 = vrsqrt.pop %v579
      %s581 = vtos %v580
      %v582 = vstv %s581
      %v583 = vmul.f32 %v441, %v582
      %v584 = vmul.f32 %v442, %v582
      %v585 = vmul.f32 %v443, %v582
      %v586 = vmul.f32 %v444, %v582
      %v587 = vmul.f32 %v445, %v582
      %v588 = vmul.f32 %v446, %v582
      %v589 = vmul.f32 %v447, %v582
      %v590 = vmul.f32 %v448, %v582
      %v591 = vmul.f32 %v449, %v582
      %v592 = vmul.f32 %v450, %v582
      %v593 = vmul.f32 %v451, %v582
      %v594 = vmul.f32 %v452, %v582
      %v595 = vmul.f32 %v453, %v582
      %v596 = vmul.f32 %v454, %v582
      %v597 = vmul.f32 %v455, %v582
      %v598 = vmul.f32 %v456, %v582
      %v599 = vmul.f32 %v457, %v582
      %v600 = vmul.f32 %v458, %v582
      %v601 = vmul.f32 %v459, %v582
      %v602 = vmul.f32 %v460, %v582
      %v603 = vmul.f32 %v461, %v582
      %v604 = vmul.f32 %v462, %v582
      %v605 = vmul.f32 %v463, %v582
      %v606 = vmul.f32 %v464, %v582
      %v607 = vmul.f32 %v465, %v582
      %v608 = vmul.f32 %v466, %v582
      %v609 = vmul.f32 %v467, %v582
      %v610 = vmul.f32 %v468, %v582
      %v611 = vmul.f32 %v469, %v582
      %v612 = vmul.f32 %v470, %v582
      %v613 = vmul.f32 %v471, %v582
      %v614 = vmul.f32 %v472, %v582
      %v615 = vld [vmem:[%s1] sm:$0x1]
      %v617 = vlaneseq
      %v618 = vshrl.u32 %v617, 7
      %v619 = vsub.s32 0, %v618
      %v620 = vrot.slane %v615, %v619
      %v622 = vmul.f32 %v583, %v620
      %v623 = vmul.f32 %v584, %v620
      %v624 = vmul.f32 %v585, %v620
      %v625 = vmul.f32 %v586, %v620
      %v626 = vmul.f32 %v587, %v620
      %v627 = vmul.f32 %v588, %v620
      %v628 = vmul.f32 %v589, %v620
      %v629 = vmul.f32 %v590, %v620
      %v630 = vmul.f32 %v591, %v620
      %v631 = vmul.f32 %v592, %v620
      %v632 = vmul.f32 %v593, %v620
      %v633 = vmul.f32 %v594, %v620
      %v634 = vmul.f32 %v595, %v620
      %v635 = vmul.f32 %v596, %v620
      %v636 = vmul.f32 %v597, %v620
      %v637 = vmul.f32 %v598, %v620
      %v638 = vmul.f32 %v599, %v620
      %v639 = vmul.f32 %v600, %v620
      %v640 = vmul.f32 %v601, %v620
      %v641 = vmul.f32 %v602, %v620
      %v642 = vmul.f32 %v603, %v620
      %v643 = vmul.f32 %v604, %v620
      %v644 = vmul.f32 %v605, %v620
      %v645 = vmul.f32 %v606, %v620
      %v646 = vmul.f32 %v607, %v620
      %v647 = vmul.f32 %v608, %v620
      %v648 = vmul.f32 %v609, %v620
      %v649 = vmul.f32 %v610, %v620
      %v650 = vmul.f32 %v611, %v620
      %v651 = vmul.f32 %v612, %v620
      %v652 = vmul.f32 %v613, %v620
      %v653 = vmul.f32 %v614, %v620
      %v654 = vld [vmem:[%s2] sm:$0x1]
      %v656 = vlaneseq
      %v657 = vshrl.u32 %v656, 7
      %v658 = vsub.s32 0, %v657
      %v659 = vrot.slane %v654, %v658
      %v661 = vadd.f32 %v622, %v659
      %v662 = vadd.f32 %v623, %v659
      %v663 = vadd.f32 %v624, %v659
      %v664 = vadd.f32 %v625, %v659
      %v665 = vadd.f32 %v626, %v659
      %v666 = vadd.f32 %v627, %v659
      %v667 = vadd.f32 %v628, %v659
      %v668 = vadd.f32 %v629, %v659
      %v669 = vadd.f32 %v630, %v659
      %v670 = vadd.f32 %v631, %v659
      %v671 = vadd.f32 %v632, %v659
      %v672 = vadd.f32 %v633, %v659
      %v673 = vadd.f32 %v634, %v659
      %v674 = vadd.f32 %v635, %v659
      %v675 = vadd.f32 %v636, %v659
      %v676 = vadd.f32 %v637, %v659
      %v677 = vadd.f32 %v638, %v659
      %v678 = vadd.f32 %v639, %v659
      %v679 = vadd.f32 %v640, %v659
      %v680 = vadd.f32 %v641, %v659
      %v681 = vadd.f32 %v642, %v659
      %v682 = vadd.f32 %v643, %v659
      %v683 = vadd.f32 %v644, %v659
      %v684 = vadd.f32 %v645, %v659
      %v685 = vadd.f32 %v646, %v659
      %v686 = vadd.f32 %v647, %v659
      %v687 = vadd.f32 %v648, %v659
      %v688 = vadd.f32 %v649, %v659
      %v689 = vadd.f32 %v650, %v659
      %v690 = vadd.f32 %v651, %v659
      %v691 = vadd.f32 %v652, %v659
      %v692 = vadd.f32 %v653, %v659
      %v693 = vsub.f32 0.0, %v661
      %v694 = vsub.f32 0.0, %v662
      %v695 = vsub.f32 0.0, %v663
      %v696 = vsub.f32 0.0, %v664
      %v697 = vsub.f32 0.0, %v665
      %v698 = vsub.f32 0.0, %v666
      %v699 = vsub.f32 0.0, %v667
      %v700 = vsub.f32 0.0, %v668
      %v701 = vsub.f32 0.0, %v669
      %v702 = vsub.f32 0.0, %v670
      %v703 = vsub.f32 0.0, %v671
      %v704 = vsub.f32 0.0, %v672
      %v705 = vsub.f32 0.0, %v673
      %v706 = vsub.f32 0.0, %v674
      %v707 = vsub.f32 0.0, %v675
      %v708 = vsub.f32 0.0, %v676
      %v709 = vsub.f32 0.0, %v677
      %v710 = vsub.f32 0.0, %v678
      %v711 = vsub.f32 0.0, %v679
      %v712 = vsub.f32 0.0, %v680
      %v713 = vsub.f32 0.0, %v681
      %v714 = vsub.f32 0.0, %v682
      %v715 = vsub.f32 0.0, %v683
      %v716 = vsub.f32 0.0, %v684
      %v717 = vsub.f32 0.0, %v685
      %v718 = vsub.f32 0.0, %v686
      %v719 = vsub.f32 0.0, %v687
      %v720 = vsub.f32 0.0, %v688
      %v721 = vsub.f32 0.0, %v689
      %v722 = vsub.f32 0.0, %v690
      %v723 = vsub.f32 0.0, %v691
      %v724 = vsub.f32 0.0, %v692
      %v725 = vmul.f32 %v693, 1.442695
      %v726 = vpow.pop %v725
      %v727 = vmul.f32 %v694, 1.442695
      %v728 = vpow.pop %v727
      %v729 = vmul.f32 %v695, 1.442695
      %v730 = vpow.pop %v729
      %v731 = vmul.f32 %v696, 1.442695
      %v732 = vpow.pop %v731
      %v733 = vmul.f32 %v697, 1.442695
      %v734 = vpow.pop %v733
      %v735 = vmul.f32 %v698, 1.442695
      %v736 = vpow.pop %v735
      %v737 = vmul.f32 %v699, 1.442695
      %v738 = vpow.pop %v737
      %v739 = vmul.f32 %v700, 1.442695
      %v740 = vpow.pop %v739
      %v741 = vmul.f32 %v701, 1.442695
      %v742 = vpow.pop %v741
      %v743 = vmul.f32 %v702, 1.442695
      %v744 = vpow.pop %v743
      %v745 = vmul.f32 %v703, 1.442695
      %v746 = vpow.pop %v745
      %v747 = vmul.f32 %v704, 1.442695
      %v748 = vpow.pop %v747
      %v749 = vmul.f32 %v705, 1.442695
      %v750 = vpow.pop %v749
      %v751 = vmul.f32 %v706, 1.442695
      %v752 = vpow.pop %v751
      %v753 = vmul.f32 %v707, 1.442695
      %v754 = vpow.pop %v753
      %v755 = vmul.f32 %v708, 1.442695
      %v756 = vpow.pop %v755
      %v757 = vmul.f32 %v709, 1.442695
      %v758 = vpow.pop %v757
      %v759 = vmul.f32 %v710, 1.442695
      %v760 = vpow.pop %v759
      %v761 = vmul.f32 %v711, 1.442695
      %v762 = vpow.pop %v761
      %v763 = vmul.f32 %v712, 1.442695
      %v764 = vpow.pop %v763
      %v765 = vmul.f32 %v713, 1.442695
      %v766 = vpow.pop %v765
      %v767 = vmul.f32 %v714, 1.442695
      %v768 = vpow.pop %v767
      %v769 = vmul.f32 %v715, 1.442695
      %v770 = vpow.pop %v769
      %v771 = vmul.f32 %v716, 1.442695
      %v772 = vpow.pop %v771
      %v773 = vmul.f32 %v717, 1.442695
      %v774 = vpow.pop %v773
      %v775 = vmul.f32 %v718, 1.442695
      %v776 = vpow.pop %v775
      %v777 = vmul.f32 %v719, 1.442695
      %v778 = vpow.pop %v777
      %v779 = vmul.f32 %v720, 1.442695
      %v780 = vpow.pop %v779
      %v781 = vmul.f32 %v721, 1.442695
      %v782 = vpow.pop %v781
      %v783 = vmul.f32 %v722, 1.442695
      %v784 = vpow.pop %v783
      %v785 = vmul.f32 %v723, 1.442695
      %v786 = vpow.pop %v785
      %v787 = vmul.f32 %v724, 1.442695
      %v788 = vpow.pop %v787
      %v789 = vadd.f32 %v726, 1.0
      %v790 = vadd.f32 %v728, 1.0
      %v791 = vadd.f32 %v730, 1.0
      %v792 = vadd.f32 %v732, 1.0
      %v793 = vadd.f32 %v734, 1.0
      %v794 = vadd.f32 %v736, 1.0
      %v795 = vadd.f32 %v738, 1.0
      %v796 = vadd.f32 %v740, 1.0
      %v797 = vadd.f32 %v742, 1.0
      %v798 = vadd.f32 %v744, 1.0
      %v799 = vadd.f32 %v746, 1.0
      %v800 = vadd.f32 %v748, 1.0
      %v801 = vadd.f32 %v750, 1.0
      %v802 = vadd.f32 %v752, 1.0
      %v803 = vadd.f32 %v754, 1.0
      %v804 = vadd.f32 %v756, 1.0
      %v805 = vadd.f32 %v758, 1.0
      %v806 = vadd.f32 %v760, 1.0
      %v807 = vadd.f32 %v762, 1.0
      %v808 = vadd.f32 %v764, 1.0
      %v809 = vadd.f32 %v766, 1.0
      %v810 = vadd.f32 %v768, 1.0
      %v811 = vadd.f32 %v770, 1.0
      %v812 = vadd.f32 %v772, 1.0
      %v813 = vadd.f32 %v774, 1.0
      %v814 = vadd.f32 %v776, 1.0
      %v815 = vadd.f32 %v778, 1.0
      %v816 = vadd.f32 %v780, 1.0
      %v817 = vadd.f32 %v782, 1.0
      %v818 = vadd.f32 %v784, 1.0
      %v819 = vadd.f32 %v786, 1.0
      %v820 = vadd.f32 %v788, 1.0
      %v821 = vrcp.pop %v789
      %v822 = vmul.f32 1.0, %v821
      %v823 = vrcp.pop %v790
      %v824 = vmul.f32 1.0, %v823
      %v825 = vrcp.pop %v791
      %v826 = vmul.f32 1.0, %v825
      %v827 = vrcp.pop %v792
      %v828 = vmul.f32 1.0, %v827
      %v829 = vrcp.pop %v793
      %v830 = vmul.f32 1.0, %v829
      %v831 = vrcp.pop %v794
      %v832 = vmul.f32 1.0, %v831
      %v833 = vrcp.pop %v795
      %v834 = vmul.f32 1.0, %v833
      %v835 = vrcp.pop %v796
      %v836 = vmul.f32 1.0, %v835
      %v837 = vrcp.pop %v797
      %v838 = vmul.f32 1.0, %v837
      %v839 = vrcp.pop %v798
      %v840 = vmul.f32 1.0, %v839
      %v841 = vrcp.pop %v799
      %v842 = vmul.f32 1.0, %v841
      %v843 = vrcp.pop %v800
      %v844 = vmul.f32 1.0, %v843
      %v845 = vrcp.pop %v801
      %v846 = vmul.f32 1.0, %v845
      %v847 = vrcp.pop %v802
      %v848 = vmul.f32 1.0, %v847
      %v849 = vrcp.pop %v803
      %v850 = vmul.f32 1.0, %v849
      %v851 = vrcp.pop %v804
      %v852 = vmul.f32 1.0, %v851
      %v853 = vrcp.pop %v805
      %v854 = vmul.f32 1.0, %v853
      %v855 = vrcp.pop %v806
      %v856 = vmul.f32 1.0, %v855
      %v857 = vrcp.pop %v807
      %v858 = vmul.f32 1.0, %v857
      %v859 = vrcp.pop %v808
      %v860 = vmul.f32 1.0, %v859
      %v861 = vrcp.pop %v809
      %v862 = vmul.f32 1.0, %v861
      %v863 = vrcp.pop %v810
      %v864 = vmul.f32 1.0, %v863
      %v865 = vrcp.pop %v811
      %v866 = vmul.f32 1.0, %v865
      %v867 = vrcp.pop %v812
      %v868 = vmul.f32 1.0, %v867
      %v869 = vrcp.pop %v813
      %v870 = vmul.f32 1.0, %v869
      %v871 = vrcp.pop %v814
      %v872 = vmul.f32 1.0, %v871
      %v873 = vrcp.pop %v815
      %v874 = vmul.f32 1.0, %v873
      %v875 = vrcp.pop %v816
      %v876 = vmul.f32 1.0, %v875
      %v877 = vrcp.pop %v817
      %v878 = vmul.f32 1.0, %v877
      %v879 = vrcp.pop %v818
      %v880 = vmul.f32 1.0, %v879
      %v881 = vrcp.pop %v819
      %v882 = vmul.f32 1.0, %v881
      %v883 = vrcp.pop %v820
      %v884 = vmul.f32 1.0, %v883
      %v885 = vmul.f32 %v661, %v822
      %v886 = vmul.f32 %v662, %v824
      %v887 = vmul.f32 %v663, %v826
      %v888 = vmul.f32 %v664, %v828
      %v889 = vmul.f32 %v665, %v830
      %v890 = vmul.f32 %v666, %v832
      %v891 = vmul.f32 %v667, %v834
      %v892 = vmul.f32 %v668, %v836
      %v893 = vmul.f32 %v669, %v838
      %v894 = vmul.f32 %v670, %v840
      %v895 = vmul.f32 %v671, %v842
      %v896 = vmul.f32 %v672, %v844
      %v897 = vmul.f32 %v673, %v846
      %v898 = vmul.f32 %v674, %v848
      %v899 = vmul.f32 %v675, %v850
      %v900 = vmul.f32 %v676, %v852
      %v901 = vmul.f32 %v677, %v854
      %v902 = vmul.f32 %v678, %v856
      %v903 = vmul.f32 %v679, %v858
      %v904 = vmul.f32 %v680, %v860
      %v905 = vmul.f32 %v681, %v862
      %v906 = vmul.f32 %v682, %v864
      %v907 = vmul.f32 %v683, %v866
      %v908 = vmul.f32 %v684, %v868
      %v909 = vmul.f32 %v685, %v870
      %v910 = vmul.f32 %v686, %v872
      %v911 = vmul.f32 %v687, %v874
      %v912 = vmul.f32 %v688, %v876
      %v913 = vmul.f32 %v689, %v878
      %v914 = vmul.f32 %v690, %v880
      %v915 = vmul.f32 %v691, %v882
      %v916 = vmul.f32 %v692, %v884
      %s917 = scalar_lea.vmem [#allocation2], 24
      %918 = vst.msk [vmem:[%s917 + $0x1] sm:$0xff] %vm279, %v885
      %919 = vst.msk [vmem:[%s917 + $0x9] sm:$0xff] %vm279, %v886
      %920 = vst.msk [vmem:[%s917 + $0x19] sm:$0xff] %vm279, %v887
      %921 = vst.msk [vmem:[%s917 + $0x21] sm:$0xff] %vm279, %v888
      %922 = vst.msk [vmem:[%s917 + $0x31] sm:$0xff] %vm279, %v889
      %923 = vst.msk [vmem:[%s917 + $0x39] sm:$0xff] %vm279, %v890
      %924 = vst.msk [vmem:[%s917 + $0x49] sm:$0xff] %vm279, %v891
      %925 = vst.msk [vmem:[%s917 + $0x51] sm:$0xff] %vm279, %v892
      %926 = vst.msk [vmem:[%s917 + $0x61] sm:$0xff] %vm279, %v893
      %927 = vst.msk [vmem:[%s917 + $0x69] sm:$0xff] %vm279, %v894
      %928 = vst.msk [vmem:[%s917 + $0x79] sm:$0xff] %vm279, %v895
      %929 = vst.msk [vmem:[%s917 + $0x81] sm:$0xff] %vm279, %v896
      %930 = vst.msk [vmem:[%s917 + $0x91] sm:$0xff] %vm279, %v897
      %931 = vst.msk [vmem:[%s917 + $0x99] sm:$0xff] %vm279, %v898
      %932 = vst.msk [vmem:[%s917 + $0xa9] sm:$0xff] %vm279, %v899
      %933 = vst.msk [vmem:[%s917 + $0xb1] sm:$0xff] %vm279, %v900
      %934 = vst.msk [vmem:[%s917 + $0xc1] sm:$0xff] %vm279, %v901
      %935 = vst.msk [vmem:[%s917 + $0xc9] sm:$0xff] %vm279, %v902
      %936 = vst.msk [vmem:[%s917 + $0xd9] sm:$0xff] %vm279, %v903
      %937 = vst.msk [vmem:[%s917 + $0xe1] sm:$0xff] %vm279, %v904
      %938 = vst.msk [vmem:[%s917 + $0xf1] sm:$0xff] %vm279, %v905
      %939 = vst.msk [vmem:[%s917 + $0xf9] sm:$0xff] %vm279, %v906
      %940 = vst.msk [vmem:[%s917 + $0x109] sm:$0xff] %vm279, %v907
      %941 = vst.msk [vmem:[%s917 + $0x111] sm:$0xff] %vm279, %v908
      %942 = vst.msk [vmem:[%s917 + $0x121] sm:$0xff] %vm279, %v909
      %943 = vst.msk [vmem:[%s917 + $0x129] sm:$0xff] %vm279, %v910
      %944 = vst.msk [vmem:[%s917 + $0x139] sm:$0xff] %vm279, %v911
      %945 = vst.msk [vmem:[%s917 + $0x141] sm:$0xff] %vm279, %v912
      %946 = vst.msk [vmem:[%s917 + $0x151] sm:$0xff] %vm279, %v913
      %947 = vst.msk [vmem:[%s917 + $0x159] sm:$0xff] %vm279, %v914
      %948 = vst.msk [vmem:[%s917 + $0x169] sm:$0xff] %vm279, %v915
      %949 = vst.msk [vmem:[%s917 + $0x171] sm:$0xff] %vm279, %v916
      %v950 = vld [vmem:[#allocation2] sm:$0xff]
      %v951 = vld [vmem:[#allocation2 + $0x8] sm:$0xff]
      %v952 = vld [vmem:[#allocation2 + $0x18] sm:$0xff]
      %v953 = vld [vmem:[#allocation2 + $0x20] sm:$0xff]
      %v954 = vld [vmem:[#allocation2 + $0x30] sm:$0xff]
      %v955 = vld [vmem:[#allocation2 + $0x38] sm:$0xff]
      %v956 = vld [vmem:[#allocation2 + $0x48] sm:$0xff]
      %v957 = vld [vmem:[#allocation2 + $0x50] sm:$0xff]
      %v958 = vld [vmem:[#allocation2 + $0x60] sm:$0xff]
      %v959 = vld [vmem:[#allocation2 + $0x68] sm:$0xff]
      %v960 = vld [vmem:[#allocation2 + $0x78] sm:$0xff]
      %v961 = vld [vmem:[#allocation2 + $0x80] sm:$0xff]
      %v962 = vld [vmem:[#allocation2 + $0x90] sm:$0xff]
      %v963 = vld [vmem:[#allocation2 + $0x98] sm:$0xff]
      %v964 = vld [vmem:[#allocation2 + $0xa8] sm:$0xff]
      %v965 = vld [vmem:[#allocation2 + $0xb0] sm:$0xff]
      %v966 = vld [vmem:[#allocation2 + $0xc0] sm:$0xff]
      %v967 = vld [vmem:[#allocation2 + $0xc8] sm:$0xff]
      %v968 = vld [vmem:[#allocation2 + $0xd8] sm:$0xff]
      %v969 = vld [vmem:[#allocation2 + $0xe0] sm:$0xff]
      %v970 = vld [vmem:[#allocation2 + $0xf0] sm:$0xff]
      %v971 = vld [vmem:[#allocation2 + $0xf8] sm:$0xff]
      %v972 = vld [vmem:[#allocation2 + $0x108] sm:$0xff]
      %v973 = vld [vmem:[#allocation2 + $0x110] sm:$0xff]
      %v974 = vld [vmem:[#allocation2 + $0x120] sm:$0xff]
      %v975 = vld [vmem:[#allocation2 + $0x128] sm:$0xff]
      %v976 = vld [vmem:[#allocation2 + $0x138] sm:$0xff]
      %v977 = vld [vmem:[#allocation2 + $0x140] sm:$0xff]
      %v978 = vld [vmem:[#allocation2 + $0x150] sm:$0xff]
      %v979 = vld [vmem:[#allocation2 + $0x158] sm:$0xff]
      %v980 = vld [vmem:[#allocation2 + $0x168] sm:$0xff]
      %v981 = vld [vmem:[#allocation2 + $0x170] sm:$0xff]
      %v982 = vld [vmem:[%s3] sm:$0xff]
      %v983 = vld [vmem:[#allocation2 + $0x1] sm:$0xff]
      %v984 = vld [vmem:[#allocation2 + $0x9] sm:$0xff]
      %v985 = vld [vmem:[#allocation2 + $0x19] sm:$0xff]
      %v986 = vld [vmem:[#allocation2 + $0x21] sm:$0xff]
      %v987 = vld [vmem:[#allocation2 + $0x31] sm:$0xff]
      %v988 = vld [vmem:[#allocation2 + $0x39] sm:$0xff]
      %v989 = vld [vmem:[#allocation2 + $0x49] sm:$0xff]
      %v990 = vld [vmem:[#allocation2 + $0x51] sm:$0xff]
      %v991 = vld [vmem:[#allocation2 + $0x61] sm:$0xff]
      %v992 = vld [vmem:[#allocation2 + $0x69] sm:$0xff]
      %v993 = vld [vmem:[#allocation2 + $0x79] sm:$0xff]
      %v994 = vld [vmem:[#allocation2 + $0x81] sm:$0xff]
      %v995 = vld [vmem:[#allocation2 + $0x91] sm:$0xff]
      %v996 = vld [vmem:[#allocation2 + $0x99] sm:$0xff]
      %v997 = vld [vmem:[#allocation2 + $0xa9] sm:$0xff]
      %v998 = vld [vmem:[#allocation2 + $0xb1] sm:$0xff]
      %v999 = vld [vmem:[#allocation2 + $0xc1] sm:$0xff]
      %v1000 = vld [vmem:[#allocation2 + $0xc9] sm:$0xff]
      %v1001 = vld [vmem:[#allocation2 + $0xd9] sm:$0xff]
      %v1002 = vld [vmem:[#allocation2 + $0xe1] sm:$0xff]
      %v1003 = vld [vmem:[#allocation2 + $0xf1] sm:$0xff]
      %v1004 = vld [vmem:[#allocation2 + $0xf9] sm:$0xff]
      %v1005 = vld [vmem:[#allocation2 + $0x109] sm:$0xff]
      %v1006 = vld [vmem:[#allocation2 + $0x111] sm:$0xff]
      %v1007 = vld [vmem:[#allocation2 + $0x121] sm:$0xff]
      %v1008 = vld [vmem:[#allocation2 + $0x129] sm:$0xff]
      %v1009 = vld [vmem:[#allocation2 + $0x139] sm:$0xff]
      %v1010 = vld [vmem:[#allocation2 + $0x141] sm:$0xff]
      %v1011 = vld [vmem:[#allocation2 + $0x151] sm:$0xff]
      %v1012 = vld [vmem:[#allocation2 + $0x159] sm:$0xff]
      %v1013 = vld [vmem:[#allocation2 + $0x169] sm:$0xff]
      %v1014 = vld [vmem:[#allocation2 + $0x171] sm:$0xff]
      %s1015 = scalar_lea.vmem %s3, 8
      %v1016 = vld [vmem:[%s1015] sm:$0xff]
      %v1018 = vsel %vm279, %v983, 0
      %v1021 = vsel %vm279, %v984, 0
      %v1024 = vsel %vm279, %v985, 0
      %v1027 = vsel %vm279, %v986, 0
      %v1030 = vsel %vm279, %v987, 0
      %v1033 = vsel %vm279, %v988, 0
      %v1036 = vsel %vm279, %v989, 0
      %v1039 = vsel %vm279, %v990, 0
      %v1042 = vsel %vm279, %v991, 0
      %v1045 = vsel %vm279, %v992, 0
      %v1048 = vsel %vm279, %v993, 0
      %v1051 = vsel %vm279, %v994, 0
      %v1054 = vsel %vm279, %v995, 0
      %v1057 = vsel %vm279, %v996, 0
      %v1060 = vsel %vm279, %v997, 0
      %v1063 = vsel %vm279, %v998, 0
      %v1066 = vsel %vm279, %v999, 0
      %v1069 = vsel %vm279, %v1000, 0
      %v1072 = vsel %vm279, %v1001, 0
      %v1075 = vsel %vm279, %v1002, 0
      %v1078 = vsel %vm279, %v1003, 0
      %v1081 = vsel %vm279, %v1004, 0
      %v1084 = vsel %vm279, %v1005, 0
      %v1087 = vsel %vm279, %v1006, 0
      %v1090 = vsel %vm279, %v1007, 0
      %v1093 = vsel %vm279, %v1008, 0
      %v1096 = vsel %vm279, %v1009, 0
      %v1099 = vsel %vm279, %v1010, 0
      %v1102 = vsel %vm279, %v1011, 0
      %v1105 = vsel %vm279, %v1012, 0
      %v1108 = vsel %vm279, %v1013, 0
      %v1111 = vsel %vm279, %v1014, 0
      %1113 = vmatprep.subr.mxu0 0.0
      %1114 = vmatpush1.msra.mxu0 %v1016
      %1115 = vmatprep.subr.mxu0 0.0
      %1116 = vmatpush1.msra.mxu0 0.0
      %1117 = vmatprep.subr.mxu0 0.0
      %1118 = vmatpush1.msra.mxu0 0.0
      %1119 = vmatprep.subr.mxu0 0.0
      %1120 = vmatpush1.msra.mxu0 0.0
      %1121 = vmatprep.subr.mxu0 0.0
      %1122 = vmatpush1.msra.mxu0 0.0
      %1123 = vmatprep.subr.mxu0 0.0
      %1124 = vmatpush1.msra.mxu0 0.0
      %1125 = vmatprep.subr.mxu0 0.0
      %1126 = vmatpush1.msra.mxu0 0.0
      %1127 = vmatprep.subr.mxu0 0.0
      %1128 = vmatpush1.msra.mxu0 0.0
      %1129 = vmatprep.subr.mxu0 0.0
      %1130 = vmatpush1.msra.mxu0 0.0
      %1131 = vmatprep.subr.mxu0 0.0
      %1132 = vmatpush1.msra.mxu0 0.0
      %1133 = vmatprep.subr.mxu0 0.0
      %1134 = vmatpush1.msra.mxu0 0.0
      %1135 = vmatprep.subr.mxu0 0.0
      %1136 = vmatpush1.msra.mxu0 0.0
      %1137 = vmatprep.subr.mxu0 0.0
      %1138 = vmatpush1.msra.mxu0 0.0
      %1139 = vmatprep.subr.mxu0 0.0
      %1140 = vmatpush1.msra.mxu0 0.0
      %1141 = vmatprep.subr.mxu0 0.0
      %1142 = vmatpush1.msra.mxu0 0.0
      %1143 = vmatprep.subr.mxu0 0.0
      %1144 = vmatpush1.msra.mxu0 0.0
      %1145 = vmatprep.subr.mxu0 0.0
      %1146 = vmatpush1.msra.mxu0 0.0
      %1147 = vmatprep.subr.mxu0 0.0
      %1148 = vmatpush1.msra.mxu0 0.0
      %1149 = vmatprep.subr.mxu0 0.0
      %1150 = vmatpush1.msra.mxu0 0.0
      %1151 = vmatprep.subr.mxu0 0.0
      %1152 = vmatpush1.msra.mxu0 0.0
      %1153 = vmatprep.subr.mxu0 0.0
      %1154 = vmatpush1.msra.mxu0 0.0
      %1155 = vmatprep.subr.mxu0 0.0
      %1156 = vmatpush1.msra.mxu0 0.0
      %1157 = vmatprep.subr.mxu0 0.0
      %1158 = vmatpush1.msra.mxu0 0.0
      %1159 = vmatprep.subr.mxu0 0.0
      %1160 = vmatpush1.msra.mxu0 0.0
      %1161 = vmatprep.subr.mxu0 0.0
      %1162 = vmatpush1.msra.mxu0 0.0
      %1163 = vmatprep.subr.mxu0 0.0
      %1164 = vmatpush1.msra.mxu0 0.0
      %1165 = vmatprep.subr.mxu0 0.0
      %1166 = vmatpush1.msra.mxu0 0.0
      %1167 = vmatprep.subr.mxu0 0.0
      %1168 = vmatpush1.msra.mxu0 0.0
      %1169 = vmatprep.subr.mxu0 0.0
      %1170 = vmatpush1.msra.mxu0 0.0
      %1171 = vmatprep.subr.mxu0 0.0
      %1172 = vmatpush1.msra.mxu0 0.0
      %1173 = vmatprep.subr.mxu0 0.0
      %1174 = vmatpush1.msra.mxu0 0.0
      %1175 = vmatprep.subr.mxu0 0.0
      %1176 = vmatpush1.msra.mxu0 0.0
      %1177 = vmatprep.mubr.f32.mxu0 0.0
      %1178 = vmatmul.mubr.f32.gmra.mrb[0].mxu0 %v1018
      %v1179 = vpop.f32.mrb[0].mxu0
      %v1180 = vadd.f32 0.0, %v1179
      %v1181 = vpop.f32.mrb[0].mxu0
      %1182 = vmatprep.mubr.f32.mxu0 0.0
      %1183 = vmatmul.mubr.f32.gmra.mrb[0].mxu0 %v1021
      %v1184 = vpop.f32.mrb[0].mxu0
      %v1185 = vadd.f32 0.0, %v1184
      %v1186 = vpop.f32.mrb[0].mxu0
      %1187 = vmatprep.mubr.f32.mxu0 0.0
      %1188 = vmatmul.mubr.f32.gmra.mrb[0].mxu0 %v1024
      %v1189 = vpop.f32.mrb[0].mxu0
      %v1190 = vadd.f32 0.0, %v1189
      %v1191 = vpop.f32.mrb[0].mxu0
      %1192 = vmatprep.mubr.f32.mxu0 0.0
      %1193 = vmatmul.mubr.f32.gmra.mrb[0].mxu0 %v1027
      %v1194 = vpop.f32.mrb[0].mxu0
      %v1195 = vadd.f32 0.0, %v1194
      %v1196 = vpop.f32.mrb[0].mxu0
      %1197 = vmatprep.mubr.f32.mxu0 0.0
      %1198 = vmatmul.mubr.f32.gmra.mrb[0].mxu0 %v1030
      %v1199 = vpop.f32.mrb[0].mxu0
      %v1200 = vadd.f32 0.0, %v1199
      %v1201 = vpop.f32.mrb[0].mxu0
      %1202 = vmatprep.mubr.f32.mxu0 0.0
      %1203 = vmatmul.mubr.f32.gmra.mrb[0].mxu0 %v1033
      %v1204 = vpop.f32.mrb[0].mxu0
      %v1205 = vadd.f32 0.0, %v1204
      %v1206 = vpop.f32.mrb[0].mxu0
      %1207 = vmatprep.mubr.f32.mxu0 0.0
      %1208 = vmatmul.mubr.f32.gmra.mrb[0].mxu0 %v1036
      %v1209 = vpop.f32.mrb[0].mxu0
      %v1210 = vadd.f32 0.0, %v1209
      %v1211 = vpop.f32.mrb[0].mxu0
      %1212 = vmatprep.mubr.f32.mxu0 0.0
      %1213 = vmatmul.mubr.f32.gmra.mrb[0].mxu0 %v1039
      %v1214 = vpop.f32.mrb[0].mxu0
      %v1215 = vadd.f32 0.0, %v1214
      %v1216 = vpop.f32.mrb[0].mxu0
      %1217 = vmatprep.mubr.f32.mxu0 0.0
      %1218 = vmatmul.mubr.f32.gmra.mrb[0].mxu0 %v1042
      %v1219 = vpop.f32.mrb[0].mxu0
      %v1220 = vadd.f32 0.0, %v1219
      %v1221 = vpop.f32.mrb[0].mxu0
      %1222 = vmatprep.mubr.f32.mxu0 0.0
      %1223 = vmatmul.mubr.f32.gmra.mrb[0].mxu0 %v1045
      %v1224 = vpop.f32.mrb[0].mxu0
      %v1225 = vadd.f32 0.0, %v1224
      %v1226 = vpop.f32.mrb[0].mxu0
      %1227 = vmatprep.mubr.f32.mxu0 0.0
      %1228 = vmatmul.mubr.f32.gmra.mrb[0].mxu0 %v1048
      %v1229 = vpop.f32.mrb[0].mxu0
      %v1230 = vadd.f32 0.0, %v1229
      %v1231 = vpop.f32.mrb[0].mxu0
      %1232 = vmatprep.mubr.f32.mxu0 0.0
      %1233 = vmatmul.mubr.f32.gmra.mrb[0].mxu0 %v1051
      %v1234 = vpop.f32.mrb[0].mxu0
      %v1235 = vadd.f32 0.0, %v1234
      %v1236 = vpop.f32.mrb[0].mxu0
      %1237 = vmatprep.mubr.f32.mxu0 0.0
      %1238 = vmatmul.mubr.f32.gmra.mrb[0].mxu0 %v1054
      %v1239 = vpop.f32.mrb[0].mxu0
      %v1240 = vadd.f32 0.0, %v1239
      %v1241 = vpop.f32.mrb[0].mxu0
      %1242 = vmatprep.mubr.f32.mxu0 0.0
      %1243 = vmatmul.mubr.f32.gmra.mrb[0].mxu0 %v1057
      %v1244 = vpop.f32.mrb[0].mxu0
      %v1245 = vadd.f32 0.0, %v1244
      %v1246 = vpop.f32.mrb[0].mxu0
      %1247 = vmatprep.mubr.f32.mxu0 0.0
      %1248 = vmatmul.mubr.f32.gmra.mrb[0].mxu0 %v1060
      %v1249 = vpop.f32.mrb[0].mxu0
      %v1250 = vadd.f32 0.0, %v1249
      %v1251 = vpop.f32.mrb[0].mxu0
      %1252 = vmatprep.mubr.f32.mxu0 0.0
      %1253 = vmatmul.mubr.f32.gmra.mrb[0].mxu0 %v1063
      %v1254 = vpop.f32.mrb[0].mxu0
      %v1255 = vadd.f32 0.0, %v1254
      %v1256 = vpop.f32.mrb[0].mxu0
      %1257 = vmatprep.mubr.f32.mxu0 0.0
      %1258 = vmatmul.mubr.f32.gmra.mrb[0].mxu0 %v1066
      %v1259 = vpop.f32.mrb[0].mxu0
      %v1260 = vadd.f32 0.0, %v1259
      %v1261 = vpop.f32.mrb[0].mxu0
      %1262 = vmatprep.mubr.f32.mxu0 0.0
      %1263 = vmatmul.mubr.f32.gmra.mrb[0].mxu0 %v1069
      %v1264 = vpop.f32.mrb[0].mxu0
      %v1265 = vadd.f32 0.0, %v1264
      %v1266 = vpop.f32.mrb[0].mxu0
      %1267 = vmatprep.mubr.f32.mxu0 0.0
      %1268 = vmatmul.mubr.f32.gmra.mrb[0].mxu0 %v1072
      %v1269 = vpop.f32.mrb[0].mxu0
      %v1270 = vadd.f32 0.0, %v1269
      %v1271 = vpop.f32.mrb[0].mxu0
      %1272 = vmatprep.mubr.f32.mxu0 0.0
      %1273 = vmatmul.mubr.f32.gmra.mrb[0].mxu0 %v1075
      %v1274 = vpop.f32.mrb[0].mxu0
      %v1275 = vadd.f32 0.0, %v1274
      %v1276 = vpop.f32.mrb[0].mxu0
      %1277 = vmatprep.mubr.f32.mxu0 0.0
      %1278 = vmatmul.mubr.f32.gmra.mrb[0].mxu0 %v1078
      %v1279 = vpop.f32.mrb[0].mxu0
      %v1280 = vadd.f32 0.0, %v1279
      %v1281 = vpop.f32.mrb[0].mxu0
      %1282 = vmatprep.mubr.f32.mxu0 0.0
      %1283 = vmatmul.mubr.f32.gmra.mrb[0].mxu0 %v1081
      %v1284 = vpop.f32.mrb[0].mxu0
      %v1285 = vadd.f32 0.0, %v1284
      %v1286 = vpop.f32.mrb[0].mxu0
      %1287 = vmatprep.mubr.f32.mxu0 0.0
      %1288 = vmatmul.mubr.f32.gmra.mrb[0].mxu0 %v1084
      %v1289 = vpop.f32.mrb[0].mxu0
      %v1290 = vadd.f32 0.0, %v1289
      %v1291 = vpop.f32.mrb[0].mxu0
      %1292 = vmatprep.mubr.f32.mxu0 0.0
      %1293 = vmatmul.mubr.f32.gmra.mrb[0].mxu0 %v1087
      %v1294 = vpop.f32.mrb[0].mxu0
      %v1295 = vadd.f32 0.0, %v1294
      %v1296 = vpop.f32.mrb[0].mxu0
      %1297 = vmatprep.mubr.f32.mxu0 0.0
      %1298 = vmatmul.mubr.f32.gmra.mrb[0].mxu0 %v1090
      %v1299 = vpop.f32.mrb[0].mxu0
      %v1300 = vadd.f32 0.0, %v1299
      %v1301 = vpop.f32.mrb[0].mxu0
      %1302 = vmatprep.mubr.f32.mxu0 0.0
      %1303 = vmatmul.mubr.f32.gmra.mrb[0].mxu0 %v1093
      %v1304 = vpop.f32.mrb[0].mxu0
      %v1305 = vadd.f32 0.0, %v1304
      %v1306 = vpop.f32.mrb[0].mxu0
      %1307 = vmatprep.mubr.f32.mxu0 0.0
      %1308 = vmatmul.mubr.f32.gmra.mrb[0].mxu0 %v1096
      %v1309 = vpop.f32.mrb[0].mxu0
      %v1310 = vadd.f32 0.0, %v1309
      %v1311 = vpop.f32.mrb[0].mxu0
      %1312 = vmatprep.mubr.f32.mxu0 0.0
      %1313 = vmatmul.mubr.f32.gmra.mrb[0].mxu0 %v1099
      %v1314 = vpop.f32.mrb[0].mxu0
      %v1315 = vadd.f32 0.0, %v1314
      %v1316 = vpop.f32.mrb[0].mxu0
      %1317 = vmatprep.mubr.f32.mxu0 0.0
      %1318 = vmatmul.mubr.f32.gmra.mrb[0].mxu0 %v1102
      %v1319 = vpop.f32.mrb[0].mxu0
      %v1320 = vadd.f32 0.0, %v1319
      %v1321 = vpop.f32.mrb[0].mxu0
      %1322 = vmatprep.mubr.f32.mxu0 0.0
      %1323 = vmatmul.mubr.f32.gmra.mrb[0].mxu0 %v1105
      %v1324 = vpop.f32.mrb[0].mxu0
      %v1325 = vadd.f32 0.0, %v1324
      %v1326 = vpop.f32.mrb[0].mxu0
      %1327 = vmatprep.mubr.f32.mxu0 0.0
      %1328 = vmatmul.mubr.f32.gmra.mrb[0].mxu0 %v1108
      %v1329 = vpop.f32.mrb[0].mxu0
      %v1330 = vadd.f32 0.0, %v1329
      %v1331 = vpop.f32.mrb[0].mxu0
      %1332 = vmatprep.mubr.f32.mxu0 0.0
      %1333 = vmatmul.mubr.f32.gmra.mrb[0].mxu0 %v1111
      %v1334 = vpop.f32.mrb[0].mxu0
      %v1335 = vadd.f32 0.0, %v1334
      %v1336 = vpop.f32.mrb[0].mxu0
      %1337 = vdwg.mxu0
      %v1339 = vsel %vm279, %v950, 0
      %v1342 = vsel %vm279, %v951, 0
      %v1345 = vsel %vm279, %v952, 0
      %v1348 = vsel %vm279, %v953, 0
      %v1351 = vsel %vm279, %v954, 0
      %v1354 = vsel %vm279, %v955, 0
      %v1357 = vsel %vm279, %v956, 0
      %v1360 = vsel %vm279, %v957, 0
      %v1363 = vsel %vm279, %v958, 0
      %v1366 = vsel %vm279, %v959, 0
      %v1369 = vsel %vm279, %v960, 0
      %v1372 = vsel %vm279, %v961, 0
      %v1375 = vsel %vm279, %v962, 0
      %v1378 = vsel %vm279, %v963, 0
      %v1381 = vsel %vm279, %v964, 0
      %v1384 = vsel %vm279, %v965, 0
      %v1387 = vsel %vm279, %v966, 0
      %v1390 = vsel %vm279, %v967, 0
      %v1393 = vsel %vm279, %v968, 0
      %v1396 = vsel %vm279, %v969, 0
      %v1399 = vsel %vm279, %v970, 0
      %v1402 = vsel %vm279, %v971, 0
      %v1405 = vsel %vm279, %v972, 0
      %v1408 = vsel %vm279, %v973, 0
      %v1411 = vsel %vm279, %v974, 0
      %v1414 = vsel %vm279, %v975, 0
      %v1417 = vsel %vm279, %v976, 0
      %v1420 = vsel %vm279, %v977, 0
      %v1423 = vsel %vm279, %v978, 0
      %v1426 = vsel %vm279, %v979, 0
      %v1429 = vsel %vm279, %v980, 0
      %v1432 = vsel %vm279, %v981, 0
      %1434 = vmatprep.subr.mxu0 0.0
      %1435 = vmatpush1.msra.mxu0 %v982
      %1436 = vmatprep.subr.mxu0 0.0
      %1437 = vmatpush1.msra.mxu0 0.0
      %1438 = vmatprep.subr.mxu0 0.0
      %1439 = vmatpush1.msra.mxu0 0.0
      %1440 = vmatprep.subr.mxu0 0.0
      %1441 = vmatpush1.msra.mxu0 0.0
      %1442 = vmatprep.subr.mxu0 0.0
      %1443 = vmatpush1.msra.mxu0 0.0
      %1444 = vmatprep.subr.mxu0 0.0
      %1445 = vmatpush1.msra.mxu0 0.0
      %1446 = vmatprep.subr.mxu0 0.0
      %1447 = vmatpush1.msra.mxu0 0.0
      %1448 = vmatprep.subr.mxu0 0.0
      %1449 = vmatpush1.msra.mxu0 0.0
      %1450 = vmatprep.subr.mxu0 0.0
      %1451 = vmatpush1.msra.mxu0 0.0
      %1452 = vmatprep.subr.mxu0 0.0
      %1453 = vmatpush1.msra.mxu0 0.0
      %1454 = vmatprep.subr.mxu0 0.0
      %1455 = vmatpush1.msra.mxu0 0.0
      %1456 = vmatprep.subr.mxu0 0.0
      %1457 = vmatpush1.msra.mxu0 0.0
      %1458 = vmatprep.subr.mxu0 0.0
      %1459 = vmatpush1.msra.mxu0 0.0
      %1460 = vmatprep.subr.mxu0 0.0
      %1461 = vmatpush1.msra.mxu0 0.0
      %1462 = vmatprep.subr.mxu0 0.0
      %1463 = vmatpush1.msra.mxu0 0.0
      %1464 = vmatprep.subr.mxu0 0.0
      %1465 = vmatpush1.msra.mxu0 0.0
      %1466 = vmatprep.subr.mxu0 0.0
      %1467 = vmatpush1.msra.mxu0 0.0
      %1468 = vmatprep.subr.mxu0 0.0
      %1469 = vmatpush1.msra.mxu0 0.0
      %1470 = vmatprep.subr.mxu0 0.0
      %1471 = vmatpush1.msra.mxu0 0.0
      %1472 = vmatprep.subr.mxu0 0.0
      %1473 = vmatpush1.msra.mxu0 0.0
      %1474 = vmatprep.subr.mxu0 0.0
      %1475 = vmatpush1.msra.mxu0 0.0
      %1476 = vmatprep.subr.mxu0 0.0
      %1477 = vmatpush1.msra.mxu0 0.0
      %1478 = vmatprep.subr.mxu0 0.0
      %1479 = vmatpush1.msra.mxu0 0.0
      %1480 = vmatprep.subr.mxu0 0.0
      %1481 = vmatpush1.msra.mxu0 0.0
      %1482 = vmatprep.subr.mxu0 0.0
      %1483 = vmatpush1.msra.mxu0 0.0
      %1484 = vmatprep.subr.mxu0 0.0
      %1485 = vmatpush1.msra.mxu0 0.0
      %1486 = vmatprep.subr.mxu0 0.0
      %1487 = vmatpush1.msra.mxu0 0.0
      %1488 = vmatprep.subr.mxu0 0.0
      %1489 = vmatpush1.msra.mxu0 0.0
      %1490 = vmatprep.subr.mxu0 0.0
      %1491 = vmatpush1.msra.mxu0 0.0
      %1492 = vmatprep.subr.mxu0 0.0
      %1493 = vmatpush1.msra.mxu0 0.0
      %1494 = vmatprep.subr.mxu0 0.0
      %1495 = vmatpush1.msra.mxu0 0.0
      %1496 = vmatprep.subr.mxu0 0.0
      %1497 = vmatpush1.msra.mxu0 0.0
      %1498 = vmatprep.mubr.f32.mxu0 0.0
      %1499 = vmatmul.mubr.f32.gmra.mrb[0].mxu0 %v1339
      %v1500 = vpop.f32.mrb[0].mxu0
      %v1501 = vadd.f32 %v1180, %v1500
      %v1502 = vpop.f32.mrb[0].mxu0
      %1503 = vmatprep.mubr.f32.mxu0 0.0
      %1504 = vmatmul.mubr.f32.gmra.mrb[0].mxu0 %v1342
      %v1505 = vpop.f32.mrb[0].mxu0
      %v1506 = vadd.f32 %v1185, %v1505
      %v1507 = vpop.f32.mrb[0].mxu0
      %1508 = vmatprep.mubr.f32.mxu0 0.0
      %1509 = vmatmul.mubr.f32.gmra.mrb[0].mxu0 %v1345
      %v1510 = vpop.f32.mrb[0].mxu0
      %v1511 = vadd.f32 %v1190, %v1510
      %v1512 = vpop.f32.mrb[0].mxu0
      %1513 = vmatprep.mubr.f32.mxu0 0.0
      %1514 = vmatmul.mubr.f32.gmra.mrb[0].mxu0 %v1348
      %v1515 = vpop.f32.mrb[0].mxu0
      %v1516 = vadd.f32 %v1195, %v1515
      %v1517 = vpop.f32.mrb[0].mxu0
      %1518 = vmatprep.mubr.f32.mxu0 0.0
      %1519 = vmatmul.mubr.f32.gmra.mrb[0].mxu0 %v1351
      %v1520 = vpop.f32.mrb[0].mxu0
      %v1521 = vadd.f32 %v1200, %v1520
      %v1522 = vpop.f32.mrb[0].mxu0
      %1523 = vmatprep.mubr.f32.mxu0 0.0
      %1524 = vmatmul.mubr.f32.gmra.mrb[0].mxu0 %v1354
      %v1525 = vpop.f32.mrb[0].mxu0
      %v1526 = vadd.f32 %v1205, %v1525
      %v1527 = vpop.f32.mrb[0].mxu0
      %1528 = vmatprep.mubr.f32.mxu0 0.0
      %1529 = vmatmul.mubr.f32.gmra.mrb[0].mxu0 %v1357
      %v1530 = vpop.f32.mrb[0].mxu0
      %v1531 = vadd.f32 %v1210, %v1530
      %v1532 = vpop.f32.mrb[0].mxu0
      %1533 = vmatprep.mubr.f32.mxu0 0.0
      %1534 = vmatmul.mubr.f32.gmra.mrb[0].mxu0 %v1360
      %v1535 = vpop.f32.mrb[0].mxu0
      %v1536 = vadd.f32 %v1215, %v1535
      %v1537 = vpop.f32.mrb[0].mxu0
      %1538 = vmatprep.mubr.f32.mxu0 0.0
      %1539 = vmatmul.mubr.f32.gmra.mrb[0].mxu0 %v1363
      %v1540 = vpop.f32.mrb[0].mxu0
      %v1541 = vadd.f32 %v1220, %v1540
      %v1542 = vpop.f32.mrb[0].mxu0
      %1543 = vmatprep.mubr.f32.mxu0 0.0
      %1544 = vmatmul.mubr.f32.gmra.mrb[0].mxu0 %v1366
      %v1545 = vpop.f32.mrb[0].mxu0
      %v1546 = vadd.f32 %v1225, %v1545
      %v1547 = vpop.f32.mrb[0].mxu0
      %1548 = vmatprep.mubr.f32.mxu0 0.0
      %1549 = vmatmul.mubr.f32.gmra.mrb[0].mxu0 %v1369
      %v1550 = vpop.f32.mrb[0].mxu0
      %v1551 = vadd.f32 %v1230, %v1550
      %v1552 = vpop.f32.mrb[0].mxu0
      %1553 = vmatprep.mubr.f32.mxu0 0.0
      %1554 = vmatmul.mubr.f32.gmra.mrb[0].mxu0 %v1372
      %v1555 = vpop.f32.mrb[0].mxu0
      %v1556 = vadd.f32 %v1235, %v1555
      %v1557 = vpop.f32.mrb[0].mxu0
      %1558 = vmatprep.mubr.f32.mxu0 0.0
      %1559 = vmatmul.mubr.f32.gmra.mrb[0].mxu0 %v1375
      %v1560 = vpop.f32.mrb[0].mxu0
      %v1561 = vadd.f32 %v1240, %v1560
      %v1562 = vpop.f32.mrb[0].mxu0
      %1563 = vmatprep.mubr.f32.mxu0 0.0
      %1564 = vmatmul.mubr.f32.gmra.mrb[0].mxu0 %v1378
      %v1565 = vpop.f32.mrb[0].mxu0
      %v1566 = vadd.f32 %v1245, %v1565
      %v1567 = vpop.f32.mrb[0].mxu0
      %1568 = vmatprep.mubr.f32.mxu0 0.0
      %1569 = vmatmul.mubr.f32.gmra.mrb[0].mxu0 %v1381
      %v1570 = vpop.f32.mrb[0].mxu0
      %v1571 = vadd.f32 %v1250, %v1570
      %v1572 = vpop.f32.mrb[0].mxu0
      %1573 = vmatprep.mubr.f32.mxu0 0.0
      %1574 = vmatmul.mubr.f32.gmra.mrb[0].mxu0 %v1384
      %v1575 = vpop.f32.mrb[0].mxu0
      %v1576 = vadd.f32 %v1255, %v1575
      %v1577 = vpop.f32.mrb[0].mxu0
      %1578 = vmatprep.mubr.f32.mxu0 0.0
      %1579 = vmatmul.mubr.f32.gmra.mrb[0].mxu0 %v1387
      %v1580 = vpop.f32.mrb[0].mxu0
      %v1581 = vadd.f32 %v1260, %v1580
      %v1582 = vpop.f32.mrb[0].mxu0
      %1583 = vmatprep.mubr.f32.mxu0 0.0
      %1584 = vmatmul.mubr.f32.gmra.mrb[0].mxu0 %v1390
      %v1585 = vpop.f32.mrb[0].mxu0
      %v1586 = vadd.f32 %v1265, %v1585
      %v1587 = vpop.f32.mrb[0].mxu0
      %1588 = vmatprep.mubr.f32.mxu0 0.0
      %1589 = vmatmul.mubr.f32.gmra.mrb[0].mxu0 %v1393
      %v1590 = vpop.f32.mrb[0].mxu0
      %v1591 = vadd.f32 %v1270, %v1590
      %v1592 = vpop.f32.mrb[0].mxu0
      %1593 = vmatprep.mubr.f32.mxu0 0.0
      %1594 = vmatmul.mubr.f32.gmra.mrb[0].mxu0 %v1396
      %v1595 = vpop.f32.mrb[0].mxu0
      %v1596 = vadd.f32 %v1275, %v1595
      %v1597 = vpop.f32.mrb[0].mxu0
      %1598 = vmatprep.mubr.f32.mxu0 0.0
      %1599 = vmatmul.mubr.f32.gmra.mrb[0].mxu0 %v1399
      %v1600 = vpop.f32.mrb[0].mxu0
      %v1601 = vadd.f32 %v1280, %v1600
      %v1602 = vpop.f32.mrb[0].mxu0
      %1603 = vmatprep.mubr.f32.mxu0 0.0
      %1604 = vmatmul.mubr.f32.gmra.mrb[0].mxu0 %v1402
      %v1605 = vpop.f32.mrb[0].mxu0
      %v1606 = vadd.f32 %v1285, %v1605
      %v1607 = vpop.f32.mrb[0].mxu0
      %1608 = vmatprep.mubr.f32.mxu0 0.0
      %1609 = vmatmul.mubr.f32.gmra.mrb[0].mxu0 %v1405
      %v1610 = vpop.f32.mrb[0].mxu0
      %v1611 = vadd.f32 %v1290, %v1610
      %v1612 = vpop.f32.mrb[0].mxu0
      %1613 = vmatprep.mubr.f32.mxu0 0.0
      %1614 = vmatmul.mubr.f32.gmra.mrb[0].mxu0 %v1408
      %v1615 = vpop.f32.mrb[0].mxu0
      %v1616 = vadd.f32 %v1295, %v1615
      %v1617 = vpop.f32.mrb[0].mxu0
      %1618 = vmatprep.mubr.f32.mxu0 0.0
      %1619 = vmatmul.mubr.f32.gmra.mrb[0].mxu0 %v1411
      %v1620 = vpop.f32.mrb[0].mxu0
      %v1621 = vadd.f32 %v1300, %v1620
      %v1622 = vpop.f32.mrb[0].mxu0
      %1623 = vmatprep.mubr.f32.mxu0 0.0
      %1624 = vmatmul.mubr.f32.gmra.mrb[0].mxu0 %v1414
      %v1625 = vpop.f32.mrb[0].mxu0
      %v1626 = vadd.f32 %v1305, %v1625
      %v1627 = vpop.f32.mrb[0].mxu0
      %1628 = vmatprep.mubr.f32.mxu0 0.0
      %1629 = vmatmul.mubr.f32.gmra.mrb[0].mxu0 %v1417
      %v1630 = vpop.f32.mrb[0].mxu0
      %v1631 = vadd.f32 %v1310, %v1630
      %v1632 = vpop.f32.mrb[0].mxu0
      %1633 = vmatprep.mubr.f32.mxu0 0.0
      %1634 = vmatmul.mubr.f32.gmra.mrb[0].mxu0 %v1420
      %v1635 = vpop.f32.mrb[0].mxu0
      %v1636 = vadd.f32 %v1315, %v1635
      %v1637 = vpop.f32.mrb[0].mxu0
      %1638 = vmatprep.mubr.f32.mxu0 0.0
      %1639 = vmatmul.mubr.f32.gmra.mrb[0].mxu0 %v1423
      %v1640 = vpop.f32.mrb[0].mxu0
      %v1641 = vadd.f32 %v1320, %v1640
      %v1642 = vpop.f32.mrb[0].mxu0
      %1643 = vmatprep.mubr.f32.mxu0 0.0
      %1644 = vmatmul.mubr.f32.gmra.mrb[0].mxu0 %v1426
      %v1645 = vpop.f32.mrb[0].mxu0
      %v1646 = vadd.f32 %v1325, %v1645
      %v1647 = vpop.f32.mrb[0].mxu0
      %1648 = vmatprep.mubr.f32.mxu0 0.0
      %1649 = vmatmul.mubr.f32.gmra.mrb[0].mxu0 %v1429
      %v1650 = vpop.f32.mrb[0].mxu0
      %v1651 = vadd.f32 %v1330, %v1650
      %v1652 = vpop.f32.mrb[0].mxu0
      %1653 = vmatprep.mubr.f32.mxu0 0.0
      %1654 = vmatmul.mubr.f32.gmra.mrb[0].mxu0 %v1432
      %v1655 = vpop.f32.mrb[0].mxu0
      %v1656 = vadd.f32 %v1335, %v1655
      %v1657 = vpop.f32.mrb[0].mxu0
      %1658 = vdwg.mxu0
      %v1659 = vld [vmem:[#allocation2 + $0x2] sm:$0xff]
      %v1660 = vld [vmem:[#allocation2 + $0xa] sm:$0xff]
      %v1661 = vld [vmem:[#allocation2 + $0x1a] sm:$0xff]
      %v1662 = vld [vmem:[#allocation2 + $0x22] sm:$0xff]
      %v1663 = vld [vmem:[#allocation2 + $0x32] sm:$0xff]
      %v1664 = vld [vmem:[#allocation2 + $0x3a] sm:$0xff]
      %v1665 = vld [vmem:[#allocation2 + $0x4a] sm:$0xff]
      %v1666 = vld [vmem:[#allocation2 + $0x52] sm:$0xff]
      %v1667 = vld [vmem:[#allocation2 + $0x62] sm:$0xff]
      %v1668 = vld [vmem:[#allocation2 + $0x6a] sm:$0xff]
      %v1669 = vld [vmem:[#allocation2 + $0x7a] sm:$0xff]
      %v1670 = vld [vmem:[#allocation2 + $0x82] sm:$0xff]
      %v1671 = vld [vmem:[#allocation2 + $0x92] sm:$0xff]
      %v1672 = vld [vmem:[#allocation2 + $0x9a] sm:$0xff]
      %v1673 = vld [vmem:[#allocation2 + $0xaa] sm:$0xff]
      %v1674 = vld [vmem:[#allocation2 + $0xb2] sm:$0xff]
      %v1675 = vld [vmem:[#allocation2 + $0xc2] sm:$0xff]
      %v1676 = vld [vmem:[#allocation2 + $0xca] sm:$0xff]
      %v1677 = vld [vmem:[#allocation2 + $0xda] sm:$0xff]
      %v1678 = vld [vmem:[#allocation2 + $0xe2] sm:$0xff]
      %v1679 = vld [vmem:[#allocation2 + $0xf2] sm:$0xff]
      %v1680 = vld [vmem:[#allocation2 + $0xfa] sm:$0xff]
      %v1681 = vld [vmem:[#allocation2 + $0x10a] sm:$0xff]
      %v1682 = vld [vmem:[#allocation2 + $0x112] sm:$0xff]
      %v1683 = vld [vmem:[#allocation2 + $0x122] sm:$0xff]
      %v1684 = vld [vmem:[#allocation2 + $0x12a] sm:$0xff]
      %v1685 = vld [vmem:[#allocation2 + $0x13a] sm:$0xff]
      %v1686 = vld [vmem:[#allocation2 + $0x142] sm:$0xff]
      %v1687 = vld [vmem:[#allocation2 + $0x152] sm:$0xff]
      %v1688 = vld [vmem:[#allocation2 + $0x15a] sm:$0xff]
      %v1689 = vld [vmem:[#allocation2 + $0x16a] sm:$0xff]
      %v1690 = vld [vmem:[#allocation2 + $0x172] sm:$0xff]
      %s1691 = scalar_lea.vmem %s3, 16
      %v1692 = vld [vmem:[%s1691] sm:$0xff]
      %v1694 = vsel %vm279, %v1659, 0
      %v1697 = vsel %vm279, %v1660, 0
      %v1700 = vsel %vm279, %v1661, 0
      %v1703 = vsel %vm279, %v1662, 0
      %v1706 = vsel %vm279, %v1663, 0
      %v1709 = vsel %vm279, %v1664, 0
      %v1712 = vsel %vm279, %v1665, 0
      %v1715 = vsel %vm279, %v1666, 0
      %v1718 = vsel %vm279, %v1667, 0
      %v1721 = vsel %vm279, %v1668, 0
      %v1724 = vsel %vm279, %v1669, 0
      %v1727 = vsel %vm279, %v1670, 0
      %v1730 = vsel %vm279, %v1671, 0
      %v1733 = vsel %vm279, %v1672, 0
      %v1736 = vsel %vm279, %v1673, 0
      %v1739 = vsel %vm279, %v1674, 0
      %v1742 = vsel %vm279, %v1675, 0
      %v1745 = vsel %vm279, %v1676, 0
      %v1748 = vsel %vm279, %v1677, 0
      %v1751 = vsel %vm279, %v1678, 0
      %v1754 = vsel %vm279, %v1679, 0
      %v1757 = vsel %vm279, %v1680, 0
      %v1760 = vsel %vm279, %v1681, 0
      %v1763 = vsel %vm279, %v1682, 0
      %v1766 = vsel %vm279, %v1683, 0
      %v1769 = vsel %vm279, %v1684, 0
      %v1772 = vsel %vm279, %v1685, 0
      %v1775 = vsel %vm279, %v1686, 0
      %v1778 = vsel %vm279, %v1687, 0
      %v1781 = vsel %vm279, %v1688, 0
      %v1784 = vsel %vm279, %v1689, 0
      %v1787 = vsel %vm279, %v1690, 0
      %1789 = vmatprep.subr.mxu0 0.0
      %1790 = vmatpush1.msra.mxu0 %v1692
      %1791 = vmatprep.subr.mxu0 0.0
      %1792 = vmatpush1.msra.mxu0 0.0
      %1793 = vmatprep.subr.mxu0 0.0
      %1794 = vmatpush1.msra.mxu0 0.0
      %1795 = vmatprep.subr.mxu0 0.0
      %1796 = vmatpush1.msra.mxu0 0.0
      %1797 = vmatprep.subr.mxu0 0.0
      %1798 = vmatpush1.msra.mxu0 0.0
      %1799 = vmatprep.subr.mxu0 0.0
      %1800 = vmatpush1.msra.mxu0 0.0
      %1801 = vmatprep.subr.mxu0 0.0
      %1802 = vmatpush1.msra.mxu0 0.0
      %1803 = vmatprep.subr.mxu0 0.0
      %1804 = vmatpush1.msra.mxu0 0.0
      %1805 = vmatprep.subr.mxu0 0.0
      %1806 = vmatpush1.msra.mxu0 0.0
      %1807 = vmatprep.subr.mxu0 0.0
      %1808 = vmatpush1.msra.mxu0 0.0
      %1809 = vmatprep.subr.mxu0 0.0
      %1810 = vmatpush1.msra.mxu0 0.0
      %1811 = vmatprep.subr.mxu0 0.0
      %1812 = vmatpush1.msra.mxu0 0.0
      %1813 = vmatprep.subr.mxu0 0.0
      %1814 = vmatpush1.msra.mxu0 0.0
      %1815 = vmatprep.subr.mxu0 0.0
      %1816 = vmatpush1.msra.mxu0 0.0
      %1817 = vmatprep.subr.mxu0 0.0
      %1818 = vmatpush1.msra.mxu0 0.0
      %1819 = vmatprep.subr.mxu0 0.0
      %1820 = vmatpush1.msra.mxu0 0.0
      %1821 = vmatprep.subr.mxu0 0.0
      %1822 = vmatpush1.msra.mxu0 0.0
      %1823 = vmatprep.subr.mxu0 0.0
      %1824 = vmatpush1.msra.mxu0 0.0
      %1825 = vmatprep.subr.mxu0 0.0
      %1826 = vmatpush1.msra.mxu0 0.0
      %1827 = vmatprep.subr.mxu0 0.0
      %1828 = vmatpush1.msra.mxu0 0.0
      %1829 = vmatprep.subr.mxu0 0.0
      %1830 = vmatpush1.msra.mxu0 0.0
      %1831 = vmatprep.subr.mxu0 0.0
      %1832 = vmatpush1.msra.mxu0 0.0
      %1833 = vmatprep.subr.mxu0 0.0
      %1834 = vmatpush1.msra.mxu0 0.0
      %1835 = vmatprep.subr.mxu0 0.0
      %1836 = vmatpush1.msra.mxu0 0.0
      %1837 = vmatprep.subr.mxu0 0.0
      %1838 = vmatpush1.msra.mxu0 0.0
      %1839 = vmatprep.subr.mxu0 0.0
      %1840 = vmatpush1.msra.mxu0 0.0
      %1841 = vmatprep.subr.mxu0 0.0
      %1842 = vmatpush1.msra.mxu0 0.0
      %1843 = vmatprep.subr.mxu0 0.0
      %1844 = vmatpush1.msra.mxu0 0.0
      %1845 = vmatprep.subr.mxu0 0.0
      %1846 = vmatpush1.msra.mxu0 0.0
      %1847 = vmatprep.subr.mxu0 0.0
      %1848 = vmatpush1.msra.mxu0 0.0
      %1849 = vmatprep.subr.mxu0 0.0
      %1850 = vmatpush1.msra.mxu0 0.0
      %1851 = vmatprep.subr.mxu0 0.0
      %1852 = vmatpush1.msra.mxu0 0.0
      %1853 = vmatprep.mubr.f32.mxu0 0.0
      %1854 = vmatmul.mubr.f32.gmra.mrb[0].mxu0 %v1694
      %v1855 = vpop.f32.mrb[0].mxu0
      %v1856 = vadd.f32 0.0, %v1855
      %v1857 = vpop.f32.mrb[0].mxu0
      %1858 = vmatprep.mubr.f32.mxu0 0.0
      %1859 = vmatmul.mubr.f32.gmra.mrb[0].mxu0 %v1697
      %v1860 = vpop.f32.mrb[0].mxu0
      %v1861 = vadd.f32 0.0, %v1860
      %v1862 = vpop.f32.mrb[0].mxu0
      %1863 = vmatprep.mubr.f32.mxu0 0.0
      %1864 = vmatmul.mubr.f32.gmra.mrb[0].mxu0 %v1700
      %v1865 = vpop.f32.mrb[0].mxu0
      %v1866 = vadd.f32 0.0, %v1865
      %v1867 = vpop.f32.mrb[0].mxu0
      %1868 = vmatprep.mubr.f32.mxu0 0.0
      %1869 = vmatmul.mubr.f32.gmra.mrb[0].mxu0 %v1703
      %v1870 = vpop.f32.mrb[0].mxu0
      %v1871 = vadd.f32 0.0, %v1870
      %v1872 = vpop.f32.mrb[0].mxu0
      %1873 = vmatprep.mubr.f32.mxu0 0.0
      %1874 = vmatmul.mubr.f32.gmra.mrb[0].mxu0 %v1706
      %v1875 = vpop.f32.mrb[0].mxu0
      %v1876 = vadd.f32 0.0, %v1875
      %v1877 = vpop.f32.mrb[0].mxu0
      %1878 = vmatprep.mubr.f32.mxu0 0.0
      %1879 = vmatmul.mubr.f32.gmra.mrb[0].mxu0 %v1709
      %v1880 = vpop.f32.mrb[0].mxu0
      %v1881 = vadd.f32 0.0, %v1880
      %v1882 = vpop.f32.mrb[0].mxu0
      %1883 = vmatprep.mubr.f32.mxu0 0.0
      %1884 = vmatmul.mubr.f32.gmra.mrb[0].mxu0 %v1712
      %v1885 = vpop.f32.mrb[0].mxu0
      %v1886 = vadd.f32 0.0, %v1885
      %v1887 = vpop.f32.mrb[0].mxu0
      %1888 = vmatprep.mubr.f32.mxu0 0.0
      %1889 = vmatmul.mubr.f32.gmra.mrb[0].mxu0 %v1715
      %v1890 = vpop.f32.mrb[0].mxu0
      %v1891 = vadd.f32 0.0, %v1890
      %v1892 = vpop.f32.mrb[0].mxu0
      %1893 = vmatprep.mubr.f32.mxu0 0.0
      %1894 = vmatmul.mubr.f32.gmra.mrb[0].mxu0 %v1718
      %v1895 = vpop.f32.mrb[0].mxu0
      %v1896 = vadd.f32 0.0, %v1895
      %v1897 = vpop.f32.mrb[0].mxu0
      %1898 = vmatprep.mubr.f32.mxu0 0.0
      %1899 = vmatmul.mubr.f32.gmra.mrb[0].mxu0 %v1721
      %v1900 = vpop.f32.mrb[0].mxu0
      %v1901 = vadd.f32 0.0, %v1900
      %v1902 = vpop.f32.mrb[0].mxu0
      %1903 = vmatprep.mubr.f32.mxu0 0.0
      %1904 = vmatmul.mubr.f32.gmra.mrb[0].mxu0 %v1724
      %v1905 = vpop.f32.mrb[0].mxu0
      %v1906 = vadd.f32 0.0, %v1905
      %v1907 = vpop.f32.mrb[0].mxu0
      %1908 = vmatprep.mubr.f32.mxu0 0.0
      %1909 = vmatmul.mubr.f32.gmra.mrb[0].mxu0 %v1727
      %v1910 = vpop.f32.mrb[0].mxu0
      %v1911 = vadd.f32 0.0, %v1910
      %v1912 = vpop.f32.mrb[0].mxu0
      %1913 = vmatprep.mubr.f32.mxu0 0.0
      %1914 = vmatmul.mubr.f32.gmra.mrb[0].mxu0 %v1730
      %v1915 = vpop.f32.mrb[0].mxu0
      %v1916 = vadd.f32 0.0, %v1915
      %v1917 = vpop.f32.mrb[0].mxu0
      %1918 = vmatprep.mubr.f32.mxu0 0.0
      %1919 = vmatmul.mubr.f32.gmra.mrb[0].mxu0 %v1733
      %v1920 = vpop.f32.mrb[0].mxu0
      %v1921 = vadd.f32 0.0, %v1920
      %v1922 = vpop.f32.mrb[0].mxu0
      %1923 = vmatprep.mubr.f32.mxu0 0.0
      %1924 = vmatmul.mubr.f32.gmra.mrb[0].mxu0 %v1736
      %v1925 = vpop.f32.mrb[0].mxu0
      %v1926 = vadd.f32 0.0, %v1925
      %v1927 = vpop.f32.mrb[0].mxu0
      %1928 = vmatprep.mubr.f32.mxu0 0.0
      %1929 = vmatmul.mubr.f32.gmra.mrb[0].mxu0 %v1739
      %v1930 = vpop.f32.mrb[0].mxu0
      %v1931 = vadd.f32 0.0, %v1930
      %v1932 = vpop.f32.mrb[0].mxu0
      %1933 = vmatprep.mubr.f32.mxu0 0.0
      %1934 = vmatmul.mubr.f32.gmra.mrb[0].mxu0 %v1742
      %v1935 = vpop.f32.mrb[0].mxu0
      %v1936 = vadd.f32 0.0, %v1935
      %v1937 = vpop.f32.mrb[0].mxu0
      %1938 = vmatprep.mubr.f32.mxu0 0.0
      %1939 = vmatmul.mubr.f32.gmra.mrb[0].mxu0 %v1745
      %v1940 = vpop.f32.mrb[0].mxu0
      %v1941 = vadd.f32 0.0, %v1940
      %v1942 = vpop.f32.mrb[0].mxu0
      %1943 = vmatprep.mubr.f32.mxu0 0.0
      %1944 = vmatmul.mubr.f32.gmra.mrb[0].mxu0 %v1748
      %v1945 = vpop.f32.mrb[0].mxu0
      %v1946 = vadd.f32 0.0, %v1945
      %v1947 = vpop.f32.mrb[0].mxu0
      %1948 = vmatprep.mubr.f32.mxu0 0.0
      %1949 = vmatmul.mubr.f32.gmra.mrb[0].mxu0 %v1751
      %v1950 = vpop.f32.mrb[0].mxu0
      %v1951 = vadd.f32 0.0, %v1950
      %v1952 = vpop.f32.mrb[0].mxu0
      %1953 = vmatprep.mubr.f32.mxu0 0.0
      %1954 = vmatmul.mubr.f32.gmra.mrb[0].mxu0 %v1754
      %v1955 = vpop.f32.mrb[0].mxu0
      %v1956 = vadd.f32 0.0, %v1955
      %v1957 = vpop.f32.mrb[0].mxu0
      %1958 = vmatprep.mubr.f32.mxu0 0.0
      %1959 = vmatmul.mubr.f32.gmra.mrb[0].mxu0 %v1757
      %v1960 = vpop.f32.mrb[0].mxu0
      %v1961 = vadd.f32 0.0, %v1960
      %v1962 = vpop.f32.mrb[0].mxu0
      %1963 = vmatprep.mubr.f32.mxu0 0.0
      %1964 = vmatmul.mubr.f32.gmra.mrb[0].mxu0 %v1760
      %v1965 = vpop.f32.mrb[0].mxu0
      %v1966 = vadd.f32 0.0, %v1965
      %v1967 = vpop.f32.mrb[0].mxu0
      %1968 = vmatprep.mubr.f32.mxu0 0.0
      %1969 = vmatmul.mubr.f32.gmra.mrb[0].mxu0 %v1763
      %v1970 = vpop.f32.mrb[0].mxu0
      %v1971 = vadd.f32 0.0, %v1970
      %v1972 = vpop.f32.mrb[0].mxu0
      %1973 = vmatprep.mubr.f32.mxu0 0.0
      %1974 = vmatmul.mubr.f32.gmra.mrb[0].mxu0 %v1766
      %v1975 = vpop.f32.mrb[0].mxu0
      %v1976 = vadd.f32 0.0, %v1975
      %v1977 = vpop.f32.mrb[0].mxu0
      %1978 = vmatprep.mubr.f32.mxu0 0.0
      %1979 = vmatmul.mubr.f32.gmra.mrb[0].mxu0 %v1769
      %v1980 = vpop.f32.mrb[0].mxu0
      %v1981 = vadd.f32 0.0, %v1980
      %v1982 = vpop.f32.mrb[0].mxu0
      %1983 = vmatprep.mubr.f32.mxu0 0.0
      %1984 = vmatmul.mubr.f32.gmra.mrb[0].mxu0 %v1772
      %v1985 = vpop.f32.mrb[0].mxu0
      %v1986 = vadd.f32 0.0, %v1985
      %v1987 = vpop.f32.mrb[0].mxu0
      %1988 = vmatprep.mubr.f32.mxu0 0.0
      %1989 = vmatmul.mubr.f32.gmra.mrb[0].mxu0 %v1775
      %v1990 = vpop.f32.mrb[0].mxu0
      %v1991 = vadd.f32 0.0, %v1990
      %v1992 = vpop.f32.mrb[0].mxu0
      %1993 = vmatprep.mubr.f32.mxu0 0.0
      %1994 = vmatmul.mubr.f32.gmra.mrb[0].mxu0 %v1778
      %v1995 = vpop.f32.mrb[0].mxu0
      %v1996 = vadd.f32 0.0, %v1995
      %v1997 = vpop.f32.mrb[0].mxu0
      %1998 = vmatprep.mubr.f32.mxu0 0.0
      %1999 = vmatmul.mubr.f32.gmra.mrb[0].mxu0 %v1781
      %v2000 = vpop.f32.mrb[0].mxu0
      %v2001 = vadd.f32 0.0, %v2000
      %v2002 = vpop.f32.mrb[0].mxu0
      %2003 = vmatprep.mubr.f32.mxu0 0.0
      %2004 = vmatmul.mubr.f32.gmra.mrb[0].mxu0 %v1784
      %v2005 = vpop.f32.mrb[0].mxu0
      %v2006 = vadd.f32 0.0, %v2005
      %v2007 = vpop.f32.mrb[0].mxu0
      %2008 = vmatprep.mubr.f32.mxu0 0.0
      %2009 = vmatmul.mubr.f32.gmra.mrb[0].mxu0 %v1787
      %v2010 = vpop.f32.mrb[0].mxu0
      %v2011 = vadd.f32 0.0, %v2010
      %v2012 = vpop.f32.mrb[0].mxu0
      %2013 = vdwg.mxu0
      %v2014 = vadd.f32 %v1501, %v1856
      %v2015 = vadd.f32 %v1506, %v1861
      %v2016 = vadd.f32 %v1511, %v1866
      %v2017 = vadd.f32 %v1516, %v1871
      %v2018 = vadd.f32 %v1521, %v1876
      %v2019 = vadd.f32 %v1526, %v1881
      %v2020 = vadd.f32 %v1531, %v1886
      %v2021 = vadd.f32 %v1536, %v1891
      %v2022 = vadd.f32 %v1541, %v1896
      %v2023 = vadd.f32 %v1546, %v1901
      %v2024 = vadd.f32 %v1551, %v1906
      %v2025 = vadd.f32 %v1556, %v1911
      %v2026 = vadd.f32 %v1561, %v1916
      %v2027 = vadd.f32 %v1566, %v1921
      %v2028 = vadd.f32 %v1571, %v1926
      %v2029 = vadd.f32 %v1576, %v1931
      %v2030 = vadd.f32 %v1581, %v1936
      %v2031 = vadd.f32 %v1586, %v1941
      %v2032 = vadd.f32 %v1591, %v1946
      %v2033 = vadd.f32 %v1596, %v1951
      %v2034 = vadd.f32 %v1601, %v1956
      %v2035 = vadd.f32 %v1606, %v1961
      %v2036 = vadd.f32 %v1611, %v1966
      %v2037 = vadd.f32 %v1616, %v1971
      %v2038 = vadd.f32 %v1621, %v1976
      %v2039 = vadd.f32 %v1626, %v1981
      %v2040 = vadd.f32 %v1631, %v1986
      %v2041 = vadd.f32 %v1636, %v1991
      %v2042 = vadd.f32 %v1641, %v1996
      %v2043 = vadd.f32 %v1646, %v2001
      %v2044 = vadd.f32 %v1651, %v2006
      %v2045 = vadd.f32 %v1656, %v2011
      %v2046 = vld [vmem:[%s917] sm:$0xff]
      %v2047 = vld [vmem:[%s917 + $0x8] sm:$0xff]
      %v2048 = vld [vmem:[%s917 + $0x18] sm:$0xff]
      %v2049 = vld [vmem:[%s917 + $0x20] sm:$0xff]
      %v2050 = vld [vmem:[%s917 + $0x30] sm:$0xff]
      %v2051 = vld [vmem:[%s917 + $0x38] sm:$0xff]
      %v2052 = vld [vmem:[%s917 + $0x48] sm:$0xff]
      %v2053 = vld [vmem:[%s917 + $0x50] sm:$0xff]
      %v2054 = vld [vmem:[%s917 + $0x60] sm:$0xff]
      %v2055 = vld [vmem:[%s917 + $0x68] sm:$0xff]
      %v2056 = vld [vmem:[%s917 + $0x78] sm:$0xff]
      %v2057 = vld [vmem:[%s917 + $0x80] sm:$0xff]
      %v2058 = vld [vmem:[%s917 + $0x90] sm:$0xff]
      %v2059 = vld [vmem:[%s917 + $0x98] sm:$0xff]
      %v2060 = vld [vmem:[%s917 + $0xa8] sm:$0xff]
      %v2061 = vld [vmem:[%s917 + $0xb0] sm:$0xff]
      %v2062 = vld [vmem:[%s917 + $0xc0] sm:$0xff]
      %v2063 = vld [vmem:[%s917 + $0xc8] sm:$0xff]
      %v2064 = vld [vmem:[%s917 + $0xd8] sm:$0xff]
      %v2065 = vld [vmem:[%s917 + $0xe0] sm:$0xff]
      %v2066 = vld [vmem:[%s917 + $0xf0] sm:$0xff]
      %v2067 = vld [vmem:[%s917 + $0xf8] sm:$0xff]
      %v2068 = vld [vmem:[%s917 + $0x108] sm:$0xff]
      %v2069 = vld [vmem:[%s917 + $0x110] sm:$0xff]
      %v2070 = vld [vmem:[%s917 + $0x120] sm:$0xff]
      %v2071 = vld [vmem:[%s917 + $0x128] sm:$0xff]
      %v2072 = vld [vmem:[%s917 + $0x138] sm:$0xff]
      %v2073 = vld [vmem:[%s917 + $0x140] sm:$0xff]
      %v2074 = vld [vmem:[%s917 + $0x150] sm:$0xff]
      %v2075 = vld [vmem:[%s917 + $0x158] sm:$0xff]
      %v2076 = vld [vmem:[%s917 + $0x168] sm:$0xff]
      %v2077 = vld [vmem:[%s917 + $0x170] sm:$0xff]
      %s2078 = scalar_lea.vmem %s3, 24
      %v2079 = vld [vmem:[%s2078] sm:$0xff]
      %v2081 = vsel %vm279, %v2046, 0
      %v2084 = vsel %vm279, %v2047, 0
      %v2087 = vsel %vm279, %v2048, 0
      %v2090 = vsel %vm279, %v2049, 0
      %v2093 = vsel %vm279, %v2050, 0
      %v2096 = vsel %vm279, %v2051, 0
      %v2099 = vsel %vm279, %v2052, 0
      %v2102 = vsel %vm279, %v2053, 0
      %v2105 = vsel %vm279, %v2054, 0
      %v2108 = vsel %vm279, %v2055, 0
      %v2111 = vsel %vm279, %v2056, 0
      %v2114 = vsel %vm279, %v2057, 0
      %v2117 = vsel %vm279, %v2058, 0
      %v2120 = vsel %vm279, %v2059, 0
      %v2123 = vsel %vm279, %v2060, 0
      %v2126 = vsel %vm279, %v2061, 0
      %v2129 = vsel %vm279, %v2062, 0
      %v2132 = vsel %vm279, %v2063, 0
      %v2135 = vsel %vm279, %v2064, 0
      %v2138 = vsel %vm279, %v2065, 0
      %v2141 = vsel %vm279, %v2066, 0
      %v2144 = vsel %vm279, %v2067, 0
      %v2147 = vsel %vm279, %v2068, 0
      %v2150 = vsel %vm279, %v2069, 0
      %v2153 = vsel %vm279, %v2070, 0
      %v2156 = vsel %vm279, %v2071, 0
      %v2159 = vsel %vm279, %v2072, 0
      %v2162 = vsel %vm279, %v2073, 0
      %v2165 = vsel %vm279, %v2074, 0
      %v2168 = vsel %vm279, %v2075, 0
      %v2171 = vsel %vm279, %v2076, 0
      %v2174 = vsel %vm279, %v2077, 0
      %2176 = vmatprep.subr.mxu0 0.0
      %2177 = vmatpush1.msra.mxu0 %v2079
      %2178 = vmatprep.subr.mxu0 0.0
      %2179 = vmatpush1.msra.mxu0 0.0
      %2180 = vmatprep.subr.mxu0 0.0
      %2181 = vmatpush1.msra.mxu0 0.0
      %2182 = vmatprep.subr.mxu0 0.0
      %2183 = vmatpush1.msra.mxu0 0.0
      %2184 = vmatprep.subr.mxu0 0.0
      %2185 = vmatpush1.msra.mxu0 0.0
      %2186 = vmatprep.subr.mxu0 0.0
      %2187 = vmatpush1.msra.mxu0 0.0
      %2188 = vmatprep.subr.mxu0 0.0
      %2189 = vmatpush1.msra.mxu0 0.0
      %2190 = vmatprep.subr.mxu0 0.0
      %2191 = vmatpush1.msra.mxu0 0.0
      %2192 = vmatprep.subr.mxu0 0.0
      %2193 = vmatpush1.msra.mxu0 0.0
      %2194 = vmatprep.subr.mxu0 0.0
      %2195 = vmatpush1.msra.mxu0 0.0
      %2196 = vmatprep.subr.mxu0 0.0
      %2197 = vmatpush1.msra.mxu0 0.0
      %2198 = vmatprep.subr.mxu0 0.0
      %2199 = vmatpush1.msra.mxu0 0.0
      %2200 = vmatprep.subr.mxu0 0.0
      %2201 = vmatpush1.msra.mxu0 0.0
      %2202 = vmatprep.subr.mxu0 0.0
      %2203 = vmatpush1.msra.mxu0 0.0
      %2204 = vmatprep.subr.mxu0 0.0
      %2205 = vmatpush1.msra.mxu0 0.0
      %2206 = vmatprep.subr.mxu0 0.0
      %2207 = vmatpush1.msra.mxu0 0.0
      %2208 = vmatprep.subr.mxu0 0.0
      %2209 = vmatpush1.msra.mxu0 0.0
      %2210 = vmatprep.subr.mxu0 0.0
      %2211 = vmatpush1.msra.mxu0 0.0
      %2212 = vmatprep.subr.mxu0 0.0
      %2213 = vmatpush1.msra.mxu0 0.0
      %2214 = vmatprep.subr.mxu0 0.0
      %2215 = vmatpush1.msra.mxu0 0.0
      %2216 = vmatprep.subr.mxu0 0.0
      %2217 = vmatpush1.msra.mxu0 0.0
      %2218 = vmatprep.subr.mxu0 0.0
      %2219 = vmatpush1.msra.mxu0 0.0
      %2220 = vmatprep.subr.mxu0 0.0
      %2221 = vmatpush1.msra.mxu0 0.0
      %2222 = vmatprep.subr.mxu0 0.0
      %2223 = vmatpush1.msra.mxu0 0.0
      %2224 = vmatprep.subr.mxu0 0.0
      %2225 = vmatpush1.msra.mxu0 0.0
      %2226 = vmatprep.subr.mxu0 0.0
      %2227 = vmatpush1.msra.mxu0 0.0
      %2228 = vmatprep.subr.mxu0 0.0
      %2229 = vmatpush1.msra.mxu0 0.0
      %2230 = vmatprep.subr.mxu0 0.0
      %2231 = vmatpush1.msra.mxu0 0.0
      %2232 = vmatprep.subr.mxu0 0.0
      %2233 = vmatpush1.msra.mxu0 0.0
      %2234 = vmatprep.subr.mxu0 0.0
      %2235 = vmatpush1.msra.mxu0 0.0
      %2236 = vmatprep.subr.mxu0 0.0
      %2237 = vmatpush1.msra.mxu0 0.0
      %2238 = vmatprep.subr.mxu0 0.0
      %2239 = vmatpush1.msra.mxu0 0.0
      %2240 = vmatprep.mubr.f32.mxu0 0.0
      %2241 = vmatmul.mubr.f32.gmra.mrb[0].mxu0 %v2081
      %v2242 = vpop.f32.mrb[0].mxu0
      %v2243 = vadd.f32 0.0, %v2242
      %v2244 = vpop.f32.mrb[0].mxu0
      %2245 = vmatprep.mubr.f32.mxu0 0.0
      %2246 = vmatmul.mubr.f32.gmra.mrb[0].mxu0 %v2084
      %v2247 = vpop.f32.mrb[0].mxu0
      %v2248 = vadd.f32 0.0, %v2247
      %v2249 = vpop.f32.mrb[0].mxu0
      %2250 = vmatprep.mubr.f32.mxu0 0.0
      %2251 = vmatmul.mubr.f32.gmra.mrb[0].mxu0 %v2087
      %v2252 = vpop.f32.mrb[0].mxu0
      %v2253 = vadd.f32 0.0, %v2252
      %v2254 = vpop.f32.mrb[0].mxu0
      %2255 = vmatprep.mubr.f32.mxu0 0.0
      %2256 = vmatmul.mubr.f32.gmra.mrb[0].mxu0 %v2090
      %v2257 = vpop.f32.mrb[0].mxu0
      %v2258 = vadd.f32 0.0, %v2257
      %v2259 = vpop.f32.mrb[0].mxu0
      %2260 = vmatprep.mubr.f32.mxu0 0.0
      %2261 = vmatmul.mubr.f32.gmra.mrb[0].mxu0 %v2093
      %v2262 = vpop.f32.mrb[0].mxu0
      %v2263 = vadd.f32 0.0, %v2262
      %v2264 = vpop.f32.mrb[0].mxu0
      %2265 = vmatprep.mubr.f32.mxu0 0.0
      %2266 = vmatmul.mubr.f32.gmra.mrb[0].mxu0 %v2096
      %v2267 = vpop.f32.mrb[0].mxu0
      %v2268 = vadd.f32 0.0, %v2267
      %v2269 = vpop.f32.mrb[0].mxu0
      %2270 = vmatprep.mubr.f32.mxu0 0.0
      %2271 = vmatmul.mubr.f32.gmra.mrb[0].mxu0 %v2099
      %v2272 = vpop.f32.mrb[0].mxu0
      %v2273 = vadd.f32 0.0, %v2272
      %v2274 = vpop.f32.mrb[0].mxu0
      %2275 = vmatprep.mubr.f32.mxu0 0.0
      %2276 = vmatmul.mubr.f32.gmra.mrb[0].mxu0 %v2102
      %v2277 = vpop.f32.mrb[0].mxu0
      %v2278 = vadd.f32 0.0, %v2277
      %v2279 = vpop.f32.mrb[0].mxu0
      %2280 = vmatprep.mubr.f32.mxu0 0.0
      %2281 = vmatmul.mubr.f32.gmra.mrb[0].mxu0 %v2105
      %v2282 = vpop.f32.mrb[0].mxu0
      %v2283 = vadd.f32 0.0, %v2282
      %v2284 = vpop.f32.mrb[0].mxu0
      %2285 = vmatprep.mubr.f32.mxu0 0.0
      %2286 = vmatmul.mubr.f32.gmra.mrb[0].mxu0 %v2108
      %v2287 = vpop.f32.mrb[0].mxu0
      %v2288 = vadd.f32 0.0, %v2287
      %v2289 = vpop.f32.mrb[0].mxu0
      %2290 = vmatprep.mubr.f32.mxu0 0.0
      %2291 = vmatmul.mubr.f32.gmra.mrb[0].mxu0 %v2111
      %v2292 = vpop.f32.mrb[0].mxu0
      %v2293 = vadd.f32 0.0, %v2292
      %v2294 = vpop.f32.mrb[0].mxu0
      %2295 = vmatprep.mubr.f32.mxu0 0.0
      %2296 = vmatmul.mubr.f32.gmra.mrb[0].mxu0 %v2114
      %v2297 = vpop.f32.mrb[0].mxu0
      %v2298 = vadd.f32 0.0, %v2297
      %v2299 = vpop.f32.mrb[0].mxu0
      %2300 = vmatprep.mubr.f32.mxu0 0.0
      %2301 = vmatmul.mubr.f32.gmra.mrb[0].mxu0 %v2117
      %v2302 = vpop.f32.mrb[0].mxu0
      %v2303 = vadd.f32 0.0, %v2302
      %v2304 = vpop.f32.mrb[0].mxu0
      %2305 = vmatprep.mubr.f32.mxu0 0.0
      %2306 = vmatmul.mubr.f32.gmra.mrb[0].mxu0 %v2120
      %v2307 = vpop.f32.mrb[0].mxu0
      %v2308 = vadd.f32 0.0, %v2307
      %v2309 = vpop.f32.mrb[0].mxu0
      %2310 = vmatprep.mubr.f32.mxu0 0.0
      %2311 = vmatmul.mubr.f32.gmra.mrb[0].mxu0 %v2123
      %v2312 = vpop.f32.mrb[0].mxu0
      %v2313 = vadd.f32 0.0, %v2312
      %v2314 = vpop.f32.mrb[0].mxu0
      %2315 = vmatprep.mubr.f32.mxu0 0.0
      %2316 = vmatmul.mubr.f32.gmra.mrb[0].mxu0 %v2126
      %v2317 = vpop.f32.mrb[0].mxu0
      %v2318 = vadd.f32 0.0, %v2317
      %v2319 = vpop.f32.mrb[0].mxu0
      %2320 = vmatprep.mubr.f32.mxu0 0.0
      %2321 = vmatmul.mubr.f32.gmra.mrb[0].mxu0 %v2129
      %v2322 = vpop.f32.mrb[0].mxu0
      %v2323 = vadd.f32 0.0, %v2322
      %v2324 = vpop.f32.mrb[0].mxu0
      %2325 = vmatprep.mubr.f32.mxu0 0.0
      %2326 = vmatmul.mubr.f32.gmra.mrb[0].mxu0 %v2132
      %v2327 = vpop.f32.mrb[0].mxu0
      %v2328 = vadd.f32 0.0, %v2327
      %v2329 = vpop.f32.mrb[0].mxu0
      %2330 = vmatprep.mubr.f32.mxu0 0.0
      %2331 = vmatmul.mubr.f32.gmra.mrb[0].mxu0 %v2135
      %v2332 = vpop.f32.mrb[0].mxu0
      %v2333 = vadd.f32 0.0, %v2332
      %v2334 = vpop.f32.mrb[0].mxu0
      %2335 = vmatprep.mubr.f32.mxu0 0.0
      %2336 = vmatmul.mubr.f32.gmra.mrb[0].mxu0 %v2138
      %v2337 = vpop.f32.mrb[0].mxu0
      %v2338 = vadd.f32 0.0, %v2337
      %v2339 = vpop.f32.mrb[0].mxu0
      %2340 = vmatprep.mubr.f32.mxu0 0.0
      %2341 = vmatmul.mubr.f32.gmra.mrb[0].mxu0 %v2141
      %v2342 = vpop.f32.mrb[0].mxu0
      %v2343 = vadd.f32 0.0, %v2342
      %v2344 = vpop.f32.mrb[0].mxu0
      %2345 = vmatprep.mubr.f32.mxu0 0.0
      %2346 = vmatmul.mubr.f32.gmra.mrb[0].mxu0 %v2144
      %v2347 = vpop.f32.mrb[0].mxu0
      %v2348 = vadd.f32 0.0, %v2347
      %v2349 = vpop.f32.mrb[0].mxu0
      %2350 = vmatprep.mubr.f32.mxu0 0.0
      %2351 = vmatmul.mubr.f32.gmra.mrb[0].mxu0 %v2147
      %v2352 = vpop.f32.mrb[0].mxu0
      %v2353 = vadd.f32 0.0, %v2352
      %v2354 = vpop.f32.mrb[0].mxu0
      %2355 = vmatprep.mubr.f32.mxu0 0.0
      %2356 = vmatmul.mubr.f32.gmra.mrb[0].mxu0 %v2150
      %v2357 = vpop.f32.mrb[0].mxu0
      %v2358 = vadd.f32 0.0, %v2357
      %v2359 = vpop.f32.mrb[0].mxu0
      %2360 = vmatprep.mubr.f32.mxu0 0.0
      %2361 = vmatmul.mubr.f32.gmra.mrb[0].mxu0 %v2153
      %v2362 = vpop.f32.mrb[0].mxu0
      %v2363 = vadd.f32 0.0, %v2362
      %v2364 = vpop.f32.mrb[0].mxu0
      %2365 = vmatprep.mubr.f32.mxu0 0.0
      %2366 = vmatmul.mubr.f32.gmra.mrb[0].mxu0 %v2156
      %v2367 = vpop.f32.mrb[0].mxu0
      %v2368 = vadd.f32 0.0, %v2367
      %v2369 = vpop.f32.mrb[0].mxu0
      %2370 = vmatprep.mubr.f32.mxu0 0.0
      %2371 = vmatmul.mubr.f32.gmra.mrb[0].mxu0 %v2159
      %v2372 = vpop.f32.mrb[0].mxu0
      %v2373 = vadd.f32 0.0, %v2372
      %v2374 = vpop.f32.mrb[0].mxu0
      %2375 = vmatprep.mubr.f32.mxu0 0.0
      %2376 = vmatmul.mubr.f32.gmra.mrb[0].mxu0 %v2162
      %v2377 = vpop.f32.mrb[0].mxu0
      %v2378 = vadd.f32 0.0, %v2377
      %v2379 = vpop.f32.mrb[0].mxu0
      %2380 = vmatprep.mubr.f32.mxu0 0.0
      %2381 = vmatmul.mubr.f32.gmra.mrb[0].mxu0 %v2165
      %v2382 = vpop.f32.mrb[0].mxu0
      %v2383 = vadd.f32 0.0, %v2382
      %v2384 = vpop.f32.mrb[0].mxu0
      %2385 = vmatprep.mubr.f32.mxu0 0.0
      %2386 = vmatmul.mubr.f32.gmra.mrb[0].mxu0 %v2168
      %v2387 = vpop.f32.mrb[0].mxu0
      %v2388 = vadd.f32 0.0, %v2387
      %v2389 = vpop.f32.mrb[0].mxu0
      %2390 = vmatprep.mubr.f32.mxu0 0.0
      %2391 = vmatmul.mubr.f32.gmra.mrb[0].mxu0 %v2171
      %v2392 = vpop.f32.mrb[0].mxu0
      %v2393 = vadd.f32 0.0, %v2392
      %v2394 = vpop.f32.mrb[0].mxu0
      %2395 = vmatprep.mubr.f32.mxu0 0.0
      %2396 = vmatmul.mubr.f32.gmra.mrb[0].mxu0 %v2174
      %v2397 = vpop.f32.mrb[0].mxu0
      %v2398 = vadd.f32 0.0, %v2397
      %v2399 = vpop.f32.mrb[0].mxu0
      %2400 = vdwg.mxu0
      %v2401 = vadd.f32 %v2014, %v2243
      %v2402 = vadd.f32 %v2015, %v2248
      %v2403 = vadd.f32 %v2016, %v2253
      %v2404 = vadd.f32 %v2017, %v2258
      %v2405 = vadd.f32 %v2018, %v2263
      %v2406 = vadd.f32 %v2019, %v2268
      %v2407 = vadd.f32 %v2020, %v2273
      %v2408 = vadd.f32 %v2021, %v2278
      %v2409 = vadd.f32 %v2022, %v2283
      %v2410 = vadd.f32 %v2023, %v2288
      %v2411 = vadd.f32 %v2024, %v2293
      %v2412 = vadd.f32 %v2025, %v2298
      %v2413 = vadd.f32 %v2026, %v2303
      %v2414 = vadd.f32 %v2027, %v2308
      %v2415 = vadd.f32 %v2028, %v2313
      %v2416 = vadd.f32 %v2029, %v2318
      %v2417 = vadd.f32 %v2030, %v2323
      %v2418 = vadd.f32 %v2031, %v2328
      %v2419 = vadd.f32 %v2032, %v2333
      %v2420 = vadd.f32 %v2033, %v2338
      %v2421 = vadd.f32 %v2034, %v2343
      %v2422 = vadd.f32 %v2035, %v2348
      %v2423 = vadd.f32 %v2036, %v2353
      %v2424 = vadd.f32 %v2037, %v2358
      %v2425 = vadd.f32 %v2038, %v2363
      %v2426 = vadd.f32 %v2039, %v2368
      %v2427 = vadd.f32 %v2040, %v2373
      %v2428 = vadd.f32 %v2041, %v2378
      %v2429 = vadd.f32 %v2042, %v2383
      %v2430 = vadd.f32 %v2043, %v2388
      %v2431 = vadd.f32 %v2044, %v2393
      %v2432 = vadd.f32 %v2045, %v2398
      %v2433 = vld [vmem:[%s917 + $0x1] sm:$0xff]
      %v2434 = vld [vmem:[%s917 + $0x9] sm:$0xff]
      %v2435 = vld [vmem:[%s917 + $0x19] sm:$0xff]
      %v2436 = vld [vmem:[%s917 + $0x21] sm:$0xff]
      %v2437 = vld [vmem:[%s917 + $0x31] sm:$0xff]
      %v2438 = vld [vmem:[%s917 + $0x39] sm:$0xff]
      %v2439 = vld [vmem:[%s917 + $0x49] sm:$0xff]
      %v2440 = vld [vmem:[%s917 + $0x51] sm:$0xff]
      %v2441 = vld [vmem:[%s917 + $0x61] sm:$0xff]
      %v2442 = vld [vmem:[%s917 + $0x69] sm:$0xff]
      %v2443 = vld [vmem:[%s917 + $0x79] sm:$0xff]
      %v2444 = vld [vmem:[%s917 + $0x81] sm:$0xff]
      %v2445 = vld [vmem:[%s917 + $0x91] sm:$0xff]
      %v2446 = vld [vmem:[%s917 + $0x99] sm:$0xff]
      %v2447 = vld [vmem:[%s917 + $0xa9] sm:$0xff]
      %v2448 = vld [vmem:[%s917 + $0xb1] sm:$0xff]
      %v2449 = vld [vmem:[%s917 + $0xc1] sm:$0xff]
      %v2450 = vld [vmem:[%s917 + $0xc9] sm:$0xff]
      %v2451 = vld [vmem:[%s917 + $0xd9] sm:$0xff]
      %v2452 = vld [vmem:[%s917 + $0xe1] sm:$0xff]
      %v2453 = vld [vmem:[%s917 + $0xf1] sm:$0xff]
      %v2454 = vld [vmem:[%s917 + $0xf9] sm:$0xff]
      %v2455 = vld [vmem:[%s917 + $0x109] sm:$0xff]
      %v2456 = vld [vmem:[%s917 + $0x111] sm:$0xff]
      %v2457 = vld [vmem:[%s917 + $0x121] sm:$0xff]
      %v2458 = vld [vmem:[%s917 + $0x129] sm:$0xff]
      %v2459 = vld [vmem:[%s917 + $0x139] sm:$0xff]
      %v2460 = vld [vmem:[%s917 + $0x141] sm:$0xff]
      %v2461 = vld [vmem:[%s917 + $0x151] sm:$0xff]
      %v2462 = vld [vmem:[%s917 + $0x159] sm:$0xff]
      %v2463 = vld [vmem:[%s917 + $0x169] sm:$0xff]
      %v2464 = vld [vmem:[%s917 + $0x171] sm:$0xff]
      %s2465 = scalar_lea.vmem %s3, 32
      %v2466 = vld [vmem:[%s2465] sm:$0xff]
      %v2468 = vsel %vm279, %v2433, 0
      %v2471 = vsel %vm279, %v2434, 0
      %v2474 = vsel %vm279, %v2435, 0
      %v2477 = vsel %vm279, %v2436, 0
      %v2480 = vsel %vm279, %v2437, 0
      %v2483 = vsel %vm279, %v2438, 0
      %v2486 = vsel %vm279, %v2439, 0
      %v2489 = vsel %vm279, %v2440, 0
      %v2492 = vsel %vm279, %v2441, 0
      %v2495 = vsel %vm279, %v2442, 0
      %v2498 = vsel %vm279, %v2443, 0
      %v2501 = vsel %vm279, %v2444, 0
      %v2504 = vsel %vm279, %v2445, 0
      %v2507 = vsel %vm279, %v2446, 0
      %v2510 = vsel %vm279, %v2447, 0
      %v2513 = vsel %vm279, %v2448, 0
      %v2516 = vsel %vm279, %v2449, 0
      %v2519 = vsel %vm279, %v2450, 0
      %v2522 = vsel %vm279, %v2451, 0
      %v2525 = vsel %vm279, %v2452, 0
      %v2528 = vsel %vm279, %v2453, 0
      %v2531 = vsel %vm279, %v2454, 0
      %v2534 = vsel %vm279, %v2455, 0
      %v2537 = vsel %vm279, %v2456, 0
      %v2540 = vsel %vm279, %v2457, 0
      %v2543 = vsel %vm279, %v2458, 0
      %v2546 = vsel %vm279, %v2459, 0
      %v2549 = vsel %vm279, %v2460, 0
      %v2552 = vsel %vm279, %v2461, 0
      %v2555 = vsel %vm279, %v2462, 0
      %v2558 = vsel %vm279, %v2463, 0
      %v2561 = vsel %vm279, %v2464, 0
      %2563 = vmatprep.subr.mxu0 0.0
      %2564 = vmatpush1.msra.mxu0 %v2466
      %2565 = vmatprep.subr.mxu0 0.0
      %2566 = vmatpush1.msra.mxu0 0.0
      %2567 = vmatprep.subr.mxu0 0.0
      %2568 = vmatpush1.msra.mxu0 0.0
      %2569 = vmatprep.subr.mxu0 0.0
      %2570 = vmatpush1.msra.mxu0 0.0
      %2571 = vmatprep.subr.mxu0 0.0
      %2572 = vmatpush1.msra.mxu0 0.0
      %2573 = vmatprep.subr.mxu0 0.0
      %2574 = vmatpush1.msra.mxu0 0.0
      %2575 = vmatprep.subr.mxu0 0.0
      %2576 = vmatpush1.msra.mxu0 0.0
      %2577 = vmatprep.subr.mxu0 0.0
      %2578 = vmatpush1.msra.mxu0 0.0
      %2579 = vmatprep.subr.mxu0 0.0
      %2580 = vmatpush1.msra.mxu0 0.0
      %2581 = vmatprep.subr.mxu0 0.0
      %2582 = vmatpush1.msra.mxu0 0.0
      %2583 = vmatprep.subr.mxu0 0.0
      %2584 = vmatpush1.msra.mxu0 0.0
      %2585 = vmatprep.subr.mxu0 0.0
      %2586 = vmatpush1.msra.mxu0 0.0
      %2587 = vmatprep.subr.mxu0 0.0
      %2588 = vmatpush1.msra.mxu0 0.0
      %2589 = vmatprep.subr.mxu0 0.0
      %2590 = vmatpush1.msra.mxu0 0.0
      %2591 = vmatprep.subr.mxu0 0.0
      %2592 = vmatpush1.msra.mxu0 0.0
      %2593 = vmatprep.subr.mxu0 0.0
      %2594 = vmatpush1.msra.mxu0 0.0
      %2595 = vmatprep.subr.mxu0 0.0
      %2596 = vmatpush1.msra.mxu0 0.0
      %2597 = vmatprep.subr.mxu0 0.0
      %2598 = vmatpush1.msra.mxu0 0.0
      %2599 = vmatprep.subr.mxu0 0.0
      %2600 = vmatpush1.msra.mxu0 0.0
      %2601 = vmatprep.subr.mxu0 0.0
      %2602 = vmatpush1.msra.mxu0 0.0
      %2603 = vmatprep.subr.mxu0 0.0
      %2604 = vmatpush1.msra.mxu0 0.0
      %2605 = vmatprep.subr.mxu0 0.0
      %2606 = vmatpush1.msra.mxu0 0.0
      %2607 = vmatprep.subr.mxu0 0.0
      %2608 = vmatpush1.msra.mxu0 0.0
      %2609 = vmatprep.subr.mxu0 0.0
      %2610 = vmatpush1.msra.mxu0 0.0
      %2611 = vmatprep.subr.mxu0 0.0
      %2612 = vmatpush1.msra.mxu0 0.0
      %2613 = vmatprep.subr.mxu0 0.0
      %2614 = vmatpush1.msra.mxu0 0.0
      %2615 = vmatprep.subr.mxu0 0.0
      %2616 = vmatpush1.msra.mxu0 0.0
      %2617 = vmatprep.subr.mxu0 0.0
      %2618 = vmatpush1.msra.mxu0 0.0
      %2619 = vmatprep.subr.mxu0 0.0
      %2620 = vmatpush1.msra.mxu0 0.0
      %2621 = vmatprep.subr.mxu0 0.0
      %2622 = vmatpush1.msra.mxu0 0.0
      %2623 = vmatprep.subr.mxu0 0.0
      %2624 = vmatpush1.msra.mxu0 0.0
      %2625 = vmatprep.subr.mxu0 0.0
      %2626 = vmatpush1.msra.mxu0 0.0
      %2627 = vmatprep.mubr.f32.mxu0 0.0
      %2628 = vmatmul.mubr.f32.gmra.mrb[0].mxu0 %v2468
      %v2629 = vpop.f32.mrb[0].mxu0
      %v2630 = vadd.f32 0.0, %v2629
      %v2631 = vpop.f32.mrb[0].mxu0
      %2632 = vmatprep.mubr.f32.mxu0 0.0
      %2633 = vmatmul.mubr.f32.gmra.mrb[0].mxu0 %v2471
      %v2634 = vpop.f32.mrb[0].mxu0
      %v2635 = vadd.f32 0.0, %v2634
      %v2636 = vpop.f32.mrb[0].mxu0
      %2637 = vmatprep.mubr.f32.mxu0 0.0
      %2638 = vmatmul.mubr.f32.gmra.mrb[0].mxu0 %v2474
      %v2639 = vpop.f32.mrb[0].mxu0
      %v2640 = vadd.f32 0.0, %v2639
      %v2641 = vpop.f32.mrb[0].mxu0
      %2642 = vmatprep.mubr.f32.mxu0 0.0
      %2643 = vmatmul.mubr.f32.gmra.mrb[0].mxu0 %v2477
      %v2644 = vpop.f32.mrb[0].mxu0
      %v2645 = vadd.f32 0.0, %v2644
      %v2646 = vpop.f32.mrb[0].mxu0
      %2647 = vmatprep.mubr.f32.mxu0 0.0
      %2648 = vmatmul.mubr.f32.gmra.mrb[0].mxu0 %v2480
      %v2649 = vpop.f32.mrb[0].mxu0
      %v2650 = vadd.f32 0.0, %v2649
      %v2651 = vpop.f32.mrb[0].mxu0
      %2652 = vmatprep.mubr.f32.mxu0 0.0
      %2653 = vmatmul.mubr.f32.gmra.mrb[0].mxu0 %v2483
      %v2654 = vpop.f32.mrb[0].mxu0
      %v2655 = vadd.f32 0.0, %v2654
      %v2656 = vpop.f32.mrb[0].mxu0
      %2657 = vmatprep.mubr.f32.mxu0 0.0
      %2658 = vmatmul.mubr.f32.gmra.mrb[0].mxu0 %v2486
      %v2659 = vpop.f32.mrb[0].mxu0
      %v2660 = vadd.f32 0.0, %v2659
      %v2661 = vpop.f32.mrb[0].mxu0
      %2662 = vmatprep.mubr.f32.mxu0 0.0
      %2663 = vmatmul.mubr.f32.gmra.mrb[0].mxu0 %v2489
      %v2664 = vpop.f32.mrb[0].mxu0
      %v2665 = vadd.f32 0.0, %v2664
      %v2666 = vpop.f32.mrb[0].mxu0
      %2667 = vmatprep.mubr.f32.mxu0 0.0
      %2668 = vmatmul.mubr.f32.gmra.mrb[0].mxu0 %v2492
      %v2669 = vpop.f32.mrb[0].mxu0
      %v2670 = vadd.f32 0.0, %v2669
      %v2671 = vpop.f32.mrb[0].mxu0
      %2672 = vmatprep.mubr.f32.mxu0 0.0
      %2673 = vmatmul.mubr.f32.gmra.mrb[0].mxu0 %v2495
      %v2674 = vpop.f32.mrb[0].mxu0
      %v2675 = vadd.f32 0.0, %v2674
      %v2676 = vpop.f32.mrb[0].mxu0
      %2677 = vmatprep.mubr.f32.mxu0 0.0
      %2678 = vmatmul.mubr.f32.gmra.mrb[0].mxu0 %v2498
      %v2679 = vpop.f32.mrb[0].mxu0
      %v2680 = vadd.f32 0.0, %v2679
      %v2681 = vpop.f32.mrb[0].mxu0
      %2682 = vmatprep.mubr.f32.mxu0 0.0
      %2683 = vmatmul.mubr.f32.gmra.mrb[0].mxu0 %v2501
      %v2684 = vpop.f32.mrb[0].mxu0
      %v2685 = vadd.f32 0.0, %v2684
      %v2686 = vpop.f32.mrb[0].mxu0
      %2687 = vmatprep.mubr.f32.mxu0 0.0
      %2688 = vmatmul.mubr.f32.gmra.mrb[0].mxu0 %v2504
      %v2689 = vpop.f32.mrb[0].mxu0
      %v2690 = vadd.f32 0.0, %v2689
      %v2691 = vpop.f32.mrb[0].mxu0
      %2692 = vmatprep.mubr.f32.mxu0 0.0
      %2693 = vmatmul.mubr.f32.gmra.mrb[0].mxu0 %v2507
      %v2694 = vpop.f32.mrb[0].mxu0
      %v2695 = vadd.f32 0.0, %v2694
      %v2696 = vpop.f32.mrb[0].mxu0
      %2697 = vmatprep.mubr.f32.mxu0 0.0
      %2698 = vmatmul.mubr.f32.gmra.mrb[0].mxu0 %v2510
      %v2699 = vpop.f32.mrb[0].mxu0
      %v2700 = vadd.f32 0.0, %v2699
      %v2701 = vpop.f32.mrb[0].mxu0
      %2702 = vmatprep.mubr.f32.mxu0 0.0
      %2703 = vmatmul.mubr.f32.gmra.mrb[0].mxu0 %v2513
      %v2704 = vpop.f32.mrb[0].mxu0
      %v2705 = vadd.f32 0.0, %v2704
      %v2706 = vpop.f32.mrb[0].mxu0
      %2707 = vmatprep.mubr.f32.mxu0 0.0
      %2708 = vmatmul.mubr.f32.gmra.mrb[0].mxu0 %v2516
      %v2709 = vpop.f32.mrb[0].mxu0
      %v2710 = vadd.f32 0.0, %v2709
      %v2711 = vpop.f32.mrb[0].mxu0
      %2712 = vmatprep.mubr.f32.mxu0 0.0
      %2713 = vmatmul.mubr.f32.gmra.mrb[0].mxu0 %v2519
      %v2714 = vpop.f32.mrb[0].mxu0
      %v2715 = vadd.f32 0.0, %v2714
      %v2716 = vpop.f32.mrb[0].mxu0
      %2717 = vmatprep.mubr.f32.mxu0 0.0
      %2718 = vmatmul.mubr.f32.gmra.mrb[0].mxu0 %v2522
      %v2719 = vpop.f32.mrb[0].mxu0
      %v2720 = vadd.f32 0.0, %v2719
      %v2721 = vpop.f32.mrb[0].mxu0
      %2722 = vmatprep.mubr.f32.mxu0 0.0
      %2723 = vmatmul.mubr.f32.gmra.mrb[0].mxu0 %v2525
      %v2724 = vpop.f32.mrb[0].mxu0
      %v2725 = vadd.f32 0.0, %v2724
      %v2726 = vpop.f32.mrb[0].mxu0
      %2727 = vmatprep.mubr.f32.mxu0 0.0
      %2728 = vmatmul.mubr.f32.gmra.mrb[0].mxu0 %v2528
      %v2729 = vpop.f32.mrb[0].mxu0
      %v2730 = vadd.f32 0.0, %v2729
      %v2731 = vpop.f32.mrb[0].mxu0
      %2732 = vmatprep.mubr.f32.mxu0 0.0
      %2733 = vmatmul.mubr.f32.gmra.mrb[0].mxu0 %v2531
      %v2734 = vpop.f32.mrb[0].mxu0
      %v2735 = vadd.f32 0.0, %v2734
      %v2736 = vpop.f32.mrb[0].mxu0
      %2737 = vmatprep.mubr.f32.mxu0 0.0
      %2738 = vmatmul.mubr.f32.gmra.mrb[0].mxu0 %v2534
      %v2739 = vpop.f32.mrb[0].mxu0
      %v2740 = vadd.f32 0.0, %v2739
      %v2741 = vpop.f32.mrb[0].mxu0
      %2742 = vmatprep.mubr.f32.mxu0 0.0
      %2743 = vmatmul.mubr.f32.gmra.mrb[0].mxu0 %v2537
      %v2744 = vpop.f32.mrb[0].mxu0
      %v2745 = vadd.f32 0.0, %v2744
      %v2746 = vpop.f32.mrb[0].mxu0
      %2747 = vmatprep.mubr.f32.mxu0 0.0
      %2748 = vmatmul.mubr.f32.gmra.mrb[0].mxu0 %v2540
      %v2749 = vpop.f32.mrb[0].mxu0
      %v2750 = vadd.f32 0.0, %v2749
      %v2751 = vpop.f32.mrb[0].mxu0
      %2752 = vmatprep.mubr.f32.mxu0 0.0
      %2753 = vmatmul.mubr.f32.gmra.mrb[0].mxu0 %v2543
      %v2754 = vpop.f32.mrb[0].mxu0
      %v2755 = vadd.f32 0.0, %v2754
      %v2756 = vpop.f32.mrb[0].mxu0
      %2757 = vmatprep.mubr.f32.mxu0 0.0
      %2758 = vmatmul.mubr.f32.gmra.mrb[0].mxu0 %v2546
      %v2759 = vpop.f32.mrb[0].mxu0
      %v2760 = vadd.f32 0.0, %v2759
      %v2761 = vpop.f32.mrb[0].mxu0
      %2762 = vmatprep.mubr.f32.mxu0 0.0
      %2763 = vmatmul.mubr.f32.gmra.mrb[0].mxu0 %v2549
      %v2764 = vpop.f32.mrb[0].mxu0
      %v2765 = vadd.f32 0.0, %v2764
      %v2766 = vpop.f32.mrb[0].mxu0
      %2767 = vmatprep.mubr.f32.mxu0 0.0
      %2768 = vmatmul.mubr.f32.gmra.mrb[0].mxu0 %v2552
      %v2769 = vpop.f32.mrb[0].mxu0
      %v2770 = vadd.f32 0.0, %v2769
      %v2771 = vpop.f32.mrb[0].mxu0
      %2772 = vmatprep.mubr.f32.mxu0 0.0
      %2773 = vmatmul.mubr.f32.gmra.mrb[0].mxu0 %v2555
      %v2774 = vpop.f32.mrb[0].mxu0
      %v2775 = vadd.f32 0.0, %v2774
      %v2776 = vpop.f32.mrb[0].mxu0
      %2777 = vmatprep.mubr.f32.mxu0 0.0
      %2778 = vmatmul.mubr.f32.gmra.mrb[0].mxu0 %v2558
      %v2779 = vpop.f32.mrb[0].mxu0
      %v2780 = vadd.f32 0.0, %v2779
      %v2781 = vpop.f32.mrb[0].mxu0
      %2782 = vmatprep.mubr.f32.mxu0 0.0
      %2783 = vmatmul.mubr.f32.gmra.mrb[0].mxu0 %v2561
      %v2784 = vpop.f32.mrb[0].mxu0
      %v2785 = vadd.f32 0.0, %v2784
      %v2786 = vpop.f32.mrb[0].mxu0
      %2787 = vdwg.mxu0
      %v2788 = vadd.f32 %v2401, %v2630
      %v2789 = vadd.f32 %v2402, %v2635
      %v2790 = vadd.f32 %v2403, %v2640
      %v2791 = vadd.f32 %v2404, %v2645
      %v2792 = vadd.f32 %v2405, %v2650
      %v2793 = vadd.f32 %v2406, %v2655
      %v2794 = vadd.f32 %v2407, %v2660
      %v2795 = vadd.f32 %v2408, %v2665
      %v2796 = vadd.f32 %v2409, %v2670
      %v2797 = vadd.f32 %v2410, %v2675
      %v2798 = vadd.f32 %v2411, %v2680
      %v2799 = vadd.f32 %v2412, %v2685
      %v2800 = vadd.f32 %v2413, %v2690
      %v2801 = vadd.f32 %v2414, %v2695
      %v2802 = vadd.f32 %v2415, %v2700
      %v2803 = vadd.f32 %v2416, %v2705
      %v2804 = vadd.f32 %v2417, %v2710
      %v2805 = vadd.f32 %v2418, %v2715
      %v2806 = vadd.f32 %v2419, %v2720
      %v2807 = vadd.f32 %v2420, %v2725
      %v2808 = vadd.f32 %v2421, %v2730
      %v2809 = vadd.f32 %v2422, %v2735
      %v2810 = vadd.f32 %v2423, %v2740
      %v2811 = vadd.f32 %v2424, %v2745
      %v2812 = vadd.f32 %v2425, %v2750
      %v2813 = vadd.f32 %v2426, %v2755
      %v2814 = vadd.f32 %v2427, %v2760
      %v2815 = vadd.f32 %v2428, %v2765
      %v2816 = vadd.f32 %v2429, %v2770
      %v2817 = vadd.f32 %v2430, %v2775
      %v2818 = vadd.f32 %v2431, %v2780
      %v2819 = vadd.f32 %v2432, %v2785
      %v2820 = vld [vmem:[%s917 + $0x2] sm:$0xff]
      %v2821 = vld [vmem:[%s917 + $0xa] sm:$0xff]
      %v2822 = vld [vmem:[%s917 + $0x1a] sm:$0xff]
      %v2823 = vld [vmem:[%s917 + $0x22] sm:$0xff]
      %v2824 = vld [vmem:[%s917 + $0x32] sm:$0xff]
      %v2825 = vld [vmem:[%s917 + $0x3a] sm:$0xff]
      %v2826 = vld [vmem:[%s917 + $0x4a] sm:$0xff]
      %v2827 = vld [vmem:[%s917 + $0x52] sm:$0xff]
      %v2828 = vld [vmem:[%s917 + $0x62] sm:$0xff]
      %v2829 = vld [vmem:[%s917 + $0x6a] sm:$0xff]
      %v2830 = vld [vmem:[%s917 + $0x7a] sm:$0xff]
      %v2831 = vld [vmem:[%s917 + $0x82] sm:$0xff]
      %v2832 = vld [vmem:[%s917 + $0x92] sm:$0xff]
      %v2833 = vld [vmem:[%s917 + $0x9a] sm:$0xff]
      %v2834 = vld [vmem:[%s917 + $0xaa] sm:$0xff]
      %v2835 = vld [vmem:[%s917 + $0xb2] sm:$0xff]
      %v2836 = vld [vmem:[%s917 + $0xc2] sm:$0xff]
      %v2837 = vld [vmem:[%s917 + $0xca] sm:$0xff]
      %v2838 = vld [vmem:[%s917 + $0xda] sm:$0xff]
      %v2839 = vld [vmem:[%s917 + $0xe2] sm:$0xff]
      %v2840 = vld [vmem:[%s917 + $0xf2] sm:$0xff]
      %v2841 = vld [vmem:[%s917 + $0xfa] sm:$0xff]
      %v2842 = vld [vmem:[%s917 + $0x10a] sm:$0xff]
      %v2843 = vld [vmem:[%s917 + $0x112] sm:$0xff]
      %v2844 = vld [vmem:[%s917 + $0x122] sm:$0xff]
      %v2845 = vld [vmem:[%s917 + $0x12a] sm:$0xff]
      %v2846 = vld [vmem:[%s917 + $0x13a] sm:$0xff]
      %v2847 = vld [vmem:[%s917 + $0x142] sm:$0xff]
      %v2848 = vld [vmem:[%s917 + $0x152] sm:$0xff]
      %v2849 = vld [vmem:[%s917 + $0x15a] sm:$0xff]
      %v2850 = vld [vmem:[%s917 + $0x16a] sm:$0xff]
      %v2851 = vld [vmem:[%s917 + $0x172] sm:$0xff]
      %s2852 = scalar_lea.vmem %s3, 40
      %v2853 = vld [vmem:[%s2852] sm:$0xff]
      %v2855 = vsel %vm279, %v2820, 0
      %v2858 = vsel %vm279, %v2821, 0
      %v2861 = vsel %vm279, %v2822, 0
      %v2864 = vsel %vm279, %v2823, 0
      %v2867 = vsel %vm279, %v2824, 0
      %v2870 = vsel %vm279, %v2825, 0
      %v2873 = vsel %vm279, %v2826, 0
      %v2876 = vsel %vm279, %v2827, 0
      %v2879 = vsel %vm279, %v2828, 0
      %v2882 = vsel %vm279, %v2829, 0
      %v2885 = vsel %vm279, %v2830, 0
      %v2888 = vsel %vm279, %v2831, 0
      %v2891 = vsel %vm279, %v2832, 0
      %v2894 = vsel %vm279, %v2833, 0
      %v2897 = vsel %vm279, %v2834, 0
      %v2900 = vsel %vm279, %v2835, 0
      %v2903 = vsel %vm279, %v2836, 0
      %v2906 = vsel %vm279, %v2837, 0
      %v2909 = vsel %vm279, %v2838, 0
      %v2912 = vsel %vm279, %v2839, 0
      %v2915 = vsel %vm279, %v2840, 0
      %v2918 = vsel %vm279, %v2841, 0
      %v2921 = vsel %vm279, %v2842, 0
      %v2924 = vsel %vm279, %v2843, 0
      %v2927 = vsel %vm279, %v2844, 0
      %v2930 = vsel %vm279, %v2845, 0
      %v2933 = vsel %vm279, %v2846, 0
      %v2936 = vsel %vm279, %v2847, 0
      %v2939 = vsel %vm279, %v2848, 0
      %v2942 = vsel %vm279, %v2849, 0
      %v2945 = vsel %vm279, %v2850, 0
      %v2948 = vsel %vm279, %v2851, 0
      %2950 = vmatprep.subr.mxu0 0.0
      %2951 = vmatpush1.msra.mxu0 %v2853
      %2952 = vmatprep.subr.mxu0 0.0
      %2953 = vmatpush1.msra.mxu0 0.0
      %2954 = vmatprep.subr.mxu0 0.0
      %2955 = vmatpush1.msra.mxu0 0.0
      %2956 = vmatprep.subr.mxu0 0.0
      %2957 = vmatpush1.msra.mxu0 0.0
      %2958 = vmatprep.subr.mxu0 0.0
      %2959 = vmatpush1.msra.mxu0 0.0
      %2960 = vmatprep.subr.mxu0 0.0
      %2961 = vmatpush1.msra.mxu0 0.0
      %2962 = vmatprep.subr.mxu0 0.0
      %2963 = vmatpush1.msra.mxu0 0.0
      %2964 = vmatprep.subr.mxu0 0.0
      %2965 = vmatpush1.msra.mxu0 0.0
      %2966 = vmatprep.subr.mxu0 0.0
      %2967 = vmatpush1.msra.mxu0 0.0
      %2968 = vmatprep.subr.mxu0 0.0
      %2969 = vmatpush1.msra.mxu0 0.0
      %2970 = vmatprep.subr.mxu0 0.0
      %2971 = vmatpush1.msra.mxu0 0.0
      %2972 = vmatprep.subr.mxu0 0.0
      %2973 = vmatpush1.msra.mxu0 0.0
      %2974 = vmatprep.subr.mxu0 0.0
      %2975 = vmatpush1.msra.mxu0 0.0
      %2976 = vmatprep.subr.mxu0 0.0
      %2977 = vmatpush1.msra.mxu0 0.0
      %2978 = vmatprep.subr.mxu0 0.0
      %2979 = vmatpush1.msra.mxu0 0.0
      %2980 = vmatprep.subr.mxu0 0.0
      %2981 = vmatpush1.msra.mxu0 0.0
      %2982 = vmatprep.subr.mxu0 0.0
      %2983 = vmatpush1.msra.mxu0 0.0
      %2984 = vmatprep.subr.mxu0 0.0
      %2985 = vmatpush1.msra.mxu0 0.0
      %2986 = vmatprep.subr.mxu0 0.0
      %2987 = vmatpush1.msra.mxu0 0.0
      %2988 = vmatprep.subr.mxu0 0.0
      %2989 = vmatpush1.msra.mxu0 0.0
      %2990 = vmatprep.subr.mxu0 0.0
      %2991 = vmatpush1.msra.mxu0 0.0
      %2992 = vmatprep.subr.mxu0 0.0
      %2993 = vmatpush1.msra.mxu0 0.0
      %2994 = vmatprep.subr.mxu0 0.0
      %2995 = vmatpush1.msra.mxu0 0.0
      %2996 = vmatprep.subr.mxu0 0.0
      %2997 = vmatpush1.msra.mxu0 0.0
      %2998 = vmatprep.subr.mxu0 0.0
      %2999 = vmatpush1.msra.mxu0 0.0
      %3000 = vmatprep.subr.mxu0 0.0
      %3001 = vmatpush1.msra.mxu0 0.0
      %3002 = vmatprep.subr.mxu0 0.0
      %3003 = vmatpush1.msra.mxu0 0.0
      %3004 = vmatprep.subr.mxu0 0.0
      %3005 = vmatpush1.msra.mxu0 0.0
      %3006 = vmatprep.subr.mxu0 0.0
      %3007 = vmatpush1.msra.mxu0 0.0
      %3008 = vmatprep.subr.mxu0 0.0
      %3009 = vmatpush1.msra.mxu0 0.0
      %3010 = vmatprep.subr.mxu0 0.0
      %3011 = vmatpush1.msra.mxu0 0.0
      %3012 = vmatprep.subr.mxu0 0.0
      %3013 = vmatpush1.msra.mxu0 0.0
      %3014 = vmatprep.mubr.f32.mxu0 0.0
      %3015 = vmatmul.mubr.f32.gmra.mrb[0].mxu0 %v2855
      %v3016 = vpop.f32.mrb[0].mxu0
      %v3017 = vadd.f32 0.0, %v3016
      %v3018 = vpop.f32.mrb[0].mxu0
      %3019 = vmatprep.mubr.f32.mxu0 0.0
      %3020 = vmatmul.mubr.f32.gmra.mrb[0].mxu0 %v2858
      %v3021 = vpop.f32.mrb[0].mxu0
      %v3022 = vadd.f32 0.0, %v3021
      %v3023 = vpop.f32.mrb[0].mxu0
      %3024 = vmatprep.mubr.f32.mxu0 0.0
      %3025 = vmatmul.mubr.f32.gmra.mrb[0].mxu0 %v2861
      %v3026 = vpop.f32.mrb[0].mxu0
      %v3027 = vadd.f32 0.0, %v3026
      %v3028 = vpop.f32.mrb[0].mxu0
      %3029 = vmatprep.mubr.f32.mxu0 0.0
      %3030 = vmatmul.mubr.f32.gmra.mrb[0].mxu0 %v2864
      %v3031 = vpop.f32.mrb[0].mxu0
      %v3032 = vadd.f32 0.0, %v3031
      %v3033 = vpop.f32.mrb[0].mxu0
      %3034 = vmatprep.mubr.f32.mxu0 0.0
      %3035 = vmatmul.mubr.f32.gmra.mrb[0].mxu0 %v2867
      %v3036 = vpop.f32.mrb[0].mxu0
      %v3037 = vadd.f32 0.0, %v3036
      %v3038 = vpop.f32.mrb[0].mxu0
      %3039 = vmatprep.mubr.f32.mxu0 0.0
      %3040 = vmatmul.mubr.f32.gmra.mrb[0].mxu0 %v2870
      %v3041 = vpop.f32.mrb[0].mxu0
      %v3042 = vadd.f32 0.0, %v3041
      %v3043 = vpop.f32.mrb[0].mxu0
      %3044 = vmatprep.mubr.f32.mxu0 0.0
      %3045 = vmatmul.mubr.f32.gmra.mrb[0].mxu0 %v2873
      %v3046 = vpop.f32.mrb[0].mxu0
      %v3047 = vadd.f32 0.0, %v3046
      %v3048 = vpop.f32.mrb[0].mxu0
      %3049 = vmatprep.mubr.f32.mxu0 0.0
      %3050 = vmatmul.mubr.f32.gmra.mrb[0].mxu0 %v2876
      %v3051 = vpop.f32.mrb[0].mxu0
      %v3052 = vadd.f32 0.0, %v3051
      %v3053 = vpop.f32.mrb[0].mxu0
      %3054 = vmatprep.mubr.f32.mxu0 0.0
      %3055 = vmatmul.mubr.f32.gmra.mrb[0].mxu0 %v2879
      %v3056 = vpop.f32.mrb[0].mxu0
      %v3057 = vadd.f32 0.0, %v3056
      %v3058 = vpop.f32.mrb[0].mxu0
      %3059 = vmatprep.mubr.f32.mxu0 0.0
      %3060 = vmatmul.mubr.f32.gmra.mrb[0].mxu0 %v2882
      %v3061 = vpop.f32.mrb[0].mxu0
      %v3062 = vadd.f32 0.0, %v3061
      %v3063 = vpop.f32.mrb[0].mxu0
      %3064 = vmatprep.mubr.f32.mxu0 0.0
      %3065 = vmatmul.mubr.f32.gmra.mrb[0].mxu0 %v2885
      %v3066 = vpop.f32.mrb[0].mxu0
      %v3067 = vadd.f32 0.0, %v3066
      %v3068 = vpop.f32.mrb[0].mxu0
      %3069 = vmatprep.mubr.f32.mxu0 0.0
      %3070 = vmatmul.mubr.f32.gmra.mrb[0].mxu0 %v2888
      %v3071 = vpop.f32.mrb[0].mxu0
      %v3072 = vadd.f32 0.0, %v3071
      %v3073 = vpop.f32.mrb[0].mxu0
      %3074 = vmatprep.mubr.f32.mxu0 0.0
      %3075 = vmatmul.mubr.f32.gmra.mrb[0].mxu0 %v2891
      %v3076 = vpop.f32.mrb[0].mxu0
      %v3077 = vadd.f32 0.0, %v3076
      %v3078 = vpop.f32.mrb[0].mxu0
      %3079 = vmatprep.mubr.f32.mxu0 0.0
      %3080 = vmatmul.mubr.f32.gmra.mrb[0].mxu0 %v2894
      %v3081 = vpop.f32.mrb[0].mxu0
      %v3082 = vadd.f32 0.0, %v3081
      %v3083 = vpop.f32.mrb[0].mxu0
      %3084 = vmatprep.mubr.f32.mxu0 0.0
      %3085 = vmatmul.mubr.f32.gmra.mrb[0].mxu0 %v2897
      %v3086 = vpop.f32.mrb[0].mxu0
      %v3087 = vadd.f32 0.0, %v3086
      %v3088 = vpop.f32.mrb[0].mxu0
      %3089 = vmatprep.mubr.f32.mxu0 0.0
      %3090 = vmatmul.mubr.f32.gmra.mrb[0].mxu0 %v2900
      %v3091 = vpop.f32.mrb[0].mxu0
      %v3092 = vadd.f32 0.0, %v3091
      %v3093 = vpop.f32.mrb[0].mxu0
      %3094 = vmatprep.mubr.f32.mxu0 0.0
      %3095 = vmatmul.mubr.f32.gmra.mrb[0].mxu0 %v2903
      %v3096 = vpop.f32.mrb[0].mxu0
      %v3097 = vadd.f32 0.0, %v3096
      %v3098 = vpop.f32.mrb[0].mxu0
      %3099 = vmatprep.mubr.f32.mxu0 0.0
      %3100 = vmatmul.mubr.f32.gmra.mrb[0].mxu0 %v2906
      %v3101 = vpop.f32.mrb[0].mxu0
      %v3102 = vadd.f32 0.0, %v3101
      %v3103 = vpop.f32.mrb[0].mxu0
      %3104 = vmatprep.mubr.f32.mxu0 0.0
      %3105 = vmatmul.mubr.f32.gmra.mrb[0].mxu0 %v2909
      %v3106 = vpop.f32.mrb[0].mxu0
      %v3107 = vadd.f32 0.0, %v3106
      %v3108 = vpop.f32.mrb[0].mxu0
      %3109 = vmatprep.mubr.f32.mxu0 0.0
      %3110 = vmatmul.mubr.f32.gmra.mrb[0].mxu0 %v2912
      %v3111 = vpop.f32.mrb[0].mxu0
      %v3112 = vadd.f32 0.0, %v3111
      %v3113 = vpop.f32.mrb[0].mxu0
      %3114 = vmatprep.mubr.f32.mxu0 0.0
      %3115 = vmatmul.mubr.f32.gmra.mrb[0].mxu0 %v2915
      %v3116 = vpop.f32.mrb[0].mxu0
      %v3117 = vadd.f32 0.0, %v3116
      %v3118 = vpop.f32.mrb[0].mxu0
      %3119 = vmatprep.mubr.f32.mxu0 0.0
      %3120 = vmatmul.mubr.f32.gmra.mrb[0].mxu0 %v2918
      %v3121 = vpop.f32.mrb[0].mxu0
      %v3122 = vadd.f32 0.0, %v3121
      %v3123 = vpop.f32.mrb[0].mxu0
      %3124 = vmatprep.mubr.f32.mxu0 0.0
      %3125 = vmatmul.mubr.f32.gmra.mrb[0].mxu0 %v2921
      %v3126 = vpop.f32.mrb[0].mxu0
      %v3127 = vadd.f32 0.0, %v3126
      %v3128 = vpop.f32.mrb[0].mxu0
      %3129 = vmatprep.mubr.f32.mxu0 0.0
      %3130 = vmatmul.mubr.f32.gmra.mrb[0].mxu0 %v2924
      %v3131 = vpop.f32.mrb[0].mxu0
      %v3132 = vadd.f32 0.0, %v3131
      %v3133 = vpop.f32.mrb[0].mxu0
      %3134 = vmatprep.mubr.f32.mxu0 0.0
      %3135 = vmatmul.mubr.f32.gmra.mrb[0].mxu0 %v2927
      %v3136 = vpop.f32.mrb[0].mxu0
      %v3137 = vadd.f32 0.0, %v3136
      %v3138 = vpop.f32.mrb[0].mxu0
      %3139 = vmatprep.mubr.f32.mxu0 0.0
      %3140 = vmatmul.mubr.f32.gmra.mrb[0].mxu0 %v2930
      %v3141 = vpop.f32.mrb[0].mxu0
      %v3142 = vadd.f32 0.0, %v3141
      %v3143 = vpop.f32.mrb[0].mxu0
      %3144 = vmatprep.mubr.f32.mxu0 0.0
      %3145 = vmatmul.mubr.f32.gmra.mrb[0].mxu0 %v2933
      %v3146 = vpop.f32.mrb[0].mxu0
      %v3147 = vadd.f32 0.0, %v3146
      %v3148 = vpop.f32.mrb[0].mxu0
      %3149 = vmatprep.mubr.f32.mxu0 0.0
      %3150 = vmatmul.mubr.f32.gmra.mrb[0].mxu0 %v2936
      %v3151 = vpop.f32.mrb[0].mxu0
      %v3152 = vadd.f32 0.0, %v3151
      %v3153 = vpop.f32.mrb[0].mxu0
      %3154 = vmatprep.mubr.f32.mxu0 0.0
      %3155 = vmatmul.mubr.f32.gmra.mrb[0].mxu0 %v2939
      %v3156 = vpop.f32.mrb[0].mxu0
      %v3157 = vadd.f32 0.0, %v3156
      %v3158 = vpop.f32.mrb[0].mxu0
      %3159 = vmatprep.mubr.f32.mxu0 0.0
      %3160 = vmatmul.mubr.f32.gmra.mrb[0].mxu0 %v2942
      %v3161 = vpop.f32.mrb[0].mxu0
      %v3162 = vadd.f32 0.0, %v3161
      %v3163 = vpop.f32.mrb[0].mxu0
      %3164 = vmatprep.mubr.f32.mxu0 0.0
      %3165 = vmatmul.mubr.f32.gmra.mrb[0].mxu0 %v2945
      %v3166 = vpop.f32.mrb[0].mxu0
      %v3167 = vadd.f32 0.0, %v3166
      %v3168 = vpop.f32.mrb[0].mxu0
      %3169 = vmatprep.mubr.f32.mxu0 0.0
      %3170 = vmatmul.mubr.f32.gmra.mrb[0].mxu0 %v2948
      %v3171 = vpop.f32.mrb[0].mxu0
      %v3172 = vadd.f32 0.0, %v3171
      %v3173 = vpop.f32.mrb[0].mxu0
      %3174 = vdwg.mxu0
      %v3175 = vadd.f32 %v2788, %v3017
      %v3176 = vadd.f32 %v2789, %v3022
      %v3177 = vadd.f32 %v2790, %v3027
      %v3178 = vadd.f32 %v2791, %v3032
      %v3179 = vadd.f32 %v2792, %v3037
      %v3180 = vadd.f32 %v2793, %v3042
      %v3181 = vadd.f32 %v2794, %v3047
      %v3182 = vadd.f32 %v2795, %v3052
      %v3183 = vadd.f32 %v2796, %v3057
      %v3184 = vadd.f32 %v2797, %v3062
      %v3185 = vadd.f32 %v2798, %v3067
      %v3186 = vadd.f32 %v2799, %v3072
      %v3187 = vadd.f32 %v2800, %v3077
      %v3188 = vadd.f32 %v2801, %v3082
      %v3189 = vadd.f32 %v2802, %v3087
      %v3190 = vadd.f32 %v2803, %v3092
      %v3191 = vadd.f32 %v2804, %v3097
      %v3192 = vadd.f32 %v2805, %v3102
      %v3193 = vadd.f32 %v2806, %v3107
      %v3194 = vadd.f32 %v2807, %v3112
      %v3195 = vadd.f32 %v2808, %v3117
      %v3196 = vadd.f32 %v2809, %v3122
      %v3197 = vadd.f32 %v2810, %v3127
      %v3198 = vadd.f32 %v2811, %v3132
      %v3199 = vadd.f32 %v2812, %v3137
      %v3200 = vadd.f32 %v2813, %v3142
      %v3201 = vadd.f32 %v2814, %v3147
      %v3202 = vadd.f32 %v2815, %v3152
      %v3203 = vadd.f32 %v2816, %v3157
      %v3204 = vadd.f32 %v2817, %v3162
      %v3205 = vadd.f32 %v2818, %v3167
      %v3206 = vadd.f32 %v2819, %v3172
      %s3207 = scalar_lea.vmem [#allocation2], 48
      %v3208 = vld [vmem:[%s3207] sm:$0xff]
      %v3209 = vld [vmem:[%s3207 + $0x8] sm:$0xff]
      %v3210 = vld [vmem:[%s3207 + $0x18] sm:$0xff]
      %v3211 = vld [vmem:[%s3207 + $0x20] sm:$0xff]
      %v3212 = vld [vmem:[%s3207 + $0x30] sm:$0xff]
      %v3213 = vld [vmem:[%s3207 + $0x38] sm:$0xff]
      %v3214 = vld [vmem:[%s3207 + $0x48] sm:$0xff]
      %v3215 = vld [vmem:[%s3207 + $0x50] sm:$0xff]
      %v3216 = vld [vmem:[%s3207 + $0x60] sm:$0xff]
      %v3217 = vld [vmem:[%s3207 + $0x68] sm:$0xff]
      %v3218 = vld [vmem:[%s3207 + $0x78] sm:$0xff]
      %v3219 = vld [vmem:[%s3207 + $0x80] sm:$0xff]
      %v3220 = vld [vmem:[%s3207 + $0x90] sm:$0xff]
      %v3221 = vld [vmem:[%s3207 + $0x98] sm:$0xff]
      %v3222 = vld [vmem:[%s3207 + $0xa8] sm:$0xff]
      %v3223 = vld [vmem:[%s3207 + $0xb0] sm:$0xff]
      %v3224 = vld [vmem:[%s3207 + $0xc0] sm:$0xff]
      %v3225 = vld [vmem:[%s3207 + $0xc8] sm:$0xff]
      %v3226 = vld [vmem:[%s3207 + $0xd8] sm:$0xff]
      %v3227 = vld [vmem:[%s3207 + $0xe0] sm:$0xff]
      %v3228 = vld [vmem:[%s3207 + $0xf0] sm:$0xff]
      %v3229 = vld [vmem:[%s3207 + $0xf8] sm:$0xff]
      %v3230 = vld [vmem:[%s3207 + $0x108] sm:$0xff]
      %v3231 = vld [vmem:[%s3207 + $0x110] sm:$0xff]
      %v3232 = vld [vmem:[%s3207 + $0x120] sm:$0xff]
      %v3233 = vld [vmem:[%s3207 + $0x128] sm:$0xff]
      %v3234 = vld [vmem:[%s3207 + $0x138] sm:$0xff]
      %v3235 = vld [vmem:[%s3207 + $0x140] sm:$0xff]
      %v3236 = vld [vmem:[%s3207 + $0x150] sm:$0xff]
      %v3237 = vld [vmem:[%s3207 + $0x158] sm:$0xff]
      %v3238 = vld [vmem:[%s3207 + $0x168] sm:$0xff]
      %v3239 = vld [vmem:[%s3207 + $0x170] sm:$0xff]
      %s3240 = scalar_lea.vmem %s3, 48
      %v3241 = vld [vmem:[%s3240] sm:$0xff]
      %v3243 = vsel %vm279, %v3208, 0
      %v3246 = vsel %vm279, %v3209, 0
      %v3249 = vsel %vm279, %v3210, 0
      %v3252 = vsel %vm279, %v3211, 0
      %v3255 = vsel %vm279, %v3212, 0
      %v3258 = vsel %vm279, %v3213, 0
      %v3261 = vsel %vm279, %v3214, 0
      %v3264 = vsel %vm279, %v3215, 0
      %v3267 = vsel %vm279, %v3216, 0
      %v3270 = vsel %vm279, %v3217, 0
      %v3273 = vsel %vm279, %v3218, 0
      %v3276 = vsel %vm279, %v3219, 0
      %v3279 = vsel %vm279, %v3220, 0
      %v3282 = vsel %vm279, %v3221, 0
      %v3285 = vsel %vm279, %v3222, 0
      %v3288 = vsel %vm279, %v3223, 0
      %v3291 = vsel %vm279, %v3224, 0
      %v3294 = vsel %vm279, %v3225, 0
      %v3297 = vsel %vm279, %v3226, 0
      %v3300 = vsel %vm279, %v3227, 0
      %v3303 = vsel %vm279, %v3228, 0
      %v3306 = vsel %vm279, %v3229, 0
      %v3309 = vsel %vm279, %v3230, 0
      %v3312 = vsel %vm279, %v3231, 0
      %v3315 = vsel %vm279, %v3232, 0
      %v3318 = vsel %vm279, %v3233, 0
      %v3321 = vsel %vm279, %v3234, 0
      %v3324 = vsel %vm279, %v3235, 0
      %v3327 = vsel %vm279, %v3236, 0
      %v3330 = vsel %vm279, %v3237, 0
      %v3333 = vsel %vm279, %v3238, 0
      %v3336 = vsel %vm279, %v3239, 0
      %3338 = vmatprep.subr.mxu0 0.0
      %3339 = vmatpush1.msra.mxu0 %v3241
      %3340 = vmatprep.subr.mxu0 0.0
      %3341 = vmatpush1.msra.mxu0 0.0
      %3342 = vmatprep.subr.mxu0 0.0
      %3343 = vmatpush1.msra.mxu0 0.0
      %3344 = vmatprep.subr.mxu0 0.0
      %3345 = vmatpush1.msra.mxu0 0.0
      %3346 = vmatprep.subr.mxu0 0.0
      %3347 = vmatpush1.msra.mxu0 0.0
      %3348 = vmatprep.subr.mxu0 0.0
      %3349 = vmatpush1.msra.mxu0 0.0
      %3350 = vmatprep.subr.mxu0 0.0
      %3351 = vmatpush1.msra.mxu0 0.0
      %3352 = vmatprep.subr.mxu0 0.0
      %3353 = vmatpush1.msra.mxu0 0.0
      %3354 = vmatprep.subr.mxu0 0.0
      %3355 = vmatpush1.msra.mxu0 0.0
      %3356 = vmatprep.subr.mxu0 0.0
      %3357 = vmatpush1.msra.mxu0 0.0
      %3358 = vmatprep.subr.mxu0 0.0
      %3359 = vmatpush1.msra.mxu0 0.0
      %3360 = vmatprep.subr.mxu0 0.0
      %3361 = vmatpush1.msra.mxu0 0.0
      %3362 = vmatprep.subr.mxu0 0.0
      %3363 = vmatpush1.msra.mxu0 0.0
      %3364 = vmatprep.subr.mxu0 0.0
      %3365 = vmatpush1.msra.mxu0 0.0
      %3366 = vmatprep.subr.mxu0 0.0
      %3367 = vmatpush1.msra.mxu0 0.0
      %3368 = vmatprep.subr.mxu0 0.0
      %3369 = vmatpush1.msra.mxu0 0.0
      %3370 = vmatprep.subr.mxu0 0.0
      %3371 = vmatpush1.msra.mxu0 0.0
      %3372 = vmatprep.subr.mxu0 0.0
      %3373 = vmatpush1.msra.mxu0 0.0
      %3374 = vmatprep.subr.mxu0 0.0
      %3375 = vmatpush1.msra.mxu0 0.0
      %3376 = vmatprep.subr.mxu0 0.0
      %3377 = vmatpush1.msra.mxu0 0.0
      %3378 = vmatprep.subr.mxu0 0.0
      %3379 = vmatpush1.msra.mxu0 0.0
      %3380 = vmatprep.subr.mxu0 0.0
      %3381 = vmatpush1.msra.mxu0 0.0
      %3382 = vmatprep.subr.mxu0 0.0
      %3383 = vmatpush1.msra.mxu0 0.0
      %3384 = vmatprep.subr.mxu0 0.0
      %3385 = vmatpush1.msra.mxu0 0.0
      %3386 = vmatprep.subr.mxu0 0.0
      %3387 = vmatpush1.msra.mxu0 0.0
      %3388 = vmatprep.subr.mxu0 0.0
      %3389 = vmatpush1.msra.mxu0 0.0
      %3390 = vmatprep.subr.mxu0 0.0
      %3391 = vmatpush1.msra.mxu0 0.0
      %3392 = vmatprep.subr.mxu0 0.0
      %3393 = vmatpush1.msra.mxu0 0.0
      %3394 = vmatprep.subr.mxu0 0.0
      %3395 = vmatpush1.msra.mxu0 0.0
      %3396 = vmatprep.subr.mxu0 0.0
      %3397 = vmatpush1.msra.mxu0 0.0
      %3398 = vmatprep.subr.mxu0 0.0
      %3399 = vmatpush1.msra.mxu0 0.0
      %3400 = vmatprep.subr.mxu0 0.0
      %3401 = vmatpush1.msra.mxu0 0.0
      %3402 = vmatprep.mubr.f32.mxu0 0.0
      %3403 = vmatmul.mubr.f32.gmra.mrb[0].mxu0 %v3243
      %v3404 = vpop.f32.mrb[0].mxu0
      %v3405 = vadd.f32 0.0, %v3404
      %v3406 = vpop.f32.mrb[0].mxu0
      %3407 = vmatprep.mubr.f32.mxu0 0.0
      %3408 = vmatmul.mubr.f32.gmra.mrb[0].mxu0 %v3246
      %v3409 = vpop.f32.mrb[0].mxu0
      %v3410 = vadd.f32 0.0, %v3409
      %v3411 = vpop.f32.mrb[0].mxu0
      %3412 = vmatprep.mubr.f32.mxu0 0.0
      %3413 = vmatmul.mubr.f32.gmra.mrb[0].mxu0 %v3249
      %v3414 = vpop.f32.mrb[0].mxu0
      %v3415 = vadd.f32 0.0, %v3414
      %v3416 = vpop.f32.mrb[0].mxu0
      %3417 = vmatprep.mubr.f32.mxu0 0.0
      %3418 = vmatmul.mubr.f32.gmra.mrb[0].mxu0 %v3252
      %v3419 = vpop.f32.mrb[0].mxu0
      %v3420 = vadd.f32 0.0, %v3419
      %v3421 = vpop.f32.mrb[0].mxu0
      %3422 = vmatprep.mubr.f32.mxu0 0.0
      %3423 = vmatmul.mubr.f32.gmra.mrb[0].mxu0 %v3255
      %v3424 = vpop.f32.mrb[0].mxu0
      %v3425 = vadd.f32 0.0, %v3424
      %v3426 = vpop.f32.mrb[0].mxu0
      %3427 = vmatprep.mubr.f32.mxu0 0.0
      %3428 = vmatmul.mubr.f32.gmra.mrb[0].mxu0 %v3258
      %v3429 = vpop.f32.mrb[0].mxu0
      %v3430 = vadd.f32 0.0, %v3429
      %v3431 = vpop.f32.mrb[0].mxu0
      %3432 = vmatprep.mubr.f32.mxu0 0.0
      %3433 = vmatmul.mubr.f32.gmra.mrb[0].mxu0 %v3261
      %v3434 = vpop.f32.mrb[0].mxu0
      %v3435 = vadd.f32 0.0, %v3434
      %v3436 = vpop.f32.mrb[0].mxu0
      %3437 = vmatprep.mubr.f32.mxu0 0.0
      %3438 = vmatmul.mubr.f32.gmra.mrb[0].mxu0 %v3264
      %v3439 = vpop.f32.mrb[0].mxu0
      %v3440 = vadd.f32 0.0, %v3439
      %v3441 = vpop.f32.mrb[0].mxu0
      %3442 = vmatprep.mubr.f32.mxu0 0.0
      %3443 = vmatmul.mubr.f32.gmra.mrb[0].mxu0 %v3267
      %v3444 = vpop.f32.mrb[0].mxu0
      %v3445 = vadd.f32 0.0, %v3444
      %v3446 = vpop.f32.mrb[0].mxu0
      %3447 = vmatprep.mubr.f32.mxu0 0.0
      %3448 = vmatmul.mubr.f32.gmra.mrb[0].mxu0 %v3270
      %v3449 = vpop.f32.mrb[0].mxu0
      %v3450 = vadd.f32 0.0, %v3449
      %v3451 = vpop.f32.mrb[0].mxu0
      %3452 = vmatprep.mubr.f32.mxu0 0.0
      %3453 = vmatmul.mubr.f32.gmra.mrb[0].mxu0 %v3273
      %v3454 = vpop.f32.mrb[0].mxu0
      %v3455 = vadd.f32 0.0, %v3454
      %v3456 = vpop.f32.mrb[0].mxu0
      %3457 = vmatprep.mubr.f32.mxu0 0.0
      %3458 = vmatmul.mubr.f32.gmra.mrb[0].mxu0 %v3276
      %v3459 = vpop.f32.mrb[0].mxu0
      %v3460 = vadd.f32 0.0, %v3459
      %v3461 = vpop.f32.mrb[0].mxu0
      %3462 = vmatprep.mubr.f32.mxu0 0.0
      %3463 = vmatmul.mubr.f32.gmra.mrb[0].mxu0 %v3279
      %v3464 = vpop.f32.mrb[0].mxu0
      %v3465 = vadd.f32 0.0, %v3464
      %v3466 = vpop.f32.mrb[0].mxu0
      %3467 = vmatprep.mubr.f32.mxu0 0.0
      %3468 = vmatmul.mubr.f32.gmra.mrb[0].mxu0 %v3282
      %v3469 = vpop.f32.mrb[0].mxu0
      %v3470 = vadd.f32 0.0, %v3469
      %v3471 = vpop.f32.mrb[0].mxu0
      %3472 = vmatprep.mubr.f32.mxu0 0.0
      %3473 = vmatmul.mubr.f32.gmra.mrb[0].mxu0 %v3285
      %v3474 = vpop.f32.mrb[0].mxu0
      %v3475 = vadd.f32 0.0, %v3474
      %v3476 = vpop.f32.mrb[0].mxu0
      %3477 = vmatprep.mubr.f32.mxu0 0.0
      %3478 = vmatmul.mubr.f32.gmra.mrb[0].mxu0 %v3288
      %v3479 = vpop.f32.mrb[0].mxu0
      %v3480 = vadd.f32 0.0, %v3479
      %v3481 = vpop.f32.mrb[0].mxu0
      %3482 = vmatprep.mubr.f32.mxu0 0.0
      %3483 = vmatmul.mubr.f32.gmra.mrb[0].mxu0 %v3291
      %v3484 = vpop.f32.mrb[0].mxu0
      %v3485 = vadd.f32 0.0, %v3484
      %v3486 = vpop.f32.mrb[0].mxu0
      %3487 = vmatprep.mubr.f32.mxu0 0.0
      %3488 = vmatmul.mubr.f32.gmra.mrb[0].mxu0 %v3294
      %v3489 = vpop.f32.mrb[0].mxu0
      %v3490 = vadd.f32 0.0, %v3489
      %v3491 = vpop.f32.mrb[0].mxu0
      %3492 = vmatprep.mubr.f32.mxu0 0.0
      %3493 = vmatmul.mubr.f32.gmra.mrb[0].mxu0 %v3297
      %v3494 = vpop.f32.mrb[0].mxu0
      %v3495 = vadd.f32 0.0, %v3494
      %v3496 = vpop.f32.mrb[0].mxu0
      %3497 = vmatprep.mubr.f32.mxu0 0.0
      %3498 = vmatmul.mubr.f32.gmra.mrb[0].mxu0 %v3300
      %v3499 = vpop.f32.mrb[0].mxu0
      %v3500 = vadd.f32 0.0, %v3499
      %v3501 = vpop.f32.mrb[0].mxu0
      %3502 = vmatprep.mubr.f32.mxu0 0.0
      %3503 = vmatmul.mubr.f32.gmra.mrb[0].mxu0 %v3303
      %v3504 = vpop.f32.mrb[0].mxu0
      %v3505 = vadd.f32 0.0, %v3504
      %v3506 = vpop.f32.mrb[0].mxu0
      %3507 = vmatprep.mubr.f32.mxu0 0.0
      %3508 = vmatmul.mubr.f32.gmra.mrb[0].mxu0 %v3306
      %v3509 = vpop.f32.mrb[0].mxu0
      %v3510 = vadd.f32 0.0, %v3509
      %v3511 = vpop.f32.mrb[0].mxu0
      %3512 = vmatprep.mubr.f32.mxu0 0.0
      %3513 = vmatmul.mubr.f32.gmra.mrb[0].mxu0 %v3309
      %v3514 = vpop.f32.mrb[0].mxu0
      %v3515 = vadd.f32 0.0, %v3514
      %v3516 = vpop.f32.mrb[0].mxu0
      %3517 = vmatprep.mubr.f32.mxu0 0.0
      %3518 = vmatmul.mubr.f32.gmra.mrb[0].mxu0 %v3312
      %v3519 = vpop.f32.mrb[0].mxu0
      %v3520 = vadd.f32 0.0, %v3519
      %v3521 = vpop.f32.mrb[0].mxu0
      %3522 = vmatprep.mubr.f32.mxu0 0.0
      %3523 = vmatmul.mubr.f32.gmra.mrb[0].mxu0 %v3315
      %v3524 = vpop.f32.mrb[0].mxu0
      %v3525 = vadd.f32 0.0, %v3524
      %v3526 = vpop.f32.mrb[0].mxu0
      %3527 = vmatprep.mubr.f32.mxu0 0.0
      %3528 = vmatmul.mubr.f32.gmra.mrb[0].mxu0 %v3318
      %v3529 = vpop.f32.mrb[0].mxu0
      %v3530 = vadd.f32 0.0, %v3529
      %v3531 = vpop.f32.mrb[0].mxu0
      %3532 = vmatprep.mubr.f32.mxu0 0.0
      %3533 = vmatmul.mubr.f32.gmra.mrb[0].mxu0 %v3321
      %v3534 = vpop.f32.mrb[0].mxu0
      %v3535 = vadd.f32 0.0, %v3534
      %v3536 = vpop.f32.mrb[0].mxu0
      %3537 = vmatprep.mubr.f32.mxu0 0.0
      %3538 = vmatmul.mubr.f32.gmra.mrb[0].mxu0 %v3324
      %v3539 = vpop.f32.mrb[0].mxu0
      %v3540 = vadd.f32 0.0, %v3539
      %v3541 = vpop.f32.mrb[0].mxu0
      %3542 = vmatprep.mubr.f32.mxu0 0.0
      %3543 = vmatmul.mubr.f32.gmra.mrb[0].mxu0 %v3327
      %v3544 = vpop.f32.mrb[0].mxu0
      %v3545 = vadd.f32 0.0, %v3544
      %v3546 = vpop.f32.mrb[0].mxu0
      %3547 = vmatprep.mubr.f32.mxu0 0.0
      %3548 = vmatmul.mubr.f32.gmra.mrb[0].mxu0 %v3330
      %v3549 = vpop.f32.mrb[0].mxu0
      %v3550 = vadd.f32 0.0, %v3549
      %v3551 = vpop.f32.mrb[0].mxu0
      %3552 = vmatprep.mubr.f32.mxu0 0.0
      %3553 = vmatmul.mubr.f32.gmra.mrb[0].mxu0 %v3333
      %v3554 = vpop.f32.mrb[0].mxu0
      %v3555 = vadd.f32 0.0, %v3554
      %v3556 = vpop.f32.mrb[0].mxu0
      %3557 = vmatprep.mubr.f32.mxu0 0.0
      %3558 = vmatmul.mubr.f32.gmra.mrb[0].mxu0 %v3336
      %v3559 = vpop.f32.mrb[0].mxu0
      %v3560 = vadd.f32 0.0, %v3559
      %v3561 = vpop.f32.mrb[0].mxu0
      %3562 = vdwg.mxu0
      %v3563 = vadd.f32 %v3175, %v3405
      %v3564 = vadd.f32 %v3176, %v3410
      %v3565 = vadd.f32 %v3177, %v3415
      %v3566 = vadd.f32 %v3178, %v3420
      %v3567 = vadd.f32 %v3179, %v3425
      %v3568 = vadd.f32 %v3180, %v3430
      %v3569 = vadd.f32 %v3181, %v3435
      %v3570 = vadd.f32 %v3182, %v3440
      %v3571 = vadd.f32 %v3183, %v3445
      %v3572 = vadd.f32 %v3184, %v3450
      %v3573 = vadd.f32 %v3185, %v3455
      %v3574 = vadd.f32 %v3186, %v3460
      %v3575 = vadd.f32 %v3187, %v3465
      %v3576 = vadd.f32 %v3188, %v3470
      %v3577 = vadd.f32 %v3189, %v3475
      %v3578 = vadd.f32 %v3190, %v3480
      %v3579 = vadd.f32 %v3191, %v3485
      %v3580 = vadd.f32 %v3192, %v3490
      %v3581 = vadd.f32 %v3193, %v3495
      %v3582 = vadd.f32 %v3194, %v3500
      %v3583 = vadd.f32 %v3195, %v3505
      %v3584 = vadd.f32 %v3196, %v3510
      %v3585 = vadd.f32 %v3197, %v3515
      %v3586 = vadd.f32 %v3198, %v3520
      %v3587 = vadd.f32 %v3199, %v3525
      %v3588 = vadd.f32 %v3200, %v3530
      %v3589 = vadd.f32 %v3201, %v3535
      %v3590 = vadd.f32 %v3202, %v3540
      %v3591 = vadd.f32 %v3203, %v3545
      %v3592 = vadd.f32 %v3204, %v3550
      %v3593 = vadd.f32 %v3205, %v3555
      %v3594 = vadd.f32 %v3206, %v3560
      %v3595 = vld [vmem:[%s3207 + $0x1] sm:$0xff]
      %v3596 = vld [vmem:[%s3207 + $0x9] sm:$0xff]
      %v3597 = vld [vmem:[%s3207 + $0x19] sm:$0xff]
      %v3598 = vld [vmem:[%s3207 + $0x21] sm:$0xff]
      %v3599 = vld [vmem:[%s3207 + $0x31] sm:$0xff]
      %v3600 = vld [vmem:[%s3207 + $0x39] sm:$0xff]
      %v3601 = vld [vmem:[%s3207 + $0x49] sm:$0xff]
      %v3602 = vld [vmem:[%s3207 + $0x51] sm:$0xff]
      %v3603 = vld [vmem:[%s3207 + $0x61] sm:$0xff]
      %v3604 = vld [vmem:[%s3207 + $0x69] sm:$0xff]
      %v3605 = vld [vmem:[%s3207 + $0x79] sm:$0xff]
      %v3606 = vld [vmem:[%s3207 + $0x81] sm:$0xff]
      %v3607 = vld [vmem:[%s3207 + $0x91] sm:$0xff]
      %v3608 = vld [vmem:[%s3207 + $0x99] sm:$0xff]
      %v3609 = vld [vmem:[%s3207 + $0xa9] sm:$0xff]
      %v3610 = vld [vmem:[%s3207 + $0xb1] sm:$0xff]
      %v3611 = vld [vmem:[%s3207 + $0xc1] sm:$0xff]
      %v3612 = vld [vmem:[%s3207 + $0xc9] sm:$0xff]
      %v3613 = vld [vmem:[%s3207 + $0xd9] sm:$0xff]
      %v3614 = vld [vmem:[%s3207 + $0xe1] sm:$0xff]
      %v3615 = vld [vmem:[%s3207 + $0xf1] sm:$0xff]
      %v3616 = vld [vmem:[%s3207 + $0xf9] sm:$0xff]
      %v3617 = vld [vmem:[%s3207 + $0x109] sm:$0xff]
      %v3618 = vld [vmem:[%s3207 + $0x111] sm:$0xff]
      %v3619 = vld [vmem:[%s3207 + $0x121] sm:$0xff]
      %v3620 = vld [vmem:[%s3207 + $0x129] sm:$0xff]
      %v3621 = vld [vmem:[%s3207 + $0x139] sm:$0xff]
      %v3622 = vld [vmem:[%s3207 + $0x141] sm:$0xff]
      %v3623 = vld [vmem:[%s3207 + $0x151] sm:$0xff]
      %v3624 = vld [vmem:[%s3207 + $0x159] sm:$0xff]
      %v3625 = vld [vmem:[%s3207 + $0x169] sm:$0xff]
      %v3626 = vld [vmem:[%s3207 + $0x171] sm:$0xff]
      %s3627 = scalar_lea.vmem %s3, 56
      %v3628 = vld [vmem:[%s3627] sm:$0xff]
      %v3630 = vsel %vm279, %v3595, 0
      %v3633 = vsel %vm279, %v3596, 0
      %v3636 = vsel %vm279, %v3597, 0
      %v3639 = vsel %vm279, %v3598, 0
      %v3642 = vsel %vm279, %v3599, 0
      %v3645 = vsel %vm279, %v3600, 0
      %v3648 = vsel %vm279, %v3601, 0
      %v3651 = vsel %vm279, %v3602, 0
      %v3654 = vsel %vm279, %v3603, 0
      %v3657 = vsel %vm279, %v3604, 0
      %v3660 = vsel %vm279, %v3605, 0
      %v3663 = vsel %vm279, %v3606, 0
      %v3666 = vsel %vm279, %v3607, 0
      %v3669 = vsel %vm279, %v3608, 0
      %v3672 = vsel %vm279, %v3609, 0
      %v3675 = vsel %vm279, %v3610, 0
      %v3678 = vsel %vm279, %v3611, 0
      %v3681 = vsel %vm279, %v3612, 0
      %v3684 = vsel %vm279, %v3613, 0
      %v3687 = vsel %vm279, %v3614, 0
      %v3690 = vsel %vm279, %v3615, 0
      %v3693 = vsel %vm279, %v3616, 0
      %v3696 = vsel %vm279, %v3617, 0
      %v3699 = vsel %vm279, %v3618, 0
      %v3702 = vsel %vm279, %v3619, 0
      %v3705 = vsel %vm279, %v3620, 0
      %v3708 = vsel %vm279, %v3621, 0
      %v3711 = vsel %vm279, %v3622, 0
      %v3714 = vsel %vm279, %v3623, 0
      %v3717 = vsel %vm279, %v3624, 0
      %v3720 = vsel %vm279, %v3625, 0
      %v3723 = vsel %vm279, %v3626, 0
      %3725 = vmatprep.subr.mxu0 0.0
      %3726 = vmatpush1.msra.mxu0 %v3628
      %3727 = vmatprep.subr.mxu0 0.0
      %3728 = vmatpush1.msra.mxu0 0.0
      %3729 = vmatprep.subr.mxu0 0.0
      %3730 = vmatpush1.msra.mxu0 0.0
      %3731 = vmatprep.subr.mxu0 0.0
      %3732 = vmatpush1.msra.mxu0 0.0
      %3733 = vmatprep.subr.mxu0 0.0
      %3734 = vmatpush1.msra.mxu0 0.0
      %3735 = vmatprep.subr.mxu0 0.0
      %3736 = vmatpush1.msra.mxu0 0.0
      %3737 = vmatprep.subr.mxu0 0.0
      %3738 = vmatpush1.msra.mxu0 0.0
      %3739 = vmatprep.subr.mxu0 0.0
      %3740 = vmatpush1.msra.mxu0 0.0
      %3741 = vmatprep.subr.mxu0 0.0
      %3742 = vmatpush1.msra.mxu0 0.0
      %3743 = vmatprep.subr.mxu0 0.0
      %3744 = vmatpush1.msra.mxu0 0.0
      %3745 = vmatprep.subr.mxu0 0.0
      %3746 = vmatpush1.msra.mxu0 0.0
      %3747 = vmatprep.subr.mxu0 0.0
      %3748 = vmatpush1.msra.mxu0 0.0
      %3749 = vmatprep.subr.mxu0 0.0
      %3750 = vmatpush1.msra.mxu0 0.0
      %3751 = vmatprep.subr.mxu0 0.0
      %3752 = vmatpush1.msra.mxu0 0.0
      %3753 = vmatprep.subr.mxu0 0.0
      %3754 = vmatpush1.msra.mxu0 0.0
      %3755 = vmatprep.subr.mxu0 0.0
      %3756 = vmatpush1.msra.mxu0 0.0
      %3757 = vmatprep.subr.mxu0 0.0
      %3758 = vmatpush1.msra.mxu0 0.0
      %3759 = vmatprep.subr.mxu0 0.0
      %3760 = vmatpush1.msra.mxu0 0.0
      %3761 = vmatprep.subr.mxu0 0.0
      %3762 = vmatpush1.msra.mxu0 0.0
      %3763 = vmatprep.subr.mxu0 0.0
      %3764 = vmatpush1.msra.mxu0 0.0
      %3765 = vmatprep.subr.mxu0 0.0
      %3766 = vmatpush1.msra.mxu0 0.0
      %3767 = vmatprep.subr.mxu0 0.0
      %3768 = vmatpush1.msra.mxu0 0.0
      %3769 = vmatprep.subr.mxu0 0.0
      %3770 = vmatpush1.msra.mxu0 0.0
      %3771 = vmatprep.subr.mxu0 0.0
      %3772 = vmatpush1.msra.mxu0 0.0
      %3773 = vmatprep.subr.mxu0 0.0
      %3774 = vmatpush1.msra.mxu0 0.0
      %3775 = vmatprep.subr.mxu0 0.0
      %3776 = vmatpush1.msra.mxu0 0.0
      %3777 = vmatprep.subr.mxu0 0.0
      %3778 = vmatpush1.msra.mxu0 0.0
      %3779 = vmatprep.subr.mxu0 0.0
      %3780 = vmatpush1.msra.mxu0 0.0
      %3781 = vmatprep.subr.mxu0 0.0
      %3782 = vmatpush1.msra.mxu0 0.0
      %3783 = vmatprep.subr.mxu0 0.0
      %3784 = vmatpush1.msra.mxu0 0.0
      %3785 = vmatprep.subr.mxu0 0.0
      %3786 = vmatpush1.msra.mxu0 0.0
      %3787 = vmatprep.subr.mxu0 0.0
      %3788 = vmatpush1.msra.mxu0 0.0
      %3789 = vmatprep.mubr.f32.mxu0 0.0
      %3790 = vmatmul.mubr.f32.gmra.mrb[0].mxu0 %v3630
      %v3791 = vpop.f32.mrb[0].mxu0
      %v3792 = vadd.f32 0.0, %v3791
      %v3793 = vpop.f32.mrb[0].mxu0
      %3794 = vmatprep.mubr.f32.mxu0 0.0
      %3795 = vmatmul.mubr.f32.gmra.mrb[0].mxu0 %v3633
      %v3796 = vpop.f32.mrb[0].mxu0
      %v3797 = vadd.f32 0.0, %v3796
      %v3798 = vpop.f32.mrb[0].mxu0
      %3799 = vmatprep.mubr.f32.mxu0 0.0
      %3800 = vmatmul.mubr.f32.gmra.mrb[0].mxu0 %v3636
      %v3801 = vpop.f32.mrb[0].mxu0
      %v3802 = vadd.f32 0.0, %v3801
      %v3803 = vpop.f32.mrb[0].mxu0
      %3804 = vmatprep.mubr.f32.mxu0 0.0
      %3805 = vmatmul.mubr.f32.gmra.mrb[0].mxu0 %v3639
      %v3806 = vpop.f32.mrb[0].mxu0
      %v3807 = vadd.f32 0.0, %v3806
      %v3808 = vpop.f32.mrb[0].mxu0
      %3809 = vmatprep.mubr.f32.mxu0 0.0
      %3810 = vmatmul.mubr.f32.gmra.mrb[0].mxu0 %v3642
      %v3811 = vpop.f32.mrb[0].mxu0
      %v3812 = vadd.f32 0.0, %v3811
      %v3813 = vpop.f32.mrb[0].mxu0
      %3814 = vmatprep.mubr.f32.mxu0 0.0
      %3815 = vmatmul.mubr.f32.gmra.mrb[0].mxu0 %v3645
      %v3816 = vpop.f32.mrb[0].mxu0
      %v3817 = vadd.f32 0.0, %v3816
      %v3818 = vpop.f32.mrb[0].mxu0
      %3819 = vmatprep.mubr.f32.mxu0 0.0
      %3820 = vmatmul.mubr.f32.gmra.mrb[0].mxu0 %v3648
      %v3821 = vpop.f32.mrb[0].mxu0
      %v3822 = vadd.f32 0.0, %v3821
      %v3823 = vpop.f32.mrb[0].mxu0
      %3824 = vmatprep.mubr.f32.mxu0 0.0
      %3825 = vmatmul.mubr.f32.gmra.mrb[0].mxu0 %v3651
      %v3826 = vpop.f32.mrb[0].mxu0
      %v3827 = vadd.f32 0.0, %v3826
      %v3828 = vpop.f32.mrb[0].mxu0
      %3829 = vmatprep.mubr.f32.mxu0 0.0
      %3830 = vmatmul.mubr.f32.gmra.mrb[0].mxu0 %v3654
      %v3831 = vpop.f32.mrb[0].mxu0
      %v3832 = vadd.f32 0.0, %v3831
      %v3833 = vpop.f32.mrb[0].mxu0
      %3834 = vmatprep.mubr.f32.mxu0 0.0
      %3835 = vmatmul.mubr.f32.gmra.mrb[0].mxu0 %v3657
      %v3836 = vpop.f32.mrb[0].mxu0
      %v3837 = vadd.f32 0.0, %v3836
      %v3838 = vpop.f32.mrb[0].mxu0
      %3839 = vmatprep.mubr.f32.mxu0 0.0
      %3840 = vmatmul.mubr.f32.gmra.mrb[0].mxu0 %v3660
      %v3841 = vpop.f32.mrb[0].mxu0
      %v3842 = vadd.f32 0.0, %v3841
      %v3843 = vpop.f32.mrb[0].mxu0
      %3844 = vmatprep.mubr.f32.mxu0 0.0
      %3845 = vmatmul.mubr.f32.gmra.mrb[0].mxu0 %v3663
      %v3846 = vpop.f32.mrb[0].mxu0
      %v3847 = vadd.f32 0.0, %v3846
      %v3848 = vpop.f32.mrb[0].mxu0
      %3849 = vmatprep.mubr.f32.mxu0 0.0
      %3850 = vmatmul.mubr.f32.gmra.mrb[0].mxu0 %v3666
      %v3851 = vpop.f32.mrb[0].mxu0
      %v3852 = vadd.f32 0.0, %v3851
      %v3853 = vpop.f32.mrb[0].mxu0
      %3854 = vmatprep.mubr.f32.mxu0 0.0
      %3855 = vmatmul.mubr.f32.gmra.mrb[0].mxu0 %v3669
      %v3856 = vpop.f32.mrb[0].mxu0
      %v3857 = vadd.f32 0.0, %v3856
      %v3858 = vpop.f32.mrb[0].mxu0
      %3859 = vmatprep.mubr.f32.mxu0 0.0
      %3860 = vmatmul.mubr.f32.gmra.mrb[0].mxu0 %v3672
      %v3861 = vpop.f32.mrb[0].mxu0
      %v3862 = vadd.f32 0.0, %v3861
      %v3863 = vpop.f32.mrb[0].mxu0
      %3864 = vmatprep.mubr.f32.mxu0 0.0
      %3865 = vmatmul.mubr.f32.gmra.mrb[0].mxu0 %v3675
      %v3866 = vpop.f32.mrb[0].mxu0
      %v3867 = vadd.f32 0.0, %v3866
      %v3868 = vpop.f32.mrb[0].mxu0
      %3869 = vmatprep.mubr.f32.mxu0 0.0
      %3870 = vmatmul.mubr.f32.gmra.mrb[0].mxu0 %v3678
      %v3871 = vpop.f32.mrb[0].mxu0
      %v3872 = vadd.f32 0.0, %v3871
      %v3873 = vpop.f32.mrb[0].mxu0
      %3874 = vmatprep.mubr.f32.mxu0 0.0
      %3875 = vmatmul.mubr.f32.gmra.mrb[0].mxu0 %v3681
      %v3876 = vpop.f32.mrb[0].mxu0
      %v3877 = vadd.f32 0.0, %v3876
      %v3878 = vpop.f32.mrb[0].mxu0
      %3879 = vmatprep.mubr.f32.mxu0 0.0
      %3880 = vmatmul.mubr.f32.gmra.mrb[0].mxu0 %v3684
      %v3881 = vpop.f32.mrb[0].mxu0
      %v3882 = vadd.f32 0.0, %v3881
      %v3883 = vpop.f32.mrb[0].mxu0
      %3884 = vmatprep.mubr.f32.mxu0 0.0
      %3885 = vmatmul.mubr.f32.gmra.mrb[0].mxu0 %v3687
      %v3886 = vpop.f32.mrb[0].mxu0
      %v3887 = vadd.f32 0.0, %v3886
      %v3888 = vpop.f32.mrb[0].mxu0
      %3889 = vmatprep.mubr.f32.mxu0 0.0
      %3890 = vmatmul.mubr.f32.gmra.mrb[0].mxu0 %v3690
      %v3891 = vpop.f32.mrb[0].mxu0
      %v3892 = vadd.f32 0.0, %v3891
      %v3893 = vpop.f32.mrb[0].mxu0
      %3894 = vmatprep.mubr.f32.mxu0 0.0
      %3895 = vmatmul.mubr.f32.gmra.mrb[0].mxu0 %v3693
      %v3896 = vpop.f32.mrb[0].mxu0
      %v3897 = vadd.f32 0.0, %v3896
      %v3898 = vpop.f32.mrb[0].mxu0
      %3899 = vmatprep.mubr.f32.mxu0 0.0
      %3900 = vmatmul.mubr.f32.gmra.mrb[0].mxu0 %v3696
      %v3901 = vpop.f32.mrb[0].mxu0
      %v3902 = vadd.f32 0.0, %v3901
      %v3903 = vpop.f32.mrb[0].mxu0
      %3904 = vmatprep.mubr.f32.mxu0 0.0
      %3905 = vmatmul.mubr.f32.gmra.mrb[0].mxu0 %v3699
      %v3906 = vpop.f32.mrb[0].mxu0
      %v3907 = vadd.f32 0.0, %v3906
      %v3908 = vpop.f32.mrb[0].mxu0
      %3909 = vmatprep.mubr.f32.mxu0 0.0
      %3910 = vmatmul.mubr.f32.gmra.mrb[0].mxu0 %v3702
      %v3911 = vpop.f32.mrb[0].mxu0
      %v3912 = vadd.f32 0.0, %v3911
      %v3913 = vpop.f32.mrb[0].mxu0
      %3914 = vmatprep.mubr.f32.mxu0 0.0
      %3915 = vmatmul.mubr.f32.gmra.mrb[0].mxu0 %v3705
      %v3916 = vpop.f32.mrb[0].mxu0
      %v3917 = vadd.f32 0.0, %v3916
      %v3918 = vpop.f32.mrb[0].mxu0
      %3919 = vmatprep.mubr.f32.mxu0 0.0
      %3920 = vmatmul.mubr.f32.gmra.mrb[0].mxu0 %v3708
      %v3921 = vpop.f32.mrb[0].mxu0
      %v3922 = vadd.f32 0.0, %v3921
      %v3923 = vpop.f32.mrb[0].mxu0
      %3924 = vmatprep.mubr.f32.mxu0 0.0
      %3925 = vmatmul.mubr.f32.gmra.mrb[0].mxu0 %v3711
      %v3926 = vpop.f32.mrb[0].mxu0
      %v3927 = vadd.f32 0.0, %v3926
      %v3928 = vpop.f32.mrb[0].mxu0
      %3929 = vmatprep.mubr.f32.mxu0 0.0
      %3930 = vmatmul.mubr.f32.gmra.mrb[0].mxu0 %v3714
      %v3931 = vpop.f32.mrb[0].mxu0
      %v3932 = vadd.f32 0.0, %v3931
      %v3933 = vpop.f32.mrb[0].mxu0
      %3934 = vmatprep.mubr.f32.mxu0 0.0
      %3935 = vmatmul.mubr.f32.gmra.mrb[0].mxu0 %v3717
      %v3936 = vpop.f32.mrb[0].mxu0
      %v3937 = vadd.f32 0.0, %v3936
      %v3938 = vpop.f32.mrb[0].mxu0
      %3939 = vmatprep.mubr.f32.mxu0 0.0
      %3940 = vmatmul.mubr.f32.gmra.mrb[0].mxu0 %v3720
      %v3941 = vpop.f32.mrb[0].mxu0
      %v3942 = vadd.f32 0.0, %v3941
      %v3943 = vpop.f32.mrb[0].mxu0
      %3944 = vmatprep.mubr.f32.mxu0 0.0
      %3945 = vmatmul.mubr.f32.gmra.mrb[0].mxu0 %v3723
      %v3946 = vpop.f32.mrb[0].mxu0
      %v3947 = vadd.f32 0.0, %v3946
      %v3948 = vpop.f32.mrb[0].mxu0
      %3949 = vdwg.mxu0
      %v3950 = vadd.f32 %v3563, %v3792
      %v3951 = vadd.f32 %v3564, %v3797
      %v3952 = vadd.f32 %v3565, %v3802
      %v3953 = vadd.f32 %v3566, %v3807
      %v3954 = vadd.f32 %v3567, %v3812
      %v3955 = vadd.f32 %v3568, %v3817
      %v3956 = vadd.f32 %v3569, %v3822
      %v3957 = vadd.f32 %v3570, %v3827
      %v3958 = vadd.f32 %v3571, %v3832
      %v3959 = vadd.f32 %v3572, %v3837
      %v3960 = vadd.f32 %v3573, %v3842
      %v3961 = vadd.f32 %v3574, %v3847
      %v3962 = vadd.f32 %v3575, %v3852
      %v3963 = vadd.f32 %v3576, %v3857
      %v3964 = vadd.f32 %v3577, %v3862
      %v3965 = vadd.f32 %v3578, %v3867
      %v3966 = vadd.f32 %v3579, %v3872
      %v3967 = vadd.f32 %v3580, %v3877
      %v3968 = vadd.f32 %v3581, %v3882
      %v3969 = vadd.f32 %v3582, %v3887
      %v3970 = vadd.f32 %v3583, %v3892
      %v3971 = vadd.f32 %v3584, %v3897
      %v3972 = vadd.f32 %v3585, %v3902
      %v3973 = vadd.f32 %v3586, %v3907
      %v3974 = vadd.f32 %v3587, %v3912
      %v3975 = vadd.f32 %v3588, %v3917
      %v3976 = vadd.f32 %v3589, %v3922
      %v3977 = vadd.f32 %v3590, %v3927
      %v3978 = vadd.f32 %v3591, %v3932
      %v3979 = vadd.f32 %v3592, %v3937
      %v3980 = vadd.f32 %v3593, %v3942
      %v3981 = vadd.f32 %v3594, %v3947
      %v3982 = vld [vmem:[%s3207 + $0x2] sm:$0xff]
      %v3983 = vld [vmem:[%s3207 + $0xa] sm:$0xff]
      %v3984 = vld [vmem:[%s3207 + $0x1a] sm:$0xff]
      %v3985 = vld [vmem:[%s3207 + $0x22] sm:$0xff]
      %v3986 = vld [vmem:[%s3207 + $0x32] sm:$0xff]
      %v3987 = vld [vmem:[%s3207 + $0x3a] sm:$0xff]
      %v3988 = vld [vmem:[%s3207 + $0x4a] sm:$0xff]
      %v3989 = vld [vmem:[%s3207 + $0x52] sm:$0xff]
      %v3990 = vld [vmem:[%s3207 + $0x62] sm:$0xff]
      %v3991 = vld [vmem:[%s3207 + $0x6a] sm:$0xff]
      %v3992 = vld [vmem:[%s3207 + $0x7a] sm:$0xff]
      %v3993 = vld [vmem:[%s3207 + $0x82] sm:$0xff]
      %v3994 = vld [vmem:[%s3207 + $0x92] sm:$0xff]
      %v3995 = vld [vmem:[%s3207 + $0x9a] sm:$0xff]
      %v3996 = vld [vmem:[%s3207 + $0xaa] sm:$0xff]
      %v3997 = vld [vmem:[%s3207 + $0xb2] sm:$0xff]
      %v3998 = vld [vmem:[%s3207 + $0xc2] sm:$0xff]
      %v3999 = vld [vmem:[%s3207 + $0xca] sm:$0xff]
      %v4000 = vld [vmem:[%s3207 + $0xda] sm:$0xff]
      %v4001 = vld [vmem:[%s3207 + $0xe2] sm:$0xff]
      %v4002 = vld [vmem:[%s3207 + $0xf2] sm:$0xff]
      %v4003 = vld [vmem:[%s3207 + $0xfa] sm:$0xff]
      %v4004 = vld [vmem:[%s3207 + $0x10a] sm:$0xff]
      %v4005 = vld [vmem:[%s3207 + $0x112] sm:$0xff]
      %v4006 = vld [vmem:[%s3207 + $0x122] sm:$0xff]
      %v4007 = vld [vmem:[%s3207 + $0x12a] sm:$0xff]
      %v4008 = vld [vmem:[%s3207 + $0x13a] sm:$0xff]
      %v4009 = vld [vmem:[%s3207 + $0x142] sm:$0xff]
      %v4010 = vld [vmem:[%s3207 + $0x152] sm:$0xff]
      %v4011 = vld [vmem:[%s3207 + $0x15a] sm:$0xff]
      %v4012 = vld [vmem:[%s3207 + $0x16a] sm:$0xff]
      %v4013 = vld [vmem:[%s3207 + $0x172] sm:$0xff]
      %s4014 = scalar_lea.vmem %s3, 64
      %v4015 = vld [vmem:[%s4014] sm:$0xff]
      %v4017 = vsel %vm279, %v3982, 0
      %v4020 = vsel %vm279, %v3983, 0
      %v4023 = vsel %vm279, %v3984, 0
      %v4026 = vsel %vm279, %v3985, 0
      %v4029 = vsel %vm279, %v3986, 0
      %v4032 = vsel %vm279, %v3987, 0
      %v4035 = vsel %vm279, %v3988, 0
      %v4038 = vsel %vm279, %v3989, 0
      %v4041 = vsel %vm279, %v3990, 0
      %v4044 = vsel %vm279, %v3991, 0
      %v4047 = vsel %vm279, %v3992, 0
      %v4050 = vsel %vm279, %v3993, 0
      %v4053 = vsel %vm279, %v3994, 0
      %v4056 = vsel %vm279, %v3995, 0
      %v4059 = vsel %vm279, %v3996, 0
      %v4062 = vsel %vm279, %v3997, 0
      %v4065 = vsel %vm279, %v3998, 0
      %v4068 = vsel %vm279, %v3999, 0
      %v4071 = vsel %vm279, %v4000, 0
      %v4074 = vsel %vm279, %v4001, 0
      %v4077 = vsel %vm279, %v4002, 0
      %v4080 = vsel %vm279, %v4003, 0
      %v4083 = vsel %vm279, %v4004, 0
      %v4086 = vsel %vm279, %v4005, 0
      %v4089 = vsel %vm279, %v4006, 0
      %v4092 = vsel %vm279, %v4007, 0
      %v4095 = vsel %vm279, %v4008, 0
      %v4098 = vsel %vm279, %v4009, 0
      %v4101 = vsel %vm279, %v4010, 0
      %v4104 = vsel %vm279, %v4011, 0
      %v4107 = vsel %vm279, %v4012, 0
      %v4110 = vsel %vm279, %v4013, 0
      %4112 = vmatprep.subr.mxu0 0.0
      %4113 = vmatpush1.msra.mxu0 %v4015
      %4114 = vmatprep.subr.mxu0 0.0
      %4115 = vmatpush1.msra.mxu0 0.0
      %4116 = vmatprep.subr.mxu0 0.0
      %4117 = vmatpush1.msra.mxu0 0.0
      %4118 = vmatprep.subr.mxu0 0.0
      %4119 = vmatpush1.msra.mxu0 0.0
      %4120 = vmatprep.subr.mxu0 0.0
      %4121 = vmatpush1.msra.mxu0 0.0
      %4122 = vmatprep.subr.mxu0 0.0
      %4123 = vmatpush1.msra.mxu0 0.0
      %4124 = vmatprep.subr.mxu0 0.0
      %4125 = vmatpush1.msra.mxu0 0.0
      %4126 = vmatprep.subr.mxu0 0.0
      %4127 = vmatpush1.msra.mxu0 0.0
      %4128 = vmatprep.subr.mxu0 0.0
      %4129 = vmatpush1.msra.mxu0 0.0
      %4130 = vmatprep.subr.mxu0 0.0
      %4131 = vmatpush1.msra.mxu0 0.0
      %4132 = vmatprep.subr.mxu0 0.0
      %4133 = vmatpush1.msra.mxu0 0.0
      %4134 = vmatprep.subr.mxu0 0.0
      %4135 = vmatpush1.msra.mxu0 0.0
      %4136 = vmatprep.subr.mxu0 0.0
      %4137 = vmatpush1.msra.mxu0 0.0
      %4138 = vmatprep.subr.mxu0 0.0
      %4139 = vmatpush1.msra.mxu0 0.0
      %4140 = vmatprep.subr.mxu0 0.0
      %4141 = vmatpush1.msra.mxu0 0.0
      %4142 = vmatprep.subr.mxu0 0.0
      %4143 = vmatpush1.msra.mxu0 0.0
      %4144 = vmatprep.subr.mxu0 0.0
      %4145 = vmatpush1.msra.mxu0 0.0
      %4146 = vmatprep.subr.mxu0 0.0
      %4147 = vmatpush1.msra.mxu0 0.0
      %4148 = vmatprep.subr.mxu0 0.0
      %4149 = vmatpush1.msra.mxu0 0.0
      %4150 = vmatprep.subr.mxu0 0.0
      %4151 = vmatpush1.msra.mxu0 0.0
      %4152 = vmatprep.subr.mxu0 0.0
      %4153 = vmatpush1.msra.mxu0 0.0
      %4154 = vmatprep.subr.mxu0 0.0
      %4155 = vmatpush1.msra.mxu0 0.0
      %4156 = vmatprep.subr.mxu0 0.0
      %4157 = vmatpush1.msra.mxu0 0.0
      %4158 = vmatprep.subr.mxu0 0.0
      %4159 = vmatpush1.msra.mxu0 0.0
      %4160 = vmatprep.subr.mxu0 0.0
      %4161 = vmatpush1.msra.mxu0 0.0
      %4162 = vmatprep.subr.mxu0 0.0
      %4163 = vmatpush1.msra.mxu0 0.0
      %4164 = vmatprep.subr.mxu0 0.0
      %4165 = vmatpush1.msra.mxu0 0.0
      %4166 = vmatprep.subr.mxu0 0.0
      %4167 = vmatpush1.msra.mxu0 0.0
      %4168 = vmatprep.subr.mxu0 0.0
      %4169 = vmatpush1.msra.mxu0 0.0
      %4170 = vmatprep.subr.mxu0 0.0
      %4171 = vmatpush1.msra.mxu0 0.0
      %4172 = vmatprep.subr.mxu0 0.0
      %4173 = vmatpush1.msra.mxu0 0.0
      %4174 = vmatprep.subr.mxu0 0.0
      %4175 = vmatpush1.msra.mxu0 0.0
      %4176 = vmatprep.mubr.f32.mxu0 0.0
      %4177 = vmatmul.mubr.f32.gmra.mrb[0].mxu0 %v4017
      %v4178 = vpop.f32.mrb[0].mxu0
      %v4179 = vadd.f32 0.0, %v4178
      %v4180 = vpop.f32.mrb[0].mxu0
      %4181 = vmatprep.mubr.f32.mxu0 0.0
      %4182 = vmatmul.mubr.f32.gmra.mrb[0].mxu0 %v4020
      %v4183 = vpop.f32.mrb[0].mxu0
      %v4184 = vadd.f32 0.0, %v4183
      %v4185 = vpop.f32.mrb[0].mxu0
      %4186 = vmatprep.mubr.f32.mxu0 0.0
      %4187 = vmatmul.mubr.f32.gmra.mrb[0].mxu0 %v4023
      %v4188 = vpop.f32.mrb[0].mxu0
      %v4189 = vadd.f32 0.0, %v4188
      %v4190 = vpop.f32.mrb[0].mxu0
      %4191 = vmatprep.mubr.f32.mxu0 0.0
      %4192 = vmatmul.mubr.f32.gmra.mrb[0].mxu0 %v4026
      %v4193 = vpop.f32.mrb[0].mxu0
      %v4194 = vadd.f32 0.0, %v4193
      %v4195 = vpop.f32.mrb[0].mxu0
      %4196 = vmatprep.mubr.f32.mxu0 0.0
      %4197 = vmatmul.mubr.f32.gmra.mrb[0].mxu0 %v4029
      %v4198 = vpop.f32.mrb[0].mxu0
      %v4199 = vadd.f32 0.0, %v4198
      %v4200 = vpop.f32.mrb[0].mxu0
      %4201 = vmatprep.mubr.f32.mxu0 0.0
      %4202 = vmatmul.mubr.f32.gmra.mrb[0].mxu0 %v4032
      %v4203 = vpop.f32.mrb[0].mxu0
      %v4204 = vadd.f32 0.0, %v4203
      %v4205 = vpop.f32.mrb[0].mxu0
      %4206 = vmatprep.mubr.f32.mxu0 0.0
      %4207 = vmatmul.mubr.f32.gmra.mrb[0].mxu0 %v4035
      %v4208 = vpop.f32.mrb[0].mxu0
      %v4209 = vadd.f32 0.0, %v4208
      %v4210 = vpop.f32.mrb[0].mxu0
      %4211 = vmatprep.mubr.f32.mxu0 0.0
      %4212 = vmatmul.mubr.f32.gmra.mrb[0].mxu0 %v4038
      %v4213 = vpop.f32.mrb[0].mxu0
      %v4214 = vadd.f32 0.0, %v4213
      %v4215 = vpop.f32.mrb[0].mxu0
      %4216 = vmatprep.mubr.f32.mxu0 0.0
      %4217 = vmatmul.mubr.f32.gmra.mrb[0].mxu0 %v4041
      %v4218 = vpop.f32.mrb[0].mxu0
      %v4219 = vadd.f32 0.0, %v4218
      %v4220 = vpop.f32.mrb[0].mxu0
      %4221 = vmatprep.mubr.f32.mxu0 0.0
      %4222 = vmatmul.mubr.f32.gmra.mrb[0].mxu0 %v4044
      %v4223 = vpop.f32.mrb[0].mxu0
      %v4224 = vadd.f32 0.0, %v4223
      %v4225 = vpop.f32.mrb[0].mxu0
      %4226 = vmatprep.mubr.f32.mxu0 0.0
      %4227 = vmatmul.mubr.f32.gmra.mrb[0].mxu0 %v4047
      %v4228 = vpop.f32.mrb[0].mxu0
      %v4229 = vadd.f32 0.0, %v4228
      %v4230 = vpop.f32.mrb[0].mxu0
      %4231 = vmatprep.mubr.f32.mxu0 0.0
      %4232 = vmatmul.mubr.f32.gmra.mrb[0].mxu0 %v4050
      %v4233 = vpop.f32.mrb[0].mxu0
      %v4234 = vadd.f32 0.0, %v4233
      %v4235 = vpop.f32.mrb[0].mxu0
      %4236 = vmatprep.mubr.f32.mxu0 0.0
      %4237 = vmatmul.mubr.f32.gmra.mrb[0].mxu0 %v4053
      %v4238 = vpop.f32.mrb[0].mxu0
      %v4239 = vadd.f32 0.0, %v4238
      %v4240 = vpop.f32.mrb[0].mxu0
      %4241 = vmatprep.mubr.f32.mxu0 0.0
      %4242 = vmatmul.mubr.f32.gmra.mrb[0].mxu0 %v4056
      %v4243 = vpop.f32.mrb[0].mxu0
      %v4244 = vadd.f32 0.0, %v4243
      %v4245 = vpop.f32.mrb[0].mxu0
      %4246 = vmatprep.mubr.f32.mxu0 0.0
      %4247 = vmatmul.mubr.f32.gmra.mrb[0].mxu0 %v4059
      %v4248 = vpop.f32.mrb[0].mxu0
      %v4249 = vadd.f32 0.0, %v4248
      %v4250 = vpop.f32.mrb[0].mxu0
      %4251 = vmatprep.mubr.f32.mxu0 0.0
      %4252 = vmatmul.mubr.f32.gmra.mrb[0].mxu0 %v4062
      %v4253 = vpop.f32.mrb[0].mxu0
      %v4254 = vadd.f32 0.0, %v4253
      %v4255 = vpop.f32.mrb[0].mxu0
      %4256 = vmatprep.mubr.f32.mxu0 0.0
      %4257 = vmatmul.mubr.f32.gmra.mrb[0].mxu0 %v4065
      %v4258 = vpop.f32.mrb[0].mxu0
      %v4259 = vadd.f32 0.0, %v4258
      %v4260 = vpop.f32.mrb[0].mxu0
      %4261 = vmatprep.mubr.f32.mxu0 0.0
      %4262 = vmatmul.mubr.f32.gmra.mrb[0].mxu0 %v4068
      %v4263 = vpop.f32.mrb[0].mxu0
      %v4264 = vadd.f32 0.0, %v4263
      %v4265 = vpop.f32.mrb[0].mxu0
      %4266 = vmatprep.mubr.f32.mxu0 0.0
      %4267 = vmatmul.mubr.f32.gmra.mrb[0].mxu0 %v4071
      %v4268 = vpop.f32.mrb[0].mxu0
      %v4269 = vadd.f32 0.0, %v4268
      %v4270 = vpop.f32.mrb[0].mxu0
      %4271 = vmatprep.mubr.f32.mxu0 0.0
      %4272 = vmatmul.mubr.f32.gmra.mrb[0].mxu0 %v4074
      %v4273 = vpop.f32.mrb[0].mxu0
      %v4274 = vadd.f32 0.0, %v4273
      %v4275 = vpop.f32.mrb[0].mxu0
      %4276 = vmatprep.mubr.f32.mxu0 0.0
      %4277 = vmatmul.mubr.f32.gmra.mrb[0].mxu0 %v4077
      %v4278 = vpop.f32.mrb[0].mxu0
      %v4279 = vadd.f32 0.0, %v4278
      %v4280 = vpop.f32.mrb[0].mxu0
      %4281 = vmatprep.mubr.f32.mxu0 0.0
      %4282 = vmatmul.mubr.f32.gmra.mrb[0].mxu0 %v4080
      %v4283 = vpop.f32.mrb[0].mxu0
      %v4284 = vadd.f32 0.0, %v4283
      %v4285 = vpop.f32.mrb[0].mxu0
      %4286 = vmatprep.mubr.f32.mxu0 0.0
      %4287 = vmatmul.mubr.f32.gmra.mrb[0].mxu0 %v4083
      %v4288 = vpop.f32.mrb[0].mxu0
      %v4289 = vadd.f32 0.0, %v4288
      %v4290 = vpop.f32.mrb[0].mxu0
      %4291 = vmatprep.mubr.f32.mxu0 0.0
      %4292 = vmatmul.mubr.f32.gmra.mrb[0].mxu0 %v4086
      %v4293 = vpop.f32.mrb[0].mxu0
      %v4294 = vadd.f32 0.0, %v4293
      %v4295 = vpop.f32.mrb[0].mxu0
      %4296 = vmatprep.mubr.f32.mxu0 0.0
      %4297 = vmatmul.mubr.f32.gmra.mrb[0].mxu0 %v4089
      %v4298 = vpop.f32.mrb[0].mxu0
      %v4299 = vadd.f32 0.0, %v4298
      %v4300 = vpop.f32.mrb[0].mxu0
      %4301 = vmatprep.mubr.f32.mxu0 0.0
      %4302 = vmatmul.mubr.f32.gmra.mrb[0].mxu0 %v4092
      %v4303 = vpop.f32.mrb[0].mxu0
      %v4304 = vadd.f32 0.0, %v4303
      %v4305 = vpop.f32.mrb[0].mxu0
      %4306 = vmatprep.mubr.f32.mxu0 0.0
      %4307 = vmatmul.mubr.f32.gmra.mrb[0].mxu0 %v4095
      %v4308 = vpop.f32.mrb[0].mxu0
      %v4309 = vadd.f32 0.0, %v4308
      %v4310 = vpop.f32.mrb[0].mxu0
      %4311 = vmatprep.mubr.f32.mxu0 0.0
      %4312 = vmatmul.mubr.f32.gmra.mrb[0].mxu0 %v4098
      %v4313 = vpop.f32.mrb[0].mxu0
      %v4314 = vadd.f32 0.0, %v4313
      %v4315 = vpop.f32.mrb[0].mxu0
      %4316 = vmatprep.mubr.f32.mxu0 0.0
      %4317 = vmatmul.mubr.f32.gmra.mrb[0].mxu0 %v4101
      %v4318 = vpop.f32.mrb[0].mxu0
      %v4319 = vadd.f32 0.0, %v4318
      %v4320 = vpop.f32.mrb[0].mxu0
      %4321 = vmatprep.mubr.f32.mxu0 0.0
      %4322 = vmatmul.mubr.f32.gmra.mrb[0].mxu0 %v4104
      %v4323 = vpop.f32.mrb[0].mxu0
      %v4324 = vadd.f32 0.0, %v4323
      %v4325 = vpop.f32.mrb[0].mxu0
      %4326 = vmatprep.mubr.f32.mxu0 0.0
      %4327 = vmatmul.mubr.f32.gmra.mrb[0].mxu0 %v4107
      %v4328 = vpop.f32.mrb[0].mxu0
      %v4329 = vadd.f32 0.0, %v4328
      %v4330 = vpop.f32.mrb[0].mxu0
      %4331 = vmatprep.mubr.f32.mxu0 0.0
      %4332 = vmatmul.mubr.f32.gmra.mrb[0].mxu0 %v4110
      %v4333 = vpop.f32.mrb[0].mxu0
      %v4334 = vadd.f32 0.0, %v4333
      %v4335 = vpop.f32.mrb[0].mxu0
      %4336 = vdwg.mxu0
      %v4337 = vadd.f32 %v3950, %v4179
      %v4338 = vadd.f32 %v3951, %v4184
      %v4339 = vadd.f32 %v3952, %v4189
      %v4340 = vadd.f32 %v3953, %v4194
      %v4341 = vadd.f32 %v3954, %v4199
      %v4342 = vadd.f32 %v3955, %v4204
      %v4343 = vadd.f32 %v3956, %v4209
      %v4344 = vadd.f32 %v3957, %v4214
      %v4345 = vadd.f32 %v3958, %v4219
      %v4346 = vadd.f32 %v3959, %v4224
      %v4347 = vadd.f32 %v3960, %v4229
      %v4348 = vadd.f32 %v3961, %v4234
      %v4349 = vadd.f32 %v3962, %v4239
      %v4350 = vadd.f32 %v3963, %v4244
      %v4351 = vadd.f32 %v3964, %v4249
      %v4352 = vadd.f32 %v3965, %v4254
      %v4353 = vadd.f32 %v3966, %v4259
      %v4354 = vadd.f32 %v3967, %v4264
      %v4355 = vadd.f32 %v3968, %v4269
      %v4356 = vadd.f32 %v3969, %v4274
      %v4357 = vadd.f32 %v3970, %v4279
      %v4358 = vadd.f32 %v3971, %v4284
      %v4359 = vadd.f32 %v3972, %v4289
      %v4360 = vadd.f32 %v3973, %v4294
      %v4361 = vadd.f32 %v3974, %v4299
      %v4362 = vadd.f32 %v3975, %v4304
      %v4363 = vadd.f32 %v3976, %v4309
      %v4364 = vadd.f32 %v3977, %v4314
      %v4365 = vadd.f32 %v3978, %v4319
      %v4366 = vadd.f32 %v3979, %v4324
      %v4367 = vadd.f32 %v3980, %v4329
      %v4368 = vadd.f32 %v3981, %v4334
      %v4369 = vsel %vm279, %v4337, 0.0
      %v4370 = vsel %vm279, %v4338, 0.0
      %v4371 = vadd.f32 %v4369, %v4370
      %v4372 = vsel %vm279, %v4339, 0.0
      %v4373 = vadd.f32 %v4371, %v4372
      %v4374 = vsel %vm279, %v4340, 0.0
      %v4375 = vadd.f32 %v4373, %v4374
      %v4376 = vsel %vm279, %v4341, 0.0
      %v4377 = vadd.f32 %v4375, %v4376
      %v4378 = vsel %vm279, %v4342, 0.0
      %v4379 = vadd.f32 %v4377, %v4378
      %v4380 = vsel %vm279, %v4343, 0.0
      %v4381 = vadd.f32 %v4379, %v4380
      %v4382 = vsel %vm279, %v4344, 0.0
      %v4383 = vadd.f32 %v4381, %v4382
      %v4384 = vsel %vm279, %v4345, 0.0
      %v4385 = vadd.f32 %v4383, %v4384
      %v4386 = vsel %vm279, %v4346, 0.0
      %v4387 = vadd.f32 %v4385, %v4386
      %v4388 = vsel %vm279, %v4347, 0.0
      %v4389 = vadd.f32 %v4387, %v4388
      %v4390 = vsel %vm279, %v4348, 0.0
      %v4391 = vadd.f32 %v4389, %v4390
      %v4392 = vsel %vm279, %v4349, 0.0
      %v4393 = vadd.f32 %v4391, %v4392
      %v4394 = vsel %vm279, %v4350, 0.0
      %v4395 = vadd.f32 %v4393, %v4394
      %v4396 = vsel %vm279, %v4351, 0.0
      %v4397 = vadd.f32 %v4395, %v4396
      %v4398 = vsel %vm279, %v4352, 0.0
      %v4399 = vadd.f32 %v4397, %v4398
      %v4400 = vsel %vm279, %v4353, 0.0
      %v4401 = vadd.f32 %v4399, %v4400
      %v4402 = vsel %vm279, %v4354, 0.0
      %v4403 = vadd.f32 %v4401, %v4402
      %v4404 = vsel %vm279, %v4355, 0.0
      %v4405 = vadd.f32 %v4403, %v4404
      %v4406 = vsel %vm279, %v4356, 0.0
      %v4407 = vadd.f32 %v4405, %v4406
      %v4408 = vsel %vm279, %v4357, 0.0
      %v4409 = vadd.f32 %v4407, %v4408
      %v4410 = vsel %vm279, %v4358, 0.0
      %v4411 = vadd.f32 %v4409, %v4410
      %v4412 = vsel %vm279, %v4359, 0.0
      %v4413 = vadd.f32 %v4411, %v4412
      %v4414 = vsel %vm279, %v4360, 0.0
      %v4415 = vadd.f32 %v4413, %v4414
      %v4416 = vsel %vm279, %v4361, 0.0
      %v4417 = vadd.f32 %v4415, %v4416
      %v4418 = vsel %vm279, %v4362, 0.0
      %v4419 = vadd.f32 %v4417, %v4418
      %v4420 = vsel %vm279, %v4363, 0.0
      %v4421 = vadd.f32 %v4419, %v4420
      %v4422 = vsel %vm279, %v4364, 0.0
      %v4423 = vadd.f32 %v4421, %v4422
      %v4424 = vsel %vm279, %v4365, 0.0
      %v4425 = vadd.f32 %v4423, %v4424
      %v4426 = vsel %vm279, %v4366, 0.0
      %v4427 = vadd.f32 %v4425, %v4426
      %v4428 = vsel %vm279, %v4367, 0.0
      %v4429 = vadd.f32 %v4427, %v4428
      %v4430 = vsel %vm279, %v4368, 0.0
      %v4431 = vadd.f32 %v4429, %v4430
      %4432 = vadd.xlane.f32.xlu0 %v4431
      %v4433 = vpop.xlane.xlu0 %4432
      %v4434 = vrot.slane %v4433, 4
      %v4435 = vadd.f32 %v4433, %v4434
      %v4436 = vrot.slane %v4435, 2
      %v4437 = vadd.f32 %v4435, %v4436
      %v4438 = vrot.slane %v4437, 1
      %v4439 = vadd.f32 %v4437, %v4438
      %s4440 = vtos %v4439
      %s4441 = smul.f32 %s4440, 0.00048828125
      %v4442 = vstv %s4441
      %v4443 = vsub.f32 %v4337, %v4442
      %v4444 = vsub.f32 %v4338, %v4442
      %v4445 = vsub.f32 %v4339, %v4442
      %v4446 = vsub.f32 %v4340, %v4442
      %v4447 = vsub.f32 %v4341, %v4442
      %v4448 = vsub.f32 %v4342, %v4442
      %v4449 = vsub.f32 %v4343, %v4442
      %v4450 = vsub.f32 %v4344, %v4442
      %v4451 = vsub.f32 %v4345, %v4442
      %v4452 = vsub.f32 %v4346, %v4442
      %v4453 = vsub.f32 %v4347, %v4442
      %v4454 = vsub.f32 %v4348, %v4442
      %v4455 = vsub.f32 %v4349, %v4442
      %v4456 = vsub.f32 %v4350, %v4442
      %v4457 = vsub.f32 %v4351, %v4442
      %v4458 = vsub.f32 %v4352, %v4442
      %v4459 = vsub.f32 %v4353, %v4442
      %v4460 = vsub.f32 %v4354, %v4442
      %v4461 = vsub.f32 %v4355, %v4442
      %v4462 = vsub.f32 %v4356, %v4442
      %v4463 = vsub.f32 %v4357, %v4442
      %v4464 = vsub.f32 %v4358, %v4442
      %v4465 = vsub.f32 %v4359, %v4442
      %v4466 = vsub.f32 %v4360, %v4442
      %v4467 = vsub.f32 %v4361, %v4442
      %v4468 = vsub.f32 %v4362, %v4442
      %v4469 = vsub.f32 %v4363, %v4442
      %v4470 = vsub.f32 %v4364, %v4442
      %v4471 = vsub.f32 %v4365, %v4442
      %v4472 = vsub.f32 %v4366, %v4442
      %v4473 = vsub.f32 %v4367, %v4442
      %v4474 = vsub.f32 %v4368, %v4442
      %v4475 = vmul.f32 %v4443, %v4443
      %v4476 = vmul.f32 %v4444, %v4444
      %v4477 = vmul.f32 %v4445, %v4445
      %v4478 = vmul.f32 %v4446, %v4446
      %v4479 = vmul.f32 %v4447, %v4447
      %v4480 = vmul.f32 %v4448, %v4448
      %v4481 = vmul.f32 %v4449, %v4449
      %v4482 = vmul.f32 %v4450, %v4450
      %v4483 = vmul.f32 %v4451, %v4451
      %v4484 = vmul.f32 %v4452, %v4452
      %v4485 = vmul.f32 %v4453, %v4453
      %v4486 = vmul.f32 %v4454, %v4454
      %v4487 = vmul.f32 %v4455, %v4455
      %v4488 = vmul.f32 %v4456, %v4456
      %v4489 = vmul.f32 %v4457, %v4457
      %v4490 = vmul.f32 %v4458, %v4458
      %v4491 = vmul.f32 %v4459, %v4459
      %v4492 = vmul.f32 %v4460, %v4460
      %v4493 = vmul.f32 %v4461, %v4461
      %v4494 = vmul.f32 %v4462, %v4462
      %v4495 = vmul.f32 %v4463, %v4463
      %v4496 = vmul.f32 %v4464, %v4464
      %v4497 = vmul.f32 %v4465, %v4465
      %v4498 = vmul.f32 %v4466, %v4466
      %v4499 = vmul.f32 %v4467, %v4467
      %v4500 = vmul.f32 %v4468, %v4468
      %v4501 = vmul.f32 %v4469, %v4469
      %v4502 = vmul.f32 %v4470, %v4470
      %v4503 = vmul.f32 %v4471, %v4471
      %v4504 = vmul.f32 %v4472, %v4472
      %v4505 = vmul.f32 %v4473, %v4473
      %v4506 = vmul.f32 %v4474, %v4474
      %v4507 = vsel %vm279, %v4475, 0.0
      %v4508 = vsel %vm279, %v4476, 0.0
      %v4509 = vadd.f32 %v4507, %v4508
      %v4510 = vsel %vm279, %v4477, 0.0
      %v4511 = vadd.f32 %v4509, %v4510
      %v4512 = vsel %vm279, %v4478, 0.0
      %v4513 = vadd.f32 %v4511, %v4512
      %v4514 = vsel %vm279, %v4479, 0.0
      %v4515 = vadd.f32 %v4513, %v4514
      %v4516 = vsel %vm279, %v4480, 0.0
      %v4517 = vadd.f32 %v4515, %v4516
      %v4518 = vsel %vm279, %v4481, 0.0
      %v4519 = vadd.f32 %v4517, %v4518
      %v4520 = vsel %vm279, %v4482, 0.0
      %v4521 = vadd.f32 %v4519, %v4520
      %v4522 = vsel %vm279, %v4483, 0.0
      %v4523 = vadd.f32 %v4521, %v4522
      %v4524 = vsel %vm279, %v4484, 0.0
      %v4525 = vadd.f32 %v4523, %v4524
      %v4526 = vsel %vm279, %v4485, 0.0
      %v4527 = vadd.f32 %v4525, %v4526
      %v4528 = vsel %vm279, %v4486, 0.0
      %v4529 = vadd.f32 %v4527, %v4528
      %v4530 = vsel %vm279, %v4487, 0.0
      %v4531 = vadd.f32 %v4529, %v4530
      %v4532 = vsel %vm279, %v4488, 0.0
      %v4533 = vadd.f32 %v4531, %v4532
      %v4534 = vsel %vm279, %v4489, 0.0
      %v4535 = vadd.f32 %v4533, %v4534
      %v4536 = vsel %vm279, %v4490, 0.0
      %v4537 = vadd.f32 %v4535, %v4536
      %v4538 = vsel %vm279, %v4491, 0.0
      %v4539 = vadd.f32 %v4537, %v4538
      %v4540 = vsel %vm279, %v4492, 0.0
      %v4541 = vadd.f32 %v4539, %v4540
      %v4542 = vsel %vm279, %v4493, 0.0
      %v4543 = vadd.f32 %v4541, %v4542
      %v4544 = vsel %vm279, %v4494, 0.0
      %v4545 = vadd.f32 %v4543, %v4544
      %v4546 = vsel %vm279, %v4495, 0.0
      %v4547 = vadd.f32 %v4545, %v4546
      %v4548 = vsel %vm279, %v4496, 0.0
      %v4549 = vadd.f32 %v4547, %v4548
      %v4550 = vsel %vm279, %v4497, 0.0
      %v4551 = vadd.f32 %v4549, %v4550
      %v4552 = vsel %vm279, %v4498, 0.0
      %v4553 = vadd.f32 %v4551, %v4552
      %v4554 = vsel %vm279, %v4499, 0.0
      %v4555 = vadd.f32 %v4553, %v4554
      %v4556 = vsel %vm279, %v4500, 0.0
      %v4557 = vadd.f32 %v4555, %v4556
      %v4558 = vsel %vm279, %v4501, 0.0
      %v4559 = vadd.f32 %v4557, %v4558
      %v4560 = vsel %vm279, %v4502, 0.0
      %v4561 = vadd.f32 %v4559, %v4560
      %v4562 = vsel %vm279, %v4503, 0.0
      %v4563 = vadd.f32 %v4561, %v4562
      %v4564 = vsel %vm279, %v4504, 0.0
      %v4565 = vadd.f32 %v4563, %v4564
      %v4566 = vsel %vm279, %v4505, 0.0
      %v4567 = vadd.f32 %v4565, %v4566
      %v4568 = vsel %vm279, %v4506, 0.0
      %v4569 = vadd.f32 %v4567, %v4568
      %4570 = vadd.xlane.f32.xlu0 %v4569
      %v4571 = vpop.xlane.xlu0 %4570
      %v4572 = vrot.slane %v4571, 4
      %v4573 = vadd.f32 %v4571, %v4572
      %v4574 = vrot.slane %v4573, 2
      %v4575 = vadd.f32 %v4573, %v4574
      %v4576 = vrot.slane %v4575, 1
      %v4577 = vadd.f32 %v4575, %v4576
      %s4578 = vtos %v4577
      %s4579 = smul.f32 %s4578, 0.0004885198
      %s4580 = sadd.f32 %s4579, 1e-06
      %v4581 = vstv %s4580
      %v4582 = vrsqrt.pop %v4581
      %s4583 = vtos %v4582
      %v4584 = vstv %s4583
      %v4585 = vmul.f32 %v4443, %v4584
      %v4586 = vmul.f32 %v4444, %v4584
      %v4587 = vmul.f32 %v4445, %v4584
      %v4588 = vmul.f32 %v4446, %v4584
      %v4589 = vmul.f32 %v4447, %v4584
      %v4590 = vmul.f32 %v4448, %v4584
      %v4591 = vmul.f32 %v4449, %v4584
      %v4592 = vmul.f32 %v4450, %v4584
      %v4593 = vmul.f32 %v4451, %v4584
      %v4594 = vmul.f32 %v4452, %v4584
      %v4595 = vmul.f32 %v4453, %v4584
      %v4596 = vmul.f32 %v4454, %v4584
      %v4597 = vmul.f32 %v4455, %v4584
      %v4598 = vmul.f32 %v4456, %v4584
      %v4599 = vmul.f32 %v4457, %v4584
      %v4600 = vmul.f32 %v4458, %v4584
      %v4601 = vmul.f32 %v4459, %v4584
      %v4602 = vmul.f32 %v4460, %v4584
      %v4603 = vmul.f32 %v4461, %v4584
      %v4604 = vmul.f32 %v4462, %v4584
      %v4605 = vmul.f32 %v4463, %v4584
      %v4606 = vmul.f32 %v4464, %v4584
      %v4607 = vmul.f32 %v4465, %v4584
      %v4608 = vmul.f32 %v4466, %v4584
      %v4609 = vmul.f32 %v4467, %v4584
      %v4610 = vmul.f32 %v4468, %v4584
      %v4611 = vmul.f32 %v4469, %v4584
      %v4612 = vmul.f32 %v4470, %v4584
      %v4613 = vmul.f32 %v4471, %v4584
      %v4614 = vmul.f32 %v4472, %v4584
      %v4615 = vmul.f32 %v4473, %v4584
      %v4616 = vmul.f32 %v4474, %v4584
      %v4617 = vld [vmem:[%s4] sm:$0x1]
      %v4619 = vlaneseq
      %v4620 = vshrl.u32 %v4619, 7
      %v4621 = vsub.s32 0, %v4620
      %v4622 = vrot.slane %v4617, %v4621
      %v4624 = vmul.f32 %v4585, %v4622
      %v4625 = vmul.f32 %v4586, %v4622
      %v4626 = vmul.f32 %v4587, %v4622
      %v4627 = vmul.f32 %v4588, %v4622
      %v4628 = vmul.f32 %v4589, %v4622
      %v4629 = vmul.f32 %v4590, %v4622
      %v4630 = vmul.f32 %v4591, %v4622
      %v4631 = vmul.f32 %v4592, %v4622
      %v4632 = vmul.f32 %v4593, %v4622
      %v4633 = vmul.f32 %v4594, %v4622
      %v4634 = vmul.f32 %v4595, %v4622
      %v4635 = vmul.f32 %v4596, %v4622
      %v4636 = vmul.f32 %v4597, %v4622
      %v4637 = vmul.f32 %v4598, %v4622
      %v4638 = vmul.f32 %v4599, %v4622
      %v4639 = vmul.f32 %v4600, %v4622
      %v4640 = vmul.f32 %v4601, %v4622
      %v4641 = vmul.f32 %v4602, %v4622
      %v4642 = vmul.f32 %v4603, %v4622
      %v4643 = vmul.f32 %v4604, %v4622
      %v4644 = vmul.f32 %v4605, %v4622
      %v4645 = vmul.f32 %v4606, %v4622
      %v4646 = vmul.f32 %v4607, %v4622
      %v4647 = vmul.f32 %v4608, %v4622
      %v4648 = vmul.f32 %v4609, %v4622
      %v4649 = vmul.f32 %v4610, %v4622
      %v4650 = vmul.f32 %v4611, %v4622
      %v4651 = vmul.f32 %v4612, %v4622
      %v4652 = vmul.f32 %v4613, %v4622
      %v4653 = vmul.f32 %v4614, %v4622
      %v4654 = vmul.f32 %v4615, %v4622
      %v4655 = vmul.f32 %v4616, %v4622
      %v4656 = vld [vmem:[%s5] sm:$0x1]
      %v4658 = vlaneseq
      %v4659 = vshrl.u32 %v4658, 7
      %v4660 = vsub.s32 0, %v4659
      %v4661 = vrot.slane %v4656, %v4660
      %v4663 = vadd.f32 %v4624, %v4661
      %v4664 = vadd.f32 %v4625, %v4661
      %v4665 = vadd.f32 %v4626, %v4661
      %v4666 = vadd.f32 %v4627, %v4661
      %v4667 = vadd.f32 %v4628, %v4661
      %v4668 = vadd.f32 %v4629, %v4661
      %v4669 = vadd.f32 %v4630, %v4661
      %v4670 = vadd.f32 %v4631, %v4661
      %v4671 = vadd.f32 %v4632, %v4661
      %v4672 = vadd.f32 %v4633, %v4661
      %v4673 = vadd.f32 %v4634, %v4661
      %v4674 = vadd.f32 %v4635, %v4661
      %v4675 = vadd.f32 %v4636, %v4661
      %v4676 = vadd.f32 %v4637, %v4661
      %v4677 = vadd.f32 %v4638, %v4661
      %v4678 = vadd.f32 %v4639, %v4661
      %v4679 = vadd.f32 %v4640, %v4661
      %v4680 = vadd.f32 %v4641, %v4661
      %v4681 = vadd.f32 %v4642, %v4661
      %v4682 = vadd.f32 %v4643, %v4661
      %v4683 = vadd.f32 %v4644, %v4661
      %v4684 = vadd.f32 %v4645, %v4661
      %v4685 = vadd.f32 %v4646, %v4661
      %v4686 = vadd.f32 %v4647, %v4661
      %v4687 = vadd.f32 %v4648, %v4661
      %v4688 = vadd.f32 %v4649, %v4661
      %v4689 = vadd.f32 %v4650, %v4661
      %v4690 = vadd.f32 %v4651, %v4661
      %v4691 = vadd.f32 %v4652, %v4661
      %v4692 = vadd.f32 %v4653, %v4661
      %v4693 = vadd.f32 %v4654, %v4661
      %v4694 = vadd.f32 %v4655, %v4661
      %v4695 = vsub.f32 0.0, %v4663
      %v4696 = vsub.f32 0.0, %v4664
      %v4697 = vsub.f32 0.0, %v4665
      %v4698 = vsub.f32 0.0, %v4666
      %v4699 = vsub.f32 0.0, %v4667
      %v4700 = vsub.f32 0.0, %v4668
      %v4701 = vsub.f32 0.0, %v4669
      %v4702 = vsub.f32 0.0, %v4670
      %v4703 = vsub.f32 0.0, %v4671
      %v4704 = vsub.f32 0.0, %v4672
      %v4705 = vsub.f32 0.0, %v4673
      %v4706 = vsub.f32 0.0, %v4674
      %v4707 = vsub.f32 0.0, %v4675
      %v4708 = vsub.f32 0.0, %v4676
      %v4709 = vsub.f32 0.0, %v4677
      %v4710 = vsub.f32 0.0, %v4678
      %v4711 = vsub.f32 0.0, %v4679
      %v4712 = vsub.f32 0.0, %v4680
      %v4713 = vsub.f32 0.0, %v4681
      %v4714 = vsub.f32 0.0, %v4682
      %v4715 = vsub.f32 0.0, %v4683
      %v4716 = vsub.f32 0.0, %v4684
      %v4717 = vsub.f32 0.0, %v4685
      %v4718 = vsub.f32 0.0, %v4686
      %v4719 = vsub.f32 0.0, %v4687
      %v4720 = vsub.f32 0.0, %v4688
      %v4721 = vsub.f32 0.0, %v4689
      %v4722 = vsub.f32 0.0, %v4690
      %v4723 = vsub.f32 0.0, %v4691
      %v4724 = vsub.f32 0.0, %v4692
      %v4725 = vsub.f32 0.0, %v4693
      %v4726 = vsub.f32 0.0, %v4694
      %v4727 = vmul.f32 %v4695, 1.442695
      %v4728 = vpow.pop %v4727
      %v4729 = vmul.f32 %v4696, 1.442695
      %v4730 = vpow.pop %v4729
      %v4731 = vmul.f32 %v4697, 1.442695
      %v4732 = vpow.pop %v4731
      %v4733 = vmul.f32 %v4698, 1.442695
      %v4734 = vpow.pop %v4733
      %v4735 = vmul.f32 %v4699, 1.442695
      %v4736 = vpow.pop %v4735
      %v4737 = vmul.f32 %v4700, 1.442695
      %v4738 = vpow.pop %v4737
      %v4739 = vmul.f32 %v4701, 1.442695
      %v4740 = vpow.pop %v4739
      %v4741 = vmul.f32 %v4702, 1.442695
      %v4742 = vpow.pop %v4741
      %v4743 = vmul.f32 %v4703, 1.442695
      %v4744 = vpow.pop %v4743
      %v4745 = vmul.f32 %v4704, 1.442695
      %v4746 = vpow.pop %v4745
      %v4747 = vmul.f32 %v4705, 1.442695
      %v4748 = vpow.pop %v4747
      %v4749 = vmul.f32 %v4706, 1.442695
      %v4750 = vpow.pop %v4749
      %v4751 = vmul.f32 %v4707, 1.442695
      %v4752 = vpow.pop %v4751
      %v4753 = vmul.f32 %v4708, 1.442695
      %v4754 = vpow.pop %v4753
      %v4755 = vmul.f32 %v4709, 1.442695
      %v4756 = vpow.pop %v4755
      %v4757 = vmul.f32 %v4710, 1.442695
      %v4758 = vpow.pop %v4757
      %v4759 = vmul.f32 %v4711, 1.442695
      %v4760 = vpow.pop %v4759
      %v4761 = vmul.f32 %v4712, 1.442695
      %v4762 = vpow.pop %v4761
      %v4763 = vmul.f32 %v4713, 1.442695
      %v4764 = vpow.pop %v4763
      %v4765 = vmul.f32 %v4714, 1.442695
      %v4766 = vpow.pop %v4765
      %v4767 = vmul.f32 %v4715, 1.442695
      %v4768 = vpow.pop %v4767
      %v4769 = vmul.f32 %v4716, 1.442695
      %v4770 = vpow.pop %v4769
      %v4771 = vmul.f32 %v4717, 1.442695
      %v4772 = vpow.pop %v4771
      %v4773 = vmul.f32 %v4718, 1.442695
      %v4774 = vpow.pop %v4773
      %v4775 = vmul.f32 %v4719, 1.442695
      %v4776 = vpow.pop %v4775
      %v4777 = vmul.f32 %v4720, 1.442695
      %v4778 = vpow.pop %v4777
      %v4779 = vmul.f32 %v4721, 1.442695
      %v4780 = vpow.pop %v4779
      %v4781 = vmul.f32 %v4722, 1.442695
      %v4782 = vpow.pop %v4781
      %v4783 = vmul.f32 %v4723, 1.442695
      %v4784 = vpow.pop %v4783
      %v4785 = vmul.f32 %v4724, 1.442695
      %v4786 = vpow.pop %v4785
      %v4787 = vmul.f32 %v4725, 1.442695
      %v4788 = vpow.pop %v4787
      %v4789 = vmul.f32 %v4726, 1.442695
      %v4790 = vpow.pop %v4789
      %v4791 = vadd.f32 %v4728, 1.0
      %v4792 = vadd.f32 %v4730, 1.0
      %v4793 = vadd.f32 %v4732, 1.0
      %v4794 = vadd.f32 %v4734, 1.0
      %v4795 = vadd.f32 %v4736, 1.0
      %v4796 = vadd.f32 %v4738, 1.0
      %v4797 = vadd.f32 %v4740, 1.0
      %v4798 = vadd.f32 %v4742, 1.0
      %v4799 = vadd.f32 %v4744, 1.0
      %v4800 = vadd.f32 %v4746, 1.0
      %v4801 = vadd.f32 %v4748, 1.0
      %v4802 = vadd.f32 %v4750, 1.0
      %v4803 = vadd.f32 %v4752, 1.0
      %v4804 = vadd.f32 %v4754, 1.0
      %v4805 = vadd.f32 %v4756, 1.0
      %v4806 = vadd.f32 %v4758, 1.0
      %v4807 = vadd.f32 %v4760, 1.0
      %v4808 = vadd.f32 %v4762, 1.0
      %v4809 = vadd.f32 %v4764, 1.0
      %v4810 = vadd.f32 %v4766, 1.0
      %v4811 = vadd.f32 %v4768, 1.0
      %v4812 = vadd.f32 %v4770, 1.0
      %v4813 = vadd.f32 %v4772, 1.0
      %v4814 = vadd.f32 %v4774, 1.0
      %v4815 = vadd.f32 %v4776, 1.0
      %v4816 = vadd.f32 %v4778, 1.0
      %v4817 = vadd.f32 %v4780, 1.0
      %v4818 = vadd.f32 %v4782, 1.0
      %v4819 = vadd.f32 %v4784, 1.0
      %v4820 = vadd.f32 %v4786, 1.0
      %v4821 = vadd.f32 %v4788, 1.0
      %v4822 = vadd.f32 %v4790, 1.0
      %v4823 = vrcp.pop %v4791
      %v4824 = vmul.f32 1.0, %v4823
      %v4825 = vrcp.pop %v4792
      %v4826 = vmul.f32 1.0, %v4825
      %v4827 = vrcp.pop %v4793
      %v4828 = vmul.f32 1.0, %v4827
      %v4829 = vrcp.pop %v4794
      %v4830 = vmul.f32 1.0, %v4829
      %v4831 = vrcp.pop %v4795
      %v4832 = vmul.f32 1.0, %v4831
      %v4833 = vrcp.pop %v4796
      %v4834 = vmul.f32 1.0, %v4833
      %v4835 = vrcp.pop %v4797
      %v4836 = vmul.f32 1.0, %v4835
      %v4837 = vrcp.pop %v4798
      %v4838 = vmul.f32 1.0, %v4837
      %v4839 = vrcp.pop %v4799
      %v4840 = vmul.f32 1.0, %v4839
      %v4841 = vrcp.pop %v4800
      %v4842 = vmul.f32 1.0, %v4841
      %v4843 = vrcp.pop %v4801
      %v4844 = vmul.f32 1.0, %v4843
      %v4845 = vrcp.pop %v4802
      %v4846 = vmul.f32 1.0, %v4845
      %v4847 = vrcp.pop %v4803
      %v4848 = vmul.f32 1.0, %v4847
      %v4849 = vrcp.pop %v4804
      %v4850 = vmul.f32 1.0, %v4849
      %v4851 = vrcp.pop %v4805
      %v4852 = vmul.f32 1.0, %v4851
      %v4853 = vrcp.pop %v4806
      %v4854 = vmul.f32 1.0, %v4853
      %v4855 = vrcp.pop %v4807
      %v4856 = vmul.f32 1.0, %v4855
      %v4857 = vrcp.pop %v4808
      %v4858 = vmul.f32 1.0, %v4857
      %v4859 = vrcp.pop %v4809
      %v4860 = vmul.f32 1.0, %v4859
      %v4861 = vrcp.pop %v4810
      %v4862 = vmul.f32 1.0, %v4861
      %v4863 = vrcp.pop %v4811
      %v4864 = vmul.f32 1.0, %v4863
      %v4865 = vrcp.pop %v4812
      %v4866 = vmul.f32 1.0, %v4865
      %v4867 = vrcp.pop %v4813
      %v4868 = vmul.f32 1.0, %v4867
      %v4869 = vrcp.pop %v4814
      %v4870 = vmul.f32 1.0, %v4869
      %v4871 = vrcp.pop %v4815
      %v4872 = vmul.f32 1.0, %v4871
      %v4873 = vrcp.pop %v4816
      %v4874 = vmul.f32 1.0, %v4873
      %v4875 = vrcp.pop %v4817
      %v4876 = vmul.f32 1.0, %v4875
      %v4877 = vrcp.pop %v4818
      %v4878 = vmul.f32 1.0, %v4877
      %v4879 = vrcp.pop %v4819
      %v4880 = vmul.f32 1.0, %v4879
      %v4881 = vrcp.pop %v4820
      %v4882 = vmul.f32 1.0, %v4881
      %v4883 = vrcp.pop %v4821
      %v4884 = vmul.f32 1.0, %v4883
      %v4885 = vrcp.pop %v4822
      %v4886 = vmul.f32 1.0, %v4885
      %v4887 = vmul.f32 %v4663, %v4824
      %v4888 = vmul.f32 %v4664, %v4826
      %v4889 = vmul.f32 %v4665, %v4828
      %v4890 = vmul.f32 %v4666, %v4830
      %v4891 = vmul.f32 %v4667, %v4832
      %v4892 = vmul.f32 %v4668, %v4834
      %v4893 = vmul.f32 %v4669, %v4836
      %v4894 = vmul.f32 %v4670, %v4838
      %v4895 = vmul.f32 %v4671, %v4840
      %v4896 = vmul.f32 %v4672, %v4842
      %v4897 = vmul.f32 %v4673, %v4844
      %v4898 = vmul.f32 %v4674, %v4846
      %v4899 = vmul.f32 %v4675, %v4848
      %v4900 = vmul.f32 %v4676, %v4850
      %v4901 = vmul.f32 %v4677, %v4852
      %v4902 = vmul.f32 %v4678, %v4854
      %v4903 = vmul.f32 %v4679, %v4856
      %v4904 = vmul.f32 %v4680, %v4858
      %v4905 = vmul.f32 %v4681, %v4860
      %v4906 = vmul.f32 %v4682, %v4862
      %v4907 = vmul.f32 %v4683, %v4864
      %v4908 = vmul.f32 %v4684, %v4866
      %v4909 = vmul.f32 %v4685, %v4868
      %v4910 = vmul.f32 %v4686, %v4870
      %v4911 = vmul.f32 %v4687, %v4872
      %v4912 = vmul.f32 %v4688, %v4874
      %v4913 = vmul.f32 %v4689, %v4876
      %v4914 = vmul.f32 %v4690, %v4878
      %v4915 = vmul.f32 %v4691, %v4880
      %v4916 = vmul.f32 %v4692, %v4882
      %v4917 = vmul.f32 %v4693, %v4884
      %v4918 = vmul.f32 %v4694, %v4886
      %4919 = vst.msk [vmem:[%s917 + $0x1] sm:$0xff] %vm279, %v4887
      %4920 = vst.msk [vmem:[%s917 + $0x9] sm:$0xff] %vm279, %v4888
      %4921 = vst.msk [vmem:[%s917 + $0x19] sm:$0xff] %vm279, %v4889
      %4922 = vst.msk [vmem:[%s917 + $0x21] sm:$0xff] %vm279, %v4890
      %4923 = vst.msk [vmem:[%s917 + $0x31] sm:$0xff] %vm279, %v4891
      %4924 = vst.msk [vmem:[%s917 + $0x39] sm:$0xff] %vm279, %v4892
      %4925 = vst.msk [vmem:[%s917 + $0x49] sm:$0xff] %vm279, %v4893
      %4926 = vst.msk [vmem:[%s917 + $0x51] sm:$0xff] %vm279, %v4894
      %4927 = vst.msk [vmem:[%s917 + $0x61] sm:$0xff] %vm279, %v4895
      %4928 = vst.msk [vmem:[%s917 + $0x69] sm:$0xff] %vm279, %v4896
      %4929 = vst.msk [vmem:[%s917 + $0x79] sm:$0xff] %vm279, %v4897
      %4930 = vst.msk [vmem:[%s917 + $0x81] sm:$0xff] %vm279, %v4898
      %4931 = vst.msk [vmem:[%s917 + $0x91] sm:$0xff] %vm279, %v4899
      %4932 = vst.msk [vmem:[%s917 + $0x99] sm:$0xff] %vm279, %v4900
      %4933 = vst.msk [vmem:[%s917 + $0xa9] sm:$0xff] %vm279, %v4901
      %4934 = vst.msk [vmem:[%s917 + $0xb1] sm:$0xff] %vm279, %v4902
      %4935 = vst.msk [vmem:[%s917 + $0xc1] sm:$0xff] %vm279, %v4903
      %4936 = vst.msk [vmem:[%s917 + $0xc9] sm:$0xff] %vm279, %v4904
      %4937 = vst.msk [vmem:[%s917 + $0xd9] sm:$0xff] %vm279, %v4905
      %4938 = vst.msk [vmem:[%s917 + $0xe1] sm:$0xff] %vm279, %v4906
      %4939 = vst.msk [vmem:[%s917 + $0xf1] sm:$0xff] %vm279, %v4907
      %4940 = vst.msk [vmem:[%s917 + $0xf9] sm:$0xff] %vm279, %v4908
      %4941 = vst.msk [vmem:[%s917 + $0x109] sm:$0xff] %vm279, %v4909
      %4942 = vst.msk [vmem:[%s917 + $0x111] sm:$0xff] %vm279, %v4910
      %4943 = vst.msk [vmem:[%s917 + $0x121] sm:$0xff] %vm279, %v4911
      %4944 = vst.msk [vmem:[%s917 + $0x129] sm:$0xff] %vm279, %v4912
      %4945 = vst.msk [vmem:[%s917 + $0x139] sm:$0xff] %vm279, %v4913
      %4946 = vst.msk [vmem:[%s917 + $0x141] sm:$0xff] %vm279, %v4914
      %4947 = vst.msk [vmem:[%s917 + $0x151] sm:$0xff] %vm279, %v4915
      %4948 = vst.msk [vmem:[%s917 + $0x159] sm:$0xff] %vm279, %v4916
      %4949 = vst.msk [vmem:[%s917 + $0x169] sm:$0xff] %vm279, %v4917
      %4950 = vst.msk [vmem:[%s917 + $0x171] sm:$0xff] %vm279, %v4918
      %v4951 = vld [vmem:[#allocation2] sm:$0xff]
      %v4952 = vld [vmem:[#allocation2 + $0x8] sm:$0xff]
      %v4953 = vld [vmem:[#allocation2 + $0x18] sm:$0xff]
      %v4954 = vld [vmem:[#allocation2 + $0x20] sm:$0xff]
      %v4955 = vld [vmem:[#allocation2 + $0x30] sm:$0xff]
      %v4956 = vld [vmem:[#allocation2 + $0x38] sm:$0xff]
      %v4957 = vld [vmem:[#allocation2 + $0x48] sm:$0xff]
      %v4958 = vld [vmem:[#allocation2 + $0x50] sm:$0xff]
      %v4959 = vld [vmem:[#allocation2 + $0x60] sm:$0xff]
      %v4960 = vld [vmem:[#allocation2 + $0x68] sm:$0xff]
      %v4961 = vld [vmem:[#allocation2 + $0x78] sm:$0xff]
      %v4962 = vld [vmem:[#allocation2 + $0x80] sm:$0xff]
      %v4963 = vld [vmem:[#allocation2 + $0x90] sm:$0xff]
      %v4964 = vld [vmem:[#allocation2 + $0x98] sm:$0xff]
      %v4965 = vld [vmem:[#allocation2 + $0xa8] sm:$0xff]
      %v4966 = vld [vmem:[#allocation2 + $0xb0] sm:$0xff]
      %v4967 = vld [vmem:[#allocation2 + $0xc0] sm:$0xff]
      %v4968 = vld [vmem:[#allocation2 + $0xc8] sm:$0xff]
      %v4969 = vld [vmem:[#allocation2 + $0xd8] sm:$0xff]
      %v4970 = vld [vmem:[#allocation2 + $0xe0] sm:$0xff]
      %v4971 = vld [vmem:[#allocation2 + $0xf0] sm:$0xff]
      %v4972 = vld [vmem:[#allocation2 + $0xf8] sm:$0xff]
      %v4973 = vld [vmem:[#allocation2 + $0x108] sm:$0xff]
      %v4974 = vld [vmem:[#allocation2 + $0x110] sm:$0xff]
      %v4975 = vld [vmem:[#allocation2 + $0x120] sm:$0xff]
      %v4976 = vld [vmem:[#allocation2 + $0x128] sm:$0xff]
      %v4977 = vld [vmem:[#allocation2 + $0x138] sm:$0xff]
      %v4978 = vld [vmem:[#allocation2 + $0x140] sm:$0xff]
      %v4979 = vld [vmem:[#allocation2 + $0x150] sm:$0xff]
      %v4980 = vld [vmem:[#allocation2 + $0x158] sm:$0xff]
      %v4981 = vld [vmem:[#allocation2 + $0x168] sm:$0xff]
      %v4982 = vld [vmem:[#allocation2 + $0x170] sm:$0xff]
      %v4983 = vld [vmem:[%s6] sm:$0xff]
      %v4984 = vld [vmem:[#allocation2 + $0x1] sm:$0xff]
      %v4985 = vld [vmem:[#allocation2 + $0x9] sm:$0xff]
      %v4986 = vld [vmem:[#allocation2 + $0x19] sm:$0xff]
      %v4987 = vld [vmem:[#allocation2 + $0x21] sm:$0xff]
      %v4988 = vld [vmem:[#allocation2 + $0x31] sm:$0xff]
      %v4989 = vld [vmem:[#allocation2 + $0x39] sm:$0xff]
      %v4990 = vld [vmem:[#allocation2 + $0x49] sm:$0xff]
      %v4991 = vld [vmem:[#allocation2 + $0x51] sm:$0xff]
      %v4992 = vld [vmem:[#allocation2 + $0x61] sm:$0xff]
      %v4993 = vld [vmem:[#allocation2 + $0x69] sm:$0xff]
      %v4994 = vld [vmem:[#allocation2 + $0x79] sm:$0xff]
      %v4995 = vld [vmem:[#allocation2 + $0x81] sm:$0xff]
      %v4996 = vld [vmem:[#allocation2 + $0x91] sm:$0xff]
      %v4997 = vld [vmem:[#allocation2 + $0x99] sm:$0xff]
      %v4998 = vld [vmem:[#allocation2 + $0xa9] sm:$0xff]
      %v4999 = vld [vmem:[#allocation2 + $0xb1] sm:$0xff]
      %v5000 = vld [vmem:[#allocation2 + $0xc1] sm:$0xff]
      %v5001 = vld [vmem:[#allocation2 + $0xc9] sm:$0xff]
      %v5002 = vld [vmem:[#allocation2 + $0xd9] sm:$0xff]
      %v5003 = vld [vmem:[#allocation2 + $0xe1] sm:$0xff]
      %v5004 = vld [vmem:[#allocation2 + $0xf1] sm:$0xff]
      %v5005 = vld [vmem:[#allocation2 + $0xf9] sm:$0xff]
      %v5006 = vld [vmem:[#allocation2 + $0x109] sm:$0xff]
      %v5007 = vld [vmem:[#allocation2 + $0x111] sm:$0xff]
      %v5008 = vld [vmem:[#allocation2 + $0x121] sm:$0xff]
      %v5009 = vld [vmem:[#allocation2 + $0x129] sm:$0xff]
      %v5010 = vld [vmem:[#allocation2 + $0x139] sm:$0xff]
      %v5011 = vld [vmem:[#allocation2 + $0x141] sm:$0xff]
      %v5012 = vld [vmem:[#allocation2 + $0x151] sm:$0xff]
      %v5013 = vld [vmem:[#allocation2 + $0x159] sm:$0xff]
      %v5014 = vld [vmem:[#allocation2 + $0x169] sm:$0xff]
      %v5015 = vld [vmem:[#allocation2 + $0x171] sm:$0xff]
      %s5016 = scalar_lea.vmem %s6, 8
      %v5017 = vld [vmem:[%s5016] sm:$0xff]
      %v5019 = vsel %vm279, %v4984, 0
      %v5022 = vsel %vm279, %v4985, 0
      %v5025 = vsel %vm279, %v4986, 0
      %v5028 = vsel %vm279, %v4987, 0
      %v5031 = vsel %vm279, %v4988, 0
      %v5034 = vsel %vm279, %v4989, 0
      %v5037 = vsel %vm279, %v4990, 0
      %v5040 = vsel %vm279, %v4991, 0
      %v5043 = vsel %vm279, %v4992, 0
      %v5046 = vsel %vm279, %v4993, 0
      %v5049 = vsel %vm279, %v4994, 0
      %v5052 = vsel %vm279, %v4995, 0
      %v5055 = vsel %vm279, %v4996, 0
      %v5058 = vsel %vm279, %v4997, 0
      %v5061 = vsel %vm279, %v4998, 0
      %v5064 = vsel %vm279, %v4999, 0
      %v5067 = vsel %vm279, %v5000, 0
      %v5070 = vsel %vm279, %v5001, 0
      %v5073 = vsel %vm279, %v5002, 0
      %v5076 = vsel %vm279, %v5003, 0
      %v5079 = vsel %vm279, %v5004, 0
      %v5082 = vsel %vm279, %v5005, 0
      %v5085 = vsel %vm279, %v5006, 0
      %v5088 = vsel %vm279, %v5007, 0
      %v5091 = vsel %vm279, %v5008, 0
      %v5094 = vsel %vm279, %v5009, 0
      %v5097 = vsel %vm279, %v5010, 0
      %v5100 = vsel %vm279, %v5011, 0
      %v5103 = vsel %vm279, %v5012, 0
      %v5106 = vsel %vm279, %v5013, 0
      %v5109 = vsel %vm279, %v5014, 0
      %v5112 = vsel %vm279, %v5015, 0
      %5114 = vmatprep.subr.mxu0 0.0
      %5115 = vmatpush1.msra.mxu0 %v5017
      %5116 = vmatprep.subr.mxu0 0.0
      %5117 = vmatpush1.msra.mxu0 0.0
      %5118 = vmatprep.subr.mxu0 0.0
      %5119 = vmatpush1.msra.mxu0 0.0
      %5120 = vmatprep.subr.mxu0 0.0
      %5121 = vmatpush1.msra.mxu0 0.0
      %5122 = vmatprep.subr.mxu0 0.0
      %5123 = vmatpush1.msra.mxu0 0.0
      %5124 = vmatprep.subr.mxu0 0.0
      %5125 = vmatpush1.msra.mxu0 0.0
      %5126 = vmatprep.subr.mxu0 0.0
      %5127 = vmatpush1.msra.mxu0 0.0
      %5128 = vmatprep.subr.mxu0 0.0
      %5129 = vmatpush1.msra.mxu0 0.0
      %5130 = vmatprep.subr.mxu0 0.0
      %5131 = vmatpush1.msra.mxu0 0.0
      %5132 = vmatprep.subr.mxu0 0.0
      %5133 = vmatpush1.msra.mxu0 0.0
      %5134 = vmatprep.subr.mxu0 0.0
      %5135 = vmatpush1.msra.mxu0 0.0
      %5136 = vmatprep.subr.mxu0 0.0
      %5137 = vmatpush1.msra.mxu0 0.0
      %5138 = vmatprep.subr.mxu0 0.0
      %5139 = vmatpush1.msra.mxu0 0.0
      %5140 = vmatprep.subr.mxu0 0.0
      %5141 = vmatpush1.msra.mxu0 0.0
      %5142 = vmatprep.subr.mxu0 0.0
      %5143 = vmatpush1.msra.mxu0 0.0
      %5144 = vmatprep.subr.mxu0 0.0
      %5145 = vmatpush1.msra.mxu0 0.0
      %5146 = vmatprep.subr.mxu0 0.0
      %5147 = vmatpush1.msra.mxu0 0.0
      %5148 = vmatprep.subr.mxu0 0.0
      %5149 = vmatpush1.msra.mxu0 0.0
      %5150 = vmatprep.subr.mxu0 0.0
      %5151 = vmatpush1.msra.mxu0 0.0
      %5152 = vmatprep.subr.mxu0 0.0
      %5153 = vmatpush1.msra.mxu0 0.0
      %5154 = vmatprep.subr.mxu0 0.0
      %5155 = vmatpush1.msra.mxu0 0.0
      %5156 = vmatprep.subr.mxu0 0.0
      %5157 = vmatpush1.msra.mxu0 0.0
      %5158 = vmatprep.subr.mxu0 0.0
      %5159 = vmatpush1.msra.mxu0 0.0
      %5160 = vmatprep.subr.mxu0 0.0
      %5161 = vmatpush1.msra.mxu0 0.0
      %5162 = vmatprep.subr.mxu0 0.0
      %5163 = vmatpush1.msra.mxu0 0.0
      %5164 = vmatprep.subr.mxu0 0.0
      %5165 = vmatpush1.msra.mxu0 0.0
      %5166 = vmatprep.subr.mxu0 0.0
      %5167 = vmatpush1.msra.mxu0 0.0
      %5168 = vmatprep.subr.mxu0 0.0
      %5169 = vmatpush1.msra.mxu0 0.0
      %5170 = vmatprep.subr.mxu0 0.0
      %5171 = vmatpush1.msra.mxu0 0.0
      %5172 = vmatprep.subr.mxu0 0.0
      %5173 = vmatpush1.msra.mxu0 0.0
      %5174 = vmatprep.subr.mxu0 0.0
      %5175 = vmatpush1.msra.mxu0 0.0
      %5176 = vmatprep.subr.mxu0 0.0
      %5177 = vmatpush1.msra.mxu0 0.0
      %5178 = vmatprep.mubr.f32.mxu0 0.0
      %5179 = vmatmul.mubr.f32.gmra.mrb[0].mxu0 %v5019
      %v5180 = vpop.f32.mrb[0].mxu0
      %v5181 = vadd.f32 0.0, %v5180
      %v5182 = vpop.f32.mrb[0].mxu0
      %5183 = vmatprep.mubr.f32.mxu0 0.0
      %5184 = vmatmul.mubr.f32.gmra.mrb[0].mxu0 %v5022
      %v5185 = vpop.f32.mrb[0].mxu0
      %v5186 = vadd.f32 0.0, %v5185
      %v5187 = vpop.f32.mrb[0].mxu0
      %5188 = vmatprep.mubr.f32.mxu0 0.0
      %5189 = vmatmul.mubr.f32.gmra.mrb[0].mxu0 %v5025
      %v5190 = vpop.f32.mrb[0].mxu0
      %v5191 = vadd.f32 0.0, %v5190
      %v5192 = vpop.f32.mrb[0].mxu0
      %5193 = vmatprep.mubr.f32.mxu0 0.0
      %5194 = vmatmul.mubr.f32.gmra.mrb[0].mxu0 %v5028
      %v5195 = vpop.f32.mrb[0].mxu0
      %v5196 = vadd.f32 0.0, %v5195
      %v5197 = vpop.f32.mrb[0].mxu0
      %5198 = vmatprep.mubr.f32.mxu0 0.0
      %5199 = vmatmul.mubr.f32.gmra.mrb[0].mxu0 %v5031
      %v5200 = vpop.f32.mrb[0].mxu0
      %v5201 = vadd.f32 0.0, %v5200
      %v5202 = vpop.f32.mrb[0].mxu0
      %5203 = vmatprep.mubr.f32.mxu0 0.0
      %5204 = vmatmul.mubr.f32.gmra.mrb[0].mxu0 %v5034
      %v5205 = vpop.f32.mrb[0].mxu0
      %v5206 = vadd.f32 0.0, %v5205
      %v5207 = vpop.f32.mrb[0].mxu0
      %5208 = vmatprep.mubr.f32.mxu0 0.0
      %5209 = vmatmul.mubr.f32.gmra.mrb[0].mxu0 %v5037
      %v5210 = vpop.f32.mrb[0].mxu0
      %v5211 = vadd.f32 0.0, %v5210
      %v5212 = vpop.f32.mrb[0].mxu0
      %5213 = vmatprep.mubr.f32.mxu0 0.0
      %5214 = vmatmul.mubr.f32.gmra.mrb[0].mxu0 %v5040
      %v5215 = vpop.f32.mrb[0].mxu0
      %v5216 = vadd.f32 0.0, %v5215
      %v5217 = vpop.f32.mrb[0].mxu0
      %5218 = vmatprep.mubr.f32.mxu0 0.0
      %5219 = vmatmul.mubr.f32.gmra.mrb[0].mxu0 %v5043
      %v5220 = vpop.f32.mrb[0].mxu0
      %v5221 = vadd.f32 0.0, %v5220
      %v5222 = vpop.f32.mrb[0].mxu0
      %5223 = vmatprep.mubr.f32.mxu0 0.0
      %5224 = vmatmul.mubr.f32.gmra.mrb[0].mxu0 %v5046
      %v5225 = vpop.f32.mrb[0].mxu0
      %v5226 = vadd.f32 0.0, %v5225
      %v5227 = vpop.f32.mrb[0].mxu0
      %5228 = vmatprep.mubr.f32.mxu0 0.0
      %5229 = vmatmul.mubr.f32.gmra.mrb[0].mxu0 %v5049
      %v5230 = vpop.f32.mrb[0].mxu0
      %v5231 = vadd.f32 0.0, %v5230
      %v5232 = vpop.f32.mrb[0].mxu0
      %5233 = vmatprep.mubr.f32.mxu0 0.0
      %5234 = vmatmul.mubr.f32.gmra.mrb[0].mxu0 %v5052
      %v5235 = vpop.f32.mrb[0].mxu0
      %v5236 = vadd.f32 0.0, %v5235
      %v5237 = vpop.f32.mrb[0].mxu0
      %5238 = vmatprep.mubr.f32.mxu0 0.0
      %5239 = vmatmul.mubr.f32.gmra.mrb[0].mxu0 %v5055
      %v5240 = vpop.f32.mrb[0].mxu0
      %v5241 = vadd.f32 0.0, %v5240
      %v5242 = vpop.f32.mrb[0].mxu0
      %5243 = vmatprep.mubr.f32.mxu0 0.0
      %5244 = vmatmul.mubr.f32.gmra.mrb[0].mxu0 %v5058
      %v5245 = vpop.f32.mrb[0].mxu0
      %v5246 = vadd.f32 0.0, %v5245
      %v5247 = vpop.f32.mrb[0].mxu0
      %5248 = vmatprep.mubr.f32.mxu0 0.0
      %5249 = vmatmul.mubr.f32.gmra.mrb[0].mxu0 %v5061
      %v5250 = vpop.f32.mrb[0].mxu0
      %v5251 = vadd.f32 0.0, %v5250
      %v5252 = vpop.f32.mrb[0].mxu0
      %5253 = vmatprep.mubr.f32.mxu0 0.0
      %5254 = vmatmul.mubr.f32.gmra.mrb[0].mxu0 %v5064
      %v5255 = vpop.f32.mrb[0].mxu0
      %v5256 = vadd.f32 0.0, %v5255
      %v5257 = vpop.f32.mrb[0].mxu0
      %5258 = vmatprep.mubr.f32.mxu0 0.0
      %5259 = vmatmul.mubr.f32.gmra.mrb[0].mxu0 %v5067
      %v5260 = vpop.f32.mrb[0].mxu0
      %v5261 = vadd.f32 0.0, %v5260
      %v5262 = vpop.f32.mrb[0].mxu0
      %5263 = vmatprep.mubr.f32.mxu0 0.0
      %5264 = vmatmul.mubr.f32.gmra.mrb[0].mxu0 %v5070
      %v5265 = vpop.f32.mrb[0].mxu0
      %v5266 = vadd.f32 0.0, %v5265
      %v5267 = vpop.f32.mrb[0].mxu0
      %5268 = vmatprep.mubr.f32.mxu0 0.0
      %5269 = vmatmul.mubr.f32.gmra.mrb[0].mxu0 %v5073
      %v5270 = vpop.f32.mrb[0].mxu0
      %v5271 = vadd.f32 0.0, %v5270
      %v5272 = vpop.f32.mrb[0].mxu0
      %5273 = vmatprep.mubr.f32.mxu0 0.0
      %5274 = vmatmul.mubr.f32.gmra.mrb[0].mxu0 %v5076
      %v5275 = vpop.f32.mrb[0].mxu0
      %v5276 = vadd.f32 0.0, %v5275
      %v5277 = vpop.f32.mrb[0].mxu0
      %5278 = vmatprep.mubr.f32.mxu0 0.0
      %5279 = vmatmul.mubr.f32.gmra.mrb[0].mxu0 %v5079
      %v5280 = vpop.f32.mrb[0].mxu0
      %v5281 = vadd.f32 0.0, %v5280
      %v5282 = vpop.f32.mrb[0].mxu0
      %5283 = vmatprep.mubr.f32.mxu0 0.0
      %5284 = vmatmul.mubr.f32.gmra.mrb[0].mxu0 %v5082
      %v5285 = vpop.f32.mrb[0].mxu0
      %v5286 = vadd.f32 0.0, %v5285
      %v5287 = vpop.f32.mrb[0].mxu0
      %5288 = vmatprep.mubr.f32.mxu0 0.0
      %5289 = vmatmul.mubr.f32.gmra.mrb[0].mxu0 %v5085
      %v5290 = vpop.f32.mrb[0].mxu0
      %v5291 = vadd.f32 0.0, %v5290
      %v5292 = vpop.f32.mrb[0].mxu0
      %5293 = vmatprep.mubr.f32.mxu0 0.0
      %5294 = vmatmul.mubr.f32.gmra.mrb[0].mxu0 %v5088
      %v5295 = vpop.f32.mrb[0].mxu0
      %v5296 = vadd.f32 0.0, %v5295
      %v5297 = vpop.f32.mrb[0].mxu0
      %5298 = vmatprep.mubr.f32.mxu0 0.0
      %5299 = vmatmul.mubr.f32.gmra.mrb[0].mxu0 %v5091
      %v5300 = vpop.f32.mrb[0].mxu0
      %v5301 = vadd.f32 0.0, %v5300
      %v5302 = vpop.f32.mrb[0].mxu0
      %5303 = vmatprep.mubr.f32.mxu0 0.0
      %5304 = vmatmul.mubr.f32.gmra.mrb[0].mxu0 %v5094
      %v5305 = vpop.f32.mrb[0].mxu0
      %v5306 = vadd.f32 0.0, %v5305
      %v5307 = vpop.f32.mrb[0].mxu0
      %5308 = vmatprep.mubr.f32.mxu0 0.0
      %5309 = vmatmul.mubr.f32.gmra.mrb[0].mxu0 %v5097
      %v5310 = vpop.f32.mrb[0].mxu0
      %v5311 = vadd.f32 0.0, %v5310
      %v5312 = vpop.f32.mrb[0].mxu0
      %5313 = vmatprep.mubr.f32.mxu0 0.0
      %5314 = vmatmul.mubr.f32.gmra.mrb[0].mxu0 %v5100
      %v5315 = vpop.f32.mrb[0].mxu0
      %v5316 = vadd.f32 0.0, %v5315
      %v5317 = vpop.f32.mrb[0].mxu0
      %5318 = vmatprep.mubr.f32.mxu0 0.0
      %5319 = vmatmul.mubr.f32.gmra.mrb[0].mxu0 %v5103
      %v5320 = vpop.f32.mrb[0].mxu0
      %v5321 = vadd.f32 0.0, %v5320
      %v5322 = vpop.f32.mrb[0].mxu0
      %5323 = vmatprep.mubr.f32.mxu0 0.0
      %5324 = vmatmul.mubr.f32.gmra.mrb[0].mxu0 %v5106
      %v5325 = vpop.f32.mrb[0].mxu0
      %v5326 = vadd.f32 0.0, %v5325
      %v5327 = vpop.f32.mrb[0].mxu0
      %5328 = vmatprep.mubr.f32.mxu0 0.0
      %5329 = vmatmul.mubr.f32.gmra.mrb[0].mxu0 %v5109
      %v5330 = vpop.f32.mrb[0].mxu0
      %v5331 = vadd.f32 0.0, %v5330
      %v5332 = vpop.f32.mrb[0].mxu0
      %5333 = vmatprep.mubr.f32.mxu0 0.0
      %5334 = vmatmul.mubr.f32.gmra.mrb[0].mxu0 %v5112
      %v5335 = vpop.f32.mrb[0].mxu0
      %v5336 = vadd.f32 0.0, %v5335
      %v5337 = vpop.f32.mrb[0].mxu0
      %5338 = vdwg.mxu0
      %v5340 = vsel %vm279, %v4951, 0
      %v5343 = vsel %vm279, %v4952, 0
      %v5346 = vsel %vm279, %v4953, 0
      %v5349 = vsel %vm279, %v4954, 0
      %v5352 = vsel %vm279, %v4955, 0
      %v5355 = vsel %vm279, %v4956, 0
      %v5358 = vsel %vm279, %v4957, 0
      %v5361 = vsel %vm279, %v4958, 0
      %v5364 = vsel %vm279, %v4959, 0
      %v5367 = vsel %vm279, %v4960, 0
      %v5370 = vsel %vm279, %v4961, 0
      %v5373 = vsel %vm279, %v4962, 0
      %v5376 = vsel %vm279, %v4963, 0
      %v5379 = vsel %vm279, %v4964, 0
      %v5382 = vsel %vm279, %v4965, 0
      %v5385 = vsel %vm279, %v4966, 0
      %v5388 = vsel %vm279, %v4967, 0
      %v5391 = vsel %vm279, %v4968, 0
      %v5394 = vsel %vm279, %v4969, 0
      %v5397 = vsel %vm279, %v4970, 0
      %v5400 = vsel %vm279, %v4971, 0
      %v5403 = vsel %vm279, %v4972, 0
      %v5406 = vsel %vm279, %v4973, 0
      %v5409 = vsel %vm279, %v4974, 0
      %v5412 = vsel %vm279, %v4975, 0
      %v5415 = vsel %vm279, %v4976, 0
      %v5418 = vsel %vm279, %v4977, 0
      %v5421 = vsel %vm279, %v4978, 0
      %v5424 = vsel %vm279, %v4979, 0
      %v5427 = vsel %vm279, %v4980, 0
      %v5430 = vsel %vm279, %v4981, 0
      %v5433 = vsel %vm279, %v4982, 0
      %5435 = vmatprep.subr.mxu0 0.0
      %5436 = vmatpush1.msra.mxu0 %v4983
      %5437 = vmatprep.subr.mxu0 0.0
      %5438 = vmatpush1.msra.mxu0 0.0
      %5439 = vmatprep.subr.mxu0 0.0
      %5440 = vmatpush1.msra.mxu0 0.0
      %5441 = vmatprep.subr.mxu0 0.0
      %5442 = vmatpush1.msra.mxu0 0.0
      %5443 = vmatprep.subr.mxu0 0.0
      %5444 = vmatpush1.msra.mxu0 0.0
      %5445 = vmatprep.subr.mxu0 0.0
      %5446 = vmatpush1.msra.mxu0 0.0
      %5447 = vmatprep.subr.mxu0 0.0
      %5448 = vmatpush1.msra.mxu0 0.0
      %5449 = vmatprep.subr.mxu0 0.0
      %5450 = vmatpush1.msra.mxu0 0.0
      %5451 = vmatprep.subr.mxu0 0.0
      %5452 = vmatpush1.msra.mxu0 0.0
      %5453 = vmatprep.subr.mxu0 0.0
      %5454 = vmatpush1.msra.mxu0 0.0
      %5455 = vmatprep.subr.mxu0 0.0
      %5456 = vmatpush1.msra.mxu0 0.0
      %5457 = vmatprep.subr.mxu0 0.0
      %5458 = vmatpush1.msra.mxu0 0.0
      %5459 = vmatprep.subr.mxu0 0.0
      %5460 = vmatpush1.msra.mxu0 0.0
      %5461 = vmatprep.subr.mxu0 0.0
      %5462 = vmatpush1.msra.mxu0 0.0
      %5463 = vmatprep.subr.mxu0 0.0
      %5464 = vmatpush1.msra.mxu0 0.0
      %5465 = vmatprep.subr.mxu0 0.0
      %5466 = vmatpush1.msra.mxu0 0.0
      %5467 = vmatprep.subr.mxu0 0.0
      %5468 = vmatpush1.msra.mxu0 0.0
      %5469 = vmatprep.subr.mxu0 0.0
      %5470 = vmatpush1.msra.mxu0 0.0
      %5471 = vmatprep.subr.mxu0 0.0
      %5472 = vmatpush1.msra.mxu0 0.0
      %5473 = vmatprep.subr.mxu0 0.0
      %5474 = vmatpush1.msra.mxu0 0.0
      %5475 = vmatprep.subr.mxu0 0.0
      %5476 = vmatpush1.msra.mxu0 0.0
      %5477 = vmatprep.subr.mxu0 0.0
      %5478 = vmatpush1.msra.mxu0 0.0
      %5479 = vmatprep.subr.mxu0 0.0
      %5480 = vmatpush1.msra.mxu0 0.0
      %5481 = vmatprep.subr.mxu0 0.0
      %5482 = vmatpush1.msra.mxu0 0.0
      %5483 = vmatprep.subr.mxu0 0.0
      %5484 = vmatpush1.msra.mxu0 0.0
      %5485 = vmatprep.subr.mxu0 0.0
      %5486 = vmatpush1.msra.mxu0 0.0
      %5487 = vmatprep.subr.mxu0 0.0
      %5488 = vmatpush1.msra.mxu0 0.0
      %5489 = vmatprep.subr.mxu0 0.0
      %5490 = vmatpush1.msra.mxu0 0.0
      %5491 = vmatprep.subr.mxu0 0.0
      %5492 = vmatpush1.msra.mxu0 0.0
      %5493 = vmatprep.subr.mxu0 0.0
      %5494 = vmatpush1.msra.mxu0 0.0
      %5495 = vmatprep.subr.mxu0 0.0
      %5496 = vmatpush1.msra.mxu0 0.0
      %5497 = vmatprep.subr.mxu0 0.0
      %5498 = vmatpush1.msra.mxu0 0.0
      %5499 = vmatprep.mubr.f32.mxu0 0.0
      %5500 = vmatmul.mubr.f32.gmra.mrb[0].mxu0 %v5340
      %v5501 = vpop.f32.mrb[0].mxu0
      %v5502 = vadd.f32 %v5181, %v5501
      %v5503 = vpop.f32.mrb[0].mxu0
      %5504 = vmatprep.mubr.f32.mxu0 0.0
      %5505 = vmatmul.mubr.f32.gmra.mrb[0].mxu0 %v5343
      %v5506 = vpop.f32.mrb[0].mxu0
      %v5507 = vadd.f32 %v5186, %v5506
      %v5508 = vpop.f32.mrb[0].mxu0
      %5509 = vmatprep.mubr.f32.mxu0 0.0
      %5510 = vmatmul.mubr.f32.gmra.mrb[0].mxu0 %v5346
      %v5511 = vpop.f32.mrb[0].mxu0
      %v5512 = vadd.f32 %v5191, %v5511
      %v5513 = vpop.f32.mrb[0].mxu0
      %5514 = vmatprep.mubr.f32.mxu0 0.0
      %5515 = vmatmul.mubr.f32.gmra.mrb[0].mxu0 %v5349
      %v5516 = vpop.f32.mrb[0].mxu0
      %v5517 = vadd.f32 %v5196, %v5516
      %v5518 = vpop.f32.mrb[0].mxu0
      %5519 = vmatprep.mubr.f32.mxu0 0.0
      %5520 = vmatmul.mubr.f32.gmra.mrb[0].mxu0 %v5352
      %v5521 = vpop.f32.mrb[0].mxu0
      %v5522 = vadd.f32 %v5201, %v5521
      %v5523 = vpop.f32.mrb[0].mxu0
      %5524 = vmatprep.mubr.f32.mxu0 0.0
      %5525 = vmatmul.mubr.f32.gmra.mrb[0].mxu0 %v5355
      %v5526 = vpop.f32.mrb[0].mxu0
      %v5527 = vadd.f32 %v5206, %v5526
      %v5528 = vpop.f32.mrb[0].mxu0
      %5529 = vmatprep.mubr.f32.mxu0 0.0
      %5530 = vmatmul.mubr.f32.gmra.mrb[0].mxu0 %v5358
      %v5531 = vpop.f32.mrb[0].mxu0
      %v5532 = vadd.f32 %v5211, %v5531
      %v5533 = vpop.f32.mrb[0].mxu0
      %5534 = vmatprep.mubr.f32.mxu0 0.0
      %5535 = vmatmul.mubr.f32.gmra.mrb[0].mxu0 %v5361
      %v5536 = vpop.f32.mrb[0].mxu0
      %v5537 = vadd.f32 %v5216, %v5536
      %v5538 = vpop.f32.mrb[0].mxu0
      %5539 = vmatprep.mubr.f32.mxu0 0.0
      %5540 = vmatmul.mubr.f32.gmra.mrb[0].mxu0 %v5364
      %v5541 = vpop.f32.mrb[0].mxu0
      %v5542 = vadd.f32 %v5221, %v5541
      %v5543 = vpop.f32.mrb[0].mxu0
      %5544 = vmatprep.mubr.f32.mxu0 0.0
      %5545 = vmatmul.mubr.f32.gmra.mrb[0].mxu0 %v5367
      %v5546 = vpop.f32.mrb[0].mxu0
      %v5547 = vadd.f32 %v5226, %v5546
      %v5548 = vpop.f32.mrb[0].mxu0
      %5549 = vmatprep.mubr.f32.mxu0 0.0
      %5550 = vmatmul.mubr.f32.gmra.mrb[0].mxu0 %v5370
      %v5551 = vpop.f32.mrb[0].mxu0
      %v5552 = vadd.f32 %v5231, %v5551
      %v5553 = vpop.f32.mrb[0].mxu0
      %5554 = vmatprep.mubr.f32.mxu0 0.0
      %5555 = vmatmul.mubr.f32.gmra.mrb[0].mxu0 %v5373
      %v5556 = vpop.f32.mrb[0].mxu0
      %v5557 = vadd.f32 %v5236, %v5556
      %v5558 = vpop.f32.mrb[0].mxu0
      %5559 = vmatprep.mubr.f32.mxu0 0.0
      %5560 = vmatmul.mubr.f32.gmra.mrb[0].mxu0 %v5376
      %v5561 = vpop.f32.mrb[0].mxu0
      %v5562 = vadd.f32 %v5241, %v5561
      %v5563 = vpop.f32.mrb[0].mxu0
      %5564 = vmatprep.mubr.f32.mxu0 0.0
      %5565 = vmatmul.mubr.f32.gmra.mrb[0].mxu0 %v5379
      %v5566 = vpop.f32.mrb[0].mxu0
      %v5567 = vadd.f32 %v5246, %v5566
      %v5568 = vpop.f32.mrb[0].mxu0
      %5569 = vmatprep.mubr.f32.mxu0 0.0
      %5570 = vmatmul.mubr.f32.gmra.mrb[0].mxu0 %v5382
      %v5571 = vpop.f32.mrb[0].mxu0
      %v5572 = vadd.f32 %v5251, %v5571
      %v5573 = vpop.f32.mrb[0].mxu0
      %5574 = vmatprep.mubr.f32.mxu0 0.0
      %5575 = vmatmul.mubr.f32.gmra.mrb[0].mxu0 %v5385
      %v5576 = vpop.f32.mrb[0].mxu0
      %v5577 = vadd.f32 %v5256, %v5576
      %v5578 = vpop.f32.mrb[0].mxu0
      %5579 = vmatprep.mubr.f32.mxu0 0.0
      %5580 = vmatmul.mubr.f32.gmra.mrb[0].mxu0 %v5388
      %v5581 = vpop.f32.mrb[0].mxu0
      %v5582 = vadd.f32 %v5261, %v5581
      %v5583 = vpop.f32.mrb[0].mxu0
      %5584 = vmatprep.mubr.f32.mxu0 0.0
      %5585 = vmatmul.mubr.f32.gmra.mrb[0].mxu0 %v5391
      %v5586 = vpop.f32.mrb[0].mxu0
      %v5587 = vadd.f32 %v5266, %v5586
      %v5588 = vpop.f32.mrb[0].mxu0
      %5589 = vmatprep.mubr.f32.mxu0 0.0
      %5590 = vmatmul.mubr.f32.gmra.mrb[0].mxu0 %v5394
      %v5591 = vpop.f32.mrb[0].mxu0
      %v5592 = vadd.f32 %v5271, %v5591
      %v5593 = vpop.f32.mrb[0].mxu0
      %5594 = vmatprep.mubr.f32.mxu0 0.0
      %5595 = vmatmul.mubr.f32.gmra.mrb[0].mxu0 %v5397
      %v5596 = vpop.f32.mrb[0].mxu0
      %v5597 = vadd.f32 %v5276, %v5596
      %v5598 = vpop.f32.mrb[0].mxu0
      %5599 = vmatprep.mubr.f32.mxu0 0.0
      %5600 = vmatmul.mubr.f32.gmra.mrb[0].mxu0 %v5400
      %v5601 = vpop.f32.mrb[0].mxu0
      %v5602 = vadd.f32 %v5281, %v5601
      %v5603 = vpop.f32.mrb[0].mxu0
      %5604 = vmatprep.mubr.f32.mxu0 0.0
      %5605 = vmatmul.mubr.f32.gmra.mrb[0].mxu0 %v5403
      %v5606 = vpop.f32.mrb[0].mxu0
      %v5607 = vadd.f32 %v5286, %v5606
      %v5608 = vpop.f32.mrb[0].mxu0
      %5609 = vmatprep.mubr.f32.mxu0 0.0
      %5610 = vmatmul.mubr.f32.gmra.mrb[0].mxu0 %v5406
      %v5611 = vpop.f32.mrb[0].mxu0
      %v5612 = vadd.f32 %v5291, %v5611
      %v5613 = vpop.f32.mrb[0].mxu0
      %5614 = vmatprep.mubr.f32.mxu0 0.0
      %5615 = vmatmul.mubr.f32.gmra.mrb[0].mxu0 %v5409
      %v5616 = vpop.f32.mrb[0].mxu0
      %v5617 = vadd.f32 %v5296, %v5616
      %v5618 = vpop.f32.mrb[0].mxu0
      %5619 = vmatprep.mubr.f32.mxu0 0.0
      %5620 = vmatmul.mubr.f32.gmra.mrb[0].mxu0 %v5412
      %v5621 = vpop.f32.mrb[0].mxu0
      %v5622 = vadd.f32 %v5301, %v5621
      %v5623 = vpop.f32.mrb[0].mxu0
      %5624 = vmatprep.mubr.f32.mxu0 0.0
      %5625 = vmatmul.mubr.f32.gmra.mrb[0].mxu0 %v5415
      %v5626 = vpop.f32.mrb[0].mxu0
      %v5627 = vadd.f32 %v5306, %v5626
      %v5628 = vpop.f32.mrb[0].mxu0
      %5629 = vmatprep.mubr.f32.mxu0 0.0
      %5630 = vmatmul.mubr.f32.gmra.mrb[0].mxu0 %v5418
      %v5631 = vpop.f32.mrb[0].mxu0
      %v5632 = vadd.f32 %v5311, %v5631
      %v5633 = vpop.f32.mrb[0].mxu0
      %5634 = vmatprep.mubr.f32.mxu0 0.0
      %5635 = vmatmul.mubr.f32.gmra.mrb[0].mxu0 %v5421
      %v5636 = vpop.f32.mrb[0].mxu0
      %v5637 = vadd.f32 %v5316, %v5636
      %v5638 = vpop.f32.mrb[0].mxu0
      %5639 = vmatprep.mubr.f32.mxu0 0.0
      %5640 = vmatmul.mubr.f32.gmra.mrb[0].mxu0 %v5424
      %v5641 = vpop.f32.mrb[0].mxu0
      %v5642 = vadd.f32 %v5321, %v5641
      %v5643 = vpop.f32.mrb[0].mxu0
      %5644 = vmatprep.mubr.f32.mxu0 0.0
      %5645 = vmatmul.mubr.f32.gmra.mrb[0].mxu0 %v5427
      %v5646 = vpop.f32.mrb[0].mxu0
      %v5647 = vadd.f32 %v5326, %v5646
      %v5648 = vpop.f32.mrb[0].mxu0
      %5649 = vmatprep.mubr.f32.mxu0 0.0
      %5650 = vmatmul.mubr.f32.gmra.mrb[0].mxu0 %v5430
      %v5651 = vpop.f32.mrb[0].mxu0
      %v5652 = vadd.f32 %v5331, %v5651
      %v5653 = vpop.f32.mrb[0].mxu0
      %5654 = vmatprep.mubr.f32.mxu0 0.0
      %5655 = vmatmul.mubr.f32.gmra.mrb[0].mxu0 %v5433
      %v5656 = vpop.f32.mrb[0].mxu0
      %v5657 = vadd.f32 %v5336, %v5656
      %v5658 = vpop.f32.mrb[0].mxu0
      %5659 = vdwg.mxu0
      %v5660 = vld [vmem:[#allocation2 + $0x2] sm:$0xff]
      %v5661 = vld [vmem:[#allocation2 + $0xa] sm:$0xff]
      %v5662 = vld [vmem:[#allocation2 + $0x1a] sm:$0xff]
      %v5663 = vld [vmem:[#allocation2 + $0x22] sm:$0xff]
      %v5664 = vld [vmem:[#allocation2 + $0x32] sm:$0xff]
      %v5665 = vld [vmem:[#allocation2 + $0x3a] sm:$0xff]
      %v5666 = vld [vmem:[#allocation2 + $0x4a] sm:$0xff]
      %v5667 = vld [vmem:[#allocation2 + $0x52] sm:$0xff]
      %v5668 = vld [vmem:[#allocation2 + $0x62] sm:$0xff]
      %v5669 = vld [vmem:[#allocation2 + $0x6a] sm:$0xff]
      %v5670 = vld [vmem:[#allocation2 + $0x7a] sm:$0xff]
      %v5671 = vld [vmem:[#allocation2 + $0x82] sm:$0xff]
      %v5672 = vld [vmem:[#allocation2 + $0x92] sm:$0xff]
      %v5673 = vld [vmem:[#allocation2 + $0x9a] sm:$0xff]
      %v5674 = vld [vmem:[#allocation2 + $0xaa] sm:$0xff]
      %v5675 = vld [vmem:[#allocation2 + $0xb2] sm:$0xff]
      %v5676 = vld [vmem:[#allocation2 + $0xc2] sm:$0xff]
      %v5677 = vld [vmem:[#allocation2 + $0xca] sm:$0xff]
      %v5678 = vld [vmem:[#allocation2 + $0xda] sm:$0xff]
      %v5679 = vld [vmem:[#allocation2 + $0xe2] sm:$0xff]
      %v5680 = vld [vmem:[#allocation2 + $0xf2] sm:$0xff]
      %v5681 = vld [vmem:[#allocation2 + $0xfa] sm:$0xff]
      %v5682 = vld [vmem:[#allocation2 + $0x10a] sm:$0xff]
      %v5683 = vld [vmem:[#allocation2 + $0x112] sm:$0xff]
      %v5684 = vld [vmem:[#allocation2 + $0x122] sm:$0xff]
      %v5685 = vld [vmem:[#allocation2 + $0x12a] sm:$0xff]
      %v5686 = vld [vmem:[#allocation2 + $0x13a] sm:$0xff]
      %v5687 = vld [vmem:[#allocation2 + $0x142] sm:$0xff]
      %v5688 = vld [vmem:[#allocation2 + $0x152] sm:$0xff]
      %v5689 = vld [vmem:[#allocation2 + $0x15a] sm:$0xff]
      %v5690 = vld [vmem:[#allocation2 + $0x16a] sm:$0xff]
      %v5691 = vld [vmem:[#allocation2 + $0x172] sm:$0xff]
      %s5692 = scalar_lea.vmem %s6, 16
      %v5693 = vld [vmem:[%s5692] sm:$0xff]
      %v5695 = vsel %vm279, %v5660, 0
      %v5698 = vsel %vm279, %v5661, 0
      %v5701 = vsel %vm279, %v5662, 0
      %v5704 = vsel %vm279, %v5663, 0
      %v5707 = vsel %vm279, %v5664, 0
      %v5710 = vsel %vm279, %v5665, 0
      %v5713 = vsel %vm279, %v5666, 0
      %v5716 = vsel %vm279, %v5667, 0
      %v5719 = vsel %vm279, %v5668, 0
      %v5722 = vsel %vm279, %v5669, 0
      %v5725 = vsel %vm279, %v5670, 0
      %v5728 = vsel %vm279, %v5671, 0
      %v5731 = vsel %vm279, %v5672, 0
      %v5734 = vsel %vm279, %v5673, 0
      %v5737 = vsel %vm279, %v5674, 0
      %v5740 = vsel %vm279, %v5675, 0
      %v5743 = vsel %vm279, %v5676, 0
      %v5746 = vsel %vm279, %v5677, 0
      %v5749 = vsel %vm279, %v5678, 0
      %v5752 = vsel %vm279, %v5679, 0
      %v5755 = vsel %vm279, %v5680, 0
      %v5758 = vsel %vm279, %v5681, 0
      %v5761 = vsel %vm279, %v5682, 0
      %v5764 = vsel %vm279, %v5683, 0
      %v5767 = vsel %vm279, %v5684, 0
      %v5770 = vsel %vm279, %v5685, 0
      %v5773 = vsel %vm279, %v5686, 0
      %v5776 = vsel %vm279, %v5687, 0
      %v5779 = vsel %vm279, %v5688, 0
      %v5782 = vsel %vm279, %v5689, 0
      %v5785 = vsel %vm279, %v5690, 0
      %v5788 = vsel %vm279, %v5691, 0
      %5790 = vmatprep.subr.mxu0 0.0
      %5791 = vmatpush1.msra.mxu0 %v5693
      %5792 = vmatprep.subr.mxu0 0.0
      %5793 = vmatpush1.msra.mxu0 0.0
      %5794 = vmatprep.subr.mxu0 0.0
      %5795 = vmatpush1.msra.mxu0 0.0
      %5796 = vmatprep.subr.mxu0 0.0
      %5797 = vmatpush1.msra.mxu0 0.0
      %5798 = vmatprep.subr.mxu0 0.0
      %5799 = vmatpush1.msra.mxu0 0.0
      %5800 = vmatprep.subr.mxu0 0.0
      %5801 = vmatpush1.msra.mxu0 0.0
      %5802 = vmatprep.subr.mxu0 0.0
      %5803 = vmatpush1.msra.mxu0 0.0
      %5804 = vmatprep.subr.mxu0 0.0
      %5805 = vmatpush1.msra.mxu0 0.0
      %5806 = vmatprep.subr.mxu0 0.0
      %5807 = vmatpush1.msra.mxu0 0.0
      %5808 = vmatprep.subr.mxu0 0.0
      %5809 = vmatpush1.msra.mxu0 0.0
      %5810 = vmatprep.subr.mxu0 0.0
      %5811 = vmatpush1.msra.mxu0 0.0
      %5812 = vmatprep.subr.mxu0 0.0
      %5813 = vmatpush1.msra.mxu0 0.0
      %5814 = vmatprep.subr.mxu0 0.0
      %5815 = vmatpush1.msra.mxu0 0.0
      %5816 = vmatprep.subr.mxu0 0.0
      %5817 = vmatpush1.msra.mxu0 0.0
      %5818 = vmatprep.subr.mxu0 0.0
      %5819 = vmatpush1.msra.mxu0 0.0
      %5820 = vmatprep.subr.mxu0 0.0
      %5821 = vmatpush1.msra.mxu0 0.0
      %5822 = vmatprep.subr.mxu0 0.0
      %5823 = vmatpush1.msra.mxu0 0.0
      %5824 = vmatprep.subr.mxu0 0.0
      %5825 = vmatpush1.msra.mxu0 0.0
      %5826 = vmatprep.subr.mxu0 0.0
      %5827 = vmatpush1.msra.mxu0 0.0
      %5828 = vmatprep.subr.mxu0 0.0
      %5829 = vmatpush1.msra.mxu0 0.0
      %5830 = vmatprep.subr.mxu0 0.0
      %5831 = vmatpush1.msra.mxu0 0.0
      %5832 = vmatprep.subr.mxu0 0.0
      %5833 = vmatpush1.msra.mxu0 0.0
      %5834 = vmatprep.subr.mxu0 0.0
      %5835 = vmatpush1.msra.mxu0 0.0
      %5836 = vmatprep.subr.mxu0 0.0
      %5837 = vmatpush1.msra.mxu0 0.0
      %5838 = vmatprep.subr.mxu0 0.0
      %5839 = vmatpush1.msra.mxu0 0.0
      %5840 = vmatprep.subr.mxu0 0.0
      %5841 = vmatpush1.msra.mxu0 0.0
      %5842 = vmatprep.subr.mxu0 0.0
      %5843 = vmatpush1.msra.mxu0 0.0
      %5844 = vmatprep.subr.mxu0 0.0
      %5845 = vmatpush1.msra.mxu0 0.0
      %5846 = vmatprep.subr.mxu0 0.0
      %5847 = vmatpush1.msra.mxu0 0.0
      %5848 = vmatprep.subr.mxu0 0.0
      %5849 = vmatpush1.msra.mxu0 0.0
      %5850 = vmatprep.subr.mxu0 0.0
      %5851 = vmatpush1.msra.mxu0 0.0
      %5852 = vmatprep.subr.mxu0 0.0
      %5853 = vmatpush1.msra.mxu0 0.0
      %5854 = vmatprep.mubr.f32.mxu0 0.0
      %5855 = vmatmul.mubr.f32.gmra.mrb[0].mxu0 %v5695
      %v5856 = vpop.f32.mrb[0].mxu0
      %v5857 = vadd.f32 0.0, %v5856
      %v5858 = vpop.f32.mrb[0].mxu0
      %5859 = vmatprep.mubr.f32.mxu0 0.0
      %5860 = vmatmul.mubr.f32.gmra.mrb[0].mxu0 %v5698
      %v5861 = vpop.f32.mrb[0].mxu0
      %v5862 = vadd.f32 0.0, %v5861
      %v5863 = vpop.f32.mrb[0].mxu0
      %5864 = vmatprep.mubr.f32.mxu0 0.0
      %5865 = vmatmul.mubr.f32.gmra.mrb[0].mxu0 %v5701
      %v5866 = vpop.f32.mrb[0].mxu0
      %v5867 = vadd.f32 0.0, %v5866
      %v5868 = vpop.f32.mrb[0].mxu0
      %5869 = vmatprep.mubr.f32.mxu0 0.0
      %5870 = vmatmul.mubr.f32.gmra.mrb[0].mxu0 %v5704
      %v5871 = vpop.f32.mrb[0].mxu0
      %v5872 = vadd.f32 0.0, %v5871
      %v5873 = vpop.f32.mrb[0].mxu0
      %5874 = vmatprep.mubr.f32.mxu0 0.0
      %5875 = vmatmul.mubr.f32.gmra.mrb[0].mxu0 %v5707
      %v5876 = vpop.f32.mrb[0].mxu0
      %v5877 = vadd.f32 0.0, %v5876
      %v5878 = vpop.f32.mrb[0].mxu0
      %5879 = vmatprep.mubr.f32.mxu0 0.0
      %5880 = vmatmul.mubr.f32.gmra.mrb[0].mxu0 %v5710
      %v5881 = vpop.f32.mrb[0].mxu0
      %v5882 = vadd.f32 0.0, %v5881
      %v5883 = vpop.f32.mrb[0].mxu0
      %5884 = vmatprep.mubr.f32.mxu0 0.0
      %5885 = vmatmul.mubr.f32.gmra.mrb[0].mxu0 %v5713
      %v5886 = vpop.f32.mrb[0].mxu0
      %v5887 = vadd.f32 0.0, %v5886
      %v5888 = vpop.f32.mrb[0].mxu0
      %5889 = vmatprep.mubr.f32.mxu0 0.0
      %5890 = vmatmul.mubr.f32.gmra.mrb[0].mxu0 %v5716
      %v5891 = vpop.f32.mrb[0].mxu0
      %v5892 = vadd.f32 0.0, %v5891
      %v5893 = vpop.f32.mrb[0].mxu0
      %5894 = vmatprep.mubr.f32.mxu0 0.0
      %5895 = vmatmul.mubr.f32.gmra.mrb[0].mxu0 %v5719
      %v5896 = vpop.f32.mrb[0].mxu0
      %v5897 = vadd.f32 0.0, %v5896
      %v5898 = vpop.f32.mrb[0].mxu0
      %5899 = vmatprep.mubr.f32.mxu0 0.0
      %5900 = vmatmul.mubr.f32.gmra.mrb[0].mxu0 %v5722
      %v5901 = vpop.f32.mrb[0].mxu0
      %v5902 = vadd.f32 0.0, %v5901
      %v5903 = vpop.f32.mrb[0].mxu0
      %5904 = vmatprep.mubr.f32.mxu0 0.0
      %5905 = vmatmul.mubr.f32.gmra.mrb[0].mxu0 %v5725
      %v5906 = vpop.f32.mrb[0].mxu0
      %v5907 = vadd.f32 0.0, %v5906
      %v5908 = vpop.f32.mrb[0].mxu0
      %5909 = vmatprep.mubr.f32.mxu0 0.0
      %5910 = vmatmul.mubr.f32.gmra.mrb[0].mxu0 %v5728
      %v5911 = vpop.f32.mrb[0].mxu0
      %v5912 = vadd.f32 0.0, %v5911
      %v5913 = vpop.f32.mrb[0].mxu0
      %5914 = vmatprep.mubr.f32.mxu0 0.0
      %5915 = vmatmul.mubr.f32.gmra.mrb[0].mxu0 %v5731
      %v5916 = vpop.f32.mrb[0].mxu0
      %v5917 = vadd.f32 0.0, %v5916
      %v5918 = vpop.f32.mrb[0].mxu0
      %5919 = vmatprep.mubr.f32.mxu0 0.0
      %5920 = vmatmul.mubr.f32.gmra.mrb[0].mxu0 %v5734
      %v5921 = vpop.f32.mrb[0].mxu0
      %v5922 = vadd.f32 0.0, %v5921
      %v5923 = vpop.f32.mrb[0].mxu0
      %5924 = vmatprep.mubr.f32.mxu0 0.0
      %5925 = vmatmul.mubr.f32.gmra.mrb[0].mxu0 %v5737
      %v5926 = vpop.f32.mrb[0].mxu0
      %v5927 = vadd.f32 0.0, %v5926
      %v5928 = vpop.f32.mrb[0].mxu0
      %5929 = vmatprep.mubr.f32.mxu0 0.0
      %5930 = vmatmul.mubr.f32.gmra.mrb[0].mxu0 %v5740
      %v5931 = vpop.f32.mrb[0].mxu0
      %v5932 = vadd.f32 0.0, %v5931
      %v5933 = vpop.f32.mrb[0].mxu0
      %5934 = vmatprep.mubr.f32.mxu0 0.0
      %5935 = vmatmul.mubr.f32.gmra.mrb[0].mxu0 %v5743
      %v5936 = vpop.f32.mrb[0].mxu0
      %v5937 = vadd.f32 0.0, %v5936
      %v5938 = vpop.f32.mrb[0].mxu0
      %5939 = vmatprep.mubr.f32.mxu0 0.0
      %5940 = vmatmul.mubr.f32.gmra.mrb[0].mxu0 %v5746
      %v5941 = vpop.f32.mrb[0].mxu0
      %v5942 = vadd.f32 0.0, %v5941
      %v5943 = vpop.f32.mrb[0].mxu0
      %5944 = vmatprep.mubr.f32.mxu0 0.0
      %5945 = vmatmul.mubr.f32.gmra.mrb[0].mxu0 %v5749
      %v5946 = vpop.f32.mrb[0].mxu0
      %v5947 = vadd.f32 0.0, %v5946
      %v5948 = vpop.f32.mrb[0].mxu0
      %5949 = vmatprep.mubr.f32.mxu0 0.0
      %5950 = vmatmul.mubr.f32.gmra.mrb[0].mxu0 %v5752
      %v5951 = vpop.f32.mrb[0].mxu0
      %v5952 = vadd.f32 0.0, %v5951
      %v5953 = vpop.f32.mrb[0].mxu0
      %5954 = vmatprep.mubr.f32.mxu0 0.0
      %5955 = vmatmul.mubr.f32.gmra.mrb[0].mxu0 %v5755
      %v5956 = vpop.f32.mrb[0].mxu0
      %v5957 = vadd.f32 0.0, %v5956
      %v5958 = vpop.f32.mrb[0].mxu0
      %5959 = vmatprep.mubr.f32.mxu0 0.0
      %5960 = vmatmul.mubr.f32.gmra.mrb[0].mxu0 %v5758
      %v5961 = vpop.f32.mrb[0].mxu0
      %v5962 = vadd.f32 0.0, %v5961
      %v5963 = vpop.f32.mrb[0].mxu0
      %5964 = vmatprep.mubr.f32.mxu0 0.0
      %5965 = vmatmul.mubr.f32.gmra.mrb[0].mxu0 %v5761
      %v5966 = vpop.f32.mrb[0].mxu0
      %v5967 = vadd.f32 0.0, %v5966
      %v5968 = vpop.f32.mrb[0].mxu0
      %5969 = vmatprep.mubr.f32.mxu0 0.0
      %5970 = vmatmul.mubr.f32.gmra.mrb[0].mxu0 %v5764
      %v5971 = vpop.f32.mrb[0].mxu0
      %v5972 = vadd.f32 0.0, %v5971
      %v5973 = vpop.f32.mrb[0].mxu0
      %5974 = vmatprep.mubr.f32.mxu0 0.0
      %5975 = vmatmul.mubr.f32.gmra.mrb[0].mxu0 %v5767
      %v5976 = vpop.f32.mrb[0].mxu0
      %v5977 = vadd.f32 0.0, %v5976
      %v5978 = vpop.f32.mrb[0].mxu0
      %5979 = vmatprep.mubr.f32.mxu0 0.0
      %5980 = vmatmul.mubr.f32.gmra.mrb[0].mxu0 %v5770
      %v5981 = vpop.f32.mrb[0].mxu0
      %v5982 = vadd.f32 0.0, %v5981
      %v5983 = vpop.f32.mrb[0].mxu0
      %5984 = vmatprep.mubr.f32.mxu0 0.0
      %5985 = vmatmul.mubr.f32.gmra.mrb[0].mxu0 %v5773
      %v5986 = vpop.f32.mrb[0].mxu0
      %v5987 = vadd.f32 0.0, %v5986
      %v5988 = vpop.f32.mrb[0].mxu0
      %5989 = vmatprep.mubr.f32.mxu0 0.0
      %5990 = vmatmul.mubr.f32.gmra.mrb[0].mxu0 %v5776
      %v5991 = vpop.f32.mrb[0].mxu0
      %v5992 = vadd.f32 0.0, %v5991
      %v5993 = vpop.f32.mrb[0].mxu0
      %5994 = vmatprep.mubr.f32.mxu0 0.0
      %5995 = vmatmul.mubr.f32.gmra.mrb[0].mxu0 %v5779
      %v5996 = vpop.f32.mrb[0].mxu0
      %v5997 = vadd.f32 0.0, %v5996
      %v5998 = vpop.f32.mrb[0].mxu0
      %5999 = vmatprep.mubr.f32.mxu0 0.0
      %6000 = vmatmul.mubr.f32.gmra.mrb[0].mxu0 %v5782
      %v6001 = vpop.f32.mrb[0].mxu0
      %v6002 = vadd.f32 0.0, %v6001
      %v6003 = vpop.f32.mrb[0].mxu0
      %6004 = vmatprep.mubr.f32.mxu0 0.0
      %6005 = vmatmul.mubr.f32.gmra.mrb[0].mxu0 %v5785
      %v6006 = vpop.f32.mrb[0].mxu0
      %v6007 = vadd.f32 0.0, %v6006
      %v6008 = vpop.f32.mrb[0].mxu0
      %6009 = vmatprep.mubr.f32.mxu0 0.0
      %6010 = vmatmul.mubr.f32.gmra.mrb[0].mxu0 %v5788
      %v6011 = vpop.f32.mrb[0].mxu0
      %v6012 = vadd.f32 0.0, %v6011
      %v6013 = vpop.f32.mrb[0].mxu0
      %6014 = vdwg.mxu0
      %v6015 = vadd.f32 %v5502, %v5857
      %v6016 = vadd.f32 %v5507, %v5862
      %v6017 = vadd.f32 %v5512, %v5867
      %v6018 = vadd.f32 %v5517, %v5872
      %v6019 = vadd.f32 %v5522, %v5877
      %v6020 = vadd.f32 %v5527, %v5882
      %v6021 = vadd.f32 %v5532, %v5887
      %v6022 = vadd.f32 %v5537, %v5892
      %v6023 = vadd.f32 %v5542, %v5897
      %v6024 = vadd.f32 %v5547, %v5902
      %v6025 = vadd.f32 %v5552, %v5907
      %v6026 = vadd.f32 %v5557, %v5912
      %v6027 = vadd.f32 %v5562, %v5917
      %v6028 = vadd.f32 %v5567, %v5922
      %v6029 = vadd.f32 %v5572, %v5927
      %v6030 = vadd.f32 %v5577, %v5932
      %v6031 = vadd.f32 %v5582, %v5937
      %v6032 = vadd.f32 %v5587, %v5942
      %v6033 = vadd.f32 %v5592, %v5947
      %v6034 = vadd.f32 %v5597, %v5952
      %v6035 = vadd.f32 %v5602, %v5957
      %v6036 = vadd.f32 %v5607, %v5962
      %v6037 = vadd.f32 %v5612, %v5967
      %v6038 = vadd.f32 %v5617, %v5972
      %v6039 = vadd.f32 %v5622, %v5977
      %v6040 = vadd.f32 %v5627, %v5982
      %v6041 = vadd.f32 %v5632, %v5987
      %v6042 = vadd.f32 %v5637, %v5992
      %v6043 = vadd.f32 %v5642, %v5997
      %v6044 = vadd.f32 %v5647, %v6002
      %v6045 = vadd.f32 %v5652, %v6007
      %v6046 = vadd.f32 %v5657, %v6012
      %v6047 = vld [vmem:[%s917] sm:$0xff]
      %v6048 = vld [vmem:[%s917 + $0x8] sm:$0xff]
      %v6049 = vld [vmem:[%s917 + $0x18] sm:$0xff]
      %v6050 = vld [vmem:[%s917 + $0x20] sm:$0xff]
      %v6051 = vld [vmem:[%s917 + $0x30] sm:$0xff]
      %v6052 = vld [vmem:[%s917 + $0x38] sm:$0xff]
      %v6053 = vld [vmem:[%s917 + $0x48] sm:$0xff]
      %v6054 = vld [vmem:[%s917 + $0x50] sm:$0xff]
      %v6055 = vld [vmem:[%s917 + $0x60] sm:$0xff]
      %v6056 = vld [vmem:[%s917 + $0x68] sm:$0xff]
      %v6057 = vld [vmem:[%s917 + $0x78] sm:$0xff]
      %v6058 = vld [vmem:[%s917 + $0x80] sm:$0xff]
      %v6059 = vld [vmem:[%s917 + $0x90] sm:$0xff]
      %v6060 = vld [vmem:[%s917 + $0x98] sm:$0xff]
      %v6061 = vld [vmem:[%s917 + $0xa8] sm:$0xff]
      %v6062 = vld [vmem:[%s917 + $0xb0] sm:$0xff]
      %v6063 = vld [vmem:[%s917 + $0xc0] sm:$0xff]
      %v6064 = vld [vmem:[%s917 + $0xc8] sm:$0xff]
      %v6065 = vld [vmem:[%s917 + $0xd8] sm:$0xff]
      %v6066 = vld [vmem:[%s917 + $0xe0] sm:$0xff]
      %v6067 = vld [vmem:[%s917 + $0xf0] sm:$0xff]
      %v6068 = vld [vmem:[%s917 + $0xf8] sm:$0xff]
      %v6069 = vld [vmem:[%s917 + $0x108] sm:$0xff]
      %v6070 = vld [vmem:[%s917 + $0x110] sm:$0xff]
      %v6071 = vld [vmem:[%s917 + $0x120] sm:$0xff]
      %v6072 = vld [vmem:[%s917 + $0x128] sm:$0xff]
      %v6073 = vld [vmem:[%s917 + $0x138] sm:$0xff]
      %v6074 = vld [vmem:[%s917 + $0x140] sm:$0xff]
      %v6075 = vld [vmem:[%s917 + $0x150] sm:$0xff]
      %v6076 = vld [vmem:[%s917 + $0x158] sm:$0xff]
      %v6077 = vld [vmem:[%s917 + $0x168] sm:$0xff]
      %v6078 = vld [vmem:[%s917 + $0x170] sm:$0xff]
      %s6079 = scalar_lea.vmem %s6, 24
      %v6080 = vld [vmem:[%s6079] sm:$0xff]
      %v6082 = vsel %vm279, %v6047, 0
      %v6085 = vsel %vm279, %v6048, 0
      %v6088 = vsel %vm279, %v6049, 0
      %v6091 = vsel %vm279, %v6050, 0
      %v6094 = vsel %vm279, %v6051, 0
      %v6097 = vsel %vm279, %v6052, 0
      %v6100 = vsel %vm279, %v6053, 0
      %v6103 = vsel %vm279, %v6054, 0
      %v6106 = vsel %vm279, %v6055, 0
      %v6109 = vsel %vm279, %v6056, 0
      %v6112 = vsel %vm279, %v6057, 0
      %v6115 = vsel %vm279, %v6058, 0
      %v6118 = vsel %vm279, %v6059, 0
      %v6121 = vsel %vm279, %v6060, 0
      %v6124 = vsel %vm279, %v6061, 0
      %v6127 = vsel %vm279, %v6062, 0
      %v6130 = vsel %vm279, %v6063, 0
      %v6133 = vsel %vm279, %v6064, 0
      %v6136 = vsel %vm279, %v6065, 0
      %v6139 = vsel %vm279, %v6066, 0
      %v6142 = vsel %vm279, %v6067, 0
      %v6145 = vsel %vm279, %v6068, 0
      %v6148 = vsel %vm279, %v6069, 0
      %v6151 = vsel %vm279, %v6070, 0
      %v6154 = vsel %vm279, %v6071, 0
      %v6157 = vsel %vm279, %v6072, 0
      %v6160 = vsel %vm279, %v6073, 0
      %v6163 = vsel %vm279, %v6074, 0
      %v6166 = vsel %vm279, %v6075, 0
      %v6169 = vsel %vm279, %v6076, 0
      %v6172 = vsel %vm279, %v6077, 0
      %v6175 = vsel %vm279, %v6078, 0
      %6177 = vmatprep.subr.mxu0 0.0
      %6178 = vmatpush1.msra.mxu0 %v6080
      %6179 = vmatprep.subr.mxu0 0.0
      %6180 = vmatpush1.msra.mxu0 0.0
      %6181 = vmatprep.subr.mxu0 0.0
      %6182 = vmatpush1.msra.mxu0 0.0
      %6183 = vmatprep.subr.mxu0 0.0
      %6184 = vmatpush1.msra.mxu0 0.0
      %6185 = vmatprep.subr.mxu0 0.0
      %6186 = vmatpush1.msra.mxu0 0.0
      %6187 = vmatprep.subr.mxu0 0.0
      %6188 = vmatpush1.msra.mxu0 0.0
      %6189 = vmatprep.subr.mxu0 0.0
      %6190 = vmatpush1.msra.mxu0 0.0
      %6191 = vmatprep.subr.mxu0 0.0
      %6192 = vmatpush1.msra.mxu0 0.0
      %6193 = vmatprep.subr.mxu0 0.0
      %6194 = vmatpush1.msra.mxu0 0.0
      %6195 = vmatprep.subr.mxu0 0.0
      %6196 = vmatpush1.msra.mxu0 0.0
      %6197 = vmatprep.subr.mxu0 0.0
      %6198 = vmatpush1.msra.mxu0 0.0
      %6199 = vmatprep.subr.mxu0 0.0
      %6200 = vmatpush1.msra.mxu0 0.0
      %6201 = vmatprep.subr.mxu0 0.0
      %6202 = vmatpush1.msra.mxu0 0.0
      %6203 = vmatprep.subr.mxu0 0.0
      %6204 = vmatpush1.msra.mxu0 0.0
      %6205 = vmatprep.subr.mxu0 0.0
      %6206 = vmatpush1.msra.mxu0 0.0
      %6207 = vmatprep.subr.mxu0 0.0
      %6208 = vmatpush1.msra.mxu0 0.0
      %6209 = vmatprep.subr.mxu0 0.0
      %6210 = vmatpush1.msra.mxu0 0.0
      %6211 = vmatprep.subr.mxu0 0.0
      %6212 = vmatpush1.msra.mxu0 0.0
      %6213 = vmatprep.subr.mxu0 0.0
      %6214 = vmatpush1.msra.mxu0 0.0
      %6215 = vmatprep.subr.mxu0 0.0
      %6216 = vmatpush1.msra.mxu0 0.0
      %6217 = vmatprep.subr.mxu0 0.0
      %6218 = vmatpush1.msra.mxu0 0.0
      %6219 = vmatprep.subr.mxu0 0.0
      %6220 = vmatpush1.msra.mxu0 0.0
      %6221 = vmatprep.subr.mxu0 0.0
      %6222 = vmatpush1.msra.mxu0 0.0
      %6223 = vmatprep.subr.mxu0 0.0
      %6224 = vmatpush1.msra.mxu0 0.0
      %6225 = vmatprep.subr.mxu0 0.0
      %6226 = vmatpush1.msra.mxu0 0.0
      %6227 = vmatprep.subr.mxu0 0.0
      %6228 = vmatpush1.msra.mxu0 0.0
      %6229 = vmatprep.subr.mxu0 0.0
      %6230 = vmatpush1.msra.mxu0 0.0
      %6231 = vmatprep.subr.mxu0 0.0
      %6232 = vmatpush1.msra.mxu0 0.0
      %6233 = vmatprep.subr.mxu0 0.0
      %6234 = vmatpush1.msra.mxu0 0.0
      %6235 = vmatprep.subr.mxu0 0.0
      %6236 = vmatpush1.msra.mxu0 0.0
      %6237 = vmatprep.subr.mxu0 0.0
      %6238 = vmatpush1.msra.mxu0 0.0
      %6239 = vmatprep.subr.mxu0 0.0
      %6240 = vmatpush1.msra.mxu0 0.0
      %6241 = vmatprep.mubr.f32.mxu0 0.0
      %6242 = vmatmul.mubr.f32.gmra.mrb[0].mxu0 %v6082
      %v6243 = vpop.f32.mrb[0].mxu0
      %v6244 = vadd.f32 0.0, %v6243
      %v6245 = vpop.f32.mrb[0].mxu0
      %6246 = vmatprep.mubr.f32.mxu0 0.0
      %6247 = vmatmul.mubr.f32.gmra.mrb[0].mxu0 %v6085
      %v6248 = vpop.f32.mrb[0].mxu0
      %v6249 = vadd.f32 0.0, %v6248
      %v6250 = vpop.f32.mrb[0].mxu0
      %6251 = vmatprep.mubr.f32.mxu0 0.0
      %6252 = vmatmul.mubr.f32.gmra.mrb[0].mxu0 %v6088
      %v6253 = vpop.f32.mrb[0].mxu0
      %v6254 = vadd.f32 0.0, %v6253
      %v6255 = vpop.f32.mrb[0].mxu0
      %6256 = vmatprep.mubr.f32.mxu0 0.0
      %6257 = vmatmul.mubr.f32.gmra.mrb[0].mxu0 %v6091
      %v6258 = vpop.f32.mrb[0].mxu0
      %v6259 = vadd.f32 0.0, %v6258
      %v6260 = vpop.f32.mrb[0].mxu0
      %6261 = vmatprep.mubr.f32.mxu0 0.0
      %6262 = vmatmul.mubr.f32.gmra.mrb[0].mxu0 %v6094
      %v6263 = vpop.f32.mrb[0].mxu0
      %v6264 = vadd.f32 0.0, %v6263
      %v6265 = vpop.f32.mrb[0].mxu0
      %6266 = vmatprep.mubr.f32.mxu0 0.0
      %6267 = vmatmul.mubr.f32.gmra.mrb[0].mxu0 %v6097
      %v6268 = vpop.f32.mrb[0].mxu0
      %v6269 = vadd.f32 0.0, %v6268
      %v6270 = vpop.f32.mrb[0].mxu0
      %6271 = vmatprep.mubr.f32.mxu0 0.0
      %6272 = vmatmul.mubr.f32.gmra.mrb[0].mxu0 %v6100
      %v6273 = vpop.f32.mrb[0].mxu0
      %v6274 = vadd.f32 0.0, %v6273
      %v6275 = vpop.f32.mrb[0].mxu0
      %6276 = vmatprep.mubr.f32.mxu0 0.0
      %6277 = vmatmul.mubr.f32.gmra.mrb[0].mxu0 %v6103
      %v6278 = vpop.f32.mrb[0].mxu0
      %v6279 = vadd.f32 0.0, %v6278
      %v6280 = vpop.f32.mrb[0].mxu0
      %6281 = vmatprep.mubr.f32.mxu0 0.0
      %6282 = vmatmul.mubr.f32.gmra.mrb[0].mxu0 %v6106
      %v6283 = vpop.f32.mrb[0].mxu0
      %v6284 = vadd.f32 0.0, %v6283
      %v6285 = vpop.f32.mrb[0].mxu0
      %6286 = vmatprep.mubr.f32.mxu0 0.0
      %6287 = vmatmul.mubr.f32.gmra.mrb[0].mxu0 %v6109
      %v6288 = vpop.f32.mrb[0].mxu0
      %v6289 = vadd.f32 0.0, %v6288
      %v6290 = vpop.f32.mrb[0].mxu0
      %6291 = vmatprep.mubr.f32.mxu0 0.0
      %6292 = vmatmul.mubr.f32.gmra.mrb[0].mxu0 %v6112
      %v6293 = vpop.f32.mrb[0].mxu0
      %v6294 = vadd.f32 0.0, %v6293
      %v6295 = vpop.f32.mrb[0].mxu0
      %6296 = vmatprep.mubr.f32.mxu0 0.0
      %6297 = vmatmul.mubr.f32.gmra.mrb[0].mxu0 %v6115
      %v6298 = vpop.f32.mrb[0].mxu0
      %v6299 = vadd.f32 0.0, %v6298
      %v6300 = vpop.f32.mrb[0].mxu0
      %6301 = vmatprep.mubr.f32.mxu0 0.0
      %6302 = vmatmul.mubr.f32.gmra.mrb[0].mxu0 %v6118
      %v6303 = vpop.f32.mrb[0].mxu0
      %v6304 = vadd.f32 0.0, %v6303
      %v6305 = vpop.f32.mrb[0].mxu0
      %6306 = vmatprep.mubr.f32.mxu0 0.0
      %6307 = vmatmul.mubr.f32.gmra.mrb[0].mxu0 %v6121
      %v6308 = vpop.f32.mrb[0].mxu0
      %v6309 = vadd.f32 0.0, %v6308
      %v6310 = vpop.f32.mrb[0].mxu0
      %6311 = vmatprep.mubr.f32.mxu0 0.0
      %6312 = vmatmul.mubr.f32.gmra.mrb[0].mxu0 %v6124
      %v6313 = vpop.f32.mrb[0].mxu0
      %v6314 = vadd.f32 0.0, %v6313
      %v6315 = vpop.f32.mrb[0].mxu0
      %6316 = vmatprep.mubr.f32.mxu0 0.0
      %6317 = vmatmul.mubr.f32.gmra.mrb[0].mxu0 %v6127
      %v6318 = vpop.f32.mrb[0].mxu0
      %v6319 = vadd.f32 0.0, %v6318
      %v6320 = vpop.f32.mrb[0].mxu0
      %6321 = vmatprep.mubr.f32.mxu0 0.0
      %6322 = vmatmul.mubr.f32.gmra.mrb[0].mxu0 %v6130
      %v6323 = vpop.f32.mrb[0].mxu0
      %v6324 = vadd.f32 0.0, %v6323
      %v6325 = vpop.f32.mrb[0].mxu0
      %6326 = vmatprep.mubr.f32.mxu0 0.0
      %6327 = vmatmul.mubr.f32.gmra.mrb[0].mxu0 %v6133
      %v6328 = vpop.f32.mrb[0].mxu0
      %v6329 = vadd.f32 0.0, %v6328
      %v6330 = vpop.f32.mrb[0].mxu0
      %6331 = vmatprep.mubr.f32.mxu0 0.0
      %6332 = vmatmul.mubr.f32.gmra.mrb[0].mxu0 %v6136
      %v6333 = vpop.f32.mrb[0].mxu0
      %v6334 = vadd.f32 0.0, %v6333
      %v6335 = vpop.f32.mrb[0].mxu0
      %6336 = vmatprep.mubr.f32.mxu0 0.0
      %6337 = vmatmul.mubr.f32.gmra.mrb[0].mxu0 %v6139
      %v6338 = vpop.f32.mrb[0].mxu0
      %v6339 = vadd.f32 0.0, %v6338
      %v6340 = vpop.f32.mrb[0].mxu0
      %6341 = vmatprep.mubr.f32.mxu0 0.0
      %6342 = vmatmul.mubr.f32.gmra.mrb[0].mxu0 %v6142
      %v6343 = vpop.f32.mrb[0].mxu0
      %v6344 = vadd.f32 0.0, %v6343
      %v6345 = vpop.f32.mrb[0].mxu0
      %6346 = vmatprep.mubr.f32.mxu0 0.0
      %6347 = vmatmul.mubr.f32.gmra.mrb[0].mxu0 %v6145
      %v6348 = vpop.f32.mrb[0].mxu0
      %v6349 = vadd.f32 0.0, %v6348
      %v6350 = vpop.f32.mrb[0].mxu0
      %6351 = vmatprep.mubr.f32.mxu0 0.0
      %6352 = vmatmul.mubr.f32.gmra.mrb[0].mxu0 %v6148
      %v6353 = vpop.f32.mrb[0].mxu0
      %v6354 = vadd.f32 0.0, %v6353
      %v6355 = vpop.f32.mrb[0].mxu0
      %6356 = vmatprep.mubr.f32.mxu0 0.0
      %6357 = vmatmul.mubr.f32.gmra.mrb[0].mxu0 %v6151
      %v6358 = vpop.f32.mrb[0].mxu0
      %v6359 = vadd.f32 0.0, %v6358
      %v6360 = vpop.f32.mrb[0].mxu0
      %6361 = vmatprep.mubr.f32.mxu0 0.0
      %6362 = vmatmul.mubr.f32.gmra.mrb[0].mxu0 %v6154
      %v6363 = vpop.f32.mrb[0].mxu0
      %v6364 = vadd.f32 0.0, %v6363
      %v6365 = vpop.f32.mrb[0].mxu0
      %6366 = vmatprep.mubr.f32.mxu0 0.0
      %6367 = vmatmul.mubr.f32.gmra.mrb[0].mxu0 %v6157
      %v6368 = vpop.f32.mrb[0].mxu0
      %v6369 = vadd.f32 0.0, %v6368
      %v6370 = vpop.f32.mrb[0].mxu0
      %6371 = vmatprep.mubr.f32.mxu0 0.0
      %6372 = vmatmul.mubr.f32.gmra.mrb[0].mxu0 %v6160
      %v6373 = vpop.f32.mrb[0].mxu0
      %v6374 = vadd.f32 0.0, %v6373
      %v6375 = vpop.f32.mrb[0].mxu0
      %6376 = vmatprep.mubr.f32.mxu0 0.0
      %6377 = vmatmul.mubr.f32.gmra.mrb[0].mxu0 %v6163
      %v6378 = vpop.f32.mrb[0].mxu0
      %v6379 = vadd.f32 0.0, %v6378
      %v6380 = vpop.f32.mrb[0].mxu0
      %6381 = vmatprep.mubr.f32.mxu0 0.0
      %6382 = vmatmul.mubr.f32.gmra.mrb[0].mxu0 %v6166
      %v6383 = vpop.f32.mrb[0].mxu0
      %v6384 = vadd.f32 0.0, %v6383
      %v6385 = vpop.f32.mrb[0].mxu0
      %6386 = vmatprep.mubr.f32.mxu0 0.0
      %6387 = vmatmul.mubr.f32.gmra.mrb[0].mxu0 %v6169
      %v6388 = vpop.f32.mrb[0].mxu0
      %v6389 = vadd.f32 0.0, %v6388
      %v6390 = vpop.f32.mrb[0].mxu0
      %6391 = vmatprep.mubr.f32.mxu0 0.0
      %6392 = vmatmul.mubr.f32.gmra.mrb[0].mxu0 %v6172
      %v6393 = vpop.f32.mrb[0].mxu0
      %v6394 = vadd.f32 0.0, %v6393
      %v6395 = vpop.f32.mrb[0].mxu0
      %6396 = vmatprep.mubr.f32.mxu0 0.0
      %6397 = vmatmul.mubr.f32.gmra.mrb[0].mxu0 %v6175
      %v6398 = vpop.f32.mrb[0].mxu0
      %v6399 = vadd.f32 0.0, %v6398
      %v6400 = vpop.f32.mrb[0].mxu0
      %6401 = vdwg.mxu0
      %v6402 = vadd.f32 %v6015, %v6244
      %v6403 = vadd.f32 %v6016, %v6249
      %v6404 = vadd.f32 %v6017, %v6254
      %v6405 = vadd.f32 %v6018, %v6259
      %v6406 = vadd.f32 %v6019, %v6264
      %v6407 = vadd.f32 %v6020, %v6269
      %v6408 = vadd.f32 %v6021, %v6274
      %v6409 = vadd.f32 %v6022, %v6279
      %v6410 = vadd.f32 %v6023, %v6284
      %v6411 = vadd.f32 %v6024, %v6289
      %v6412 = vadd.f32 %v6025, %v6294
      %v6413 = vadd.f32 %v6026, %v6299
      %v6414 = vadd.f32 %v6027, %v6304
      %v6415 = vadd.f32 %v6028, %v6309
      %v6416 = vadd.f32 %v6029, %v6314
      %v6417 = vadd.f32 %v6030, %v6319
      %v6418 = vadd.f32 %v6031, %v6324
      %v6419 = vadd.f32 %v6032, %v6329
      %v6420 = vadd.f32 %v6033, %v6334
      %v6421 = vadd.f32 %v6034, %v6339
      %v6422 = vadd.f32 %v6035, %v6344
      %v6423 = vadd.f32 %v6036, %v6349
      %v6424 = vadd.f32 %v6037, %v6354
      %v6425 = vadd.f32 %v6038, %v6359
      %v6426 = vadd.f32 %v6039, %v6364
      %v6427 = vadd.f32 %v6040, %v6369
      %v6428 = vadd.f32 %v6041, %v6374
      %v6429 = vadd.f32 %v6042, %v6379
      %v6430 = vadd.f32 %v6043, %v6384
      %v6431 = vadd.f32 %v6044, %v6389
      %v6432 = vadd.f32 %v6045, %v6394
      %v6433 = vadd.f32 %v6046, %v6399
      %v6434 = vld [vmem:[%s917 + $0x1] sm:$0xff]
      %v6435 = vld [vmem:[%s917 + $0x9] sm:$0xff]
      %v6436 = vld [vmem:[%s917 + $0x19] sm:$0xff]
      %v6437 = vld [vmem:[%s917 + $0x21] sm:$0xff]
      %v6438 = vld [vmem:[%s917 + $0x31] sm:$0xff]
      %v6439 = vld [vmem:[%s917 + $0x39] sm:$0xff]
      %v6440 = vld [vmem:[%s917 + $0x49] sm:$0xff]
      %v6441 = vld [vmem:[%s917 + $0x51] sm:$0xff]
      %v6442 = vld [vmem:[%s917 + $0x61] sm:$0xff]
      %v6443 = vld [vmem:[%s917 + $0x69] sm:$0xff]
      %v6444 = vld [vmem:[%s917 + $0x79] sm:$0xff]
      %v6445 = vld [vmem:[%s917 + $0x81] sm:$0xff]
      %v6446 = vld [vmem:[%s917 + $0x91] sm:$0xff]
      %v6447 = vld [vmem:[%s917 + $0x99] sm:$0xff]
      %v6448 = vld [vmem:[%s917 + $0xa9] sm:$0xff]
      %v6449 = vld [vmem:[%s917 + $0xb1] sm:$0xff]
      %v6450 = vld [vmem:[%s917 + $0xc1] sm:$0xff]
      %v6451 = vld [vmem:[%s917 + $0xc9] sm:$0xff]
      %v6452 = vld [vmem:[%s917 + $0xd9] sm:$0xff]
      %v6453 = vld [vmem:[%s917 + $0xe1] sm:$0xff]
      %v6454 = vld [vmem:[%s917 + $0xf1] sm:$0xff]
      %v6455 = vld [vmem:[%s917 + $0xf9] sm:$0xff]
      %v6456 = vld [vmem:[%s917 + $0x109] sm:$0xff]
      %v6457 = vld [vmem:[%s917 + $0x111] sm:$0xff]
      %v6458 = vld [vmem:[%s917 + $0x121] sm:$0xff]
      %v6459 = vld [vmem:[%s917 + $0x129] sm:$0xff]
      %v6460 = vld [vmem:[%s917 + $0x139] sm:$0xff]
      %v6461 = vld [vmem:[%s917 + $0x141] sm:$0xff]
      %v6462 = vld [vmem:[%s917 + $0x151] sm:$0xff]
      %v6463 = vld [vmem:[%s917 + $0x159] sm:$0xff]
      %v6464 = vld [vmem:[%s917 + $0x169] sm:$0xff]
      %v6465 = vld [vmem:[%s917 + $0x171] sm:$0xff]
      %s6466 = scalar_lea.vmem %s6, 32
      %v6467 = vld [vmem:[%s6466] sm:$0xff]
      %v6469 = vsel %vm279, %v6434, 0
      %v6472 = vsel %vm279, %v6435, 0
      %v6475 = vsel %vm279, %v6436, 0
      %v6478 = vsel %vm279, %v6437, 0
      %v6481 = vsel %vm279, %v6438, 0
      %v6484 = vsel %vm279, %v6439, 0
      %v6487 = vsel %vm279, %v6440, 0
      %v6490 = vsel %vm279, %v6441, 0
      %v6493 = vsel %vm279, %v6442, 0
      %v6496 = vsel %vm279, %v6443, 0
      %v6499 = vsel %vm279, %v6444, 0
      %v6502 = vsel %vm279, %v6445, 0
      %v6505 = vsel %vm279, %v6446, 0
      %v6508 = vsel %vm279, %v6447, 0
      %v6511 = vsel %vm279, %v6448, 0
      %v6514 = vsel %vm279, %v6449, 0
      %v6517 = vsel %vm279, %v6450, 0
      %v6520 = vsel %vm279, %v6451, 0
      %v6523 = vsel %vm279, %v6452, 0
      %v6526 = vsel %vm279, %v6453, 0
      %v6529 = vsel %vm279, %v6454, 0
      %v6532 = vsel %vm279, %v6455, 0
      %v6535 = vsel %vm279, %v6456, 0
      %v6538 = vsel %vm279, %v6457, 0
      %v6541 = vsel %vm279, %v6458, 0
      %v6544 = vsel %vm279, %v6459, 0
      %v6547 = vsel %vm279, %v6460, 0
      %v6550 = vsel %vm279, %v6461, 0
      %v6553 = vsel %vm279, %v6462, 0
      %v6556 = vsel %vm279, %v6463, 0
      %v6559 = vsel %vm279, %v6464, 0
      %v6562 = vsel %vm279, %v6465, 0
      %6564 = vmatprep.subr.mxu0 0.0
      %6565 = vmatpush1.msra.mxu0 %v6467
      %6566 = vmatprep.subr.mxu0 0.0
      %6567 = vmatpush1.msra.mxu0 0.0
      %6568 = vmatprep.subr.mxu0 0.0
      %6569 = vmatpush1.msra.mxu0 0.0
      %6570 = vmatprep.subr.mxu0 0.0
      %6571 = vmatpush1.msra.mxu0 0.0
      %6572 = vmatprep.subr.mxu0 0.0
      %6573 = vmatpush1.msra.mxu0 0.0
      %6574 = vmatprep.subr.mxu0 0.0
      %6575 = vmatpush1.msra.mxu0 0.0
      %6576 = vmatprep.subr.mxu0 0.0
      %6577 = vmatpush1.msra.mxu0 0.0
      %6578 = vmatprep.subr.mxu0 0.0
      %6579 = vmatpush1.msra.mxu0 0.0
      %6580 = vmatprep.subr.mxu0 0.0
      %6581 = vmatpush1.msra.mxu0 0.0
      %6582 = vmatprep.subr.mxu0 0.0
      %6583 = vmatpush1.msra.mxu0 0.0
      %6584 = vmatprep.subr.mxu0 0.0
      %6585 = vmatpush1.msra.mxu0 0.0
      %6586 = vmatprep.subr.mxu0 0.0
      %6587 = vmatpush1.msra.mxu0 0.0
      %6588 = vmatprep.subr.mxu0 0.0
      %6589 = vmatpush1.msra.mxu0 0.0
      %6590 = vmatprep.subr.mxu0 0.0
      %6591 = vmatpush1.msra.mxu0 0.0
      %6592 = vmatprep.subr.mxu0 0.0
      %6593 = vmatpush1.msra.mxu0 0.0
      %6594 = vmatprep.subr.mxu0 0.0
      %6595 = vmatpush1.msra.mxu0 0.0
      %6596 = vmatprep.subr.mxu0 0.0
      %6597 = vmatpush1.msra.mxu0 0.0
      %6598 = vmatprep.subr.mxu0 0.0
      %6599 = vmatpush1.msra.mxu0 0.0
      %6600 = vmatprep.subr.mxu0 0.0
      %6601 = vmatpush1.msra.mxu0 0.0
      %6602 = vmatprep.subr.mxu0 0.0
      %6603 = vmatpush1.msra.mxu0 0.0
      %6604 = vmatprep.subr.mxu0 0.0
      %6605 = vmatpush1.msra.mxu0 0.0
      %6606 = vmatprep.subr.mxu0 0.0
      %6607 = vmatpush1.msra.mxu0 0.0
      %6608 = vmatprep.subr.mxu0 0.0
      %6609 = vmatpush1.msra.mxu0 0.0
      %6610 = vmatprep.subr.mxu0 0.0
      %6611 = vmatpush1.msra.mxu0 0.0
      %6612 = vmatprep.subr.mxu0 0.0
      %6613 = vmatpush1.msra.mxu0 0.0
      %6614 = vmatprep.subr.mxu0 0.0
      %6615 = vmatpush1.msra.mxu0 0.0
      %6616 = vmatprep.subr.mxu0 0.0
      %6617 = vmatpush1.msra.mxu0 0.0
      %6618 = vmatprep.subr.mxu0 0.0
      %6619 = vmatpush1.msra.mxu0 0.0
      %6620 = vmatprep.subr.mxu0 0.0
      %6621 = vmatpush1.msra.mxu0 0.0
      %6622 = vmatprep.subr.mxu0 0.0
      %6623 = vmatpush1.msra.mxu0 0.0
      %6624 = vmatprep.subr.mxu0 0.0
      %6625 = vmatpush1.msra.mxu0 0.0
      %6626 = vmatprep.subr.mxu0 0.0
      %6627 = vmatpush1.msra.mxu0 0.0
      %6628 = vmatprep.mubr.f32.mxu0 0.0
      %6629 = vmatmul.mubr.f32.gmra.mrb[0].mxu0 %v6469
      %v6630 = vpop.f32.mrb[0].mxu0
      %v6631 = vadd.f32 0.0, %v6630
      %v6632 = vpop.f32.mrb[0].mxu0
      %6633 = vmatprep.mubr.f32.mxu0 0.0
      %6634 = vmatmul.mubr.f32.gmra.mrb[0].mxu0 %v6472
      %v6635 = vpop.f32.mrb[0].mxu0
      %v6636 = vadd.f32 0.0, %v6635
      %v6637 = vpop.f32.mrb[0].mxu0
      %6638 = vmatprep.mubr.f32.mxu0 0.0
      %6639 = vmatmul.mubr.f32.gmra.mrb[0].mxu0 %v6475
      %v6640 = vpop.f32.mrb[0].mxu0
      %v6641 = vadd.f32 0.0, %v6640
      %v6642 = vpop.f32.mrb[0].mxu0
      %6643 = vmatprep.mubr.f32.mxu0 0.0
      %6644 = vmatmul.mubr.f32.gmra.mrb[0].mxu0 %v6478
      %v6645 = vpop.f32.mrb[0].mxu0
      %v6646 = vadd.f32 0.0, %v6645
      %v6647 = vpop.f32.mrb[0].mxu0
      %6648 = vmatprep.mubr.f32.mxu0 0.0
      %6649 = vmatmul.mubr.f32.gmra.mrb[0].mxu0 %v6481
      %v6650 = vpop.f32.mrb[0].mxu0
      %v6651 = vadd.f32 0.0, %v6650
      %v6652 = vpop.f32.mrb[0].mxu0
      %6653 = vmatprep.mubr.f32.mxu0 0.0
      %6654 = vmatmul.mubr.f32.gmra.mrb[0].mxu0 %v6484
      %v6655 = vpop.f32.mrb[0].mxu0
      %v6656 = vadd.f32 0.0, %v6655
      %v6657 = vpop.f32.mrb[0].mxu0
      %6658 = vmatprep.mubr.f32.mxu0 0.0
      %6659 = vmatmul.mubr.f32.gmra.mrb[0].mxu0 %v6487
      %v6660 = vpop.f32.mrb[0].mxu0
      %v6661 = vadd.f32 0.0, %v6660
      %v6662 = vpop.f32.mrb[0].mxu0
      %6663 = vmatprep.mubr.f32.mxu0 0.0
      %6664 = vmatmul.mubr.f32.gmra.mrb[0].mxu0 %v6490
      %v6665 = vpop.f32.mrb[0].mxu0
      %v6666 = vadd.f32 0.0, %v6665
      %v6667 = vpop.f32.mrb[0].mxu0
      %6668 = vmatprep.mubr.f32.mxu0 0.0
      %6669 = vmatmul.mubr.f32.gmra.mrb[0].mxu0 %v6493
      %v6670 = vpop.f32.mrb[0].mxu0
      %v6671 = vadd.f32 0.0, %v6670
      %v6672 = vpop.f32.mrb[0].mxu0
      %6673 = vmatprep.mubr.f32.mxu0 0.0
      %6674 = vmatmul.mubr.f32.gmra.mrb[0].mxu0 %v6496
      %v6675 = vpop.f32.mrb[0].mxu0
      %v6676 = vadd.f32 0.0, %v6675
      %v6677 = vpop.f32.mrb[0].mxu0
      %6678 = vmatprep.mubr.f32.mxu0 0.0
      %6679 = vmatmul.mubr.f32.gmra.mrb[0].mxu0 %v6499
      %v6680 = vpop.f32.mrb[0].mxu0
      %v6681 = vadd.f32 0.0, %v6680
      %v6682 = vpop.f32.mrb[0].mxu0
      %6683 = vmatprep.mubr.f32.mxu0 0.0
      %6684 = vmatmul.mubr.f32.gmra.mrb[0].mxu0 %v6502
      %v6685 = vpop.f32.mrb[0].mxu0
      %v6686 = vadd.f32 0.0, %v6685
      %v6687 = vpop.f32.mrb[0].mxu0
      %6688 = vmatprep.mubr.f32.mxu0 0.0
      %6689 = vmatmul.mubr.f32.gmra.mrb[0].mxu0 %v6505
      %v6690 = vpop.f32.mrb[0].mxu0
      %v6691 = vadd.f32 0.0, %v6690
      %v6692 = vpop.f32.mrb[0].mxu0
      %6693 = vmatprep.mubr.f32.mxu0 0.0
      %6694 = vmatmul.mubr.f32.gmra.mrb[0].mxu0 %v6508
      %v6695 = vpop.f32.mrb[0].mxu0
      %v6696 = vadd.f32 0.0, %v6695
      %v6697 = vpop.f32.mrb[0].mxu0
      %6698 = vmatprep.mubr.f32.mxu0 0.0
      %6699 = vmatmul.mubr.f32.gmra.mrb[0].mxu0 %v6511
      %v6700 = vpop.f32.mrb[0].mxu0
      %v6701 = vadd.f32 0.0, %v6700
      %v6702 = vpop.f32.mrb[0].mxu0
      %6703 = vmatprep.mubr.f32.mxu0 0.0
      %6704 = vmatmul.mubr.f32.gmra.mrb[0].mxu0 %v6514
      %v6705 = vpop.f32.mrb[0].mxu0
      %v6706 = vadd.f32 0.0, %v6705
      %v6707 = vpop.f32.mrb[0].mxu0
      %6708 = vmatprep.mubr.f32.mxu0 0.0
      %6709 = vmatmul.mubr.f32.gmra.mrb[0].mxu0 %v6517
      %v6710 = vpop.f32.mrb[0].mxu0
      %v6711 = vadd.f32 0.0, %v6710
      %v6712 = vpop.f32.mrb[0].mxu0
      %6713 = vmatprep.mubr.f32.mxu0 0.0
      %6714 = vmatmul.mubr.f32.gmra.mrb[0].mxu0 %v6520
      %v6715 = vpop.f32.mrb[0].mxu0
      %v6716 = vadd.f32 0.0, %v6715
      %v6717 = vpop.f32.mrb[0].mxu0
      %6718 = vmatprep.mubr.f32.mxu0 0.0
      %6719 = vmatmul.mubr.f32.gmra.mrb[0].mxu0 %v6523
      %v6720 = vpop.f32.mrb[0].mxu0
      %v6721 = vadd.f32 0.0, %v6720
      %v6722 = vpop.f32.mrb[0].mxu0
      %6723 = vmatprep.mubr.f32.mxu0 0.0
      %6724 = vmatmul.mubr.f32.gmra.mrb[0].mxu0 %v6526
      %v6725 = vpop.f32.mrb[0].mxu0
      %v6726 = vadd.f32 0.0, %v6725
      %v6727 = vpop.f32.mrb[0].mxu0
      %6728 = vmatprep.mubr.f32.mxu0 0.0
      %6729 = vmatmul.mubr.f32.gmra.mrb[0].mxu0 %v6529
      %v6730 = vpop.f32.mrb[0].mxu0
      %v6731 = vadd.f32 0.0, %v6730
      %v6732 = vpop.f32.mrb[0].mxu0
      %6733 = vmatprep.mubr.f32.mxu0 0.0
      %6734 = vmatmul.mubr.f32.gmra.mrb[0].mxu0 %v6532
      %v6735 = vpop.f32.mrb[0].mxu0
      %v6736 = vadd.f32 0.0, %v6735
      %v6737 = vpop.f32.mrb[0].mxu0
      %6738 = vmatprep.mubr.f32.mxu0 0.0
      %6739 = vmatmul.mubr.f32.gmra.mrb[0].mxu0 %v6535
      %v6740 = vpop.f32.mrb[0].mxu0
      %v6741 = vadd.f32 0.0, %v6740
      %v6742 = vpop.f32.mrb[0].mxu0
      %6743 = vmatprep.mubr.f32.mxu0 0.0
      %6744 = vmatmul.mubr.f32.gmra.mrb[0].mxu0 %v6538
      %v6745 = vpop.f32.mrb[0].mxu0
      %v6746 = vadd.f32 0.0, %v6745
      %v6747 = vpop.f32.mrb[0].mxu0
      %6748 = vmatprep.mubr.f32.mxu0 0.0
      %6749 = vmatmul.mubr.f32.gmra.mrb[0].mxu0 %v6541
      %v6750 = vpop.f32.mrb[0].mxu0
      %v6751 = vadd.f32 0.0, %v6750
      %v6752 = vpop.f32.mrb[0].mxu0
      %6753 = vmatprep.mubr.f32.mxu0 0.0
      %6754 = vmatmul.mubr.f32.gmra.mrb[0].mxu0 %v6544
      %v6755 = vpop.f32.mrb[0].mxu0
      %v6756 = vadd.f32 0.0, %v6755
      %v6757 = vpop.f32.mrb[0].mxu0
      %6758 = vmatprep.mubr.f32.mxu0 0.0
      %6759 = vmatmul.mubr.f32.gmra.mrb[0].mxu0 %v6547
      %v6760 = vpop.f32.mrb[0].mxu0
      %v6761 = vadd.f32 0.0, %v6760
      %v6762 = vpop.f32.mrb[0].mxu0
      %6763 = vmatprep.mubr.f32.mxu0 0.0
      %6764 = vmatmul.mubr.f32.gmra.mrb[0].mxu0 %v6550
      %v6765 = vpop.f32.mrb[0].mxu0
      %v6766 = vadd.f32 0.0, %v6765
      %v6767 = vpop.f32.mrb[0].mxu0
      %6768 = vmatprep.mubr.f32.mxu0 0.0
      %6769 = vmatmul.mubr.f32.gmra.mrb[0].mxu0 %v6553
      %v6770 = vpop.f32.mrb[0].mxu0
      %v6771 = vadd.f32 0.0, %v6770
      %v6772 = vpop.f32.mrb[0].mxu0
      %6773 = vmatprep.mubr.f32.mxu0 0.0
      %6774 = vmatmul.mubr.f32.gmra.mrb[0].mxu0 %v6556
      %v6775 = vpop.f32.mrb[0].mxu0
      %v6776 = vadd.f32 0.0, %v6775
      %v6777 = vpop.f32.mrb[0].mxu0
      %6778 = vmatprep.mubr.f32.mxu0 0.0
      %6779 = vmatmul.mubr.f32.gmra.mrb[0].mxu0 %v6559
      %v6780 = vpop.f32.mrb[0].mxu0
      %v6781 = vadd.f32 0.0, %v6780
      %v6782 = vpop.f32.mrb[0].mxu0
      %6783 = vmatprep.mubr.f32.mxu0 0.0
      %6784 = vmatmul.mubr.f32.gmra.mrb[0].mxu0 %v6562
      %v6785 = vpop.f32.mrb[0].mxu0
      %v6786 = vadd.f32 0.0, %v6785
      %v6787 = vpop.f32.mrb[0].mxu0
      %6788 = vdwg.mxu0
      %v6789 = vadd.f32 %v6402, %v6631
      %v6790 = vadd.f32 %v6403, %v6636
      %v6791 = vadd.f32 %v6404, %v6641
      %v6792 = vadd.f32 %v6405, %v6646
      %v6793 = vadd.f32 %v6406, %v6651
      %v6794 = vadd.f32 %v6407, %v6656
      %v6795 = vadd.f32 %v6408, %v6661
      %v6796 = vadd.f32 %v6409, %v6666
      %v6797 = vadd.f32 %v6410, %v6671
      %v6798 = vadd.f32 %v6411, %v6676
      %v6799 = vadd.f32 %v6412, %v6681
      %v6800 = vadd.f32 %v6413, %v6686
      %v6801 = vadd.f32 %v6414, %v6691
      %v6802 = vadd.f32 %v6415, %v6696
      %v6803 = vadd.f32 %v6416, %v6701
      %v6804 = vadd.f32 %v6417, %v6706
      %v6805 = vadd.f32 %v6418, %v6711
      %v6806 = vadd.f32 %v6419, %v6716
      %v6807 = vadd.f32 %v6420, %v6721
      %v6808 = vadd.f32 %v6421, %v6726
      %v6809 = vadd.f32 %v6422, %v6731
      %v6810 = vadd.f32 %v6423, %v6736
      %v6811 = vadd.f32 %v6424, %v6741
      %v6812 = vadd.f32 %v6425, %v6746
      %v6813 = vadd.f32 %v6426, %v6751
      %v6814 = vadd.f32 %v6427, %v6756
      %v6815 = vadd.f32 %v6428, %v6761
      %v6816 = vadd.f32 %v6429, %v6766
      %v6817 = vadd.f32 %v6430, %v6771
      %v6818 = vadd.f32 %v6431, %v6776
      %v6819 = vadd.f32 %v6432, %v6781
      %v6820 = vadd.f32 %v6433, %v6786
      %v6821 = vld [vmem:[%s917 + $0x2] sm:$0xff]
      %v6822 = vld [vmem:[%s917 + $0xa] sm:$0xff]
      %v6823 = vld [vmem:[%s917 + $0x1a] sm:$0xff]
      %v6824 = vld [vmem:[%s917 + $0x22] sm:$0xff]
      %v6825 = vld [vmem:[%s917 + $0x32] sm:$0xff]
      %v6826 = vld [vmem:[%s917 + $0x3a] sm:$0xff]
      %v6827 = vld [vmem:[%s917 + $0x4a] sm:$0xff]
      %v6828 = vld [vmem:[%s917 + $0x52] sm:$0xff]
      %v6829 = vld [vmem:[%s917 + $0x62] sm:$0xff]
      %v6830 = vld [vmem:[%s917 + $0x6a] sm:$0xff]
      %v6831 = vld [vmem:[%s917 + $0x7a] sm:$0xff]
      %v6832 = vld [vmem:[%s917 + $0x82] sm:$0xff]
      %v6833 = vld [vmem:[%s917 + $0x92] sm:$0xff]
      %v6834 = vld [vmem:[%s917 + $0x9a] sm:$0xff]
      %v6835 = vld [vmem:[%s917 + $0xaa] sm:$0xff]
      %v6836 = vld [vmem:[%s917 + $0xb2] sm:$0xff]
      %v6837 = vld [vmem:[%s917 + $0xc2] sm:$0xff]
      %v6838 = vld [vmem:[%s917 + $0xca] sm:$0xff]
      %v6839 = vld [vmem:[%s917 + $0xda] sm:$0xff]
      %v6840 = vld [vmem:[%s917 + $0xe2] sm:$0xff]
      %v6841 = vld [vmem:[%s917 + $0xf2] sm:$0xff]
      %v6842 = vld [vmem:[%s917 + $0xfa] sm:$0xff]
      %v6843 = vld [vmem:[%s917 + $0x10a] sm:$0xff]
      %v6844 = vld [vmem:[%s917 + $0x112] sm:$0xff]
      %v6845 = vld [vmem:[%s917 + $0x122] sm:$0xff]
      %v6846 = vld [vmem:[%s917 + $0x12a] sm:$0xff]
      %v6847 = vld [vmem:[%s917 + $0x13a] sm:$0xff]
      %v6848 = vld [vmem:[%s917 + $0x142] sm:$0xff]
      %v6849 = vld [vmem:[%s917 + $0x152] sm:$0xff]
      %v6850 = vld [vmem:[%s917 + $0x15a] sm:$0xff]
      %v6851 = vld [vmem:[%s917 + $0x16a] sm:$0xff]
      %v6852 = vld [vmem:[%s917 + $0x172] sm:$0xff]
      %s6853 = scalar_lea.vmem %s6, 40
      %v6854 = vld [vmem:[%s6853] sm:$0xff]
      %v6856 = vsel %vm279, %v6821, 0
      %v6859 = vsel %vm279, %v6822, 0
      %v6862 = vsel %vm279, %v6823, 0
      %v6865 = vsel %vm279, %v6824, 0
      %v6868 = vsel %vm279, %v6825, 0
      %v6871 = vsel %vm279, %v6826, 0
      %v6874 = vsel %vm279, %v6827, 0
      %v6877 = vsel %vm279, %v6828, 0
      %v6880 = vsel %vm279, %v6829, 0
      %v6883 = vsel %vm279, %v6830, 0
      %v6886 = vsel %vm279, %v6831, 0
      %v6889 = vsel %vm279, %v6832, 0
      %v6892 = vsel %vm279, %v6833, 0
      %v6895 = vsel %vm279, %v6834, 0
      %v6898 = vsel %vm279, %v6835, 0
      %v6901 = vsel %vm279, %v6836, 0
      %v6904 = vsel %vm279, %v6837, 0
      %v6907 = vsel %vm279, %v6838, 0
      %v6910 = vsel %vm279, %v6839, 0
      %v6913 = vsel %vm279, %v6840, 0
      %v6916 = vsel %vm279, %v6841, 0
      %v6919 = vsel %vm279, %v6842, 0
      %v6922 = vsel %vm279, %v6843, 0
      %v6925 = vsel %vm279, %v6844, 0
      %v6928 = vsel %vm279, %v6845, 0
      %v6931 = vsel %vm279, %v6846, 0
      %v6934 = vsel %vm279, %v6847, 0
      %v6937 = vsel %vm279, %v6848, 0
      %v6940 = vsel %vm279, %v6849, 0
      %v6943 = vsel %vm279, %v6850, 0
      %v6946 = vsel %vm279, %v6851, 0
      %v6949 = vsel %vm279, %v6852, 0
      %6951 = vmatprep.subr.mxu0 0.0
      %6952 = vmatpush1.msra.mxu0 %v6854
      %6953 = vmatprep.subr.mxu0 0.0
      %6954 = vmatpush1.msra.mxu0 0.0
      %6955 = vmatprep.subr.mxu0 0.0
      %6956 = vmatpush1.msra.mxu0 0.0
      %6957 = vmatprep.subr.mxu0 0.0
      %6958 = vmatpush1.msra.mxu0 0.0
      %6959 = vmatprep.subr.mxu0 0.0
      %6960 = vmatpush1.msra.mxu0 0.0
      %6961 = vmatprep.subr.mxu0 0.0
      %6962 = vmatpush1.msra.mxu0 0.0
      %6963 = vmatprep.subr.mxu0 0.0
      %6964 = vmatpush1.msra.mxu0 0.0
      %6965 = vmatprep.subr.mxu0 0.0
      %6966 = vmatpush1.msra.mxu0 0.0
      %6967 = vmatprep.subr.mxu0 0.0
      %6968 = vmatpush1.msra.mxu0 0.0
      %6969 = vmatprep.subr.mxu0 0.0
      %6970 = vmatpush1.msra.mxu0 0.0
      %6971 = vmatprep.subr.mxu0 0.0
      %6972 = vmatpush1.msra.mxu0 0.0
      %6973 = vmatprep.subr.mxu0 0.0
      %6974 = vmatpush1.msra.mxu0 0.0
      %6975 = vmatprep.subr.mxu0 0.0
      %6976 = vmatpush1.msra.mxu0 0.0
      %6977 = vmatprep.subr.mxu0 0.0
      %6978 = vmatpush1.msra.mxu0 0.0
      %6979 = vmatprep.subr.mxu0 0.0
      %6980 = vmatpush1.msra.mxu0 0.0
      %6981 = vmatprep.subr.mxu0 0.0
      %6982 = vmatpush1.msra.mxu0 0.0
      %6983 = vmatprep.subr.mxu0 0.0
      %6984 = vmatpush1.msra.mxu0 0.0
      %6985 = vmatprep.subr.mxu0 0.0
      %6986 = vmatpush1.msra.mxu0 0.0
      %6987 = vmatprep.subr.mxu0 0.0
      %6988 = vmatpush1.msra.mxu0 0.0
      %6989 = vmatprep.subr.mxu0 0.0
      %6990 = vmatpush1.msra.mxu0 0.0
      %6991 = vmatprep.subr.mxu0 0.0
      %6992 = vmatpush1.msra.mxu0 0.0
      %6993 = vmatprep.subr.mxu0 0.0
      %6994 = vmatpush1.msra.mxu0 0.0
      %6995 = vmatprep.subr.mxu0 0.0
      %6996 = vmatpush1.msra.mxu0 0.0
      %6997 = vmatprep.subr.mxu0 0.0
      %6998 = vmatpush1.msra.mxu0 0.0
      %6999 = vmatprep.subr.mxu0 0.0
      %7000 = vmatpush1.msra.mxu0 0.0
      %7001 = vmatprep.subr.mxu0 0.0
      %7002 = vmatpush1.msra.mxu0 0.0
      %7003 = vmatprep.subr.mxu0 0.0
      %7004 = vmatpush1.msra.mxu0 0.0
      %7005 = vmatprep.subr.mxu0 0.0
      %7006 = vmatpush1.msra.mxu0 0.0
      %7007 = vmatprep.subr.mxu0 0.0
      %7008 = vmatpush1.msra.mxu0 0.0
      %7009 = vmatprep.subr.mxu0 0.0
      %7010 = vmatpush1.msra.mxu0 0.0
      %7011 = vmatprep.subr.mxu0 0.0
      %7012 = vmatpush1.msra.mxu0 0.0
      %7013 = vmatprep.subr.mxu0 0.0
      %7014 = vmatpush1.msra.mxu0 0.0
      %7015 = vmatprep.mubr.f32.mxu0 0.0
      %7016 = vmatmul.mubr.f32.gmra.mrb[0].mxu0 %v6856
      %v7017 = vpop.f32.mrb[0].mxu0
      %v7018 = vadd.f32 0.0, %v7017
      %v7019 = vpop.f32.mrb[0].mxu0
      %7020 = vmatprep.mubr.f32.mxu0 0.0
      %7021 = vmatmul.mubr.f32.gmra.mrb[0].mxu0 %v6859
      %v7022 = vpop.f32.mrb[0].mxu0
      %v7023 = vadd.f32 0.0, %v7022
      %v7024 = vpop.f32.mrb[0].mxu0
      %7025 = vmatprep.mubr.f32.mxu0 0.0
      %7026 = vmatmul.mubr.f32.gmra.mrb[0].mxu0 %v6862
      %v7027 = vpop.f32.mrb[0].mxu0
      %v7028 = vadd.f32 0.0, %v7027
      %v7029 = vpop.f32.mrb[0].mxu0
      %7030 = vmatprep.mubr.f32.mxu0 0.0
      %7031 = vmatmul.mubr.f32.gmra.mrb[0].mxu0 %v6865
      %v7032 = vpop.f32.mrb[0].mxu0
      %v7033 = vadd.f32 0.0, %v7032
      %v7034 = vpop.f32.mrb[0].mxu0
      %7035 = vmatprep.mubr.f32.mxu0 0.0
      %7036 = vmatmul.mubr.f32.gmra.mrb[0].mxu0 %v6868
      %v7037 = vpop.f32.mrb[0].mxu0
      %v7038 = vadd.f32 0.0, %v7037
      %v7039 = vpop.f32.mrb[0].mxu0
      %7040 = vmatprep.mubr.f32.mxu0 0.0
      %7041 = vmatmul.mubr.f32.gmra.mrb[0].mxu0 %v6871
      %v7042 = vpop.f32.mrb[0].mxu0
      %v7043 = vadd.f32 0.0, %v7042
      %v7044 = vpop.f32.mrb[0].mxu0
      %7045 = vmatprep.mubr.f32.mxu0 0.0
      %7046 = vmatmul.mubr.f32.gmra.mrb[0].mxu0 %v6874
      %v7047 = vpop.f32.mrb[0].mxu0
      %v7048 = vadd.f32 0.0, %v7047
      %v7049 = vpop.f32.mrb[0].mxu0
      %7050 = vmatprep.mubr.f32.mxu0 0.0
      %7051 = vmatmul.mubr.f32.gmra.mrb[0].mxu0 %v6877
      %v7052 = vpop.f32.mrb[0].mxu0
      %v7053 = vadd.f32 0.0, %v7052
      %v7054 = vpop.f32.mrb[0].mxu0
      %7055 = vmatprep.mubr.f32.mxu0 0.0
      %7056 = vmatmul.mubr.f32.gmra.mrb[0].mxu0 %v6880
      %v7057 = vpop.f32.mrb[0].mxu0
      %v7058 = vadd.f32 0.0, %v7057
      %v7059 = vpop.f32.mrb[0].mxu0
      %7060 = vmatprep.mubr.f32.mxu0 0.0
      %7061 = vmatmul.mubr.f32.gmra.mrb[0].mxu0 %v6883
      %v7062 = vpop.f32.mrb[0].mxu0
      %v7063 = vadd.f32 0.0, %v7062
      %v7064 = vpop.f32.mrb[0].mxu0
      %7065 = vmatprep.mubr.f32.mxu0 0.0
      %7066 = vmatmul.mubr.f32.gmra.mrb[0].mxu0 %v6886
      %v7067 = vpop.f32.mrb[0].mxu0
      %v7068 = vadd.f32 0.0, %v7067
      %v7069 = vpop.f32.mrb[0].mxu0
      %7070 = vmatprep.mubr.f32.mxu0 0.0
      %7071 = vmatmul.mubr.f32.gmra.mrb[0].mxu0 %v6889
      %v7072 = vpop.f32.mrb[0].mxu0
      %v7073 = vadd.f32 0.0, %v7072
      %v7074 = vpop.f32.mrb[0].mxu0
      %7075 = vmatprep.mubr.f32.mxu0 0.0
      %7076 = vmatmul.mubr.f32.gmra.mrb[0].mxu0 %v6892
      %v7077 = vpop.f32.mrb[0].mxu0
      %v7078 = vadd.f32 0.0, %v7077
      %v7079 = vpop.f32.mrb[0].mxu0
      %7080 = vmatprep.mubr.f32.mxu0 0.0
      %7081 = vmatmul.mubr.f32.gmra.mrb[0].mxu0 %v6895
      %v7082 = vpop.f32.mrb[0].mxu0
      %v7083 = vadd.f32 0.0, %v7082
      %v7084 = vpop.f32.mrb[0].mxu0
      %7085 = vmatprep.mubr.f32.mxu0 0.0
      %7086 = vmatmul.mubr.f32.gmra.mrb[0].mxu0 %v6898
      %v7087 = vpop.f32.mrb[0].mxu0
      %v7088 = vadd.f32 0.0, %v7087
      %v7089 = vpop.f32.mrb[0].mxu0
      %7090 = vmatprep.mubr.f32.mxu0 0.0
      %7091 = vmatmul.mubr.f32.gmra.mrb[0].mxu0 %v6901
      %v7092 = vpop.f32.mrb[0].mxu0
      %v7093 = vadd.f32 0.0, %v7092
      %v7094 = vpop.f32.mrb[0].mxu0
      %7095 = vmatprep.mubr.f32.mxu0 0.0
      %7096 = vmatmul.mubr.f32.gmra.mrb[0].mxu0 %v6904
      %v7097 = vpop.f32.mrb[0].mxu0
      %v7098 = vadd.f32 0.0, %v7097
      %v7099 = vpop.f32.mrb[0].mxu0
      %7100 = vmatprep.mubr.f32.mxu0 0.0
      %7101 = vmatmul.mubr.f32.gmra.mrb[0].mxu0 %v6907
      %v7102 = vpop.f32.mrb[0].mxu0
      %v7103 = vadd.f32 0.0, %v7102
      %v7104 = vpop.f32.mrb[0].mxu0
      %7105 = vmatprep.mubr.f32.mxu0 0.0
      %7106 = vmatmul.mubr.f32.gmra.mrb[0].mxu0 %v6910
      %v7107 = vpop.f32.mrb[0].mxu0
      %v7108 = vadd.f32 0.0, %v7107
      %v7109 = vpop.f32.mrb[0].mxu0
      %7110 = vmatprep.mubr.f32.mxu0 0.0
      %7111 = vmatmul.mubr.f32.gmra.mrb[0].mxu0 %v6913
      %v7112 = vpop.f32.mrb[0].mxu0
      %v7113 = vadd.f32 0.0, %v7112
      %v7114 = vpop.f32.mrb[0].mxu0
      %7115 = vmatprep.mubr.f32.mxu0 0.0
      %7116 = vmatmul.mubr.f32.gmra.mrb[0].mxu0 %v6916
      %v7117 = vpop.f32.mrb[0].mxu0
      %v7118 = vadd.f32 0.0, %v7117
      %v7119 = vpop.f32.mrb[0].mxu0
      %7120 = vmatprep.mubr.f32.mxu0 0.0
      %7121 = vmatmul.mubr.f32.gmra.mrb[0].mxu0 %v6919
      %v7122 = vpop.f32.mrb[0].mxu0
      %v7123 = vadd.f32 0.0, %v7122
      %v7124 = vpop.f32.mrb[0].mxu0
      %7125 = vmatprep.mubr.f32.mxu0 0.0
      %7126 = vmatmul.mubr.f32.gmra.mrb[0].mxu0 %v6922
      %v7127 = vpop.f32.mrb[0].mxu0
      %v7128 = vadd.f32 0.0, %v7127
      %v7129 = vpop.f32.mrb[0].mxu0
      %7130 = vmatprep.mubr.f32.mxu0 0.0
      %7131 = vmatmul.mubr.f32.gmra.mrb[0].mxu0 %v6925
      %v7132 = vpop.f32.mrb[0].mxu0
      %v7133 = vadd.f32 0.0, %v7132
      %v7134 = vpop.f32.mrb[0].mxu0
      %7135 = vmatprep.mubr.f32.mxu0 0.0
      %7136 = vmatmul.mubr.f32.gmra.mrb[0].mxu0 %v6928
      %v7137 = vpop.f32.mrb[0].mxu0
      %v7138 = vadd.f32 0.0, %v7137
      %v7139 = vpop.f32.mrb[0].mxu0
      %7140 = vmatprep.mubr.f32.mxu0 0.0
      %7141 = vmatmul.mubr.f32.gmra.mrb[0].mxu0 %v6931
      %v7142 = vpop.f32.mrb[0].mxu0
      %v7143 = vadd.f32 0.0, %v7142
      %v7144 = vpop.f32.mrb[0].mxu0
      %7145 = vmatprep.mubr.f32.mxu0 0.0
      %7146 = vmatmul.mubr.f32.gmra.mrb[0].mxu0 %v6934
      %v7147 = vpop.f32.mrb[0].mxu0
      %v7148 = vadd.f32 0.0, %v7147
      %v7149 = vpop.f32.mrb[0].mxu0
      %7150 = vmatprep.mubr.f32.mxu0 0.0
      %7151 = vmatmul.mubr.f32.gmra.mrb[0].mxu0 %v6937
      %v7152 = vpop.f32.mrb[0].mxu0
      %v7153 = vadd.f32 0.0, %v7152
      %v7154 = vpop.f32.mrb[0].mxu0
      %7155 = vmatprep.mubr.f32.mxu0 0.0
      %7156 = vmatmul.mubr.f32.gmra.mrb[0].mxu0 %v6940
      %v7157 = vpop.f32.mrb[0].mxu0
      %v7158 = vadd.f32 0.0, %v7157
      %v7159 = vpop.f32.mrb[0].mxu0
      %7160 = vmatprep.mubr.f32.mxu0 0.0
      %7161 = vmatmul.mubr.f32.gmra.mrb[0].mxu0 %v6943
      %v7162 = vpop.f32.mrb[0].mxu0
      %v7163 = vadd.f32 0.0, %v7162
      %v7164 = vpop.f32.mrb[0].mxu0
      %7165 = vmatprep.mubr.f32.mxu0 0.0
      %7166 = vmatmul.mubr.f32.gmra.mrb[0].mxu0 %v6946
      %v7167 = vpop.f32.mrb[0].mxu0
      %v7168 = vadd.f32 0.0, %v7167
      %v7169 = vpop.f32.mrb[0].mxu0
      %7170 = vmatprep.mubr.f32.mxu0 0.0
      %7171 = vmatmul.mubr.f32.gmra.mrb[0].mxu0 %v6949
      %v7172 = vpop.f32.mrb[0].mxu0
      %v7173 = vadd.f32 0.0, %v7172
      %v7174 = vpop.f32.mrb[0].mxu0
      %7175 = vdwg.mxu0
      %v7176 = vadd.f32 %v6789, %v7018
      %v7177 = vadd.f32 %v6790, %v7023
      %v7178 = vadd.f32 %v6791, %v7028
      %v7179 = vadd.f32 %v6792, %v7033
      %v7180 = vadd.f32 %v6793, %v7038
      %v7181 = vadd.f32 %v6794, %v7043
      %v7182 = vadd.f32 %v6795, %v7048
      %v7183 = vadd.f32 %v6796, %v7053
      %v7184 = vadd.f32 %v6797, %v7058
      %v7185 = vadd.f32 %v6798, %v7063
      %v7186 = vadd.f32 %v6799, %v7068
      %v7187 = vadd.f32 %v6800, %v7073
      %v7188 = vadd.f32 %v6801, %v7078
      %v7189 = vadd.f32 %v6802, %v7083
      %v7190 = vadd.f32 %v6803, %v7088
      %v7191 = vadd.f32 %v6804, %v7093
      %v7192 = vadd.f32 %v6805, %v7098
      %v7193 = vadd.f32 %v6806, %v7103
      %v7194 = vadd.f32 %v6807, %v7108
      %v7195 = vadd.f32 %v6808, %v7113
      %v7196 = vadd.f32 %v6809, %v7118
      %v7197 = vadd.f32 %v6810, %v7123
      %v7198 = vadd.f32 %v6811, %v7128
      %v7199 = vadd.f32 %v6812, %v7133
      %v7200 = vadd.f32 %v6813, %v7138
      %v7201 = vadd.f32 %v6814, %v7143
      %v7202 = vadd.f32 %v6815, %v7148
      %v7203 = vadd.f32 %v6816, %v7153
      %v7204 = vadd.f32 %v6817, %v7158
      %v7205 = vadd.f32 %v6818, %v7163
      %v7206 = vadd.f32 %v6819, %v7168
      %v7207 = vadd.f32 %v6820, %v7173
      %v7208 = vld [vmem:[%s3207] sm:$0xff]
      %v7209 = vld [vmem:[%s3207 + $0x8] sm:$0xff]
      %v7210 = vld [vmem:[%s3207 + $0x18] sm:$0xff]
      %v7211 = vld [vmem:[%s3207 + $0x20] sm:$0xff]
      %v7212 = vld [vmem:[%s3207 + $0x30] sm:$0xff]
      %v7213 = vld [vmem:[%s3207 + $0x38] sm:$0xff]
      %v7214 = vld [vmem:[%s3207 + $0x48] sm:$0xff]
      %v7215 = vld [vmem:[%s3207 + $0x50] sm:$0xff]
      %v7216 = vld [vmem:[%s3207 + $0x60] sm:$0xff]
      %v7217 = vld [vmem:[%s3207 + $0x68] sm:$0xff]
      %v7218 = vld [vmem:[%s3207 + $0x78] sm:$0xff]
      %v7219 = vld [vmem:[%s3207 + $0x80] sm:$0xff]
      %v7220 = vld [vmem:[%s3207 + $0x90] sm:$0xff]
      %v7221 = vld [vmem:[%s3207 + $0x98] sm:$0xff]
      %v7222 = vld [vmem:[%s3207 + $0xa8] sm:$0xff]
      %v7223 = vld [vmem:[%s3207 + $0xb0] sm:$0xff]
      %v7224 = vld [vmem:[%s3207 + $0xc0] sm:$0xff]
      %v7225 = vld [vmem:[%s3207 + $0xc8] sm:$0xff]
      %v7226 = vld [vmem:[%s3207 + $0xd8] sm:$0xff]
      %v7227 = vld [vmem:[%s3207 + $0xe0] sm:$0xff]
      %v7228 = vld [vmem:[%s3207 + $0xf0] sm:$0xff]
      %v7229 = vld [vmem:[%s3207 + $0xf8] sm:$0xff]
      %v7230 = vld [vmem:[%s3207 + $0x108] sm:$0xff]
      %v7231 = vld [vmem:[%s3207 + $0x110] sm:$0xff]
      %v7232 = vld [vmem:[%s3207 + $0x120] sm:$0xff]
      %v7233 = vld [vmem:[%s3207 + $0x128] sm:$0xff]
      %v7234 = vld [vmem:[%s3207 + $0x138] sm:$0xff]
      %v7235 = vld [vmem:[%s3207 + $0x140] sm:$0xff]
      %v7236 = vld [vmem:[%s3207 + $0x150] sm:$0xff]
      %v7237 = vld [vmem:[%s3207 + $0x158] sm:$0xff]
      %v7238 = vld [vmem:[%s3207 + $0x168] sm:$0xff]
      %v7239 = vld [vmem:[%s3207 + $0x170] sm:$0xff]
      %s7240 = scalar_lea.vmem %s6, 48
      %v7241 = vld [vmem:[%s7240] sm:$0xff]
      %v7243 = vsel %vm279, %v7208, 0
      %v7246 = vsel %vm279, %v7209, 0
      %v7249 = vsel %vm279, %v7210, 0
      %v7252 = vsel %vm279, %v7211, 0
      %v7255 = vsel %vm279, %v7212, 0
      %v7258 = vsel %vm279, %v7213, 0
      %v7261 = vsel %vm279, %v7214, 0
      %v7264 = vsel %vm279, %v7215, 0
      %v7267 = vsel %vm279, %v7216, 0
      %v7270 = vsel %vm279, %v7217, 0
      %v7273 = vsel %vm279, %v7218, 0
      %v7276 = vsel %vm279, %v7219, 0
      %v7279 = vsel %vm279, %v7220, 0
      %v7282 = vsel %vm279, %v7221, 0
      %v7285 = vsel %vm279, %v7222, 0
      %v7288 = vsel %vm279, %v7223, 0
      %v7291 = vsel %vm279, %v7224, 0
      %v7294 = vsel %vm279, %v7225, 0
      %v7297 = vsel %vm279, %v7226, 0
      %v7300 = vsel %vm279, %v7227, 0
      %v7303 = vsel %vm279, %v7228, 0
      %v7306 = vsel %vm279, %v7229, 0
      %v7309 = vsel %vm279, %v7230, 0
      %v7312 = vsel %vm279, %v7231, 0
      %v7315 = vsel %vm279, %v7232, 0
      %v7318 = vsel %vm279, %v7233, 0
      %v7321 = vsel %vm279, %v7234, 0
      %v7324 = vsel %vm279, %v7235, 0
      %v7327 = vsel %vm279, %v7236, 0
      %v7330 = vsel %vm279, %v7237, 0
      %v7333 = vsel %vm279, %v7238, 0
      %v7336 = vsel %vm279, %v7239, 0
      %7338 = vmatprep.subr.mxu0 0.0
      %7339 = vmatpush1.msra.mxu0 %v7241
      %7340 = vmatprep.subr.mxu0 0.0
      %7341 = vmatpush1.msra.mxu0 0.0
      %7342 = vmatprep.subr.mxu0 0.0
      %7343 = vmatpush1.msra.mxu0 0.0
      %7344 = vmatprep.subr.mxu0 0.0
      %7345 = vmatpush1.msra.mxu0 0.0
      %7346 = vmatprep.subr.mxu0 0.0
      %7347 = vmatpush1.msra.mxu0 0.0
      %7348 = vmatprep.subr.mxu0 0.0
      %7349 = vmatpush1.msra.mxu0 0.0
      %7350 = vmatprep.subr.mxu0 0.0
      %7351 = vmatpush1.msra.mxu0 0.0
      %7352 = vmatprep.subr.mxu0 0.0
      %7353 = vmatpush1.msra.mxu0 0.0
      %7354 = vmatprep.subr.mxu0 0.0
      %7355 = vmatpush1.msra.mxu0 0.0
      %7356 = vmatprep.subr.mxu0 0.0
      %7357 = vmatpush1.msra.mxu0 0.0
      %7358 = vmatprep.subr.mxu0 0.0
      %7359 = vmatpush1.msra.mxu0 0.0
      %7360 = vmatprep.subr.mxu0 0.0
      %7361 = vmatpush1.msra.mxu0 0.0
      %7362 = vmatprep.subr.mxu0 0.0
      %7363 = vmatpush1.msra.mxu0 0.0
      %7364 = vmatprep.subr.mxu0 0.0
      %7365 = vmatpush1.msra.mxu0 0.0
      %7366 = vmatprep.subr.mxu0 0.0
      %7367 = vmatpush1.msra.mxu0 0.0
      %7368 = vmatprep.subr.mxu0 0.0
      %7369 = vmatpush1.msra.mxu0 0.0
      %7370 = vmatprep.subr.mxu0 0.0
      %7371 = vmatpush1.msra.mxu0 0.0
      %7372 = vmatprep.subr.mxu0 0.0
      %7373 = vmatpush1.msra.mxu0 0.0
      %7374 = vmatprep.subr.mxu0 0.0
      %7375 = vmatpush1.msra.mxu0 0.0
      %7376 = vmatprep.subr.mxu0 0.0
      %7377 = vmatpush1.msra.mxu0 0.0
      %7378 = vmatprep.subr.mxu0 0.0
      %7379 = vmatpush1.msra.mxu0 0.0
      %7380 = vmatprep.subr.mxu0 0.0
      %7381 = vmatpush1.msra.mxu0 0.0
      %7382 = vmatprep.subr.mxu0 0.0
      %7383 = vmatpush1.msra.mxu0 0.0
      %7384 = vmatprep.subr.mxu0 0.0
      %7385 = vmatpush1.msra.mxu0 0.0
      %7386 = vmatprep.subr.mxu0 0.0
      %7387 = vmatpush1.msra.mxu0 0.0
      %7388 = vmatprep.subr.mxu0 0.0
      %7389 = vmatpush1.msra.mxu0 0.0
      %7390 = vmatprep.subr.mxu0 0.0
      %7391 = vmatpush1.msra.mxu0 0.0
      %7392 = vmatprep.subr.mxu0 0.0
      %7393 = vmatpush1.msra.mxu0 0.0
      %7394 = vmatprep.subr.mxu0 0.0
      %7395 = vmatpush1.msra.mxu0 0.0
      %7396 = vmatprep.subr.mxu0 0.0
      %7397 = vmatpush1.msra.mxu0 0.0
      %7398 = vmatprep.subr.mxu0 0.0
      %7399 = vmatpush1.msra.mxu0 0.0
      %7400 = vmatprep.subr.mxu0 0.0
      %7401 = vmatpush1.msra.mxu0 0.0
      %7402 = vmatprep.mubr.f32.mxu0 0.0
      %7403 = vmatmul.mubr.f32.gmra.mrb[0].mxu0 %v7243
      %v7404 = vpop.f32.mrb[0].mxu0
      %v7405 = vadd.f32 0.0, %v7404
      %v7406 = vpop.f32.mrb[0].mxu0
      %7407 = vmatprep.mubr.f32.mxu0 0.0
      %7408 = vmatmul.mubr.f32.gmra.mrb[0].mxu0 %v7246
      %v7409 = vpop.f32.mrb[0].mxu0
      %v7410 = vadd.f32 0.0, %v7409
      %v7411 = vpop.f32.mrb[0].mxu0
      %7412 = vmatprep.mubr.f32.mxu0 0.0
      %7413 = vmatmul.mubr.f32.gmra.mrb[0].mxu0 %v7249
      %v7414 = vpop.f32.mrb[0].mxu0
      %v7415 = vadd.f32 0.0, %v7414
      %v7416 = vpop.f32.mrb[0].mxu0
      %7417 = vmatprep.mubr.f32.mxu0 0.0
      %7418 = vmatmul.mubr.f32.gmra.mrb[0].mxu0 %v7252
      %v7419 = vpop.f32.mrb[0].mxu0
      %v7420 = vadd.f32 0.0, %v7419
      %v7421 = vpop.f32.mrb[0].mxu0
      %7422 = vmatprep.mubr.f32.mxu0 0.0
      %7423 = vmatmul.mubr.f32.gmra.mrb[0].mxu0 %v7255
      %v7424 = vpop.f32.mrb[0].mxu0
      %v7425 = vadd.f32 0.0, %v7424
      %v7426 = vpop.f32.mrb[0].mxu0
      %7427 = vmatprep.mubr.f32.mxu0 0.0
      %7428 = vmatmul.mubr.f32.gmra.mrb[0].mxu0 %v7258
      %v7429 = vpop.f32.mrb[0].mxu0
      %v7430 = vadd.f32 0.0, %v7429
      %v7431 = vpop.f32.mrb[0].mxu0
      %7432 = vmatprep.mubr.f32.mxu0 0.0
      %7433 = vmatmul.mubr.f32.gmra.mrb[0].mxu0 %v7261
      %v7434 = vpop.f32.mrb[0].mxu0
      %v7435 = vadd.f32 0.0, %v7434
      %v7436 = vpop.f32.mrb[0].mxu0
      %7437 = vmatprep.mubr.f32.mxu0 0.0
      %7438 = vmatmul.mubr.f32.gmra.mrb[0].mxu0 %v7264
      %v7439 = vpop.f32.mrb[0].mxu0
      %v7440 = vadd.f32 0.0, %v7439
      %v7441 = vpop.f32.mrb[0].mxu0
      %7442 = vmatprep.mubr.f32.mxu0 0.0
      %7443 = vmatmul.mubr.f32.gmra.mrb[0].mxu0 %v7267
      %v7444 = vpop.f32.mrb[0].mxu0
      %v7445 = vadd.f32 0.0, %v7444
      %v7446 = vpop.f32.mrb[0].mxu0
      %7447 = vmatprep.mubr.f32.mxu0 0.0
      %7448 = vmatmul.mubr.f32.gmra.mrb[0].mxu0 %v7270
      %v7449 = vpop.f32.mrb[0].mxu0
      %v7450 = vadd.f32 0.0, %v7449
      %v7451 = vpop.f32.mrb[0].mxu0
      %7452 = vmatprep.mubr.f32.mxu0 0.0
      %7453 = vmatmul.mubr.f32.gmra.mrb[0].mxu0 %v7273
      %v7454 = vpop.f32.mrb[0].mxu0
      %v7455 = vadd.f32 0.0, %v7454
      %v7456 = vpop.f32.mrb[0].mxu0
      %7457 = vmatprep.mubr.f32.mxu0 0.0
      %7458 = vmatmul.mubr.f32.gmra.mrb[0].mxu0 %v7276
      %v7459 = vpop.f32.mrb[0].mxu0
      %v7460 = vadd.f32 0.0, %v7459
      %v7461 = vpop.f32.mrb[0].mxu0
      %7462 = vmatprep.mubr.f32.mxu0 0.0
      %7463 = vmatmul.mubr.f32.gmra.mrb[0].mxu0 %v7279
      %v7464 = vpop.f32.mrb[0].mxu0
      %v7465 = vadd.f32 0.0, %v7464
      %v7466 = vpop.f32.mrb[0].mxu0
      %7467 = vmatprep.mubr.f32.mxu0 0.0
      %7468 = vmatmul.mubr.f32.gmra.mrb[0].mxu0 %v7282
      %v7469 = vpop.f32.mrb[0].mxu0
      %v7470 = vadd.f32 0.0, %v7469
      %v7471 = vpop.f32.mrb[0].mxu0
      %7472 = vmatprep.mubr.f32.mxu0 0.0
      %7473 = vmatmul.mubr.f32.gmra.mrb[0].mxu0 %v7285
      %v7474 = vpop.f32.mrb[0].mxu0
      %v7475 = vadd.f32 0.0, %v7474
      %v7476 = vpop.f32.mrb[0].mxu0
      %7477 = vmatprep.mubr.f32.mxu0 0.0
      %7478 = vmatmul.mubr.f32.gmra.mrb[0].mxu0 %v7288
      %v7479 = vpop.f32.mrb[0].mxu0
      %v7480 = vadd.f32 0.0, %v7479
      %v7481 = vpop.f32.mrb[0].mxu0
      %7482 = vmatprep.mubr.f32.mxu0 0.0
      %7483 = vmatmul.mubr.f32.gmra.mrb[0].mxu0 %v7291
      %v7484 = vpop.f32.mrb[0].mxu0
      %v7485 = vadd.f32 0.0, %v7484
      %v7486 = vpop.f32.mrb[0].mxu0
      %7487 = vmatprep.mubr.f32.mxu0 0.0
      %7488 = vmatmul.mubr.f32.gmra.mrb[0].mxu0 %v7294
      %v7489 = vpop.f32.mrb[0].mxu0
      %v7490 = vadd.f32 0.0, %v7489
      %v7491 = vpop.f32.mrb[0].mxu0
      %7492 = vmatprep.mubr.f32.mxu0 0.0
      %7493 = vmatmul.mubr.f32.gmra.mrb[0].mxu0 %v7297
      %v7494 = vpop.f32.mrb[0].mxu0
      %v7495 = vadd.f32 0.0, %v7494
      %v7496 = vpop.f32.mrb[0].mxu0
      %7497 = vmatprep.mubr.f32.mxu0 0.0
      %7498 = vmatmul.mubr.f32.gmra.mrb[0].mxu0 %v7300
      %v7499 = vpop.f32.mrb[0].mxu0
      %v7500 = vadd.f32 0.0, %v7499
      %v7501 = vpop.f32.mrb[0].mxu0
      %7502 = vmatprep.mubr.f32.mxu0 0.0
      %7503 = vmatmul.mubr.f32.gmra.mrb[0].mxu0 %v7303
      %v7504 = vpop.f32.mrb[0].mxu0
      %v7505 = vadd.f32 0.0, %v7504
      %v7506 = vpop.f32.mrb[0].mxu0
      %7507 = vmatprep.mubr.f32.mxu0 0.0
      %7508 = vmatmul.mubr.f32.gmra.mrb[0].mxu0 %v7306
      %v7509 = vpop.f32.mrb[0].mxu0
      %v7510 = vadd.f32 0.0, %v7509
      %v7511 = vpop.f32.mrb[0].mxu0
      %7512 = vmatprep.mubr.f32.mxu0 0.0
      %7513 = vmatmul.mubr.f32.gmra.mrb[0].mxu0 %v7309
      %v7514 = vpop.f32.mrb[0].mxu0
      %v7515 = vadd.f32 0.0, %v7514
      %v7516 = vpop.f32.mrb[0].mxu0
      %7517 = vmatprep.mubr.f32.mxu0 0.0
      %7518 = vmatmul.mubr.f32.gmra.mrb[0].mxu0 %v7312
      %v7519 = vpop.f32.mrb[0].mxu0
      %v7520 = vadd.f32 0.0, %v7519
      %v7521 = vpop.f32.mrb[0].mxu0
      %7522 = vmatprep.mubr.f32.mxu0 0.0
      %7523 = vmatmul.mubr.f32.gmra.mrb[0].mxu0 %v7315
      %v7524 = vpop.f32.mrb[0].mxu0
      %v7525 = vadd.f32 0.0, %v7524
      %v7526 = vpop.f32.mrb[0].mxu0
      %7527 = vmatprep.mubr.f32.mxu0 0.0
      %7528 = vmatmul.mubr.f32.gmra.mrb[0].mxu0 %v7318
      %v7529 = vpop.f32.mrb[0].mxu0
      %v7530 = vadd.f32 0.0, %v7529
      %v7531 = vpop.f32.mrb[0].mxu0
      %7532 = vmatprep.mubr.f32.mxu0 0.0
      %7533 = vmatmul.mubr.f32.gmra.mrb[0].mxu0 %v7321
      %v7534 = vpop.f32.mrb[0].mxu0
      %v7535 = vadd.f32 0.0, %v7534
      %v7536 = vpop.f32.mrb[0].mxu0
      %7537 = vmatprep.mubr.f32.mxu0 0.0
      %7538 = vmatmul.mubr.f32.gmra.mrb[0].mxu0 %v7324
      %v7539 = vpop.f32.mrb[0].mxu0
      %v7540 = vadd.f32 0.0, %v7539
      %v7541 = vpop.f32.mrb[0].mxu0
      %7542 = vmatprep.mubr.f32.mxu0 0.0
      %7543 = vmatmul.mubr.f32.gmra.mrb[0].mxu0 %v7327
      %v7544 = vpop.f32.mrb[0].mxu0
      %v7545 = vadd.f32 0.0, %v7544
      %v7546 = vpop.f32.mrb[0].mxu0
      %7547 = vmatprep.mubr.f32.mxu0 0.0
      %7548 = vmatmul.mubr.f32.gmra.mrb[0].mxu0 %v7330
      %v7549 = vpop.f32.mrb[0].mxu0
      %v7550 = vadd.f32 0.0, %v7549
      %v7551 = vpop.f32.mrb[0].mxu0
      %7552 = vmatprep.mubr.f32.mxu0 0.0
      %7553 = vmatmul.mubr.f32.gmra.mrb[0].mxu0 %v7333
      %v7554 = vpop.f32.mrb[0].mxu0
      %v7555 = vadd.f32 0.0, %v7554
      %v7556 = vpop.f32.mrb[0].mxu0
      %7557 = vmatprep.mubr.f32.mxu0 0.0
      %7558 = vmatmul.mubr.f32.gmra.mrb[0].mxu0 %v7336
      %v7559 = vpop.f32.mrb[0].mxu0
      %v7560 = vadd.f32 0.0, %v7559
      %v7561 = vpop.f32.mrb[0].mxu0
      %7562 = vdwg.mxu0
      %v7563 = vadd.f32 %v7176, %v7405
      %v7564 = vadd.f32 %v7177, %v7410
      %v7565 = vadd.f32 %v7178, %v7415
      %v7566 = vadd.f32 %v7179, %v7420
      %v7567 = vadd.f32 %v7180, %v7425
      %v7568 = vadd.f32 %v7181, %v7430
      %v7569 = vadd.f32 %v7182, %v7435
      %v7570 = vadd.f32 %v7183, %v7440
      %v7571 = vadd.f32 %v7184, %v7445
      %v7572 = vadd.f32 %v7185, %v7450
      %v7573 = vadd.f32 %v7186, %v7455
      %v7574 = vadd.f32 %v7187, %v7460
      %v7575 = vadd.f32 %v7188, %v7465
      %v7576 = vadd.f32 %v7189, %v7470
      %v7577 = vadd.f32 %v7190, %v7475
      %v7578 = vadd.f32 %v7191, %v7480
      %v7579 = vadd.f32 %v7192, %v7485
      %v7580 = vadd.f32 %v7193, %v7490
      %v7581 = vadd.f32 %v7194, %v7495
      %v7582 = vadd.f32 %v7195, %v7500
      %v7583 = vadd.f32 %v7196, %v7505
      %v7584 = vadd.f32 %v7197, %v7510
      %v7585 = vadd.f32 %v7198, %v7515
      %v7586 = vadd.f32 %v7199, %v7520
      %v7587 = vadd.f32 %v7200, %v7525
      %v7588 = vadd.f32 %v7201, %v7530
      %v7589 = vadd.f32 %v7202, %v7535
      %v7590 = vadd.f32 %v7203, %v7540
      %v7591 = vadd.f32 %v7204, %v7545
      %v7592 = vadd.f32 %v7205, %v7550
      %v7593 = vadd.f32 %v7206, %v7555
      %v7594 = vadd.f32 %v7207, %v7560
      %v7595 = vld [vmem:[%s3207 + $0x1] sm:$0xff]
      %v7596 = vld [vmem:[%s3207 + $0x9] sm:$0xff]
      %v7597 = vld [vmem:[%s3207 + $0x19] sm:$0xff]
      %v7598 = vld [vmem:[%s3207 + $0x21] sm:$0xff]
      %v7599 = vld [vmem:[%s3207 + $0x31] sm:$0xff]
      %v7600 = vld [vmem:[%s3207 + $0x39] sm:$0xff]
      %v7601 = vld [vmem:[%s3207 + $0x49] sm:$0xff]
      %v7602 = vld [vmem:[%s3207 + $0x51] sm:$0xff]
      %v7603 = vld [vmem:[%s3207 + $0x61] sm:$0xff]
      %v7604 = vld [vmem:[%s3207 + $0x69] sm:$0xff]
      %v7605 = vld [vmem:[%s3207 + $0x79] sm:$0xff]
      %v7606 = vld [vmem:[%s3207 + $0x81] sm:$0xff]
      %v7607 = vld [vmem:[%s3207 + $0x91] sm:$0xff]
      %v7608 = vld [vmem:[%s3207 + $0x99] sm:$0xff]
      %v7609 = vld [vmem:[%s3207 + $0xa9] sm:$0xff]
      %v7610 = vld [vmem:[%s3207 + $0xb1] sm:$0xff]
      %v7611 = vld [vmem:[%s3207 + $0xc1] sm:$0xff]
      %v7612 = vld [vmem:[%s3207 + $0xc9] sm:$0xff]
      %v7613 = vld [vmem:[%s3207 + $0xd9] sm:$0xff]
      %v7614 = vld [vmem:[%s3207 + $0xe1] sm:$0xff]
      %v7615 = vld [vmem:[%s3207 + $0xf1] sm:$0xff]
      %v7616 = vld [vmem:[%s3207 + $0xf9] sm:$0xff]
      %v7617 = vld [vmem:[%s3207 + $0x109] sm:$0xff]
      %v7618 = vld [vmem:[%s3207 + $0x111] sm:$0xff]
      %v7619 = vld [vmem:[%s3207 + $0x121] sm:$0xff]
      %v7620 = vld [vmem:[%s3207 + $0x129] sm:$0xff]
      %v7621 = vld [vmem:[%s3207 + $0x139] sm:$0xff]
      %v7622 = vld [vmem:[%s3207 + $0x141] sm:$0xff]
      %v7623 = vld [vmem:[%s3207 + $0x151] sm:$0xff]
      %v7624 = vld [vmem:[%s3207 + $0x159] sm:$0xff]
      %v7625 = vld [vmem:[%s3207 + $0x169] sm:$0xff]
      %v7626 = vld [vmem:[%s3207 + $0x171] sm:$0xff]
      %s7627 = scalar_lea.vmem %s6, 56
      %v7628 = vld [vmem:[%s7627] sm:$0xff]
      %v7630 = vsel %vm279, %v7595, 0
      %v7633 = vsel %vm279, %v7596, 0
      %v7636 = vsel %vm279, %v7597, 0
      %v7639 = vsel %vm279, %v7598, 0
      %v7642 = vsel %vm279, %v7599, 0
      %v7645 = vsel %vm279, %v7600, 0
      %v7648 = vsel %vm279, %v7601, 0
      %v7651 = vsel %vm279, %v7602, 0
      %v7654 = vsel %vm279, %v7603, 0
      %v7657 = vsel %vm279, %v7604, 0
      %v7660 = vsel %vm279, %v7605, 0
      %v7663 = vsel %vm279, %v7606, 0
      %v7666 = vsel %vm279, %v7607, 0
      %v7669 = vsel %vm279, %v7608, 0
      %v7672 = vsel %vm279, %v7609, 0
      %v7675 = vsel %vm279, %v7610, 0
      %v7678 = vsel %vm279, %v7611, 0
      %v7681 = vsel %vm279, %v7612, 0
      %v7684 = vsel %vm279, %v7613, 0
      %v7687 = vsel %vm279, %v7614, 0
      %v7690 = vsel %vm279, %v7615, 0
      %v7693 = vsel %vm279, %v7616, 0
      %v7696 = vsel %vm279, %v7617, 0
      %v7699 = vsel %vm279, %v7618, 0
      %v7702 = vsel %vm279, %v7619, 0
      %v7705 = vsel %vm279, %v7620, 0
      %v7708 = vsel %vm279, %v7621, 0
      %v7711 = vsel %vm279, %v7622, 0
      %v7714 = vsel %vm279, %v7623, 0
      %v7717 = vsel %vm279, %v7624, 0
      %v7720 = vsel %vm279, %v7625, 0
      %v7723 = vsel %vm279, %v7626, 0
      %7725 = vmatprep.subr.mxu0 0.0
      %7726 = vmatpush1.msra.mxu0 %v7628
      %7727 = vmatprep.subr.mxu0 0.0
      %7728 = vmatpush1.msra.mxu0 0.0
      %7729 = vmatprep.subr.mxu0 0.0
      %7730 = vmatpush1.msra.mxu0 0.0
      %7731 = vmatprep.subr.mxu0 0.0
      %7732 = vmatpush1.msra.mxu0 0.0
      %7733 = vmatprep.subr.mxu0 0.0
      %7734 = vmatpush1.msra.mxu0 0.0
      %7735 = vmatprep.subr.mxu0 0.0
      %7736 = vmatpush1.msra.mxu0 0.0
      %7737 = vmatprep.subr.mxu0 0.0
      %7738 = vmatpush1.msra.mxu0 0.0
      %7739 = vmatprep.subr.mxu0 0.0
      %7740 = vmatpush1.msra.mxu0 0.0
      %7741 = vmatprep.subr.mxu0 0.0
      %7742 = vmatpush1.msra.mxu0 0.0
      %7743 = vmatprep.subr.mxu0 0.0
      %7744 = vmatpush1.msra.mxu0 0.0
      %7745 = vmatprep.subr.mxu0 0.0
      %7746 = vmatpush1.msra.mxu0 0.0
      %7747 = vmatprep.subr.mxu0 0.0
      %7748 = vmatpush1.msra.mxu0 0.0
      %7749 = vmatprep.subr.mxu0 0.0
      %7750 = vmatpush1.msra.mxu0 0.0
      %7751 = vmatprep.subr.mxu0 0.0
      %7752 = vmatpush1.msra.mxu0 0.0
      %7753 = vmatprep.subr.mxu0 0.0
      %7754 = vmatpush1.msra.mxu0 0.0
      %7755 = vmatprep.subr.mxu0 0.0
      %7756 = vmatpush1.msra.mxu0 0.0
      %7757 = vmatprep.subr.mxu0 0.0
      %7758 = vmatpush1.msra.mxu0 0.0
      %7759 = vmatprep.subr.mxu0 0.0
      %7760 = vmatpush1.msra.mxu0 0.0
      %7761 = vmatprep.subr.mxu0 0.0
      %7762 = vmatpush1.msra.mxu0 0.0
      %7763 = vmatprep.subr.mxu0 0.0
      %7764 = vmatpush1.msra.mxu0 0.0
      %7765 = vmatprep.subr.mxu0 0.0
      %7766 = vmatpush1.msra.mxu0 0.0
      %7767 = vmatprep.subr.mxu0 0.0
      %7768 = vmatpush1.msra.mxu0 0.0
      %7769 = vmatprep.subr.mxu0 0.0
      %7770 = vmatpush1.msra.mxu0 0.0
      %7771 = vmatprep.subr.mxu0 0.0
      %7772 = vmatpush1.msra.mxu0 0.0
      %7773 = vmatprep.subr.mxu0 0.0
      %7774 = vmatpush1.msra.mxu0 0.0
      %7775 = vmatprep.subr.mxu0 0.0
      %7776 = vmatpush1.msra.mxu0 0.0
      %7777 = vmatprep.subr.mxu0 0.0
      %7778 = vmatpush1.msra.mxu0 0.0
      %7779 = vmatprep.subr.mxu0 0.0
      %7780 = vmatpush1.msra.mxu0 0.0
      %7781 = vmatprep.subr.mxu0 0.0
      %7782 = vmatpush1.msra.mxu0 0.0
      %7783 = vmatprep.subr.mxu0 0.0
      %7784 = vmatpush1.msra.mxu0 0.0
      %7785 = vmatprep.subr.mxu0 0.0
      %7786 = vmatpush1.msra.mxu0 0.0
      %7787 = vmatprep.subr.mxu0 0.0
      %7788 = vmatpush1.msra.mxu0 0.0
      %7789 = vmatprep.mubr.f32.mxu0 0.0
      %7790 = vmatmul.mubr.f32.gmra.mrb[0].mxu0 %v7630
      %v7791 = vpop.f32.mrb[0].mxu0
      %v7792 = vadd.f32 0.0, %v7791
      %v7793 = vpop.f32.mrb[0].mxu0
      %7794 = vmatprep.mubr.f32.mxu0 0.0
      %7795 = vmatmul.mubr.f32.gmra.mrb[0].mxu0 %v7633
      %v7796 = vpop.f32.mrb[0].mxu0
      %v7797 = vadd.f32 0.0, %v7796
      %v7798 = vpop.f32.mrb[0].mxu0
      %7799 = vmatprep.mubr.f32.mxu0 0.0
      %7800 = vmatmul.mubr.f32.gmra.mrb[0].mxu0 %v7636
      %v7801 = vpop.f32.mrb[0].mxu0
      %v7802 = vadd.f32 0.0, %v7801
      %v7803 = vpop.f32.mrb[0].mxu0
      %7804 = vmatprep.mubr.f32.mxu0 0.0
      %7805 = vmatmul.mubr.f32.gmra.mrb[0].mxu0 %v7639
      %v7806 = vpop.f32.mrb[0].mxu0
      %v7807 = vadd.f32 0.0, %v7806
      %v7808 = vpop.f32.mrb[0].mxu0
      %7809 = vmatprep.mubr.f32.mxu0 0.0
      %7810 = vmatmul.mubr.f32.gmra.mrb[0].mxu0 %v7642
      %v7811 = vpop.f32.mrb[0].mxu0
      %v7812 = vadd.f32 0.0, %v7811
      %v7813 = vpop.f32.mrb[0].mxu0
      %7814 = vmatprep.mubr.f32.mxu0 0.0
      %7815 = vmatmul.mubr.f32.gmra.mrb[0].mxu0 %v7645
      %v7816 = vpop.f32.mrb[0].mxu0
      %v7817 = vadd.f32 0.0, %v7816
      %v7818 = vpop.f32.mrb[0].mxu0
      %7819 = vmatprep.mubr.f32.mxu0 0.0
      %7820 = vmatmul.mubr.f32.gmra.mrb[0].mxu0 %v7648
      %v7821 = vpop.f32.mrb[0].mxu0
      %v7822 = vadd.f32 0.0, %v7821
      %v7823 = vpop.f32.mrb[0].mxu0
      %7824 = vmatprep.mubr.f32.mxu0 0.0
      %7825 = vmatmul.mubr.f32.gmra.mrb[0].mxu0 %v7651
      %v7826 = vpop.f32.mrb[0].mxu0
      %v7827 = vadd.f32 0.0, %v7826
      %v7828 = vpop.f32.mrb[0].mxu0
      %7829 = vmatprep.mubr.f32.mxu0 0.0
      %7830 = vmatmul.mubr.f32.gmra.mrb[0].mxu0 %v7654
      %v7831 = vpop.f32.mrb[0].mxu0
      %v7832 = vadd.f32 0.0, %v7831
      %v7833 = vpop.f32.mrb[0].mxu0
      %7834 = vmatprep.mubr.f32.mxu0 0.0
      %7835 = vmatmul.mubr.f32.gmra.mrb[0].mxu0 %v7657
      %v7836 = vpop.f32.mrb[0].mxu0
      %v7837 = vadd.f32 0.0, %v7836
      %v7838 = vpop.f32.mrb[0].mxu0
      %7839 = vmatprep.mubr.f32.mxu0 0.0
      %7840 = vmatmul.mubr.f32.gmra.mrb[0].mxu0 %v7660
      %v7841 = vpop.f32.mrb[0].mxu0
      %v7842 = vadd.f32 0.0, %v7841
      %v7843 = vpop.f32.mrb[0].mxu0
      %7844 = vmatprep.mubr.f32.mxu0 0.0
      %7845 = vmatmul.mubr.f32.gmra.mrb[0].mxu0 %v7663
      %v7846 = vpop.f32.mrb[0].mxu0
      %v7847 = vadd.f32 0.0, %v7846
      %v7848 = vpop.f32.mrb[0].mxu0
      %7849 = vmatprep.mubr.f32.mxu0 0.0
      %7850 = vmatmul.mubr.f32.gmra.mrb[0].mxu0 %v7666
      %v7851 = vpop.f32.mrb[0].mxu0
      %v7852 = vadd.f32 0.0, %v7851
      %v7853 = vpop.f32.mrb[0].mxu0
      %7854 = vmatprep.mubr.f32.mxu0 0.0
      %7855 = vmatmul.mubr.f32.gmra.mrb[0].mxu0 %v7669
      %v7856 = vpop.f32.mrb[0].mxu0
      %v7857 = vadd.f32 0.0, %v7856
      %v7858 = vpop.f32.mrb[0].mxu0
      %7859 = vmatprep.mubr.f32.mxu0 0.0
      %7860 = vmatmul.mubr.f32.gmra.mrb[0].mxu0 %v7672
      %v7861 = vpop.f32.mrb[0].mxu0
      %v7862 = vadd.f32 0.0, %v7861
      %v7863 = vpop.f32.mrb[0].mxu0
      %7864 = vmatprep.mubr.f32.mxu0 0.0
      %7865 = vmatmul.mubr.f32.gmra.mrb[0].mxu0 %v7675
      %v7866 = vpop.f32.mrb[0].mxu0
      %v7867 = vadd.f32 0.0, %v7866
      %v7868 = vpop.f32.mrb[0].mxu0
      %7869 = vmatprep.mubr.f32.mxu0 0.0
      %7870 = vmatmul.mubr.f32.gmra.mrb[0].mxu0 %v7678
      %v7871 = vpop.f32.mrb[0].mxu0
      %v7872 = vadd.f32 0.0, %v7871
      %v7873 = vpop.f32.mrb[0].mxu0
      %7874 = vmatprep.mubr.f32.mxu0 0.0
      %7875 = vmatmul.mubr.f32.gmra.mrb[0].mxu0 %v7681
      %v7876 = vpop.f32.mrb[0].mxu0
      %v7877 = vadd.f32 0.0, %v7876
      %v7878 = vpop.f32.mrb[0].mxu0
      %7879 = vmatprep.mubr.f32.mxu0 0.0
      %7880 = vmatmul.mubr.f32.gmra.mrb[0].mxu0 %v7684
      %v7881 = vpop.f32.mrb[0].mxu0
      %v7882 = vadd.f32 0.0, %v7881
      %v7883 = vpop.f32.mrb[0].mxu0
      %7884 = vmatprep.mubr.f32.mxu0 0.0
      %7885 = vmatmul.mubr.f32.gmra.mrb[0].mxu0 %v7687
      %v7886 = vpop.f32.mrb[0].mxu0
      %v7887 = vadd.f32 0.0, %v7886
      %v7888 = vpop.f32.mrb[0].mxu0
      %7889 = vmatprep.mubr.f32.mxu0 0.0
      %7890 = vmatmul.mubr.f32.gmra.mrb[0].mxu0 %v7690
      %v7891 = vpop.f32.mrb[0].mxu0
      %v7892 = vadd.f32 0.0, %v7891
      %v7893 = vpop.f32.mrb[0].mxu0
      %7894 = vmatprep.mubr.f32.mxu0 0.0
      %7895 = vmatmul.mubr.f32.gmra.mrb[0].mxu0 %v7693
      %v7896 = vpop.f32.mrb[0].mxu0
      %v7897 = vadd.f32 0.0, %v7896
      %v7898 = vpop.f32.mrb[0].mxu0
      %7899 = vmatprep.mubr.f32.mxu0 0.0
      %7900 = vmatmul.mubr.f32.gmra.mrb[0].mxu0 %v7696
      %v7901 = vpop.f32.mrb[0].mxu0
      %v7902 = vadd.f32 0.0, %v7901
      %v7903 = vpop.f32.mrb[0].mxu0
      %7904 = vmatprep.mubr.f32.mxu0 0.0
      %7905 = vmatmul.mubr.f32.gmra.mrb[0].mxu0 %v7699
      %v7906 = vpop.f32.mrb[0].mxu0
      %v7907 = vadd.f32 0.0, %v7906
      %v7908 = vpop.f32.mrb[0].mxu0
      %7909 = vmatprep.mubr.f32.mxu0 0.0
      %7910 = vmatmul.mubr.f32.gmra.mrb[0].mxu0 %v7702
      %v7911 = vpop.f32.mrb[0].mxu0
      %v7912 = vadd.f32 0.0, %v7911
      %v7913 = vpop.f32.mrb[0].mxu0
      %7914 = vmatprep.mubr.f32.mxu0 0.0
      %7915 = vmatmul.mubr.f32.gmra.mrb[0].mxu0 %v7705
      %v7916 = vpop.f32.mrb[0].mxu0
      %v7917 = vadd.f32 0.0, %v7916
      %v7918 = vpop.f32.mrb[0].mxu0
      %7919 = vmatprep.mubr.f32.mxu0 0.0
      %7920 = vmatmul.mubr.f32.gmra.mrb[0].mxu0 %v7708
      %v7921 = vpop.f32.mrb[0].mxu0
      %v7922 = vadd.f32 0.0, %v7921
      %v7923 = vpop.f32.mrb[0].mxu0
      %7924 = vmatprep.mubr.f32.mxu0 0.0
      %7925 = vmatmul.mubr.f32.gmra.mrb[0].mxu0 %v7711
      %v7926 = vpop.f32.mrb[0].mxu0
      %v7927 = vadd.f32 0.0, %v7926
      %v7928 = vpop.f32.mrb[0].mxu0
      %7929 = vmatprep.mubr.f32.mxu0 0.0
      %7930 = vmatmul.mubr.f32.gmra.mrb[0].mxu0 %v7714
      %v7931 = vpop.f32.mrb[0].mxu0
      %v7932 = vadd.f32 0.0, %v7931
      %v7933 = vpop.f32.mrb[0].mxu0
      %7934 = vmatprep.mubr.f32.mxu0 0.0
      %7935 = vmatmul.mubr.f32.gmra.mrb[0].mxu0 %v7717
      %v7936 = vpop.f32.mrb[0].mxu0
      %v7937 = vadd.f32 0.0, %v7936
      %v7938 = vpop.f32.mrb[0].mxu0
      %7939 = vmatprep.mubr.f32.mxu0 0.0
      %7940 = vmatmul.mubr.f32.gmra.mrb[0].mxu0 %v7720
      %v7941 = vpop.f32.mrb[0].mxu0
      %v7942 = vadd.f32 0.0, %v7941
      %v7943 = vpop.f32.mrb[0].mxu0
      %7944 = vmatprep.mubr.f32.mxu0 0.0
      %7945 = vmatmul.mubr.f32.gmra.mrb[0].mxu0 %v7723
      %v7946 = vpop.f32.mrb[0].mxu0
      %v7947 = vadd.f32 0.0, %v7946
      %v7948 = vpop.f32.mrb[0].mxu0
      %7949 = vdwg.mxu0
      %v7950 = vadd.f32 %v7563, %v7792
      %v7951 = vadd.f32 %v7564, %v7797
      %v7952 = vadd.f32 %v7565, %v7802
      %v7953 = vadd.f32 %v7566, %v7807
      %v7954 = vadd.f32 %v7567, %v7812
      %v7955 = vadd.f32 %v7568, %v7817
      %v7956 = vadd.f32 %v7569, %v7822
      %v7957 = vadd.f32 %v7570, %v7827
      %v7958 = vadd.f32 %v7571, %v7832
      %v7959 = vadd.f32 %v7572, %v7837
      %v7960 = vadd.f32 %v7573, %v7842
      %v7961 = vadd.f32 %v7574, %v7847
      %v7962 = vadd.f32 %v7575, %v7852
      %v7963 = vadd.f32 %v7576, %v7857
      %v7964 = vadd.f32 %v7577, %v7862
      %v7965 = vadd.f32 %v7578, %v7867
      %v7966 = vadd.f32 %v7579, %v7872
      %v7967 = vadd.f32 %v7580, %v7877
      %v7968 = vadd.f32 %v7581, %v7882
      %v7969 = vadd.f32 %v7582, %v7887
      %v7970 = vadd.f32 %v7583, %v7892
      %v7971 = vadd.f32 %v7584, %v7897
      %v7972 = vadd.f32 %v7585, %v7902
      %v7973 = vadd.f32 %v7586, %v7907
      %v7974 = vadd.f32 %v7587, %v7912
      %v7975 = vadd.f32 %v7588, %v7917
      %v7976 = vadd.f32 %v7589, %v7922
      %v7977 = vadd.f32 %v7590, %v7927
      %v7978 = vadd.f32 %v7591, %v7932
      %v7979 = vadd.f32 %v7592, %v7937
      %v7980 = vadd.f32 %v7593, %v7942
      %v7981 = vadd.f32 %v7594, %v7947
      %v7982 = vld [vmem:[%s3207 + $0x2] sm:$0xff]
      %v7983 = vld [vmem:[%s3207 + $0xa] sm:$0xff]
      %v7984 = vld [vmem:[%s3207 + $0x1a] sm:$0xff]
      %v7985 = vld [vmem:[%s3207 + $0x22] sm:$0xff]
      %v7986 = vld [vmem:[%s3207 + $0x32] sm:$0xff]
      %v7987 = vld [vmem:[%s3207 + $0x3a] sm:$0xff]
      %v7988 = vld [vmem:[%s3207 + $0x4a] sm:$0xff]
      %v7989 = vld [vmem:[%s3207 + $0x52] sm:$0xff]
      %v7990 = vld [vmem:[%s3207 + $0x62] sm:$0xff]
      %v7991 = vld [vmem:[%s3207 + $0x6a] sm:$0xff]
      %v7992 = vld [vmem:[%s3207 + $0x7a] sm:$0xff]
      %v7993 = vld [vmem:[%s3207 + $0x82] sm:$0xff]
      %v7994 = vld [vmem:[%s3207 + $0x92] sm:$0xff]
      %v7995 = vld [vmem:[%s3207 + $0x9a] sm:$0xff]
      %v7996 = vld [vmem:[%s3207 + $0xaa] sm:$0xff]
      %v7997 = vld [vmem:[%s3207 + $0xb2] sm:$0xff]
      %v7998 = vld [vmem:[%s3207 + $0xc2] sm:$0xff]
      %v7999 = vld [vmem:[%s3207 + $0xca] sm:$0xff]
      %v8000 = vld [vmem:[%s3207 + $0xda] sm:$0xff]
      %v8001 = vld [vmem:[%s3207 + $0xe2] sm:$0xff]
      %v8002 = vld [vmem:[%s3207 + $0xf2] sm:$0xff]
      %v8003 = vld [vmem:[%s3207 + $0xfa] sm:$0xff]
      %v8004 = vld [vmem:[%s3207 + $0x10a] sm:$0xff]
      %v8005 = vld [vmem:[%s3207 + $0x112] sm:$0xff]
      %v8006 = vld [vmem:[%s3207 + $0x122] sm:$0xff]
      %v8007 = vld [vmem:[%s3207 + $0x12a] sm:$0xff]
      %v8008 = vld [vmem:[%s3207 + $0x13a] sm:$0xff]
      %v8009 = vld [vmem:[%s3207 + $0x142] sm:$0xff]
      %v8010 = vld [vmem:[%s3207 + $0x152] sm:$0xff]
      %v8011 = vld [vmem:[%s3207 + $0x15a] sm:$0xff]
      %v8012 = vld [vmem:[%s3207 + $0x16a] sm:$0xff]
      %v8013 = vld [vmem:[%s3207 + $0x172] sm:$0xff]
      %s8014 = scalar_lea.vmem %s6, 64
      %v8015 = vld [vmem:[%s8014] sm:$0xff]
      %v8017 = vsel %vm279, %v7982, 0
      %v8020 = vsel %vm279, %v7983, 0
      %v8023 = vsel %vm279, %v7984, 0
      %v8026 = vsel %vm279, %v7985, 0
      %v8029 = vsel %vm279, %v7986, 0
      %v8032 = vsel %vm279, %v7987, 0
      %v8035 = vsel %vm279, %v7988, 0
      %v8038 = vsel %vm279, %v7989, 0
      %v8041 = vsel %vm279, %v7990, 0
      %v8044 = vsel %vm279, %v7991, 0
      %v8047 = vsel %vm279, %v7992, 0
      %v8050 = vsel %vm279, %v7993, 0
      %v8053 = vsel %vm279, %v7994, 0
      %v8056 = vsel %vm279, %v7995, 0
      %v8059 = vsel %vm279, %v7996, 0
      %v8062 = vsel %vm279, %v7997, 0
      %v8065 = vsel %vm279, %v7998, 0
      %v8068 = vsel %vm279, %v7999, 0
      %v8071 = vsel %vm279, %v8000, 0
      %v8074 = vsel %vm279, %v8001, 0
      %v8077 = vsel %vm279, %v8002, 0
      %v8080 = vsel %vm279, %v8003, 0
      %v8083 = vsel %vm279, %v8004, 0
      %v8086 = vsel %vm279, %v8005, 0
      %v8089 = vsel %vm279, %v8006, 0
      %v8092 = vsel %vm279, %v8007, 0
      %v8095 = vsel %vm279, %v8008, 0
      %v8098 = vsel %vm279, %v8009, 0
      %v8101 = vsel %vm279, %v8010, 0
      %v8104 = vsel %vm279, %v8011, 0
      %v8107 = vsel %vm279, %v8012, 0
      %v8110 = vsel %vm279, %v8013, 0
      %8112 = vmatprep.subr.mxu0 0.0
      %8113 = vmatpush1.msra.mxu0 %v8015
      %8114 = vmatprep.subr.mxu0 0.0
      %8115 = vmatpush1.msra.mxu0 0.0
      %8116 = vmatprep.subr.mxu0 0.0
      %8117 = vmatpush1.msra.mxu0 0.0
      %8118 = vmatprep.subr.mxu0 0.0
      %8119 = vmatpush1.msra.mxu0 0.0
      %8120 = vmatprep.subr.mxu0 0.0
      %8121 = vmatpush1.msra.mxu0 0.0
      %8122 = vmatprep.subr.mxu0 0.0
      %8123 = vmatpush1.msra.mxu0 0.0
      %8124 = vmatprep.subr.mxu0 0.0
      %8125 = vmatpush1.msra.mxu0 0.0
      %8126 = vmatprep.subr.mxu0 0.0
      %8127 = vmatpush1.msra.mxu0 0.0
      %8128 = vmatprep.subr.mxu0 0.0
      %8129 = vmatpush1.msra.mxu0 0.0
      %8130 = vmatprep.subr.mxu0 0.0
      %8131 = vmatpush1.msra.mxu0 0.0
      %8132 = vmatprep.subr.mxu0 0.0
      %8133 = vmatpush1.msra.mxu0 0.0
      %8134 = vmatprep.subr.mxu0 0.0
      %8135 = vmatpush1.msra.mxu0 0.0
      %8136 = vmatprep.subr.mxu0 0.0
      %8137 = vmatpush1.msra.mxu0 0.0
      %8138 = vmatprep.subr.mxu0 0.0
      %8139 = vmatpush1.msra.mxu0 0.0
      %8140 = vmatprep.subr.mxu0 0.0
      %8141 = vmatpush1.msra.mxu0 0.0
      %8142 = vmatprep.subr.mxu0 0.0
      %8143 = vmatpush1.msra.mxu0 0.0
      %8144 = vmatprep.subr.mxu0 0.0
      %8145 = vmatpush1.msra.mxu0 0.0
      %8146 = vmatprep.subr.mxu0 0.0
      %8147 = vmatpush1.msra.mxu0 0.0
      %8148 = vmatprep.subr.mxu0 0.0
      %8149 = vmatpush1.msra.mxu0 0.0
      %8150 = vmatprep.subr.mxu0 0.0
      %8151 = vmatpush1.msra.mxu0 0.0
      %8152 = vmatprep.subr.mxu0 0.0
      %8153 = vmatpush1.msra.mxu0 0.0
      %8154 = vmatprep.subr.mxu0 0.0
      %8155 = vmatpush1.msra.mxu0 0.0
      %8156 = vmatprep.subr.mxu0 0.0
      %8157 = vmatpush1.msra.mxu0 0.0
      %8158 = vmatprep.subr.mxu0 0.0
      %8159 = vmatpush1.msra.mxu0 0.0
      %8160 = vmatprep.subr.mxu0 0.0
      %8161 = vmatpush1.msra.mxu0 0.0
      %8162 = vmatprep.subr.mxu0 0.0
      %8163 = vmatpush1.msra.mxu0 0.0
      %8164 = vmatprep.subr.mxu0 0.0
      %8165 = vmatpush1.msra.mxu0 0.0
      %8166 = vmatprep.subr.mxu0 0.0
      %8167 = vmatpush1.msra.mxu0 0.0
      %8168 = vmatprep.subr.mxu0 0.0
      %8169 = vmatpush1.msra.mxu0 0.0
      %8170 = vmatprep.subr.mxu0 0.0
      %8171 = vmatpush1.msra.mxu0 0.0
      %8172 = vmatprep.subr.mxu0 0.0
      %8173 = vmatpush1.msra.mxu0 0.0
      %8174 = vmatprep.subr.mxu0 0.0
      %8175 = vmatpush1.msra.mxu0 0.0
      %8176 = vmatprep.mubr.f32.mxu0 0.0
      %8177 = vmatmul.mubr.f32.gmra.mrb[0].mxu0 %v8017
      %v8178 = vpop.f32.mrb[0].mxu0
      %v8179 = vadd.f32 0.0, %v8178
      %v8180 = vpop.f32.mrb[0].mxu0
      %8181 = vmatprep.mubr.f32.mxu0 0.0
      %8182 = vmatmul.mubr.f32.gmra.mrb[0].mxu0 %v8020
      %v8183 = vpop.f32.mrb[0].mxu0
      %v8184 = vadd.f32 0.0, %v8183
      %v8185 = vpop.f32.mrb[0].mxu0
      %8186 = vmatprep.mubr.f32.mxu0 0.0
      %8187 = vmatmul.mubr.f32.gmra.mrb[0].mxu0 %v8023
      %v8188 = vpop.f32.mrb[0].mxu0
      %v8189 = vadd.f32 0.0, %v8188
      %v8190 = vpop.f32.mrb[0].mxu0
      %8191 = vmatprep.mubr.f32.mxu0 0.0
      %8192 = vmatmul.mubr.f32.gmra.mrb[0].mxu0 %v8026
      %v8193 = vpop.f32.mrb[0].mxu0
      %v8194 = vadd.f32 0.0, %v8193
      %v8195 = vpop.f32.mrb[0].mxu0
      %8196 = vmatprep.mubr.f32.mxu0 0.0
      %8197 = vmatmul.mubr.f32.gmra.mrb[0].mxu0 %v8029
      %v8198 = vpop.f32.mrb[0].mxu0
      %v8199 = vadd.f32 0.0, %v8198
      %v8200 = vpop.f32.mrb[0].mxu0
      %8201 = vmatprep.mubr.f32.mxu0 0.0
      %8202 = vmatmul.mubr.f32.gmra.mrb[0].mxu0 %v8032
      %v8203 = vpop.f32.mrb[0].mxu0
      %v8204 = vadd.f32 0.0, %v8203
      %v8205 = vpop.f32.mrb[0].mxu0
      %8206 = vmatprep.mubr.f32.mxu0 0.0
      %8207 = vmatmul.mubr.f32.gmra.mrb[0].mxu0 %v8035
      %v8208 = vpop.f32.mrb[0].mxu0
      %v8209 = vadd.f32 0.0, %v8208
      %v8210 = vpop.f32.mrb[0].mxu0
      %8211 = vmatprep.mubr.f32.mxu0 0.0
      %8212 = vmatmul.mubr.f32.gmra.mrb[0].mxu0 %v8038
      %v8213 = vpop.f32.mrb[0].mxu0
      %v8214 = vadd.f32 0.0, %v8213
      %v8215 = vpop.f32.mrb[0].mxu0
      %8216 = vmatprep.mubr.f32.mxu0 0.0
      %8217 = vmatmul.mubr.f32.gmra.mrb[0].mxu0 %v8041
      %v8218 = vpop.f32.mrb[0].mxu0
      %v8219 = vadd.f32 0.0, %v8218
      %v8220 = vpop.f32.mrb[0].mxu0
      %8221 = vmatprep.mubr.f32.mxu0 0.0
      %8222 = vmatmul.mubr.f32.gmra.mrb[0].mxu0 %v8044
      %v8223 = vpop.f32.mrb[0].mxu0
      %v8224 = vadd.f32 0.0, %v8223
      %v8225 = vpop.f32.mrb[0].mxu0
      %8226 = vmatprep.mubr.f32.mxu0 0.0
      %8227 = vmatmul.mubr.f32.gmra.mrb[0].mxu0 %v8047
      %v8228 = vpop.f32.mrb[0].mxu0
      %v8229 = vadd.f32 0.0, %v8228
      %v8230 = vpop.f32.mrb[0].mxu0
      %8231 = vmatprep.mubr.f32.mxu0 0.0
      %8232 = vmatmul.mubr.f32.gmra.mrb[0].mxu0 %v8050
      %v8233 = vpop.f32.mrb[0].mxu0
      %v8234 = vadd.f32 0.0, %v8233
      %v8235 = vpop.f32.mrb[0].mxu0
      %8236 = vmatprep.mubr.f32.mxu0 0.0
      %8237 = vmatmul.mubr.f32.gmra.mrb[0].mxu0 %v8053
      %v8238 = vpop.f32.mrb[0].mxu0
      %v8239 = vadd.f32 0.0, %v8238
      %v8240 = vpop.f32.mrb[0].mxu0
      %8241 = vmatprep.mubr.f32.mxu0 0.0
      %8242 = vmatmul.mubr.f32.gmra.mrb[0].mxu0 %v8056
      %v8243 = vpop.f32.mrb[0].mxu0
      %v8244 = vadd.f32 0.0, %v8243
      %v8245 = vpop.f32.mrb[0].mxu0
      %8246 = vmatprep.mubr.f32.mxu0 0.0
      %8247 = vmatmul.mubr.f32.gmra.mrb[0].mxu0 %v8059
      %v8248 = vpop.f32.mrb[0].mxu0
      %v8249 = vadd.f32 0.0, %v8248
      %v8250 = vpop.f32.mrb[0].mxu0
      %8251 = vmatprep.mubr.f32.mxu0 0.0
      %8252 = vmatmul.mubr.f32.gmra.mrb[0].mxu0 %v8062
      %v8253 = vpop.f32.mrb[0].mxu0
      %v8254 = vadd.f32 0.0, %v8253
      %v8255 = vpop.f32.mrb[0].mxu0
      %8256 = vmatprep.mubr.f32.mxu0 0.0
      %8257 = vmatmul.mubr.f32.gmra.mrb[0].mxu0 %v8065
      %v8258 = vpop.f32.mrb[0].mxu0
      %v8259 = vadd.f32 0.0, %v8258
      %v8260 = vpop.f32.mrb[0].mxu0
      %8261 = vmatprep.mubr.f32.mxu0 0.0
      %8262 = vmatmul.mubr.f32.gmra.mrb[0].mxu0 %v8068
      %v8263 = vpop.f32.mrb[0].mxu0
      %v8264 = vadd.f32 0.0, %v8263
      %v8265 = vpop.f32.mrb[0].mxu0
      %8266 = vmatprep.mubr.f32.mxu0 0.0
      %8267 = vmatmul.mubr.f32.gmra.mrb[0].mxu0 %v8071
      %v8268 = vpop.f32.mrb[0].mxu0
      %v8269 = vadd.f32 0.0, %v8268
      %v8270 = vpop.f32.mrb[0].mxu0
      %8271 = vmatprep.mubr.f32.mxu0 0.0
      %8272 = vmatmul.mubr.f32.gmra.mrb[0].mxu0 %v8074
      %v8273 = vpop.f32.mrb[0].mxu0
      %v8274 = vadd.f32 0.0, %v8273
      %v8275 = vpop.f32.mrb[0].mxu0
      %8276 = vmatprep.mubr.f32.mxu0 0.0
      %8277 = vmatmul.mubr.f32.gmra.mrb[0].mxu0 %v8077
      %v8278 = vpop.f32.mrb[0].mxu0
      %v8279 = vadd.f32 0.0, %v8278
      %v8280 = vpop.f32.mrb[0].mxu0
      %8281 = vmatprep.mubr.f32.mxu0 0.0
      %8282 = vmatmul.mubr.f32.gmra.mrb[0].mxu0 %v8080
      %v8283 = vpop.f32.mrb[0].mxu0
      %v8284 = vadd.f32 0.0, %v8283
      %v8285 = vpop.f32.mrb[0].mxu0
      %8286 = vmatprep.mubr.f32.mxu0 0.0
      %8287 = vmatmul.mubr.f32.gmra.mrb[0].mxu0 %v8083
      %v8288 = vpop.f32.mrb[0].mxu0
      %v8289 = vadd.f32 0.0, %v8288
      %v8290 = vpop.f32.mrb[0].mxu0
      %8291 = vmatprep.mubr.f32.mxu0 0.0
      %8292 = vmatmul.mubr.f32.gmra.mrb[0].mxu0 %v8086
      %v8293 = vpop.f32.mrb[0].mxu0
      %v8294 = vadd.f32 0.0, %v8293
      %v8295 = vpop.f32.mrb[0].mxu0
      %8296 = vmatprep.mubr.f32.mxu0 0.0
      %8297 = vmatmul.mubr.f32.gmra.mrb[0].mxu0 %v8089
      %v8298 = vpop.f32.mrb[0].mxu0
      %v8299 = vadd.f32 0.0, %v8298
      %v8300 = vpop.f32.mrb[0].mxu0
      %8301 = vmatprep.mubr.f32.mxu0 0.0
      %8302 = vmatmul.mubr.f32.gmra.mrb[0].mxu0 %v8092
      %v8303 = vpop.f32.mrb[0].mxu0
      %v8304 = vadd.f32 0.0, %v8303
      %v8305 = vpop.f32.mrb[0].mxu0
      %8306 = vmatprep.mubr.f32.mxu0 0.0
      %8307 = vmatmul.mubr.f32.gmra.mrb[0].mxu0 %v8095
      %v8308 = vpop.f32.mrb[0].mxu0
      %v8309 = vadd.f32 0.0, %v8308
      %v8310 = vpop.f32.mrb[0].mxu0
      %8311 = vmatprep.mubr.f32.mxu0 0.0
      %8312 = vmatmul.mubr.f32.gmra.mrb[0].mxu0 %v8098
      %v8313 = vpop.f32.mrb[0].mxu0
      %v8314 = vadd.f32 0.0, %v8313
      %v8315 = vpop.f32.mrb[0].mxu0
      %8316 = vmatprep.mubr.f32.mxu0 0.0
      %8317 = vmatmul.mubr.f32.gmra.mrb[0].mxu0 %v8101
      %v8318 = vpop.f32.mrb[0].mxu0
      %v8319 = vadd.f32 0.0, %v8318
      %v8320 = vpop.f32.mrb[0].mxu0
      %8321 = vmatprep.mubr.f32.mxu0 0.0
      %8322 = vmatmul.mubr.f32.gmra.mrb[0].mxu0 %v8104
      %v8323 = vpop.f32.mrb[0].mxu0
      %v8324 = vadd.f32 0.0, %v8323
      %v8325 = vpop.f32.mrb[0].mxu0
      %8326 = vmatprep.mubr.f32.mxu0 0.0
      %8327 = vmatmul.mubr.f32.gmra.mrb[0].mxu0 %v8107
      %v8328 = vpop.f32.mrb[0].mxu0
      %v8329 = vadd.f32 0.0, %v8328
      %v8330 = vpop.f32.mrb[0].mxu0
      %8331 = vmatprep.mubr.f32.mxu0 0.0
      %8332 = vmatmul.mubr.f32.gmra.mrb[0].mxu0 %v8110
      %v8333 = vpop.f32.mrb[0].mxu0
      %v8334 = vadd.f32 0.0, %v8333
      %v8335 = vpop.f32.mrb[0].mxu0
      %8336 = vdwg.mxu0
      %v8337 = vadd.f32 %v7950, %v8179
      %v8338 = vadd.f32 %v7951, %v8184
      %v8339 = vadd.f32 %v7952, %v8189
      %v8340 = vadd.f32 %v7953, %v8194
      %v8341 = vadd.f32 %v7954, %v8199
      %v8342 = vadd.f32 %v7955, %v8204
      %v8343 = vadd.f32 %v7956, %v8209
      %v8344 = vadd.f32 %v7957, %v8214
      %v8345 = vadd.f32 %v7958, %v8219
      %v8346 = vadd.f32 %v7959, %v8224
      %v8347 = vadd.f32 %v7960, %v8229
      %v8348 = vadd.f32 %v7961, %v8234
      %v8349 = vadd.f32 %v7962, %v8239
      %v8350 = vadd.f32 %v7963, %v8244
      %v8351 = vadd.f32 %v7964, %v8249
      %v8352 = vadd.f32 %v7965, %v8254
      %v8353 = vadd.f32 %v7966, %v8259
      %v8354 = vadd.f32 %v7967, %v8264
      %v8355 = vadd.f32 %v7968, %v8269
      %v8356 = vadd.f32 %v7969, %v8274
      %v8357 = vadd.f32 %v7970, %v8279
      %v8358 = vadd.f32 %v7971, %v8284
      %v8359 = vadd.f32 %v7972, %v8289
      %v8360 = vadd.f32 %v7973, %v8294
      %v8361 = vadd.f32 %v7974, %v8299
      %v8362 = vadd.f32 %v7975, %v8304
      %v8363 = vadd.f32 %v7976, %v8309
      %v8364 = vadd.f32 %v7977, %v8314
      %v8365 = vadd.f32 %v7978, %v8319
      %v8366 = vadd.f32 %v7979, %v8324
      %v8367 = vadd.f32 %v7980, %v8329
      %v8368 = vadd.f32 %v7981, %v8334
      %v8369 = vadd.f32 %v335, %v8337
      %v8370 = vadd.f32 %v336, %v8338
      %v8371 = vadd.f32 %v337, %v8339
      %v8372 = vadd.f32 %v338, %v8340
      %v8373 = vadd.f32 %v339, %v8341
      %v8374 = vadd.f32 %v340, %v8342
      %v8375 = vadd.f32 %v341, %v8343
      %v8376 = vadd.f32 %v342, %v8344
      %v8377 = vadd.f32 %v343, %v8345
      %v8378 = vadd.f32 %v344, %v8346
      %v8379 = vadd.f32 %v345, %v8347
      %v8380 = vadd.f32 %v346, %v8348
      %v8381 = vadd.f32 %v347, %v8349
      %v8382 = vadd.f32 %v348, %v8350
      %v8383 = vadd.f32 %v349, %v8351
      %v8384 = vadd.f32 %v350, %v8352
      %v8385 = vadd.f32 %v351, %v8353
      %v8386 = vadd.f32 %v352, %v8354
      %v8387 = vadd.f32 %v353, %v8355
      %v8388 = vadd.f32 %v354, %v8356
      %v8389 = vadd.f32 %v355, %v8357
      %v8390 = vadd.f32 %v356, %v8358
      %v8391 = vadd.f32 %v357, %v8359
      %v8392 = vadd.f32 %v358, %v8360
      %v8393 = vadd.f32 %v359, %v8361
      %v8394 = vadd.f32 %v360, %v8362
      %v8395 = vadd.f32 %v361, %v8363
      %v8396 = vadd.f32 %v362, %v8364
      %v8397 = vadd.f32 %v363, %v8365
      %v8398 = vadd.f32 %v364, %v8366
      %v8399 = vadd.f32 %v365, %v8367
      %v8400 = vadd.f32 %v366, %v8368
      %8401 = vst.msk [vmem:[%s278] sm:$0xff] %vm279, %v8369
      %8402 = vst.msk [vmem:[%s278 + $0x8] sm:$0xff] %vm279, %v8370
      %8403 = vst.msk [vmem:[%s278 + $0x10] sm:$0xff] %vm279, %v8371
      %8404 = vst.msk [vmem:[%s278 + $0x18] sm:$0xff] %vm279, %v8372
      %8405 = vst.msk [vmem:[%s278 + $0x20] sm:$0xff] %vm279, %v8373
      %8406 = vst.msk [vmem:[%s278 + $0x28] sm:$0xff] %vm279, %v8374
      %8407 = vst.msk [vmem:[%s278 + $0x30] sm:$0xff] %vm279, %v8375
      %8408 = vst.msk [vmem:[%s278 + $0x38] sm:$0xff] %vm279, %v8376
      %8409 = vst.msk [vmem:[%s278 + $0x40] sm:$0xff] %vm279, %v8377
      %8410 = vst.msk [vmem:[%s278 + $0x48] sm:$0xff] %vm279, %v8378
      %8411 = vst.msk [vmem:[%s278 + $0x50] sm:$0xff] %vm279, %v8379
      %8412 = vst.msk [vmem:[%s278 + $0x58] sm:$0xff] %vm279, %v8380
      %8413 = vst.msk [vmem:[%s278 + $0x60] sm:$0xff] %vm279, %v8381
      %8414 = vst.msk [vmem:[%s278 + $0x68] sm:$0xff] %vm279, %v8382
      %8415 = vst.msk [vmem:[%s278 + $0x70] sm:$0xff] %vm279, %v8383
      %8416 = vst.msk [vmem:[%s278 + $0x78] sm:$0xff] %vm279, %v8384
      %8417 = vst.msk [vmem:[%s278 + $0x80] sm:$0xff] %vm279, %v8385
      %8418 = vst.msk [vmem:[%s278 + $0x88] sm:$0xff] %vm279, %v8386
      %8419 = vst.msk [vmem:[%s278 + $0x90] sm:$0xff] %vm279, %v8387
      %8420 = vst.msk [vmem:[%s278 + $0x98] sm:$0xff] %vm279, %v8388
      %8421 = vst.msk [vmem:[%s278 + $0xa0] sm:$0xff] %vm279, %v8389
      %8422 = vst.msk [vmem:[%s278 + $0xa8] sm:$0xff] %vm279, %v8390
      %8423 = vst.msk [vmem:[%s278 + $0xb0] sm:$0xff] %vm279, %v8391
      %8424 = vst.msk [vmem:[%s278 + $0xb8] sm:$0xff] %vm279, %v8392
      %8425 = vst.msk [vmem:[%s278 + $0xc0] sm:$0xff] %vm279, %v8393
      %8426 = vst.msk [vmem:[%s278 + $0xc8] sm:$0xff] %vm279, %v8394
      %8427 = vst.msk [vmem:[%s278 + $0xd0] sm:$0xff] %vm279, %v8395
      %8428 = vst.msk [vmem:[%s278 + $0xd8] sm:$0xff] %vm279, %v8396
      %8429 = vst.msk [vmem:[%s278 + $0xe0] sm:$0xff] %vm279, %v8397
      %8430 = vst.msk [vmem:[%s278 + $0xe8] sm:$0xff] %vm279, %v8398
      %8431 = vst.msk [vmem:[%s278 + $0xf0] sm:$0xff] %vm279, %v8399
      %8432 = vst.msk [vmem:[%s278 + $0xf8] sm:$0xff] %vm279, %v8400
      %p8433 = scmp.lt.s32.totalorder %s18, 1
      %s8434 = scalar_select %p8433, %s18, 1
      %s8435 = smul.addr %s8434, 32
      %s8436 = smul.addr %s8435, 8
      %s8437 = scalar_lea.vmem %s7, %s8436
      // Predicated region
      $region49: #{tpu_custom_call.1} parent=47 // pred_check
        %p8438 = pneg %p188
      $region50: #{tpu_custom_call.1} parent=47 // pred_check_branch
        %8440 = sbr.rel (%p8438) target = $region52
      $region51: #{tpu_custom_call.1} parent=47 // pred_region
        _
      $region52: #{tpu_custom_call.1} parent=47 // pred_fallthru
        _
    $region48: #{tpu_custom_call.1} parent=5 // pred_fallthru
      _
    %p8441 = scmp.le.s32.totalorder 2, %s13
    // Predicated region
    $region53: #{tpu_custom_call.1} parent=5 // pred_check
      %p8442 = pneg %p8441
    $region54: #{tpu_custom_call.1} parent=5 // pred_check_branch
      %8444 = sbr.rel (%p8442) target = $region56
    $region55: #{tpu_custom_call.1} parent=5 // pred_region
      %s8445 = ssub.s32 %s13, 2
      // Predicated region
      $region57: #{tpu_custom_call.1} parent=55 // pred_check
        %p8446 = pneg %p194
      $region58: #{tpu_custom_call.1} parent=55 // pred_check_branch
        %8448 = sbr.rel (%p8446) target = $region60
      $region59: #{tpu_custom_call.1} parent=55 // pred_region
        %p8449 = scmp.lt.s32.totalorder %s19, 1
        %s8450 = scalar_select %p8449, %s19, 1
        %s8451 = smul.addr %s8450, 32
        %s8452 = smul.addr %s8451, 8
        %s8453 = scalar_lea.vmem %s7, %s8452
      $region60: #{tpu_custom_call.1} parent=55 // pred_fallthru
        _
    $region56: #{tpu_custom_call.1} parent=5 // pred_fallthru
      _
  $region6: #{tpu_custom_call.1} parent=0 // loop_footer
    %s17 = sadd.s32 1, %s13
  $region7: #{tpu_custom_call.1} parent=0 // loop_footer_branch
    %12 = sbr.rel target = $region3
  $region8: #{tpu_custom_call.1} parent=0 // loop_exit
    _

</llo_original>
